<compile_context>
chip_gen: v7x
topology: tpu7x:2x2x1
jax: 0.10.0
libtpu: 0.0.40
codegen_flags: <defaults>
</compile_context>

<pallas_src>
import functools

import jax
import jax.numpy as jnp
from jax.experimental import pallas as pl
from jax.experimental.pallas import tpu as pltpu

_TILE_OUT = 128  # lane-dense output column block (600 -> padded 640 = 5 * 128)


# ---------------------------------------------------------------------------
# Stage 1 (tiny, runs once): h = LeakyReLU((x @ W0 + b0) @ W1), stored bf16.
# Hoisted out of the W2-streaming loop so the streaming steps never recompute
# it (it would be the exposed critical path on v7x's ~3.2 TB/s HBM).
# ---------------------------------------------------------------------------
def _hidden_kernel(x_ref, w0_ref, b0_ref, w1_ref, h_ref):
    y = jnp.dot(x_ref[...], w0_ref[...], preferred_element_type=jnp.float32)
    y = y + b0_ref[...]
    h = jnp.dot(y.astype(jnp.bfloat16), w1_ref[...],
                preferred_element_type=jnp.float32)
    # LeakyReLU(slope=0.01) fused with the bf16 downcast in one pass.
    h_ref[...] = jnp.maximum(h, jnp.float32(0.01) * h).astype(h_ref.dtype)


# ---------------------------------------------------------------------------
# Stage 2 (memory bound): out[:, j*128:(j+1)*128] = h @ W2_block[j].
# W2 arrives pre-blocked as [n_out, H, 128]; block j is a single contiguous
# HBM slab, double-buffered by the BlockSpec pipeline while the MXU works.
# ---------------------------------------------------------------------------
def _stream_kernel(h_ref, w2_ref, out_ref):
    out_ref[...] = jnp.dot(h_ref[...], w2_ref[0],
                           preferred_element_type=jnp.float32
                           ).astype(out_ref.dtype)


def prepare_metric_params(w0, b0, w1, w2):
    """One-time (outside jit) prep: [in,out] layout, bf16, W2 padded+pre-blocked.

    Note: W1/W2 (and y) are bf16-quantized, so results deviate ~1e-2 (rel)
    from the f32 PyTorch model -- intended bandwidth trade.
    """
    hidden, out_dim = w2.shape
    out_pad = pl.cdiv(out_dim, _TILE_OUT) * _TILE_OUT
    if out_pad != out_dim:
        # Zero columns contribute zero output; sliced off in the forward.
        w2 = jnp.pad(w2, ((0, 0), (0, out_pad - out_dim)))
    n_out = out_pad // _TILE_OUT
    # [H, n_out*128] -> [n_out, H, 128]; block j == W2[:, j*128:(j+1)*128],
    # contiguous in HBM so each streamed block is one 2.56 MB burst DMA.
    w2_blocked = jnp.transpose(w2.reshape(hidden, n_out, _TILE_OUT), (1, 0, 2))
    return (w0.astype(jnp.float32),
            b0.reshape(1, -1).astype(jnp.float32),
            w1.astype(jnp.bfloat16),
            w2_blocked.astype(jnp.bfloat16))


@functools.partial(jax.jit, static_argnames=("out_dim",))
def metric_model_forward(x, w0, b0_2d, w1, w2_blocked, *, out_dim=600):
    """x: [B, D] f32; w0: [D, D] f32; b0_2d: [1, D] f32; w1: [D, H] bf16;
    w2_blocked: [n_out, H, 128] bf16 (from prepare_metric_params) -> [B, out_dim] f32."""
    B, D = x.shape
    H = w1.shape[1]
    n_out, _, tile = w2_blocked.shape
    out_pad = n_out * tile
    assert tile == _TILE_OUT and out_pad >= out_dim, "use prepare_metric_params()"

    # ---- Stage 1: tiny fused front-end, computed once (not per W2 block). ----
    h = pl.pallas_call(
        _hidden_kernel,
        out_shape=jax.ShapeDtypeStruct((B, H), jnp.bfloat16),
        grid=(1,),
        in_specs=[
            pl.BlockSpec((B, D), lambda i: (0, 0)),   # x
            pl.BlockSpec((D, D), lambda i: (0, 0)),   # W0 [in, out]
            pl.BlockSpec((1, D), lambda i: (0, 0)),   # b0
            pl.BlockSpec((D, H), lambda i: (0, 0)),   # W1 [in, out]
        ],
        out_specs=pl.BlockSpec((B, H), lambda i: (0, 0)),
        cost_estimate=pl.CostEstimate(
            flops=2 * B * (D * D + D * H), transcendentals=0,
            bytes_accessed=B * D * 4 + D * D * 4 + D * 4 + D * H * 2 + B * H * 2),
    )(x, w0, b0_2d, w1)

    # ---- Stage 2: stream W2 in contiguous 128-column blocks. ----
    flops = 2 * B * H * out_pad
    bytes_accessed = B * H * 2 + n_out * H * tile * 2 + B * out_pad * 4

    out_padded = pl.pallas_call(
        _stream_kernel,
        out_shape=jax.ShapeDtypeStruct((B, out_pad), jnp.float32),
        grid=(n_out,),
        in_specs=[
            pl.BlockSpec((B, H), lambda j: (0, 0)),            # h (VMEM resident)
            pl.BlockSpec((1, H, _TILE_OUT), lambda j: (j, 0, 0)),  # contiguous W2 slab
        ],
        out_specs=pl.BlockSpec((B, _TILE_OUT), lambda j: (0, j)),
        compiler_params=pltpu.CompilerParams(
            dimension_semantics=("parallel",),   # v7x: 2 TCs split the W2 stream
        ),
        cost_estimate=pl.CostEstimate(
            flops=flops, transcendentals=0, bytes_accessed=bytes_accessed),
    )(h, w2_blocked)

    return out_padded[:, :out_dim]


def _init_params(key, input_data_dim, hidden=10000, out_dim=600):
    """Deterministic PyTorch-style init; weights already stored as [in, out]."""
    k0, k1, k2, k3 = jax.random.split(key, 4)
    bound0 = 1.0 / (input_data_dim ** 0.5)
    w0 = jax.random.uniform(k0, (input_data_dim, input_data_dim),
                            jnp.float32, -bound0, bound0)
    b0 = jax.random.uniform(k1, (input_data_dim,), jnp.float32, -bound0, bound0)
    w1 = jax.random.uniform(k2, (input_data_dim, hidden),
                            jnp.float32, -bound0, bound0)
    bound2 = 1.0 / (hidden ** 0.5)
    w2 = jax.random.uniform(k3, (hidden, out_dim), jnp.float32, -bound2, bound2)
    return w0, b0, w1, w2


if __name__ == "__main__":
    key = jax.random.PRNGKey(0)
    kx, kp = jax.random.split(key)

    B = 8                 # batch (sublane-aligned); larger B amortizes the W2 stream
    INPUT_DATA_DIM = 32   # input_data_dim
    HIDDEN = 10000        # fixed by the module definition
    OUT = 600             # fixed by the module definition

    x = jax.random.normal(kx, (B, INPUT_DATA_DIM), dtype=jnp.float32)
    w0, b0, w1, w2 = _init_params(kp, INPUT_DATA_DIM, HIDDEN, OUT)

    # One-time weight preparation (pad + bf16 + pre-block) -- outside jit.
    params = prepare_metric_params(w0, b0, w1, w2)
    params = jax.tree_util.tree_map(jax.block_until_ready, params)

    out = metric_model_forward(x, *params, out_dim=OUT)
    out = jax.block_until_ready(out)
    assert out.shape == (B, OUT) and out.dtype == jnp.float32

    # Pure-JAX reference using the SAME bf16-quantized weights.
    w0f, b0f, w1bf, w2b = params
    w2_full = jnp.transpose(w2b, (1, 0, 2)).reshape(HIDDEN, -1)  # [H, OUT_PAD]
    y_ref = x @ w0f + b0f
    h_ref = y_ref @ w1bf.astype(jnp.float32)
    h_ref = jnp.where(h_ref > 0, h_ref, 0.01 * h_ref)
    ref = jnp.dot(h_ref, w2_full[:, :OUT].astype(jnp.float32),
                  precision=jax.lax.Precision.HIGHEST)
    max_err = float(jnp.max(jnp.abs(out - ref)))
    assert jnp.allclose(out, ref, rtol=2e-2, atol=2e-2), max_err

    print("KERNEL_OK")
</pallas_src>

<mosaic_0001>
module attributes {stable_mosaic.version = 11 : i64} {
  func.func @_stream_kernel(%arg0: i32, %arg1: memref<8x10000xbf16, #tpu.memory_space<vmem>>, %arg2: memref<1x10000x128xbf16, #tpu.memory_space<vmem>>, %arg3: memref<8x128xf32, #tpu.memory_space<vmem>>) attributes {dimension_semantics = [#tpu.dimension_semantics<parallel>], iteration_bounds = array<i64: 5>, scalar_prefetch = 0 : i64, scratch_operands = 0 : i64, tpu.core_type = #tpu.core_type<tc>, window_params = [{pipeline_mode = #tpu.pipeline_mode<synchronous>, transform_indices = @transform_0, window_bounds = array<i64: 8, 10000>}, {transform_indices = @transform_1, window_bounds = array<i64: 1, 10000, 128>}, {transform_indices = @transform_2, window_bounds = array<i64: 8, 128>}]} {
    %c0 = arith.constant 0 : index
    %c0_0 = arith.constant 0 : index
    %0 = vector.load %arg1[%c0, %c0_0] : memref<8x10000xbf16, #tpu.memory_space<vmem>>, vector<8x10000xbf16>
    %c0_1 = arith.constant 0 : index
    %c0_2 = arith.constant 0 : index
    %c0_3 = arith.constant 0 : index
    %1 = vector.load %arg2[%c0_1, %c0_2, %c0_3] : memref<1x10000x128xbf16, #tpu.memory_space<vmem>>, vector<1x10000x128xbf16>
    %2 = vector.shape_cast %1 : vector<1x10000x128xbf16> to vector<10000x128xbf16>
    %cst = arith.constant dense<0.000000e+00> : vector<8x128xf32>
    %3 = tpu.matmul %0, %2, %cst {dimension_numbers = #tpu.dot_dimension_numbers<[1], [0], [0], [1], [0, 0, 1, 1], [], []>} : vector<8x10000xbf16>, vector<10000x128xbf16>, vector<8x128xf32> -> vector<8x128xf32>
    %c0_4 = arith.constant 0 : index
    %c0_5 = arith.constant 0 : index
    %4 = vector.load %arg3[%c0_4, %c0_5] : memref<8x128xf32, #tpu.memory_space<vmem>>, vector<8x128xf32>
    tpu.vector_store %arg3[%c0_4, %c0_5], %3 {strides = array<i32>} : memref<8x128xf32, #tpu.memory_space<vmem>>, vector<8x128xf32>,
    return
  }
  func.func @transform_0(%arg0: i32) -> (i32, i32) {
    %c0_i32 = arith.constant 0 : i32
    %c0_i32_0 = arith.constant 0 : i32
    %c0_i32_1 = arith.constant 0 : i32
    return %c0_i32, %c0_i32_0 : i32, i32
  }
  func.func @transform_1(%arg0: i32) -> (i32, i32, i32) {
    %c0_i32 = arith.constant 0 : i32
    %c0_i32_0 = arith.constant 0 : i32
    %c0_i32_1 = arith.constant 0 : i32
    return %arg0, %c0_i32, %c0_i32_0 : i32, i32, i32
  }
  func.func @transform_2(%arg0: i32) -> (i32, i32) {
    %c0_i32 = arith.constant 0 : i32
    %c0_i32_0 = arith.constant 0 : i32
    return %c0_i32, %arg0 : i32, i32
  }
}

module attributes {stable_mosaic.version = 11 : i64} {
  func.func @_hidden_kernel(%arg0: i32, %arg1: memref<8x32xf32, #tpu.memory_space<vmem>>, %arg2: memref<32x32xf32, #tpu.memory_space<vmem>>, %arg3: memref<1x32xf32, #tpu.memory_space<vmem>>, %arg4: memref<32x10000xbf16, #tpu.memory_space<vmem>>, %arg5: memref<8x10000xbf16, #tpu.memory_space<vmem>>) attributes {dimension_semantics = [#tpu.dimension_semantics<arbitrary>], iteration_bounds = array<i64: 1>, scalar_prefetch = 0 : i64, scratch_operands = 0 : i64, tpu.core_type = #tpu.core_type<tc>, window_params = [{pipeline_mode = #tpu.pipeline_mode<synchronous>, transform_indices = @transform_0, window_bounds = array<i64: 8, 32>}, {pipeline_mode = #tpu.pipeline_mode<synchronous>, transform_indices = @transform_1, window_bounds = array<i64: 32, 32>}, {pipeline_mode = #tpu.pipeline_mode<synchronous>, transform_indices = @transform_2, window_bounds = array<i64: 1, 32>}, {pipeline_mode = #tpu.pipeline_mode<synchronous>, transform_indices = @transform_3, window_bounds = array<i64: 32, 10000>}, {pipeline_mode = #tpu.pipeline_mode<synchronous>, transform_indices = @transform_4, window_bounds = array<i64: 8, 10000>}]} {
    %c0 = arith.constant 0 : index
    %c0_0 = arith.constant 0 : index
    %0 = vector.load %arg1[%c0, %c0_0] : memref<8x32xf32, #tpu.memory_space<vmem>>, vector<8x32xf32>
    %c0_1 = arith.constant 0 : index
    %c0_2 = arith.constant 0 : index
    %1 = vector.load %arg2[%c0_1, %c0_2] : memref<32x32xf32, #tpu.memory_space<vmem>>, vector<32x32xf32>
    %cst = arith.constant dense<0.000000e+00> : vector<8x32xf32>
    %2 = tpu.matmul %0, %1, %cst {dimension_numbers = #tpu.dot_dimension_numbers<[1], [0], [0], [1], [0, 0, 1, 1], [], []>} : vector<8x32xf32>, vector<32x32xf32>, vector<8x32xf32> -> vector<8x32xf32>
    %c0_3 = arith.constant 0 : index
    %c0_4 = arith.constant 0 : index
    %3 = vector.load %arg3[%c0_3, %c0_4] : memref<1x32xf32, #tpu.memory_space<vmem>>, vector<1x32xf32>
    %4 = vector.broadcast %3 : vector<1x32xf32> to vector<8x32xf32>
    %5 = arith.addf %2, %4 : vector<8x32xf32>
    %6 = arith.truncf %5 : vector<8x32xf32> to vector<8x32xbf16>
    %c0_5 = arith.constant 0 : index
    %c0_6 = arith.constant 0 : index
    %7 = vector.load %arg4[%c0_5, %c0_6] : memref<32x10000xbf16, #tpu.memory_space<vmem>>, vector<32x10000xbf16>
    %cst_7 = arith.constant dense<0.000000e+00> : vector<8x10000xf32>
    %8 = tpu.matmul %6, %7, %cst_7 {dimension_numbers = #tpu.dot_dimension_numbers<[1], [0], [0], [1], [0, 0, 1, 1], [], []>} : vector<8x32xbf16>, vector<32x10000xbf16>, vector<8x10000xf32> -> vector<8x10000xf32>
    %cst_8 = arith.constant 0.00999999977 : f32
    %9 = vector.broadcast %cst_8 : f32 to vector<8x10000xf32>
    %10 = arith.mulf %9, %8 : vector<8x10000xf32>
    %11 = arith.maximumf %8, %10 : vector<8x10000xf32>
    %12 = arith.truncf %11 : vector<8x10000xf32> to vector<8x10000xbf16>
    %c0_9 = arith.constant 0 : index
    %c0_10 = arith.constant 0 : index
    %13 = vector.load %arg5[%c0_9, %c0_10] : memref<8x10000xbf16, #tpu.memory_space<vmem>>, vector<8x10000xbf16>
    tpu.vector_store %arg5[%c0_9, %c0_10], %12 {strides = array<i32>} : memref<8x10000xbf16, #tpu.memory_space<vmem>>, vector<8x10000xbf16>,
    return
  }
  func.func @transform_0(%arg0: i32) -> (i32, i32) {
    %c0_i32 = arith.constant 0 : i32
    %c0_i32_0 = arith.constant 0 : i32
    %c0_i32_1 = arith.constant 0 : i32
    return %c0_i32, %c0_i32_0 : i32, i32
  }
  func.func @transform_1(%arg0: i32) -> (i32, i32) {
    %c0_i32 = arith.constant 0 : i32
    %c0_i32_0 = arith.constant 0 : i32
    %c0_i32_1 = arith.constant 0 : i32
    return %c0_i32, %c0_i32_0 : i32, i32
  }
  func.func @transform_2(%arg0: i32) -> (i32, i32) {
    %c0_i32 = arith.constant 0 : i32
    %c0_i32_0 = arith.constant 0 : i32
    %c0_i32_1 = arith.constant 0 : i32
    return %c0_i32, %c0_i32_0 : i32, i32
  }
  func.func @transform_3(%arg0: i32) -> (i32, i32) {
    %c0_i32 = arith.constant 0 : i32
    %c0_i32_0 = arith.constant 0 : i32
    %c0_i32_1 = arith.constant 0 : i32
    return %c0_i32, %c0_i32_0 : i32, i32
  }
  func.func @transform_4(%arg0: i32) -> (i32, i32) {
    %c0_i32 = arith.constant 0 : i32
    %c0_i32_0 = arith.constant 0 : i32
    %c0_i32_1 = arith.constant 0 : i32
    return %c0_i32, %c0_i32_0 : i32, i32
  }
}

</mosaic_0001>

<llo_original>
// kernel: metric_model_forward.2
$region0: #{metric_model_forward.2}
  #allocation0 [shape = 'u32[]', space=smem, size = 0x4, offset = 0x4, fixed_abs, tag = 'smem constant byte address 0x4 - core index']
  #allocation1 [shape = 'u32[144,128]{1,0:T(1,128)}', space=vmem, size = 0x12000, scoped, tag = 'internal scratch']
  %s0 = inlined_call_operand.hbm [shape: f32[8,32], index: 0, kind: input, shape index: {}]
  %s1 = inlined_call_operand.hbm [shape: f32[32,32], index: 1, kind: input, shape index: {}]
  %s2 = inlined_call_operand.hbm [shape: f32[1,32], index: 2, kind: input, shape index: {}]
  %s3 = inlined_call_operand.hbm [shape: bf16[32,10000], index: 3, kind: input, shape index: {}]
  %s4 = inlined_call_operand.vmem [shape: bf16[8,10000], index: 4, kind: output, shape index: {}]
  %s5 = sld [smem:[#allocation0]]
  $region42: #{metric_model_forward.2} parent=0
    _
  %s7 = ssub.s32 1, %s5
  %s8 = scalar_select 0, %s7, %s5
  $region1: #{metric_model_forward.2} parent=0
    #allocation2 [shape = 'u8[4096]{0}', space=vmem, size = 0x1000, scoped, tag = 'input window, operand 0, single buffered']
    #allocation3 [shape = 's32[1]{0}', space=sflag, size = 0x4, scoped, tag = 'scoped memory for metric_model_forward.2']
    #allocation4 [shape = 'u8[16384]{0}', space=vmem, size = 0x4000, scoped, tag = 'input window, operand 1, single buffered']
    #allocation5 [shape = 's32[1]{0}', space=sflag, size = 0x4, scoped, tag = 'scoped memory for metric_model_forward.2']
    #allocation6 [shape = 'u8[512]{0}', space=vmem, size = 0x400, scoped, tag = 'input window, operand 2, single buffered']
    #allocation7 [shape = 'u8[647168]{0}', space=vmem, size = 0x9e000, scoped, tag = 'input window, operand 3, single buffered']
    #allocation8 [shape = 's32[1]{0}', space=sflag, size = 0x4, scoped, tag = 'scoped memory for metric_model_forward.2']
    %9 = vsyncpa [#allocation3], 0
    %10 = vsyncpa [#allocation5], 0
    %11 = vsyncpa [#allocation8], 0
    // Predicated region
    $region2: #{metric_model_forward.2} parent=1 // pred_check
      _
    $region3: #{metric_model_forward.2} parent=1 // pred_check_branch
      %13 = sbr.rel (0) target = $region5
    $region4: #{metric_model_forward.2} parent=1 // pred_region
      %s15 = ssub.s32 128, 128
      %16 = vsyncadd [#allocation3], %s15
      %s18 = sshll.u32 [#allocation2], 4
      %s19 = int_to_ptr.vmem [resolvable:$true] %s18
      %21 = dma.hbm_to_vmem [thread:$0]  %s0, 128, %s19, [#allocation3]
    $region5: #{metric_model_forward.2} parent=1 // pred_fallthru
      _
    // Predicated region
    $region6: #{metric_model_forward.2} parent=1 // pred_check
      _
    $region7: #{metric_model_forward.2} parent=1 // pred_check_branch
      %23 = sbr.rel (0) target = $region9
    $region8: #{metric_model_forward.2} parent=1 // pred_region
      %s25 = ssub.s32 512, 512
      %26 = vsyncadd [#allocation5], %s25
      %s27 = sshll.u32 [#allocation4], 4
      %s28 = int_to_ptr.vmem [resolvable:$true] %s27
      %33 = dma.hbm_to_vmem [thread:$0]  %s1, 512, %s28, [#allocation5], 128, 128, 8
    $region9: #{metric_model_forward.2} parent=1 // pred_fallthru
      _
    // Predicated region
    $region10: #{metric_model_forward.2} parent=1 // pred_check
      _
    $region11: #{metric_model_forward.2} parent=1 // pred_check_branch
      %35 = sbr.rel (0) target = $region13
    $region12: #{metric_model_forward.2} parent=1 // pred_region
      %s37 = ssub.s32 16, 16
      %38 = vsyncadd [#allocation5], %s37
      %s40 = sshll.u32 [#allocation6], 4
      %s41 = int_to_ptr.vmem [resolvable:$true] %s40
      %43 = dma.hbm_to_vmem [thread:$0]  %s2, 16, %s41, [#allocation5]
    $region13: #{metric_model_forward.2} parent=1 // pred_fallthru
      _
    // Predicated region
    $region14: #{metric_model_forward.2} parent=1 // pred_check
      _
    $region15: #{metric_model_forward.2} parent=1 // pred_check_branch
      %45 = sbr.rel (0) target = $region17
    $region16: #{metric_model_forward.2} parent=1 // pred_region
      %s47 = ssub.s32 20224, 20224
      %48 = vsyncadd [#allocation8], %s47
      %s49 = sshll.u32 [#allocation7], 4
      %s50 = int_to_ptr.vmem [resolvable:$true] %s49
      %55 = dma.hbm_to_vmem [thread:$0]  %s3, 20224, %s50, [#allocation8], 5056, 5056, 316
    $region17: #{metric_model_forward.2} parent=1 // pred_fallthru
      _
    // Predicated region
    $region18: #{metric_model_forward.2} parent=1 // pred_check
      _
    $region19: #{metric_model_forward.2} parent=1 // pred_check_branch
      %57 = sbr.rel (0) target = $region21
    $region20: #{metric_model_forward.2} parent=1 // pred_region
      %58 = dma.done [#allocation3], 128
    $region21: #{metric_model_forward.2} parent=1 // pred_fallthru
      _
    // Predicated region
    $region22: #{metric_model_forward.2} parent=1 // pred_check
      _
    $region23: #{metric_model_forward.2} parent=1 // pred_check_branch
      %60 = sbr.rel (0) target = $region25
    $region24: #{metric_model_forward.2} parent=1 // pred_region
      %61 = dma.done [#allocation5], 512
    $region25: #{metric_model_forward.2} parent=1 // pred_fallthru
      _
    // Predicated region
    $region26: #{metric_model_forward.2} parent=1 // pred_check
      _
    $region27: #{metric_model_forward.2} parent=1 // pred_check_branch
      %63 = sbr.rel (0) target = $region29
    $region28: #{metric_model_forward.2} parent=1 // pred_region
      %64 = dma.done [#allocation5], 16
    $region29: #{metric_model_forward.2} parent=1 // pred_fallthru
      _
    // Predicated region
    $region30: #{metric_model_forward.2} parent=1 // pred_check
      _
    $region31: #{metric_model_forward.2} parent=1 // pred_check_branch
      %66 = sbr.rel (0) target = $region33
    $region32: #{metric_model_forward.2} parent=1 // pred_region
      %67 = dma.done [#allocation8], 20224
    $region33: #{metric_model_forward.2} parent=1 // pred_fallthru
      _
    %v69 = vld [vmem:[#allocation2] sm:$0xff]
    %v70 = vld [vmem:[#allocation4] sm:$0xff]
    %v71 = vld [vmem:[#allocation4 + $0x8] sm:$0xff]
    %v72 = vld [vmem:[#allocation4 + $0x10] sm:$0xff]
    %v73 = vld [vmem:[#allocation4 + $0x18] sm:$0xff]
    %v74 = vld [vmem:[#allocation6] sm:$0x1]
    %v76 = vlaneseq
    %v77 = vshrl.u32 %v76, 7
    %v78 = vsub.s32 0, %v77
    %v79 = vrot.slane %v74, %v78
    %vm81 = vcmask 261120
    %v83 = vsel %vm81, %v69, 0
    %85 = vmatprep.subr.mxu0 0.0
    %86 = vmatpush1.msra.mxu0 %v70
    %87 = vmatprep.subr.mxu0 0.0
    %88 = vmatpush1.msra.mxu0 %v71
    %89 = vmatprep.subr.mxu0 0.0
    %90 = vmatpush1.msra.mxu0 %v72
    %91 = vmatprep.subr.mxu0 0.0
    %92 = vmatpush1.msra.mxu0 %v73
    %93 = vmatprep.subr.mxu0 0.0
    %94 = vmatpush1.msra.mxu0 0.0
    %95 = vmatprep.subr.mxu0 0.0
    %96 = vmatpush1.msra.mxu0 0.0
    %97 = vmatprep.subr.mxu0 0.0
    %98 = vmatpush1.msra.mxu0 0.0
    %99 = vmatprep.subr.mxu0 0.0
    %100 = vmatpush1.msra.mxu0 0.0
    %101 = vmatprep.subr.mxu0 0.0
    %102 = vmatpush1.msra.mxu0 0.0
    %103 = vmatprep.subr.mxu0 0.0
    %104 = vmatpush1.msra.mxu0 0.0
    %105 = vmatprep.subr.mxu0 0.0
    %106 = vmatpush1.msra.mxu0 0.0
    %107 = vmatprep.subr.mxu0 0.0
    %108 = vmatpush1.msra.mxu0 0.0
    %109 = vmatprep.subr.mxu0 0.0
    %110 = vmatpush1.msra.mxu0 0.0
    %111 = vmatprep.subr.mxu0 0.0
    %112 = vmatpush1.msra.mxu0 0.0
    %113 = vmatprep.subr.mxu0 0.0
    %114 = vmatpush1.msra.mxu0 0.0
    %115 = vmatprep.subr.mxu0 0.0
    %116 = vmatpush1.msra.mxu0 0.0
    %117 = vmatprep.subr.mxu0 0.0
    %118 = vmatpush1.msra.mxu0 0.0
    %119 = vmatprep.subr.mxu0 0.0
    %120 = vmatpush1.msra.mxu0 0.0
    %121 = vmatprep.subr.mxu0 0.0
    %122 = vmatpush1.msra.mxu0 0.0
    %123 = vmatprep.subr.mxu0 0.0
    %124 = vmatpush1.msra.mxu0 0.0
    %125 = vmatprep.subr.mxu0 0.0
    %126 = vmatpush1.msra.mxu0 0.0
    %127 = vmatprep.subr.mxu0 0.0
    %128 = vmatpush1.msra.mxu0 0.0
    %129 = vmatprep.subr.mxu0 0.0
    %130 = vmatpush1.msra.mxu0 0.0
    %131 = vmatprep.subr.mxu0 0.0
    %132 = vmatpush1.msra.mxu0 0.0
    %133 = vmatprep.subr.mxu0 0.0
    %134 = vmatpush1.msra.mxu0 0.0
    %135 = vmatprep.subr.mxu0 0.0
    %136 = vmatpush1.msra.mxu0 0.0
    %137 = vmatprep.subr.mxu0 0.0
    %138 = vmatpush1.msra.mxu0 0.0
    %139 = vmatprep.subr.mxu0 0.0
    %140 = vmatpush1.msra.mxu0 0.0
    %141 = vmatprep.subr.mxu0 0.0
    %142 = vmatpush1.msra.mxu0 0.0
    %143 = vmatprep.subr.mxu0 0.0
    %144 = vmatpush1.msra.mxu0 0.0
    %145 = vmatprep.subr.mxu0 0.0
    %146 = vmatpush1.msra.mxu0 0.0
    %147 = vmatprep.subr.mxu0 0.0
    %148 = vmatpush1.msra.mxu0 0.0
    %149 = vmatprep.mubr.f32.mxu0 0.0
    %150 = vmatmul.mubr.f32.gmra.mrb[0].mxu0 %v83
    %v151 = vpop.f32.mrb[0].mxu0
    %v152 = vadd.f32 %v79, %v151
    %v153 = vpop.f32.mrb[0].mxu0
    %154 = vdwg.mxu0
    %v155 = vpack.c.bf16 %v152, %v152
    %v156 = vld [vmem:[#allocation7] sm:$0xff]
    %v157 = vld [vmem:[#allocation7 + $0x8] sm:$0xff]
    %v158 = vld [vmem:[#allocation7 + $0x10] sm:$0xff]
    %v159 = vld [vmem:[#allocation7 + $0x18] sm:$0xff]
    %v160 = vld [vmem:[#allocation7 + $0x20] sm:$0xff]
    %v161 = vld [vmem:[#allocation7 + $0x28] sm:$0xff]
    %v162 = vld [vmem:[#allocation7 + $0x30] sm:$0xff]
    %v163 = vld [vmem:[#allocation7 + $0x38] sm:$0xff]
    %v164 = vld [vmem:[#allocation7 + $0x40] sm:$0xff]
    %v165 = vld [vmem:[#allocation7 + $0x48] sm:$0xff]
    %v166 = vld [vmem:[#allocation7 + $0x50] sm:$0xff]
    %v167 = vld [vmem:[#allocation7 + $0x58] sm:$0xff]
    %v168 = vld [vmem:[#allocation7 + $0x60] sm:$0xff]
    %v169 = vld [vmem:[#allocation7 + $0x68] sm:$0xff]
    %v170 = vld [vmem:[#allocation7 + $0x70] sm:$0xff]
    %v171 = vld [vmem:[#allocation7 + $0x78] sm:$0xff]
    %v172 = vld [vmem:[#allocation7 + $0x80] sm:$0xff]
    %v173 = vld [vmem:[#allocation7 + $0x88] sm:$0xff]
    %v174 = vld [vmem:[#allocation7 + $0x90] sm:$0xff]
    %v175 = vld [vmem:[#allocation7 + $0x98] sm:$0xff]
    %v176 = vld [vmem:[#allocation7 + $0xa0] sm:$0xff]
    %v177 = vld [vmem:[#allocation7 + $0xa8] sm:$0xff]
    %v178 = vld [vmem:[#allocation7 + $0xb0] sm:$0xff]
    %v179 = vld [vmem:[#allocation7 + $0xb8] sm:$0xff]
    %v180 = vld [vmem:[#allocation7 + $0xc0] sm:$0xff]
    %v181 = vld [vmem:[#allocation7 + $0xc8] sm:$0xff]
    %v182 = vld [vmem:[#allocation7 + $0xd0] sm:$0xff]
    %v183 = vld [vmem:[#allocation7 + $0xd8] sm:$0xff]
    %v184 = vld [vmem:[#allocation7 + $0xe0] sm:$0xff]
    %v185 = vld [vmem:[#allocation7 + $0xe8] sm:$0xff]
    %v186 = vld [vmem:[#allocation7 + $0xf0] sm:$0xff]
    %v187 = vld [vmem:[#allocation7 + $0xf8] sm:$0xff]
    %v188 = vld [vmem:[#allocation7 + $0x100] sm:$0xff]
    %v189 = vld [vmem:[#allocation7 + $0x108] sm:$0xff]
    %v190 = vld [vmem:[#allocation7 + $0x110] sm:$0xff]
    %v191 = vld [vmem:[#allocation7 + $0x118] sm:$0xff]
    %v192 = vld [vmem:[#allocation7 + $0x120] sm:$0xff]
    %v193 = vld [vmem:[#allocation7 + $0x128] sm:$0xff]
    %v194 = vld [vmem:[#allocation7 + $0x130] sm:$0xff]
    %v195 = vld [vmem:[#allocation7 + $0x138] sm:$0xf]
    %v196 = vld [vmem:[#allocation7 + $0x13c] sm:$0xff]
    %v197 = vld [vmem:[#allocation7 + $0x144] sm:$0xff]
    %v198 = vld [vmem:[#allocation7 + $0x14c] sm:$0xff]
    %v199 = vld [vmem:[#allocation7 + $0x154] sm:$0xff]
    %v200 = vld [vmem:[#allocation7 + $0x15c] sm:$0xff]
    %v201 = vld [vmem:[#allocation7 + $0x164] sm:$0xff]
    %v202 = vld [vmem:[#allocation7 + $0x16c] sm:$0xff]
    %v203 = vld [vmem:[#allocation7 + $0x174] sm:$0xff]
    %v204 = vld [vmem:[#allocation7 + $0x17c] sm:$0xff]
    %v205 = vld [vmem:[#allocation7 + $0x184] sm:$0xff]
    %v206 = vld [vmem:[#allocation7 + $0x18c] sm:$0xff]
    %v207 = vld [vmem:[#allocation7 + $0x194] sm:$0xff]
    %v208 = vld [vmem:[#allocation7 + $0x19c] sm:$0xff]
    %v209 = vld [vmem:[#allocation7 + $0x1a4] sm:$0xff]
    %v210 = vld [vmem:[#allocation7 + $0x1ac] sm:$0xff]
    %v211 = vld [vmem:[#allocation7 + $0x1b4] sm:$0xff]
    %v212 = vld [vmem:[#allocation7 + $0x1bc] sm:$0xff]
    %v213 = vld [vmem:[#allocation7 + $0x1c4] sm:$0xff]
    %v214 = vld [vmem:[#allocation7 + $0x1cc] sm:$0xff]
    %v215 = vld [vmem:[#allocation7 + $0x1d4] sm:$0xff]
    %v216 = vld [vmem:[#allocation7 + $0x1dc] sm:$0xff]
    %v217 = vld [vmem:[#allocation7 + $0x1e4] sm:$0xff]
    %v218 = vld [vmem:[#allocation7 + $0x1ec] sm:$0xff]
    %v219 = vld [vmem:[#allocation7 + $0x1f4] sm:$0xff]
    %v220 = vld [vmem:[#allocation7 + $0x1fc] sm:$0xff]
    %v221 = vld [vmem:[#allocation7 + $0x204] sm:$0xff]
    %v222 = vld [vmem:[#allocation7 + $0x20c] sm:$0xff]
    %v223 = vld [vmem:[#allocation7 + $0x214] sm:$0xff]
    %v224 = vld [vmem:[#allocation7 + $0x21c] sm:$0xff]
    %v225 = vld [vmem:[#allocation7 + $0x224] sm:$0xff]
    %v226 = vld [vmem:[#allocation7 + $0x22c] sm:$0xff]
    %v227 = vld [vmem:[#allocation7 + $0x234] sm:$0xff]
    %v228 = vld [vmem:[#allocation7 + $0x23c] sm:$0xff]
    %v229 = vld [vmem:[#allocation7 + $0x244] sm:$0xff]
    %v230 = vld [vmem:[#allocation7 + $0x24c] sm:$0xff]
    %v231 = vld [vmem:[#allocation7 + $0x254] sm:$0xff]
    %v232 = vld [vmem:[#allocation7 + $0x25c] sm:$0xff]
    %v233 = vld [vmem:[#allocation7 + $0x264] sm:$0xff]
    %v234 = vld [vmem:[#allocation7 + $0x26c] sm:$0xff]
    %v235 = vld [vmem:[#allocation7 + $0x274] sm:$0xf]
    %v236 = vld [vmem:[#allocation7 + $0x278] sm:$0xff]
    %v237 = vld [vmem:[#allocation7 + $0x280] sm:$0xff]
    %v238 = vld [vmem:[#allocation7 + $0x288] sm:$0xff]
    %v239 = vld [vmem:[#allocation7 + $0x290] sm:$0xff]
    %v240 = vld [vmem:[#allocation7 + $0x298] sm:$0xff]
    %v241 = vld [vmem:[#allocation7 + $0x2a0] sm:$0xff]
    %v242 = vld [vmem:[#allocation7 + $0x2a8] sm:$0xff]
    %v243 = vld [vmem:[#allocation7 + $0x2b0] sm:$0xff]
    %v244 = vld [vmem:[#allocation7 + $0x2b8] sm:$0xff]
    %v245 = vld [vmem:[#allocation7 + $0x2c0] sm:$0xff]
    %v246 = vld [vmem:[#allocation7 + $0x2c8] sm:$0xff]
    %v247 = vld [vmem:[#allocation7 + $0x2d0] sm:$0xff]
    %v248 = vld [vmem:[#allocation7 + $0x2d8] sm:$0xff]
    %v249 = vld [vmem:[#allocation7 + $0x2e0] sm:$0xff]
    %v250 = vld [vmem:[#allocation7 + $0x2e8] sm:$0xff]
    %v251 = vld [vmem:[#allocation7 + $0x2f0] sm:$0xff]
    %v252 = vld [vmem:[#allocation7 + $0x2f8] sm:$0xff]
    %v253 = vld [vmem:[#allocation7 + $0x300] sm:$0xff]
    %v254 = vld [vmem:[#allocation7 + $0x308] sm:$0xff]
    %v255 = vld [vmem:[#allocation7 + $0x310] sm:$0xff]
    %v256 = vld [vmem:[#allocation7 + $0x318] sm:$0xff]
    %v257 = vld [vmem:[#allocation7 + $0x320] sm:$0xff]
    %v258 = vld [vmem:[#allocation7 + $0x328] sm:$0xff]
    %v259 = vld [vmem:[#allocation7 + $0x330] sm:$0xff]
    %v260 = vld [vmem:[#allocation7 + $0x338] sm:$0xff]
    %v261 = vld [vmem:[#allocation7 + $0x340] sm:$0xff]
    %v262 = vld [vmem:[#allocation7 + $0x348] sm:$0xff]
    %v263 = vld [vmem:[#allocation7 + $0x350] sm:$0xff]
    %v264 = vld [vmem:[#allocation7 + $0x358] sm:$0xff]
    %v265 = vld [vmem:[#allocation7 + $0x360] sm:$0xff]
    %v266 = vld [vmem:[#allocation7 + $0x368] sm:$0xff]
    %v267 = vld [vmem:[#allocation7 + $0x370] sm:$0xff]
    %v268 = vld [vmem:[#allocation7 + $0x378] sm:$0xff]
    %v269 = vld [vmem:[#allocation7 + $0x380] sm:$0xff]
    %v270 = vld [vmem:[#allocation7 + $0x388] sm:$0xff]
    %v271 = vld [vmem:[#allocation7 + $0x390] sm:$0xff]
    %v272 = vld [vmem:[#allocation7 + $0x398] sm:$0xff]
    %v273 = vld [vmem:[#allocation7 + $0x3a0] sm:$0xff]
    %v274 = vld [vmem:[#allocation7 + $0x3a8] sm:$0xff]
    %v275 = vld [vmem:[#allocation7 + $0x3b0] sm:$0xf]
    %v276 = vld [vmem:[#allocation7 + $0x3b4] sm:$0xff]
    %v277 = vld [vmem:[#allocation7 + $0x3bc] sm:$0xff]
    %v278 = vld [vmem:[#allocation7 + $0x3c4] sm:$0xff]
    %v279 = vld [vmem:[#allocation7 + $0x3cc] sm:$0xff]
    %v280 = vld [vmem:[#allocation7 + $0x3d4] sm:$0xff]
    %v281 = vld [vmem:[#allocation7 + $0x3dc] sm:$0xff]
    %v282 = vld [vmem:[#allocation7 + $0x3e4] sm:$0xff]
    %v283 = vld [vmem:[#allocation7 + $0x3ec] sm:$0xff]
    %v284 = vld [vmem:[#allocation7 + $0x3f4] sm:$0xff]
    %v285 = vld [vmem:[#allocation7 + $0x3fc] sm:$0xff]
    %v286 = vld [vmem:[#allocation7 + $0x404] sm:$0xff]
    %v287 = vld [vmem:[#allocation7 + $0x40c] sm:$0xff]
    %v288 = vld [vmem:[#allocation7 + $0x414] sm:$0xff]
    %v289 = vld [vmem:[#allocation7 + $0x41c] sm:$0xff]
    %v290 = vld [vmem:[#allocation7 + $0x424] sm:$0xff]
    %v291 = vld [vmem:[#allocation7 + $0x42c] sm:$0xff]
    %v292 = vld [vmem:[#allocation7 + $0x434] sm:$0xff]
    %v293 = vld [vmem:[#allocation7 + $0x43c] sm:$0xff]
    %v294 = vld [vmem:[#allocation7 + $0x444] sm:$0xff]
    %v295 = vld [vmem:[#allocation7 + $0x44c] sm:$0xff]
    %v296 = vld [vmem:[#allocation7 + $0x454] sm:$0xff]
    %v297 = vld [vmem:[#allocation7 + $0x45c] sm:$0xff]
    %v298 = vld [vmem:[#allocation7 + $0x464] sm:$0xff]
    %v299 = vld [vmem:[#allocation7 + $0x46c] sm:$0xff]
    %v300 = vld [vmem:[#allocation7 + $0x474] sm:$0xff]
    %v301 = vld [vmem:[#allocation7 + $0x47c] sm:$0xff]
    %v302 = vld [vmem:[#allocation7 + $0x484] sm:$0xff]
    %v303 = vld [vmem:[#allocation7 + $0x48c] sm:$0xff]
    %v304 = vld [vmem:[#allocation7 + $0x494] sm:$0xff]
    %v305 = vld [vmem:[#allocation7 + $0x49c] sm:$0xff]
    %v306 = vld [vmem:[#allocation7 + $0x4a4] sm:$0xff]
    %v307 = vld [vmem:[#allocation7 + $0x4ac] sm:$0xff]
    %v308 = vld [vmem:[#allocation7 + $0x4b4] sm:$0xff]
    %v309 = vld [vmem:[#allocation7 + $0x4bc] sm:$0xff]
    %v310 = vld [vmem:[#allocation7 + $0x4c4] sm:$0xff]
    %v311 = vld [vmem:[#allocation7 + $0x4cc] sm:$0xff]
    %v312 = vld [vmem:[#allocation7 + $0x4d4] sm:$0xff]
    %v313 = vld [vmem:[#allocation7 + $0x4dc] sm:$0xff]
    %v314 = vld [vmem:[#allocation7 + $0x4e4] sm:$0xff]
    %v315 = vld [vmem:[#allocation7 + $0x4ec] sm:$0xf]
    %v476 = vunpack.c.l.b16 %v156
    %v477 = vunpack.c.h.b16 %v156
    %v478 = vunpack.c.l.b16 %v157
    %v479 = vunpack.c.h.b16 %v157
    %v480 = vunpack.c.l.b16 %v158
    %v481 = vunpack.c.h.b16 %v158
    %v482 = vunpack.c.l.b16 %v159
    %v483 = vunpack.c.h.b16 %v159
    %v484 = vunpack.c.l.b16 %v160
    %v485 = vunpack.c.h.b16 %v160
    %v486 = vunpack.c.l.b16 %v161
    %v487 = vunpack.c.h.b16 %v161
    %v488 = vunpack.c.l.b16 %v162
    %v489 = vunpack.c.h.b16 %v162
    %v490 = vunpack.c.l.b16 %v163
    %v491 = vunpack.c.h.b16 %v163
    %v492 = vunpack.c.l.b16 %v164
    %v493 = vunpack.c.h.b16 %v164
    %v494 = vunpack.c.l.b16 %v165
    %v495 = vunpack.c.h.b16 %v165
    %v496 = vunpack.c.l.b16 %v166
    %v497 = vunpack.c.h.b16 %v166
    %v498 = vunpack.c.l.b16 %v167
    %v499 = vunpack.c.h.b16 %v167
    %v500 = vunpack.c.l.b16 %v168
    %v501 = vunpack.c.h.b16 %v168
    %v502 = vunpack.c.l.b16 %v169
    %v503 = vunpack.c.h.b16 %v169
    %v504 = vunpack.c.l.b16 %v170
    %v505 = vunpack.c.h.b16 %v170
    %v506 = vunpack.c.l.b16 %v171
    %v507 = vunpack.c.h.b16 %v171
    %v508 = vunpack.c.l.b16 %v172
    %v509 = vunpack.c.h.b16 %v172
    %v510 = vunpack.c.l.b16 %v173
    %v511 = vunpack.c.h.b16 %v173
    %v512 = vunpack.c.l.b16 %v174
    %v513 = vunpack.c.h.b16 %v174
    %v514 = vunpack.c.l.b16 %v175
    %v515 = vunpack.c.h.b16 %v175
    %v516 = vunpack.c.l.b16 %v176
    %v517 = vunpack.c.h.b16 %v176
    %v518 = vunpack.c.l.b16 %v177
    %v519 = vunpack.c.h.b16 %v177
    %v520 = vunpack.c.l.b16 %v178
    %v521 = vunpack.c.h.b16 %v178
    %v522 = vunpack.c.l.b16 %v179
    %v523 = vunpack.c.h.b16 %v179
    %v524 = vunpack.c.l.b16 %v180
    %v525 = vunpack.c.h.b16 %v180
    %v526 = vunpack.c.l.b16 %v181
    %v527 = vunpack.c.h.b16 %v181
    %v528 = vunpack.c.l.b16 %v182
    %v529 = vunpack.c.h.b16 %v182
    %v530 = vunpack.c.l.b16 %v183
    %v531 = vunpack.c.h.b16 %v183
    %v532 = vunpack.c.l.b16 %v184
    %v533 = vunpack.c.h.b16 %v184
    %v534 = vunpack.c.l.b16 %v185
    %v535 = vunpack.c.h.b16 %v185
    %v536 = vunpack.c.l.b16 %v186
    %v537 = vunpack.c.h.b16 %v186
    %v538 = vunpack.c.l.b16 %v187
    %v539 = vunpack.c.h.b16 %v187
    %v540 = vunpack.c.l.b16 %v188
    %v541 = vunpack.c.h.b16 %v188
    %v542 = vunpack.c.l.b16 %v189
    %v543 = vunpack.c.h.b16 %v189
    %v544 = vunpack.c.l.b16 %v190
    %v545 = vunpack.c.h.b16 %v190
    %v546 = vunpack.c.l.b16 %v191
    %v547 = vunpack.c.h.b16 %v191
    %v548 = vunpack.c.l.b16 %v192
    %v549 = vunpack.c.h.b16 %v192
    %v550 = vunpack.c.l.b16 %v193
    %v551 = vunpack.c.h.b16 %v193
    %v552 = vunpack.c.l.b16 %v194
    %v553 = vunpack.c.h.b16 %v194
    %v554 = vunpack.c.l.b16 %v195
    %v555 = vunpack.c.l.b16 %v196
    %v556 = vunpack.c.h.b16 %v196
    %v557 = vunpack.c.l.b16 %v197
    %v558 = vunpack.c.h.b16 %v197
    %v559 = vunpack.c.l.b16 %v198
    %v560 = vunpack.c.h.b16 %v198
    %v561 = vunpack.c.l.b16 %v199
    %v562 = vunpack.c.h.b16 %v199
    %v563 = vunpack.c.l.b16 %v200
    %v564 = vunpack.c.h.b16 %v200
    %v565 = vunpack.c.l.b16 %v201
    %v566 = vunpack.c.h.b16 %v201
    %v567 = vunpack.c.l.b16 %v202
    %v568 = vunpack.c.h.b16 %v202
    %v569 = vunpack.c.l.b16 %v203
    %v570 = vunpack.c.h.b16 %v203
    %v571 = vunpack.c.l.b16 %v204
    %v572 = vunpack.c.h.b16 %v204
    %v573 = vunpack.c.l.b16 %v205
    %v574 = vunpack.c.h.b16 %v205
    %v575 = vunpack.c.l.b16 %v206
    %v576 = vunpack.c.h.b16 %v206
    %v577 = vunpack.c.l.b16 %v207
    %v578 = vunpack.c.h.b16 %v207
    %v579 = vunpack.c.l.b16 %v208
    %v580 = vunpack.c.h.b16 %v208
    %v581 = vunpack.c.l.b16 %v209
    %v582 = vunpack.c.h.b16 %v209
    %v583 = vunpack.c.l.b16 %v210
    %v584 = vunpack.c.h.b16 %v210
    %v585 = vunpack.c.l.b16 %v211
    %v586 = vunpack.c.h.b16 %v211
    %v587 = vunpack.c.l.b16 %v212
    %v588 = vunpack.c.h.b16 %v212
    %v589 = vunpack.c.l.b16 %v213
    %v590 = vunpack.c.h.b16 %v213
    %v591 = vunpack.c.l.b16 %v214
    %v592 = vunpack.c.h.b16 %v214
    %v593 = vunpack.c.l.b16 %v215
    %v594 = vunpack.c.h.b16 %v215
    %v595 = vunpack.c.l.b16 %v216
    %v596 = vunpack.c.h.b16 %v216
    %v597 = vunpack.c.l.b16 %v217
    %v598 = vunpack.c.h.b16 %v217
    %v599 = vunpack.c.l.b16 %v218
    %v600 = vunpack.c.h.b16 %v218
    %v601 = vunpack.c.l.b16 %v219
    %v602 = vunpack.c.h.b16 %v219
    %v603 = vunpack.c.l.b16 %v220
    %v604 = vunpack.c.h.b16 %v220
    %v605 = vunpack.c.l.b16 %v221
    %v606 = vunpack.c.h.b16 %v221
    %v607 = vunpack.c.l.b16 %v222
    %v608 = vunpack.c.h.b16 %v222
    %v609 = vunpack.c.l.b16 %v223
    %v610 = vunpack.c.h.b16 %v223
    %v611 = vunpack.c.l.b16 %v224
    %v612 = vunpack.c.h.b16 %v224
    %v613 = vunpack.c.l.b16 %v225
    %v614 = vunpack.c.h.b16 %v225
    %v615 = vunpack.c.l.b16 %v226
    %v616 = vunpack.c.h.b16 %v226
    %v617 = vunpack.c.l.b16 %v227
    %v618 = vunpack.c.h.b16 %v227
    %v619 = vunpack.c.l.b16 %v228
    %v620 = vunpack.c.h.b16 %v228
    %v621 = vunpack.c.l.b16 %v229
    %v622 = vunpack.c.h.b16 %v229
    %v623 = vunpack.c.l.b16 %v230
    %v624 = vunpack.c.h.b16 %v230
    %v625 = vunpack.c.l.b16 %v231
    %v626 = vunpack.c.h.b16 %v231
    %v627 = vunpack.c.l.b16 %v232
    %v628 = vunpack.c.h.b16 %v232
    %v629 = vunpack.c.l.b16 %v233
    %v630 = vunpack.c.h.b16 %v233
    %v631 = vunpack.c.l.b16 %v234
    %v632 = vunpack.c.h.b16 %v234
    %v633 = vunpack.c.l.b16 %v235
    %v634 = vunpack.c.l.b16 %v236
    %v635 = vunpack.c.h.b16 %v236
    %v636 = vunpack.c.l.b16 %v237
    %v637 = vunpack.c.h.b16 %v237
    %v638 = vunpack.c.l.b16 %v238
    %v639 = vunpack.c.h.b16 %v238
    %v640 = vunpack.c.l.b16 %v239
    %v641 = vunpack.c.h.b16 %v239
    %v642 = vunpack.c.l.b16 %v240
    %v643 = vunpack.c.h.b16 %v240
    %v644 = vunpack.c.l.b16 %v241
    %v645 = vunpack.c.h.b16 %v241
    %v646 = vunpack.c.l.b16 %v242
    %v647 = vunpack.c.h.b16 %v242
    %v648 = vunpack.c.l.b16 %v243
    %v649 = vunpack.c.h.b16 %v243
    %v650 = vunpack.c.l.b16 %v244
    %v651 = vunpack.c.h.b16 %v244
    %v652 = vunpack.c.l.b16 %v245
    %v653 = vunpack.c.h.b16 %v245
    %v654 = vunpack.c.l.b16 %v246
    %v655 = vunpack.c.h.b16 %v246
    %v656 = vunpack.c.l.b16 %v247
    %v657 = vunpack.c.h.b16 %v247
    %v658 = vunpack.c.l.b16 %v248
    %v659 = vunpack.c.h.b16 %v248
    %v660 = vunpack.c.l.b16 %v249
    %v661 = vunpack.c.h.b16 %v249
    %v662 = vunpack.c.l.b16 %v250
    %v663 = vunpack.c.h.b16 %v250
    %v664 = vunpack.c.l.b16 %v251
    %v665 = vunpack.c.h.b16 %v251
    %v666 = vunpack.c.l.b16 %v252
    %v667 = vunpack.c.h.b16 %v252
    %v668 = vunpack.c.l.b16 %v253
    %v669 = vunpack.c.h.b16 %v253
    %v670 = vunpack.c.l.b16 %v254
    %v671 = vunpack.c.h.b16 %v254
    %v672 = vunpack.c.l.b16 %v255
    %v673 = vunpack.c.h.b16 %v255
    %v674 = vunpack.c.l.b16 %v256
    %v675 = vunpack.c.h.b16 %v256
    %v676 = vunpack.c.l.b16 %v257
    %v677 = vunpack.c.h.b16 %v257
    %v678 = vunpack.c.l.b16 %v258
    %v679 = vunpack.c.h.b16 %v258
    %v680 = vunpack.c.l.b16 %v259
    %v681 = vunpack.c.h.b16 %v259
    %v682 = vunpack.c.l.b16 %v260
    %v683 = vunpack.c.h.b16 %v260
    %v684 = vunpack.c.l.b16 %v261
    %v685 = vunpack.c.h.b16 %v261
    %v686 = vunpack.c.l.b16 %v262
    %v687 = vunpack.c.h.b16 %v262
    %v688 = vunpack.c.l.b16 %v263
    %v689 = vunpack.c.h.b16 %v263
    %v690 = vunpack.c.l.b16 %v264
    %v691 = vunpack.c.h.b16 %v264
    %v692 = vunpack.c.l.b16 %v265
    %v693 = vunpack.c.h.b16 %v265
    %v694 = vunpack.c.l.b16 %v266
    %v695 = vunpack.c.h.b16 %v266
    %v696 = vunpack.c.l.b16 %v267
    %v697 = vunpack.c.h.b16 %v267
    %v698 = vunpack.c.l.b16 %v268
    %v699 = vunpack.c.h.b16 %v268
    %v700 = vunpack.c.l.b16 %v269
    %v701 = vunpack.c.h.b16 %v269
    %v702 = vunpack.c.l.b16 %v270
    %v703 = vunpack.c.h.b16 %v270
    %v704 = vunpack.c.l.b16 %v271
    %v705 = vunpack.c.h.b16 %v271
    %v706 = vunpack.c.l.b16 %v272
    %v707 = vunpack.c.h.b16 %v272
    %v708 = vunpack.c.l.b16 %v273
    %v709 = vunpack.c.h.b16 %v273
    %v710 = vunpack.c.l.b16 %v274
    %v711 = vunpack.c.h.b16 %v274
    %v712 = vunpack.c.l.b16 %v275
    %v713 = vunpack.c.l.b16 %v276
    %v714 = vunpack.c.h.b16 %v276
    %v715 = vunpack.c.l.b16 %v277
    %v716 = vunpack.c.h.b16 %v277
    %v717 = vunpack.c.l.b16 %v278
    %v718 = vunpack.c.h.b16 %v278
    %v719 = vunpack.c.l.b16 %v279
    %v720 = vunpack.c.h.b16 %v279
    %v721 = vunpack.c.l.b16 %v280
    %v722 = vunpack.c.h.b16 %v280
    %v723 = vunpack.c.l.b16 %v281
    %v724 = vunpack.c.h.b16 %v281
    %v725 = vunpack.c.l.b16 %v282
    %v726 = vunpack.c.h.b16 %v282
    %v727 = vunpack.c.l.b16 %v283
    %v728 = vunpack.c.h.b16 %v283
    %v729 = vunpack.c.l.b16 %v284
    %v730 = vunpack.c.h.b16 %v284
    %v731 = vunpack.c.l.b16 %v285
    %v732 = vunpack.c.h.b16 %v285
    %v733 = vunpack.c.l.b16 %v286
    %v734 = vunpack.c.h.b16 %v286
    %v735 = vunpack.c.l.b16 %v287
    %v736 = vunpack.c.h.b16 %v287
    %v737 = vunpack.c.l.b16 %v288
    %v738 = vunpack.c.h.b16 %v288
    %v739 = vunpack.c.l.b16 %v289
    %v740 = vunpack.c.h.b16 %v289
    %v741 = vunpack.c.l.b16 %v290
    %v742 = vunpack.c.h.b16 %v290
    %v743 = vunpack.c.l.b16 %v291
    %v744 = vunpack.c.h.b16 %v291
    %v745 = vunpack.c.l.b16 %v292
    %v746 = vunpack.c.h.b16 %v292
    %v747 = vunpack.c.l.b16 %v293
    %v748 = vunpack.c.h.b16 %v293
    %v749 = vunpack.c.l.b16 %v294
    %v750 = vunpack.c.h.b16 %v294
    %v751 = vunpack.c.l.b16 %v295
    %v752 = vunpack.c.h.b16 %v295
    %v753 = vunpack.c.l.b16 %v296
    %v754 = vunpack.c.h.b16 %v296
    %v755 = vunpack.c.l.b16 %v297
    %v756 = vunpack.c.h.b16 %v297
    %v757 = vunpack.c.l.b16 %v298
    %v758 = vunpack.c.h.b16 %v298
    %v759 = vunpack.c.l.b16 %v299
    %v760 = vunpack.c.h.b16 %v299
    %v761 = vunpack.c.l.b16 %v300
    %v762 = vunpack.c.h.b16 %v300
    %v763 = vunpack.c.l.b16 %v301
    %v764 = vunpack.c.h.b16 %v301
    %v765 = vunpack.c.l.b16 %v302
    %v766 = vunpack.c.h.b16 %v302
    %v767 = vunpack.c.l.b16 %v303
    %v768 = vunpack.c.h.b16 %v303
    %v769 = vunpack.c.l.b16 %v304
    %v770 = vunpack.c.h.b16 %v304
    %v771 = vunpack.c.l.b16 %v305
    %v772 = vunpack.c.h.b16 %v305
    %v773 = vunpack.c.l.b16 %v306
    %v774 = vunpack.c.h.b16 %v306
    %v775 = vunpack.c.l.b16 %v307
    %v776 = vunpack.c.h.b16 %v307
    %v777 = vunpack.c.l.b16 %v308
    %v778 = vunpack.c.h.b16 %v308
    %v779 = vunpack.c.l.b16 %v309
    %v780 = vunpack.c.h.b16 %v309
    %v781 = vunpack.c.l.b16 %v310
    %v782 = vunpack.c.h.b16 %v310
    %v783 = vunpack.c.l.b16 %v311
    %v784 = vunpack.c.h.b16 %v311
    %v785 = vunpack.c.l.b16 %v312
    %v786 = vunpack.c.h.b16 %v312
    %v787 = vunpack.c.l.b16 %v313
    %v788 = vunpack.c.h.b16 %v313
    %v789 = vunpack.c.l.b16 %v314
    %v790 = vunpack.c.h.b16 %v314
    %v791 = vunpack.c.l.b16 %v315
    %v792 = vpack.c.b16 %v555, %v476
    %v793 = vpack.c.b16 %v556, %v477
    %v794 = vpack.c.b16 %v557, %v478
    %v795 = vpack.c.b16 %v558, %v479
    %v796 = vpack.c.b16 %v559, %v480
    %v797 = vpack.c.b16 %v560, %v481
    %v798 = vpack.c.b16 %v561, %v482
    %v799 = vpack.c.b16 %v562, %v483
    %v800 = vpack.c.b16 %v563, %v484
    %v801 = vpack.c.b16 %v564, %v485
    %v802 = vpack.c.b16 %v565, %v486
    %v803 = vpack.c.b16 %v566, %v487
    %v804 = vpack.c.b16 %v567, %v488
    %v805 = vpack.c.b16 %v568, %v489
    %v806 = vpack.c.b16 %v569, %v490
    %v807 = vpack.c.b16 %v570, %v491
    %v808 = vpack.c.b16 %v571, %v492
    %v809 = vpack.c.b16 %v572, %v493
    %v810 = vpack.c.b16 %v573, %v494
    %v811 = vpack.c.b16 %v574, %v495
    %v812 = vpack.c.b16 %v575, %v496
    %v813 = vpack.c.b16 %v576, %v497
    %v814 = vpack.c.b16 %v577, %v498
    %v815 = vpack.c.b16 %v578, %v499
    %v816 = vpack.c.b16 %v579, %v500
    %v817 = vpack.c.b16 %v580, %v501
    %v818 = vpack.c.b16 %v581, %v502
    %v819 = vpack.c.b16 %v582, %v503
    %v820 = vpack.c.b16 %v583, %v504
    %v821 = vpack.c.b16 %v584, %v505
    %v822 = vpack.c.b16 %v585, %v506
    %v823 = vpack.c.b16 %v586, %v507
    %v824 = vpack.c.b16 %v587, %v508
    %v825 = vpack.c.b16 %v588, %v509
    %v826 = vpack.c.b16 %v589, %v510
    %v827 = vpack.c.b16 %v590, %v511
    %v828 = vpack.c.b16 %v591, %v512
    %v829 = vpack.c.b16 %v592, %v513
    %v830 = vpack.c.b16 %v593, %v514
    %v831 = vpack.c.b16 %v594, %v515
    %v832 = vpack.c.b16 %v595, %v516
    %v833 = vpack.c.b16 %v596, %v517
    %v834 = vpack.c.b16 %v597, %v518
    %v835 = vpack.c.b16 %v598, %v519
    %v836 = vpack.c.b16 %v599, %v520
    %v837 = vpack.c.b16 %v600, %v521
    %v838 = vpack.c.b16 %v601, %v522
    %v839 = vpack.c.b16 %v602, %v523
    %v840 = vpack.c.b16 %v603, %v524
    %v841 = vpack.c.b16 %v604, %v525
    %v842 = vpack.c.b16 %v605, %v526
    %v843 = vpack.c.b16 %v606, %v527
    %v844 = vpack.c.b16 %v607, %v528
    %v845 = vpack.c.b16 %v608, %v529
    %v846 = vpack.c.b16 %v609, %v530
    %v847 = vpack.c.b16 %v610, %v531
    %v848 = vpack.c.b16 %v611, %v532
    %v849 = vpack.c.b16 %v612, %v533
    %v850 = vpack.c.b16 %v613, %v534
    %v851 = vpack.c.b16 %v614, %v535
    %v852 = vpack.c.b16 %v615, %v536
    %v853 = vpack.c.b16 %v616, %v537
    %v854 = vpack.c.b16 %v617, %v538
    %v855 = vpack.c.b16 %v618, %v539
    %v856 = vpack.c.b16 %v619, %v540
    %v857 = vpack.c.b16 %v620, %v541
    %v858 = vpack.c.b16 %v621, %v542
    %v859 = vpack.c.b16 %v622, %v543
    %v860 = vpack.c.b16 %v623, %v544
    %v861 = vpack.c.b16 %v624, %v545
    %v862 = vpack.c.b16 %v625, %v546
    %v863 = vpack.c.b16 %v626, %v547
    %v864 = vpack.c.b16 %v627, %v548
    %v865 = vpack.c.b16 %v628, %v549
    %v866 = vpack.c.b16 %v629, %v550
    %v867 = vpack.c.b16 %v630, %v551
    %v868 = vpack.c.b16 %v631, %v552
    %v869 = vpack.c.b16 %v632, %v553
    %v870 = vpack.c.b16 %v633, %v554
    %v871 = vpack.c.b16 %v713, %v634
    %v872 = vpack.c.b16 %v714, %v635
    %v873 = vpack.c.b16 %v715, %v636
    %v874 = vpack.c.b16 %v716, %v637
    %v875 = vpack.c.b16 %v717, %v638
    %v876 = vpack.c.b16 %v718, %v639
    %v877 = vpack.c.b16 %v719, %v640
    %v878 = vpack.c.b16 %v720, %v641
    %v879 = vpack.c.b16 %v721, %v642
    %v880 = vpack.c.b16 %v722, %v643
    %v881 = vpack.c.b16 %v723, %v644
    %v882 = vpack.c.b16 %v724, %v645
    %v883 = vpack.c.b16 %v725, %v646
    %v884 = vpack.c.b16 %v726, %v647
    %v885 = vpack.c.b16 %v727, %v648
    %v886 = vpack.c.b16 %v728, %v649
    %v887 = vpack.c.b16 %v729, %v650
    %v888 = vpack.c.b16 %v730, %v651
    %v889 = vpack.c.b16 %v731, %v652
    %v890 = vpack.c.b16 %v732, %v653
    %v891 = vpack.c.b16 %v733, %v654
    %v892 = vpack.c.b16 %v734, %v655
    %v893 = vpack.c.b16 %v735, %v656
    %v894 = vpack.c.b16 %v736, %v657
    %v895 = vpack.c.b16 %v737, %v658
    %v896 = vpack.c.b16 %v738, %v659
    %v897 = vpack.c.b16 %v739, %v660
    %v898 = vpack.c.b16 %v740, %v661
    %v899 = vpack.c.b16 %v741, %v662
    %v900 = vpack.c.b16 %v742, %v663
    %v901 = vpack.c.b16 %v743, %v664
    %v902 = vpack.c.b16 %v744, %v665
    %v903 = vpack.c.b16 %v745, %v666
    %v904 = vpack.c.b16 %v746, %v667
    %v905 = vpack.c.b16 %v747, %v668
    %v906 = vpack.c.b16 %v748, %v669
    %v907 = vpack.c.b16 %v749, %v670
    %v908 = vpack.c.b16 %v750, %v671
    %v909 = vpack.c.b16 %v751, %v672
    %v910 = vpack.c.b16 %v752, %v673
    %v911 = vpack.c.b16 %v753, %v674
    %v912 = vpack.c.b16 %v754, %v675
    %v913 = vpack.c.b16 %v755, %v676
    %v914 = vpack.c.b16 %v756, %v677
    %v915 = vpack.c.b16 %v757, %v678
    %v916 = vpack.c.b16 %v758, %v679
    %v917 = vpack.c.b16 %v759, %v680
    %v918 = vpack.c.b16 %v760, %v681
    %v919 = vpack.c.b16 %v761, %v682
    %v920 = vpack.c.b16 %v762, %v683
    %v921 = vpack.c.b16 %v763, %v684
    %v922 = vpack.c.b16 %v764, %v685
    %v923 = vpack.c.b16 %v765, %v686
    %v924 = vpack.c.b16 %v766, %v687
    %v925 = vpack.c.b16 %v767, %v688
    %v926 = vpack.c.b16 %v768, %v689
    %v927 = vpack.c.b16 %v769, %v690
    %v928 = vpack.c.b16 %v770, %v691
    %v929 = vpack.c.b16 %v771, %v692
    %v930 = vpack.c.b16 %v772, %v693
    %v931 = vpack.c.b16 %v773, %v694
    %v932 = vpack.c.b16 %v774, %v695
    %v933 = vpack.c.b16 %v775, %v696
    %v934 = vpack.c.b16 %v776, %v697
    %v935 = vpack.c.b16 %v777, %v698
    %v936 = vpack.c.b16 %v778, %v699
    %v937 = vpack.c.b16 %v779, %v700
    %v938 = vpack.c.b16 %v780, %v701
    %v939 = vpack.c.b16 %v781, %v702
    %v940 = vpack.c.b16 %v782, %v703
    %v941 = vpack.c.b16 %v783, %v704
    %v942 = vpack.c.b16 %v784, %v705
    %v943 = vpack.c.b16 %v785, %v706
    %v944 = vpack.c.b16 %v786, %v707
    %v945 = vpack.c.b16 %v787, %v708
    %v946 = vpack.c.b16 %v788, %v709
    %v947 = vpack.c.b16 %v789, %v710
    %v948 = vpack.c.b16 %v790, %v711
    %v949 = vpack.c.b16 %v791, %v712
    %v1109 = vsel %vm81, %v155, 0
    %1111 = vmatprep.subr.bf16.mxu0 %v793
    %1112 = vmatpush1.bf16.msra.mxu0 %v792
    %1113 = vmatprep.subr.bf16.mxu0 %v872
    %1114 = vmatpush1.bf16.msra.mxu0 %v871
    %1115 = vmatprep.subr.bf16.mxu0 0
    %1116 = vmatpush1.bf16.msra.mxu0 0
    %1117 = vmatprep.subr.bf16.mxu0 0
    %1118 = vmatpush1.bf16.msra.mxu0 0
    %1119 = vmatprep.subr.bf16.mxu0 0
    %1120 = vmatpush1.bf16.msra.mxu0 0
    %1121 = vmatprep.subr.bf16.mxu0 0
    %1122 = vmatpush1.bf16.msra.mxu0 0
    %1123 = vmatprep.subr.bf16.mxu0 0
    %1124 = vmatpush1.bf16.msra.mxu0 0
    %1125 = vmatprep.subr.bf16.mxu0 0
    %1126 = vmatpush1.bf16.msra.mxu0 0
    %1127 = vmatprep.subr.bf16.mxu0 0
    %1128 = vmatpush1.bf16.msra.mxu0 0
    %1129 = vmatprep.subr.bf16.mxu0 0
    %1130 = vmatpush1.bf16.msra.mxu0 0
    %1131 = vmatprep.subr.bf16.mxu0 0
    %1132 = vmatpush1.bf16.msra.mxu0 0
    %1133 = vmatprep.subr.bf16.mxu0 0
    %1134 = vmatpush1.bf16.msra.mxu0 0
    %1135 = vmatprep.subr.bf16.mxu0 0
    %1136 = vmatpush1.bf16.msra.mxu0 0
    %1137 = vmatprep.subr.bf16.mxu0 0
    %1138 = vmatpush1.bf16.msra.mxu0 0
    %1139 = vmatprep.subr.bf16.mxu0 0
    %1140 = vmatpush1.bf16.msra.mxu0 0
    %1141 = vmatprep.subr.bf16.mxu0 0
    %1142 = vmatpush1.bf16.msra.mxu0 0
    %1143 = vmatprep.mubr.bf16.mxu0 0
    %1144 = vmatmul.mubr.bf16.gmra.mrb[0].mxu0 %v1109
    %v1145 = vpop.f32.mrb[0].mxu0
    %v1146 = vadd.f32 0.0, %v1145
    %v1147 = vpop.f32.mrb[0].mxu0
    %v1148 = vadd.f32 0.0, %v1147
    %v1149 = vpop.f32.mrb[0].mxu0
    %v1150 = vpop.f32.mrb[0].mxu0
    %1151 = vdwg.mxu0
    %1152 = vmatprep.subr.bf16.mxu0 %v795
    %1153 = vmatpush1.bf16.msra.mxu0 %v794
    %1154 = vmatprep.subr.bf16.mxu0 %v874
    %1155 = vmatpush1.bf16.msra.mxu0 %v873
    %1156 = vmatprep.subr.bf16.mxu0 0
    %1157 = vmatpush1.bf16.msra.mxu0 0
    %1158 = vmatprep.subr.bf16.mxu0 0
    %1159 = vmatpush1.bf16.msra.mxu0 0
    %1160 = vmatprep.subr.bf16.mxu0 0
    %1161 = vmatpush1.bf16.msra.mxu0 0
    %1162 = vmatprep.subr.bf16.mxu0 0
    %1163 = vmatpush1.bf16.msra.mxu0 0
    %1164 = vmatprep.subr.bf16.mxu0 0
    %1165 = vmatpush1.bf16.msra.mxu0 0
    %1166 = vmatprep.subr.bf16.mxu0 0
    %1167 = vmatpush1.bf16.msra.mxu0 0
    %1168 = vmatprep.subr.bf16.mxu0 0
    %1169 = vmatpush1.bf16.msra.mxu0 0
    %1170 = vmatprep.subr.bf16.mxu0 0
    %1171 = vmatpush1.bf16.msra.mxu0 0
    %1172 = vmatprep.subr.bf16.mxu0 0
    %1173 = vmatpush1.bf16.msra.mxu0 0
    %1174 = vmatprep.subr.bf16.mxu0 0
    %1175 = vmatpush1.bf16.msra.mxu0 0
    %1176 = vmatprep.subr.bf16.mxu0 0
    %1177 = vmatpush1.bf16.msra.mxu0 0
    %1178 = vmatprep.subr.bf16.mxu0 0
    %1179 = vmatpush1.bf16.msra.mxu0 0
    %1180 = vmatprep.subr.bf16.mxu0 0
    %1181 = vmatpush1.bf16.msra.mxu0 0
    %1182 = vmatprep.subr.bf16.mxu0 0
    %1183 = vmatpush1.bf16.msra.mxu0 0
    %1184 = vmatprep.mubr.bf16.mxu0 0
    %1185 = vmatmul.mubr.bf16.gmra.mrb[0].mxu0 %v1109
    %v1186 = vpop.f32.mrb[0].mxu0
    %v1187 = vadd.f32 0.0, %v1186
    %v1188 = vpop.f32.mrb[0].mxu0
    %v1189 = vadd.f32 0.0, %v1188
    %v1190 = vpop.f32.mrb[0].mxu0
    %v1191 = vpop.f32.mrb[0].mxu0
    %1192 = vdwg.mxu0
    %1193 = vmatprep.subr.bf16.mxu0 %v797
    %1194 = vmatpush1.bf16.msra.mxu0 %v796
    %1195 = vmatprep.subr.bf16.mxu0 %v876
    %1196 = vmatpush1.bf16.msra.mxu0 %v875
    %1197 = vmatprep.subr.bf16.mxu0 0
    %1198 = vmatpush1.bf16.msra.mxu0 0
    %1199 = vmatprep.subr.bf16.mxu0 0
    %1200 = vmatpush1.bf16.msra.mxu0 0
    %1201 = vmatprep.subr.bf16.mxu0 0
    %1202 = vmatpush1.bf16.msra.mxu0 0
    %1203 = vmatprep.subr.bf16.mxu0 0
    %1204 = vmatpush1.bf16.msra.mxu0 0
    %1205 = vmatprep.subr.bf16.mxu0 0
    %1206 = vmatpush1.bf16.msra.mxu0 0
    %1207 = vmatprep.subr.bf16.mxu0 0
    %1208 = vmatpush1.bf16.msra.mxu0 0
    %1209 = vmatprep.subr.bf16.mxu0 0
    %1210 = vmatpush1.bf16.msra.mxu0 0
    %1211 = vmatprep.subr.bf16.mxu0 0
    %1212 = vmatpush1.bf16.msra.mxu0 0
    %1213 = vmatprep.subr.bf16.mxu0 0
    %1214 = vmatpush1.bf16.msra.mxu0 0
    %1215 = vmatprep.subr.bf16.mxu0 0
    %1216 = vmatpush1.bf16.msra.mxu0 0
    %1217 = vmatprep.subr.bf16.mxu0 0
    %1218 = vmatpush1.bf16.msra.mxu0 0
    %1219 = vmatprep.subr.bf16.mxu0 0
    %1220 = vmatpush1.bf16.msra.mxu0 0
    %1221 = vmatprep.subr.bf16.mxu0 0
    %1222 = vmatpush1.bf16.msra.mxu0 0
    %1223 = vmatprep.subr.bf16.mxu0 0
    %1224 = vmatpush1.bf16.msra.mxu0 0
    %1225 = vmatprep.mubr.bf16.mxu0 0
    %1226 = vmatmul.mubr.bf16.gmra.mrb[0].mxu0 %v1109
    %v1227 = vpop.f32.mrb[0].mxu0
    %v1228 = vadd.f32 0.0, %v1227
    %v1229 = vpop.f32.mrb[0].mxu0
    %v1230 = vadd.f32 0.0, %v1229
    %v1231 = vpop.f32.mrb[0].mxu0
    %v1232 = vpop.f32.mrb[0].mxu0
    %1233 = vdwg.mxu0
    %1234 = vmatprep.subr.bf16.mxu0 %v799
    %1235 = vmatpush1.bf16.msra.mxu0 %v798
    %1236 = vmatprep.subr.bf16.mxu0 %v878
    %1237 = vmatpush1.bf16.msra.mxu0 %v877
    %1238 = vmatprep.subr.bf16.mxu0 0
    %1239 = vmatpush1.bf16.msra.mxu0 0
    %1240 = vmatprep.subr.bf16.mxu0 0
    %1241 = vmatpush1.bf16.msra.mxu0 0
    %1242 = vmatprep.subr.bf16.mxu0 0
    %1243 = vmatpush1.bf16.msra.mxu0 0
    %1244 = vmatprep.subr.bf16.mxu0 0
    %1245 = vmatpush1.bf16.msra.mxu0 0
    %1246 = vmatprep.subr.bf16.mxu0 0
    %1247 = vmatpush1.bf16.msra.mxu0 0
    %1248 = vmatprep.subr.bf16.mxu0 0
    %1249 = vmatpush1.bf16.msra.mxu0 0
    %1250 = vmatprep.subr.bf16.mxu0 0
    %1251 = vmatpush1.bf16.msra.mxu0 0
    %1252 = vmatprep.subr.bf16.mxu0 0
    %1253 = vmatpush1.bf16.msra.mxu0 0
    %1254 = vmatprep.subr.bf16.mxu0 0
    %1255 = vmatpush1.bf16.msra.mxu0 0
    %1256 = vmatprep.subr.bf16.mxu0 0
    %1257 = vmatpush1.bf16.msra.mxu0 0
    %1258 = vmatprep.subr.bf16.mxu0 0
    %1259 = vmatpush1.bf16.msra.mxu0 0
    %1260 = vmatprep.subr.bf16.mxu0 0
    %1261 = vmatpush1.bf16.msra.mxu0 0
    %1262 = vmatprep.subr.bf16.mxu0 0
    %1263 = vmatpush1.bf16.msra.mxu0 0
    %1264 = vmatprep.subr.bf16.mxu0 0
    %1265 = vmatpush1.bf16.msra.mxu0 0
    %1266 = vmatprep.mubr.bf16.mxu0 0
    %1267 = vmatmul.mubr.bf16.gmra.mrb[0].mxu0 %v1109
    %v1268 = vpop.f32.mrb[0].mxu0
    %v1269 = vadd.f32 0.0, %v1268
    %v1270 = vpop.f32.mrb[0].mxu0
    %v1271 = vadd.f32 0.0, %v1270
    %v1272 = vpop.f32.mrb[0].mxu0
    %v1273 = vpop.f32.mrb[0].mxu0
    %1274 = vdwg.mxu0
    %1275 = vmatprep.subr.bf16.mxu0 %v801
    %1276 = vmatpush1.bf16.msra.mxu0 %v800
    %1277 = vmatprep.subr.bf16.mxu0 %v880
    %1278 = vmatpush1.bf16.msra.mxu0 %v879
    %1279 = vmatprep.subr.bf16.mxu0 0
    %1280 = vmatpush1.bf16.msra.mxu0 0
    %1281 = vmatprep.subr.bf16.mxu0 0
    %1282 = vmatpush1.bf16.msra.mxu0 0
    %1283 = vmatprep.subr.bf16.mxu0 0
    %1284 = vmatpush1.bf16.msra.mxu0 0
    %1285 = vmatprep.subr.bf16.mxu0 0
    %1286 = vmatpush1.bf16.msra.mxu0 0
    %1287 = vmatprep.subr.bf16.mxu0 0
    %1288 = vmatpush1.bf16.msra.mxu0 0
    %1289 = vmatprep.subr.bf16.mxu0 0
    %1290 = vmatpush1.bf16.msra.mxu0 0
    %1291 = vmatprep.subr.bf16.mxu0 0
    %1292 = vmatpush1.bf16.msra.mxu0 0
    %1293 = vmatprep.subr.bf16.mxu0 0
    %1294 = vmatpush1.bf16.msra.mxu0 0
    %1295 = vmatprep.subr.bf16.mxu0 0
    %1296 = vmatpush1.bf16.msra.mxu0 0
    %1297 = vmatprep.subr.bf16.mxu0 0
    %1298 = vmatpush1.bf16.msra.mxu0 0
    %1299 = vmatprep.subr.bf16.mxu0 0
    %1300 = vmatpush1.bf16.msra.mxu0 0
    %1301 = vmatprep.subr.bf16.mxu0 0
    %1302 = vmatpush1.bf16.msra.mxu0 0
    %1303 = vmatprep.subr.bf16.mxu0 0
    %1304 = vmatpush1.bf16.msra.mxu0 0
    %1305 = vmatprep.subr.bf16.mxu0 0
    %1306 = vmatpush1.bf16.msra.mxu0 0
    %1307 = vmatprep.mubr.bf16.mxu0 0
    %1308 = vmatmul.mubr.bf16.gmra.mrb[0].mxu0 %v1109
    %v1309 = vpop.f32.mrb[0].mxu0
    %v1310 = vadd.f32 0.0, %v1309
    %v1311 = vpop.f32.mrb[0].mxu0
    %v1312 = vadd.f32 0.0, %v1311
    %v1313 = vpop.f32.mrb[0].mxu0
    %v1314 = vpop.f32.mrb[0].mxu0
    %1315 = vdwg.mxu0
    %1316 = vmatprep.subr.bf16.mxu0 %v803
    %1317 = vmatpush1.bf16.msra.mxu0 %v802
    %1318 = vmatprep.subr.bf16.mxu0 %v882
    %1319 = vmatpush1.bf16.msra.mxu0 %v881
    %1320 = vmatprep.subr.bf16.mxu0 0
    %1321 = vmatpush1.bf16.msra.mxu0 0
    %1322 = vmatprep.subr.bf16.mxu0 0
    %1323 = vmatpush1.bf16.msra.mxu0 0
    %1324 = vmatprep.subr.bf16.mxu0 0
    %1325 = vmatpush1.bf16.msra.mxu0 0
    %1326 = vmatprep.subr.bf16.mxu0 0
    %1327 = vmatpush1.bf16.msra.mxu0 0
    %1328 = vmatprep.subr.bf16.mxu0 0
    %1329 = vmatpush1.bf16.msra.mxu0 0
    %1330 = vmatprep.subr.bf16.mxu0 0
    %1331 = vmatpush1.bf16.msra.mxu0 0
    %1332 = vmatprep.subr.bf16.mxu0 0
    %1333 = vmatpush1.bf16.msra.mxu0 0
    %1334 = vmatprep.subr.bf16.mxu0 0
    %1335 = vmatpush1.bf16.msra.mxu0 0
    %1336 = vmatprep.subr.bf16.mxu0 0
    %1337 = vmatpush1.bf16.msra.mxu0 0
    %1338 = vmatprep.subr.bf16.mxu0 0
    %1339 = vmatpush1.bf16.msra.mxu0 0
    %1340 = vmatprep.subr.bf16.mxu0 0
    %1341 = vmatpush1.bf16.msra.mxu0 0
    %1342 = vmatprep.subr.bf16.mxu0 0
    %1343 = vmatpush1.bf16.msra.mxu0 0
    %1344 = vmatprep.subr.bf16.mxu0 0
    %1345 = vmatpush1.bf16.msra.mxu0 0
    %1346 = vmatprep.subr.bf16.mxu0 0
    %1347 = vmatpush1.bf16.msra.mxu0 0
    %1348 = vmatprep.mubr.bf16.mxu0 0
    %1349 = vmatmul.mubr.bf16.gmra.mrb[0].mxu0 %v1109
    %v1350 = vpop.f32.mrb[0].mxu0
    %v1351 = vadd.f32 0.0, %v1350
    %v1352 = vpop.f32.mrb[0].mxu0
    %v1353 = vadd.f32 0.0, %v1352
    %v1354 = vpop.f32.mrb[0].mxu0
    %v1355 = vpop.f32.mrb[0].mxu0
    %1356 = vdwg.mxu0
    %1357 = vmatprep.subr.bf16.mxu0 %v805
    %1358 = vmatpush1.bf16.msra.mxu0 %v804
    %1359 = vmatprep.subr.bf16.mxu0 %v884
    %1360 = vmatpush1.bf16.msra.mxu0 %v883
    %1361 = vmatprep.subr.bf16.mxu0 0
    %1362 = vmatpush1.bf16.msra.mxu0 0
    %1363 = vmatprep.subr.bf16.mxu0 0
    %1364 = vmatpush1.bf16.msra.mxu0 0
    %1365 = vmatprep.subr.bf16.mxu0 0
    %1366 = vmatpush1.bf16.msra.mxu0 0
    %1367 = vmatprep.subr.bf16.mxu0 0
    %1368 = vmatpush1.bf16.msra.mxu0 0
    %1369 = vmatprep.subr.bf16.mxu0 0
    %1370 = vmatpush1.bf16.msra.mxu0 0
    %1371 = vmatprep.subr.bf16.mxu0 0
    %1372 = vmatpush1.bf16.msra.mxu0 0
    %1373 = vmatprep.subr.bf16.mxu0 0
    %1374 = vmatpush1.bf16.msra.mxu0 0
    %1375 = vmatprep.subr.bf16.mxu0 0
    %1376 = vmatpush1.bf16.msra.mxu0 0
    %1377 = vmatprep.subr.bf16.mxu0 0
    %1378 = vmatpush1.bf16.msra.mxu0 0
    %1379 = vmatprep.subr.bf16.mxu0 0
    %1380 = vmatpush1.bf16.msra.mxu0 0
    %1381 = vmatprep.subr.bf16.mxu0 0
    %1382 = vmatpush1.bf16.msra.mxu0 0
    %1383 = vmatprep.subr.bf16.mxu0 0
    %1384 = vmatpush1.bf16.msra.mxu0 0
    %1385 = vmatprep.subr.bf16.mxu0 0
    %1386 = vmatpush1.bf16.msra.mxu0 0
    %1387 = vmatprep.subr.bf16.mxu0 0
    %1388 = vmatpush1.bf16.msra.mxu0 0
    %1389 = vmatprep.mubr.bf16.mxu0 0
    %1390 = vmatmul.mubr.bf16.gmra.mrb[0].mxu0 %v1109
    %v1391 = vpop.f32.mrb[0].mxu0
    %v1392 = vadd.f32 0.0, %v1391
    %v1393 = vpop.f32.mrb[0].mxu0
    %v1394 = vadd.f32 0.0, %v1393
    %v1395 = vpop.f32.mrb[0].mxu0
    %v1396 = vpop.f32.mrb[0].mxu0
    %1397 = vdwg.mxu0
    %1398 = vmatprep.subr.bf16.mxu0 %v807
    %1399 = vmatpush1.bf16.msra.mxu0 %v806
    %1400 = vmatprep.subr.bf16.mxu0 %v886
    %1401 = vmatpush1.bf16.msra.mxu0 %v885
    %1402 = vmatprep.subr.bf16.mxu0 0
    %1403 = vmatpush1.bf16.msra.mxu0 0
    %1404 = vmatprep.subr.bf16.mxu0 0
    %1405 = vmatpush1.bf16.msra.mxu0 0
    %1406 = vmatprep.subr.bf16.mxu0 0
    %1407 = vmatpush1.bf16.msra.mxu0 0
    %1408 = vmatprep.subr.bf16.mxu0 0
    %1409 = vmatpush1.bf16.msra.mxu0 0
    %1410 = vmatprep.subr.bf16.mxu0 0
    %1411 = vmatpush1.bf16.msra.mxu0 0
    %1412 = vmatprep.subr.bf16.mxu0 0
    %1413 = vmatpush1.bf16.msra.mxu0 0
    %1414 = vmatprep.subr.bf16.mxu0 0
    %1415 = vmatpush1.bf16.msra.mxu0 0
    %1416 = vmatprep.subr.bf16.mxu0 0
    %1417 = vmatpush1.bf16.msra.mxu0 0
    %1418 = vmatprep.subr.bf16.mxu0 0
    %1419 = vmatpush1.bf16.msra.mxu0 0
    %1420 = vmatprep.subr.bf16.mxu0 0
    %1421 = vmatpush1.bf16.msra.mxu0 0
    %1422 = vmatprep.subr.bf16.mxu0 0
    %1423 = vmatpush1.bf16.msra.mxu0 0
    %1424 = vmatprep.subr.bf16.mxu0 0
    %1425 = vmatpush1.bf16.msra.mxu0 0
    %1426 = vmatprep.subr.bf16.mxu0 0
    %1427 = vmatpush1.bf16.msra.mxu0 0
    %1428 = vmatprep.subr.bf16.mxu0 0
    %1429 = vmatpush1.bf16.msra.mxu0 0
    %1430 = vmatprep.mubr.bf16.mxu0 0
    %1431 = vmatmul.mubr.bf16.gmra.mrb[0].mxu0 %v1109
    %v1432 = vpop.f32.mrb[0].mxu0
    %v1433 = vadd.f32 0.0, %v1432
    %v1434 = vpop.f32.mrb[0].mxu0
    %v1435 = vadd.f32 0.0, %v1434
    %v1436 = vpop.f32.mrb[0].mxu0
    %v1437 = vpop.f32.mrb[0].mxu0
    %1438 = vdwg.mxu0
    %1439 = vmatprep.subr.bf16.mxu0 %v809
    %1440 = vmatpush1.bf16.msra.mxu0 %v808
    %1441 = vmatprep.subr.bf16.mxu0 %v888
    %1442 = vmatpush1.bf16.msra.mxu0 %v887
    %1443 = vmatprep.subr.bf16.mxu0 0
    %1444 = vmatpush1.bf16.msra.mxu0 0
    %1445 = vmatprep.subr.bf16.mxu0 0
    %1446 = vmatpush1.bf16.msra.mxu0 0
    %1447 = vmatprep.subr.bf16.mxu0 0
    %1448 = vmatpush1.bf16.msra.mxu0 0
    %1449 = vmatprep.subr.bf16.mxu0 0
    %1450 = vmatpush1.bf16.msra.mxu0 0
    %1451 = vmatprep.subr.bf16.mxu0 0
    %1452 = vmatpush1.bf16.msra.mxu0 0
    %1453 = vmatprep.subr.bf16.mxu0 0
    %1454 = vmatpush1.bf16.msra.mxu0 0
    %1455 = vmatprep.subr.bf16.mxu0 0
    %1456 = vmatpush1.bf16.msra.mxu0 0
    %1457 = vmatprep.subr.bf16.mxu0 0
    %1458 = vmatpush1.bf16.msra.mxu0 0
    %1459 = vmatprep.subr.bf16.mxu0 0
    %1460 = vmatpush1.bf16.msra.mxu0 0
    %1461 = vmatprep.subr.bf16.mxu0 0
    %1462 = vmatpush1.bf16.msra.mxu0 0
    %1463 = vmatprep.subr.bf16.mxu0 0
    %1464 = vmatpush1.bf16.msra.mxu0 0
    %1465 = vmatprep.subr.bf16.mxu0 0
    %1466 = vmatpush1.bf16.msra.mxu0 0
    %1467 = vmatprep.subr.bf16.mxu0 0
    %1468 = vmatpush1.bf16.msra.mxu0 0
    %1469 = vmatprep.subr.bf16.mxu0 0
    %1470 = vmatpush1.bf16.msra.mxu0 0
    %1471 = vmatprep.mubr.bf16.mxu0 0
    %1472 = vmatmul.mubr.bf16.gmra.mrb[0].mxu0 %v1109
    %v1473 = vpop.f32.mrb[0].mxu0
    %v1474 = vadd.f32 0.0, %v1473
    %v1475 = vpop.f32.mrb[0].mxu0
    %v1476 = vadd.f32 0.0, %v1475
    %v1477 = vpop.f32.mrb[0].mxu0
    %v1478 = vpop.f32.mrb[0].mxu0
    %1479 = vdwg.mxu0
    %1480 = vmatprep.subr.bf16.mxu0 %v811
    %1481 = vmatpush1.bf16.msra.mxu0 %v810
    %1482 = vmatprep.subr.bf16.mxu0 %v890
    %1483 = vmatpush1.bf16.msra.mxu0 %v889
    %1484 = vmatprep.subr.bf16.mxu0 0
    %1485 = vmatpush1.bf16.msra.mxu0 0
    %1486 = vmatprep.subr.bf16.mxu0 0
    %1487 = vmatpush1.bf16.msra.mxu0 0
    %1488 = vmatprep.subr.bf16.mxu0 0
    %1489 = vmatpush1.bf16.msra.mxu0 0
    %1490 = vmatprep.subr.bf16.mxu0 0
    %1491 = vmatpush1.bf16.msra.mxu0 0
    %1492 = vmatprep.subr.bf16.mxu0 0
    %1493 = vmatpush1.bf16.msra.mxu0 0
    %1494 = vmatprep.subr.bf16.mxu0 0
    %1495 = vmatpush1.bf16.msra.mxu0 0
    %1496 = vmatprep.subr.bf16.mxu0 0
    %1497 = vmatpush1.bf16.msra.mxu0 0
    %1498 = vmatprep.subr.bf16.mxu0 0
    %1499 = vmatpush1.bf16.msra.mxu0 0
    %1500 = vmatprep.subr.bf16.mxu0 0
    %1501 = vmatpush1.bf16.msra.mxu0 0
    %1502 = vmatprep.subr.bf16.mxu0 0
    %1503 = vmatpush1.bf16.msra.mxu0 0
    %1504 = vmatprep.subr.bf16.mxu0 0
    %1505 = vmatpush1.bf16.msra.mxu0 0
    %1506 = vmatprep.subr.bf16.mxu0 0
    %1507 = vmatpush1.bf16.msra.mxu0 0
    %1508 = vmatprep.subr.bf16.mxu0 0
    %1509 = vmatpush1.bf16.msra.mxu0 0
    %1510 = vmatprep.subr.bf16.mxu0 0
    %1511 = vmatpush1.bf16.msra.mxu0 0
    %1512 = vmatprep.mubr.bf16.mxu0 0
    %1513 = vmatmul.mubr.bf16.gmra.mrb[0].mxu0 %v1109
    %v1514 = vpop.f32.mrb[0].mxu0
    %v1515 = vadd.f32 0.0, %v1514
    %v1516 = vpop.f32.mrb[0].mxu0
    %v1517 = vadd.f32 0.0, %v1516
    %v1518 = vpop.f32.mrb[0].mxu0
    %v1519 = vpop.f32.mrb[0].mxu0
    %1520 = vdwg.mxu0
    %1521 = vmatprep.subr.bf16.mxu0 %v813
    %1522 = vmatpush1.bf16.msra.mxu0 %v812
    %1523 = vmatprep.subr.bf16.mxu0 %v892
    %1524 = vmatpush1.bf16.msra.mxu0 %v891
    %1525 = vmatprep.subr.bf16.mxu0 0
    %1526 = vmatpush1.bf16.msra.mxu0 0
    %1527 = vmatprep.subr.bf16.mxu0 0
    %1528 = vmatpush1.bf16.msra.mxu0 0
    %1529 = vmatprep.subr.bf16.mxu0 0
    %1530 = vmatpush1.bf16.msra.mxu0 0
    %1531 = vmatprep.subr.bf16.mxu0 0
    %1532 = vmatpush1.bf16.msra.mxu0 0
    %1533 = vmatprep.subr.bf16.mxu0 0
    %1534 = vmatpush1.bf16.msra.mxu0 0
    %1535 = vmatprep.subr.bf16.mxu0 0
    %1536 = vmatpush1.bf16.msra.mxu0 0
    %1537 = vmatprep.subr.bf16.mxu0 0
    %1538 = vmatpush1.bf16.msra.mxu0 0
    %1539 = vmatprep.subr.bf16.mxu0 0
    %1540 = vmatpush1.bf16.msra.mxu0 0
    %1541 = vmatprep.subr.bf16.mxu0 0
    %1542 = vmatpush1.bf16.msra.mxu0 0
    %1543 = vmatprep.subr.bf16.mxu0 0
    %1544 = vmatpush1.bf16.msra.mxu0 0
    %1545 = vmatprep.subr.bf16.mxu0 0
    %1546 = vmatpush1.bf16.msra.mxu0 0
    %1547 = vmatprep.subr.bf16.mxu0 0
    %1548 = vmatpush1.bf16.msra.mxu0 0
    %1549 = vmatprep.subr.bf16.mxu0 0
    %1550 = vmatpush1.bf16.msra.mxu0 0
    %1551 = vmatprep.subr.bf16.mxu0 0
    %1552 = vmatpush1.bf16.msra.mxu0 0
    %1553 = vmatprep.mubr.bf16.mxu0 0
    %1554 = vmatmul.mubr.bf16.gmra.mrb[0].mxu0 %v1109
    %v1555 = vpop.f32.mrb[0].mxu0
    %v1556 = vadd.f32 0.0, %v1555
    %v1557 = vpop.f32.mrb[0].mxu0
    %v1558 = vadd.f32 0.0, %v1557
    %v1559 = vpop.f32.mrb[0].mxu0
    %v1560 = vpop.f32.mrb[0].mxu0
    %1561 = vdwg.mxu0
    %1562 = vmatprep.subr.bf16.mxu0 %v815
    %1563 = vmatpush1.bf16.msra.mxu0 %v814
    %1564 = vmatprep.subr.bf16.mxu0 %v894
    %1565 = vmatpush1.bf16.msra.mxu0 %v893
    %1566 = vmatprep.subr.bf16.mxu0 0
    %1567 = vmatpush1.bf16.msra.mxu0 0
    %1568 = vmatprep.subr.bf16.mxu0 0
    %1569 = vmatpush1.bf16.msra.mxu0 0
    %1570 = vmatprep.subr.bf16.mxu0 0
    %1571 = vmatpush1.bf16.msra.mxu0 0
    %1572 = vmatprep.subr.bf16.mxu0 0
    %1573 = vmatpush1.bf16.msra.mxu0 0
    %1574 = vmatprep.subr.bf16.mxu0 0
    %1575 = vmatpush1.bf16.msra.mxu0 0
    %1576 = vmatprep.subr.bf16.mxu0 0
    %1577 = vmatpush1.bf16.msra.mxu0 0
    %1578 = vmatprep.subr.bf16.mxu0 0
    %1579 = vmatpush1.bf16.msra.mxu0 0
    %1580 = vmatprep.subr.bf16.mxu0 0
    %1581 = vmatpush1.bf16.msra.mxu0 0
    %1582 = vmatprep.subr.bf16.mxu0 0
    %1583 = vmatpush1.bf16.msra.mxu0 0
    %1584 = vmatprep.subr.bf16.mxu0 0
    %1585 = vmatpush1.bf16.msra.mxu0 0
    %1586 = vmatprep.subr.bf16.mxu0 0
    %1587 = vmatpush1.bf16.msra.mxu0 0
    %1588 = vmatprep.subr.bf16.mxu0 0
    %1589 = vmatpush1.bf16.msra.mxu0 0
    %1590 = vmatprep.subr.bf16.mxu0 0
    %1591 = vmatpush1.bf16.msra.mxu0 0
    %1592 = vmatprep.subr.bf16.mxu0 0
    %1593 = vmatpush1.bf16.msra.mxu0 0
    %1594 = vmatprep.mubr.bf16.mxu0 0
    %1595 = vmatmul.mubr.bf16.gmra.mrb[0].mxu0 %v1109
    %v1596 = vpop.f32.mrb[0].mxu0
    %v1597 = vadd.f32 0.0, %v1596
    %v1598 = vpop.f32.mrb[0].mxu0
    %v1599 = vadd.f32 0.0, %v1598
    %v1600 = vpop.f32.mrb[0].mxu0
    %v1601 = vpop.f32.mrb[0].mxu0
    %1602 = vdwg.mxu0
    %1603 = vmatprep.subr.bf16.mxu0 %v817
    %1604 = vmatpush1.bf16.msra.mxu0 %v816
    %1605 = vmatprep.subr.bf16.mxu0 %v896
    %1606 = vmatpush1.bf16.msra.mxu0 %v895
    %1607 = vmatprep.subr.bf16.mxu0 0
    %1608 = vmatpush1.bf16.msra.mxu0 0
    %1609 = vmatprep.subr.bf16.mxu0 0
    %1610 = vmatpush1.bf16.msra.mxu0 0
    %1611 = vmatprep.subr.bf16.mxu0 0
    %1612 = vmatpush1.bf16.msra.mxu0 0
    %1613 = vmatprep.subr.bf16.mxu0 0
    %1614 = vmatpush1.bf16.msra.mxu0 0
    %1615 = vmatprep.subr.bf16.mxu0 0
    %1616 = vmatpush1.bf16.msra.mxu0 0
    %1617 = vmatprep.subr.bf16.mxu0 0
    %1618 = vmatpush1.bf16.msra.mxu0 0
    %1619 = vmatprep.subr.bf16.mxu0 0
    %1620 = vmatpush1.bf16.msra.mxu0 0
    %1621 = vmatprep.subr.bf16.mxu0 0
    %1622 = vmatpush1.bf16.msra.mxu0 0
    %1623 = vmatprep.subr.bf16.mxu0 0
    %1624 = vmatpush1.bf16.msra.mxu0 0
    %1625 = vmatprep.subr.bf16.mxu0 0
    %1626 = vmatpush1.bf16.msra.mxu0 0
    %1627 = vmatprep.subr.bf16.mxu0 0
    %1628 = vmatpush1.bf16.msra.mxu0 0
    %1629 = vmatprep.subr.bf16.mxu0 0
    %1630 = vmatpush1.bf16.msra.mxu0 0
    %1631 = vmatprep.subr.bf16.mxu0 0
    %1632 = vmatpush1.bf16.msra.mxu0 0
    %1633 = vmatprep.subr.bf16.mxu0 0
    %1634 = vmatpush1.bf16.msra.mxu0 0
    %1635 = vmatprep.mubr.bf16.mxu0 0
    %1636 = vmatmul.mubr.bf16.gmra.mrb[0].mxu0 %v1109
    %v1637 = vpop.f32.mrb[0].mxu0
    %v1638 = vadd.f32 0.0, %v1637
    %v1639 = vpop.f32.mrb[0].mxu0
    %v1640 = vadd.f32 0.0, %v1639
    %v1641 = vpop.f32.mrb[0].mxu0
    %v1642 = vpop.f32.mrb[0].mxu0
    %1643 = vdwg.mxu0
    %1644 = vmatprep.subr.bf16.mxu0 %v819
    %1645 = vmatpush1.bf16.msra.mxu0 %v818
    %1646 = vmatprep.subr.bf16.mxu0 %v898
    %1647 = vmatpush1.bf16.msra.mxu0 %v897
    %1648 = vmatprep.subr.bf16.mxu0 0
    %1649 = vmatpush1.bf16.msra.mxu0 0
    %1650 = vmatprep.subr.bf16.mxu0 0
    %1651 = vmatpush1.bf16.msra.mxu0 0
    %1652 = vmatprep.subr.bf16.mxu0 0
    %1653 = vmatpush1.bf16.msra.mxu0 0
    %1654 = vmatprep.subr.bf16.mxu0 0
    %1655 = vmatpush1.bf16.msra.mxu0 0
    %1656 = vmatprep.subr.bf16.mxu0 0
    %1657 = vmatpush1.bf16.msra.mxu0 0
    %1658 = vmatprep.subr.bf16.mxu0 0
    %1659 = vmatpush1.bf16.msra.mxu0 0
    %1660 = vmatprep.subr.bf16.mxu0 0
    %1661 = vmatpush1.bf16.msra.mxu0 0
    %1662 = vmatprep.subr.bf16.mxu0 0
    %1663 = vmatpush1.bf16.msra.mxu0 0
    %1664 = vmatprep.subr.bf16.mxu0 0
    %1665 = vmatpush1.bf16.msra.mxu0 0
    %1666 = vmatprep.subr.bf16.mxu0 0
    %1667 = vmatpush1.bf16.msra.mxu0 0
    %1668 = vmatprep.subr.bf16.mxu0 0
    %1669 = vmatpush1.bf16.msra.mxu0 0
    %1670 = vmatprep.subr.bf16.mxu0 0
    %1671 = vmatpush1.bf16.msra.mxu0 0
    %1672 = vmatprep.subr.bf16.mxu0 0
    %1673 = vmatpush1.bf16.msra.mxu0 0
    %1674 = vmatprep.subr.bf16.mxu0 0
    %1675 = vmatpush1.bf16.msra.mxu0 0
    %1676 = vmatprep.mubr.bf16.mxu0 0
    %1677 = vmatmul.mubr.bf16.gmra.mrb[0].mxu0 %v1109
    %v1678 = vpop.f32.mrb[0].mxu0
    %v1679 = vadd.f32 0.0, %v1678
    %v1680 = vpop.f32.mrb[0].mxu0
    %v1681 = vadd.f32 0.0, %v1680
    %v1682 = vpop.f32.mrb[0].mxu0
    %v1683 = vpop.f32.mrb[0].mxu0
    %1684 = vdwg.mxu0
    %1685 = vmatprep.subr.bf16.mxu0 %v821
    %1686 = vmatpush1.bf16.msra.mxu0 %v820
    %1687 = vmatprep.subr.bf16.mxu0 %v900
    %1688 = vmatpush1.bf16.msra.mxu0 %v899
    %1689 = vmatprep.subr.bf16.mxu0 0
    %1690 = vmatpush1.bf16.msra.mxu0 0
    %1691 = vmatprep.subr.bf16.mxu0 0
    %1692 = vmatpush1.bf16.msra.mxu0 0
    %1693 = vmatprep.subr.bf16.mxu0 0
    %1694 = vmatpush1.bf16.msra.mxu0 0
    %1695 = vmatprep.subr.bf16.mxu0 0
    %1696 = vmatpush1.bf16.msra.mxu0 0
    %1697 = vmatprep.subr.bf16.mxu0 0
    %1698 = vmatpush1.bf16.msra.mxu0 0
    %1699 = vmatprep.subr.bf16.mxu0 0
    %1700 = vmatpush1.bf16.msra.mxu0 0
    %1701 = vmatprep.subr.bf16.mxu0 0
    %1702 = vmatpush1.bf16.msra.mxu0 0
    %1703 = vmatprep.subr.bf16.mxu0 0
    %1704 = vmatpush1.bf16.msra.mxu0 0
    %1705 = vmatprep.subr.bf16.mxu0 0
    %1706 = vmatpush1.bf16.msra.mxu0 0
    %1707 = vmatprep.subr.bf16.mxu0 0
    %1708 = vmatpush1.bf16.msra.mxu0 0
    %1709 = vmatprep.subr.bf16.mxu0 0
    %1710 = vmatpush1.bf16.msra.mxu0 0
    %1711 = vmatprep.subr.bf16.mxu0 0
    %1712 = vmatpush1.bf16.msra.mxu0 0
    %1713 = vmatprep.subr.bf16.mxu0 0
    %1714 = vmatpush1.bf16.msra.mxu0 0
    %1715 = vmatprep.subr.bf16.mxu0 0
    %1716 = vmatpush1.bf16.msra.mxu0 0
    %1717 = vmatprep.mubr.bf16.mxu0 0
    %1718 = vmatmul.mubr.bf16.gmra.mrb[0].mxu0 %v1109
    %v1719 = vpop.f32.mrb[0].mxu0
    %v1720 = vadd.f32 0.0, %v1719
    %v1721 = vpop.f32.mrb[0].mxu0
    %v1722 = vadd.f32 0.0, %v1721
    %v1723 = vpop.f32.mrb[0].mxu0
    %v1724 = vpop.f32.mrb[0].mxu0
    %1725 = vdwg.mxu0
    %1726 = vmatprep.subr.bf16.mxu0 %v823
    %1727 = vmatpush1.bf16.msra.mxu0 %v822
    %1728 = vmatprep.subr.bf16.mxu0 %v902
    %1729 = vmatpush1.bf16.msra.mxu0 %v901
    %1730 = vmatprep.subr.bf16.mxu0 0
    %1731 = vmatpush1.bf16.msra.mxu0 0
    %1732 = vmatprep.subr.bf16.mxu0 0
    %1733 = vmatpush1.bf16.msra.mxu0 0
    %1734 = vmatprep.subr.bf16.mxu0 0
    %1735 = vmatpush1.bf16.msra.mxu0 0
    %1736 = vmatprep.subr.bf16.mxu0 0
    %1737 = vmatpush1.bf16.msra.mxu0 0
    %1738 = vmatprep.subr.bf16.mxu0 0
    %1739 = vmatpush1.bf16.msra.mxu0 0
    %1740 = vmatprep.subr.bf16.mxu0 0
    %1741 = vmatpush1.bf16.msra.mxu0 0
    %1742 = vmatprep.subr.bf16.mxu0 0
    %1743 = vmatpush1.bf16.msra.mxu0 0
    %1744 = vmatprep.subr.bf16.mxu0 0
    %1745 = vmatpush1.bf16.msra.mxu0 0
    %1746 = vmatprep.subr.bf16.mxu0 0
    %1747 = vmatpush1.bf16.msra.mxu0 0
    %1748 = vmatprep.subr.bf16.mxu0 0
    %1749 = vmatpush1.bf16.msra.mxu0 0
    %1750 = vmatprep.subr.bf16.mxu0 0
    %1751 = vmatpush1.bf16.msra.mxu0 0
    %1752 = vmatprep.subr.bf16.mxu0 0
    %1753 = vmatpush1.bf16.msra.mxu0 0
    %1754 = vmatprep.subr.bf16.mxu0 0
    %1755 = vmatpush1.bf16.msra.mxu0 0
    %1756 = vmatprep.subr.bf16.mxu0 0
    %1757 = vmatpush1.bf16.msra.mxu0 0
    %1758 = vmatprep.mubr.bf16.mxu0 0
    %1759 = vmatmul.mubr.bf16.gmra.mrb[0].mxu0 %v1109
    %v1760 = vpop.f32.mrb[0].mxu0
    %v1761 = vadd.f32 0.0, %v1760
    %v1762 = vpop.f32.mrb[0].mxu0
    %v1763 = vadd.f32 0.0, %v1762
    %v1764 = vpop.f32.mrb[0].mxu0
    %v1765 = vpop.f32.mrb[0].mxu0
    %1766 = vdwg.mxu0
    %1767 = vmatprep.subr.bf16.mxu0 %v825
    %1768 = vmatpush1.bf16.msra.mxu0 %v824
    %1769 = vmatprep.subr.bf16.mxu0 %v904
    %1770 = vmatpush1.bf16.msra.mxu0 %v903
    %1771 = vmatprep.subr.bf16.mxu0 0
    %1772 = vmatpush1.bf16.msra.mxu0 0
    %1773 = vmatprep.subr.bf16.mxu0 0
    %1774 = vmatpush1.bf16.msra.mxu0 0
    %1775 = vmatprep.subr.bf16.mxu0 0
    %1776 = vmatpush1.bf16.msra.mxu0 0
    %1777 = vmatprep.subr.bf16.mxu0 0
    %1778 = vmatpush1.bf16.msra.mxu0 0
    %1779 = vmatprep.subr.bf16.mxu0 0
    %1780 = vmatpush1.bf16.msra.mxu0 0
    %1781 = vmatprep.subr.bf16.mxu0 0
    %1782 = vmatpush1.bf16.msra.mxu0 0
    %1783 = vmatprep.subr.bf16.mxu0 0
    %1784 = vmatpush1.bf16.msra.mxu0 0
    %1785 = vmatprep.subr.bf16.mxu0 0
    %1786 = vmatpush1.bf16.msra.mxu0 0
    %1787 = vmatprep.subr.bf16.mxu0 0
    %1788 = vmatpush1.bf16.msra.mxu0 0
    %1789 = vmatprep.subr.bf16.mxu0 0
    %1790 = vmatpush1.bf16.msra.mxu0 0
    %1791 = vmatprep.subr.bf16.mxu0 0
    %1792 = vmatpush1.bf16.msra.mxu0 0
    %1793 = vmatprep.subr.bf16.mxu0 0
    %1794 = vmatpush1.bf16.msra.mxu0 0
    %1795 = vmatprep.subr.bf16.mxu0 0
    %1796 = vmatpush1.bf16.msra.mxu0 0
    %1797 = vmatprep.subr.bf16.mxu0 0
    %1798 = vmatpush1.bf16.msra.mxu0 0
    %1799 = vmatprep.mubr.bf16.mxu0 0
    %1800 = vmatmul.mubr.bf16.gmra.mrb[0].mxu0 %v1109
    %v1801 = vpop.f32.mrb[0].mxu0
    %v1802 = vadd.f32 0.0, %v1801
    %v1803 = vpop.f32.mrb[0].mxu0
    %v1804 = vadd.f32 0.0, %v1803
    %v1805 = vpop.f32.mrb[0].mxu0
    %v1806 = vpop.f32.mrb[0].mxu0
    %1807 = vdwg.mxu0
    %1808 = vmatprep.subr.bf16.mxu0 %v827
    %1809 = vmatpush1.bf16.msra.mxu0 %v826
    %1810 = vmatprep.subr.bf16.mxu0 %v906
    %1811 = vmatpush1.bf16.msra.mxu0 %v905
    %1812 = vmatprep.subr.bf16.mxu0 0
    %1813 = vmatpush1.bf16.msra.mxu0 0
    %1814 = vmatprep.subr.bf16.mxu0 0
    %1815 = vmatpush1.bf16.msra.mxu0 0
    %1816 = vmatprep.subr.bf16.mxu0 0
    %1817 = vmatpush1.bf16.msra.mxu0 0
    %1818 = vmatprep.subr.bf16.mxu0 0
    %1819 = vmatpush1.bf16.msra.mxu0 0
    %1820 = vmatprep.subr.bf16.mxu0 0
    %1821 = vmatpush1.bf16.msra.mxu0 0
    %1822 = vmatprep.subr.bf16.mxu0 0
    %1823 = vmatpush1.bf16.msra.mxu0 0
    %1824 = vmatprep.subr.bf16.mxu0 0
    %1825 = vmatpush1.bf16.msra.mxu0 0
    %1826 = vmatprep.subr.bf16.mxu0 0
    %1827 = vmatpush1.bf16.msra.mxu0 0
    %1828 = vmatprep.subr.bf16.mxu0 0
    %1829 = vmatpush1.bf16.msra.mxu0 0
    %1830 = vmatprep.subr.bf16.mxu0 0
    %1831 = vmatpush1.bf16.msra.mxu0 0
    %1832 = vmatprep.subr.bf16.mxu0 0
    %1833 = vmatpush1.bf16.msra.mxu0 0
    %1834 = vmatprep.subr.bf16.mxu0 0
    %1835 = vmatpush1.bf16.msra.mxu0 0
    %1836 = vmatprep.subr.bf16.mxu0 0
    %1837 = vmatpush1.bf16.msra.mxu0 0
    %1838 = vmatprep.subr.bf16.mxu0 0
    %1839 = vmatpush1.bf16.msra.mxu0 0
    %1840 = vmatprep.mubr.bf16.mxu0 0
    %1841 = vmatmul.mubr.bf16.gmra.mrb[0].mxu0 %v1109
    %v1842 = vpop.f32.mrb[0].mxu0
    %v1843 = vadd.f32 0.0, %v1842
    %v1844 = vpop.f32.mrb[0].mxu0
    %v1845 = vadd.f32 0.0, %v1844
    %v1846 = vpop.f32.mrb[0].mxu0
    %v1847 = vpop.f32.mrb[0].mxu0
    %1848 = vdwg.mxu0
    %1849 = vmatprep.subr.bf16.mxu0 %v829
    %1850 = vmatpush1.bf16.msra.mxu0 %v828
    %1851 = vmatprep.subr.bf16.mxu0 %v908
    %1852 = vmatpush1.bf16.msra.mxu0 %v907
    %1853 = vmatprep.subr.bf16.mxu0 0
    %1854 = vmatpush1.bf16.msra.mxu0 0
    %1855 = vmatprep.subr.bf16.mxu0 0
    %1856 = vmatpush1.bf16.msra.mxu0 0
    %1857 = vmatprep.subr.bf16.mxu0 0
    %1858 = vmatpush1.bf16.msra.mxu0 0
    %1859 = vmatprep.subr.bf16.mxu0 0
    %1860 = vmatpush1.bf16.msra.mxu0 0
    %1861 = vmatprep.subr.bf16.mxu0 0
    %1862 = vmatpush1.bf16.msra.mxu0 0
    %1863 = vmatprep.subr.bf16.mxu0 0
    %1864 = vmatpush1.bf16.msra.mxu0 0
    %1865 = vmatprep.subr.bf16.mxu0 0
    %1866 = vmatpush1.bf16.msra.mxu0 0
    %1867 = vmatprep.subr.bf16.mxu0 0
    %1868 = vmatpush1.bf16.msra.mxu0 0
    %1869 = vmatprep.subr.bf16.mxu0 0
    %1870 = vmatpush1.bf16.msra.mxu0 0
    %1871 = vmatprep.subr.bf16.mxu0 0
    %1872 = vmatpush1.bf16.msra.mxu0 0
    %1873 = vmatprep.subr.bf16.mxu0 0
    %1874 = vmatpush1.bf16.msra.mxu0 0
    %1875 = vmatprep.subr.bf16.mxu0 0
    %1876 = vmatpush1.bf16.msra.mxu0 0
    %1877 = vmatprep.subr.bf16.mxu0 0
    %1878 = vmatpush1.bf16.msra.mxu0 0
    %1879 = vmatprep.subr.bf16.mxu0 0
    %1880 = vmatpush1.bf16.msra.mxu0 0
    %1881 = vmatprep.mubr.bf16.mxu0 0
    %1882 = vmatmul.mubr.bf16.gmra.mrb[0].mxu0 %v1109
    %v1883 = vpop.f32.mrb[0].mxu0
    %v1884 = vadd.f32 0.0, %v1883
    %v1885 = vpop.f32.mrb[0].mxu0
    %v1886 = vadd.f32 0.0, %v1885
    %v1887 = vpop.f32.mrb[0].mxu0
    %v1888 = vpop.f32.mrb[0].mxu0
    %1889 = vdwg.mxu0
    %1890 = vmatprep.subr.bf16.mxu0 %v831
    %1891 = vmatpush1.bf16.msra.mxu0 %v830
    %1892 = vmatprep.subr.bf16.mxu0 %v910
    %1893 = vmatpush1.bf16.msra.mxu0 %v909
    %1894 = vmatprep.subr.bf16.mxu0 0
    %1895 = vmatpush1.bf16.msra.mxu0 0
    %1896 = vmatprep.subr.bf16.mxu0 0
    %1897 = vmatpush1.bf16.msra.mxu0 0
    %1898 = vmatprep.subr.bf16.mxu0 0
    %1899 = vmatpush1.bf16.msra.mxu0 0
    %1900 = vmatprep.subr.bf16.mxu0 0
    %1901 = vmatpush1.bf16.msra.mxu0 0
    %1902 = vmatprep.subr.bf16.mxu0 0
    %1903 = vmatpush1.bf16.msra.mxu0 0
    %1904 = vmatprep.subr.bf16.mxu0 0
    %1905 = vmatpush1.bf16.msra.mxu0 0
    %1906 = vmatprep.subr.bf16.mxu0 0
    %1907 = vmatpush1.bf16.msra.mxu0 0
    %1908 = vmatprep.subr.bf16.mxu0 0
    %1909 = vmatpush1.bf16.msra.mxu0 0
    %1910 = vmatprep.subr.bf16.mxu0 0
    %1911 = vmatpush1.bf16.msra.mxu0 0
    %1912 = vmatprep.subr.bf16.mxu0 0
    %1913 = vmatpush1.bf16.msra.mxu0 0
    %1914 = vmatprep.subr.bf16.mxu0 0
    %1915 = vmatpush1.bf16.msra.mxu0 0
    %1916 = vmatprep.subr.bf16.mxu0 0
    %1917 = vmatpush1.bf16.msra.mxu0 0
    %1918 = vmatprep.subr.bf16.mxu0 0
    %1919 = vmatpush1.bf16.msra.mxu0 0
    %1920 = vmatprep.subr.bf16.mxu0 0
    %1921 = vmatpush1.bf16.msra.mxu0 0
    %1922 = vmatprep.mubr.bf16.mxu0 0
    %1923 = vmatmul.mubr.bf16.gmra.mrb[0].mxu0 %v1109
    %v1924 = vpop.f32.mrb[0].mxu0
    %v1925 = vadd.f32 0.0, %v1924
    %v1926 = vpop.f32.mrb[0].mxu0
    %v1927 = vadd.f32 0.0, %v1926
    %v1928 = vpop.f32.mrb[0].mxu0
    %v1929 = vpop.f32.mrb[0].mxu0
    %1930 = vdwg.mxu0
    %1931 = vmatprep.subr.bf16.mxu0 %v833
    %1932 = vmatpush1.bf16.msra.mxu0 %v832
    %1933 = vmatprep.subr.bf16.mxu0 %v912
    %1934 = vmatpush1.bf16.msra.mxu0 %v911
    %1935 = vmatprep.subr.bf16.mxu0 0
    %1936 = vmatpush1.bf16.msra.mxu0 0
    %1937 = vmatprep.subr.bf16.mxu0 0
    %1938 = vmatpush1.bf16.msra.mxu0 0
    %1939 = vmatprep.subr.bf16.mxu0 0
    %1940 = vmatpush1.bf16.msra.mxu0 0
    %1941 = vmatprep.subr.bf16.mxu0 0
    %1942 = vmatpush1.bf16.msra.mxu0 0
    %1943 = vmatprep.subr.bf16.mxu0 0
    %1944 = vmatpush1.bf16.msra.mxu0 0
    %1945 = vmatprep.subr.bf16.mxu0 0
    %1946 = vmatpush1.bf16.msra.mxu0 0
    %1947 = vmatprep.subr.bf16.mxu0 0
    %1948 = vmatpush1.bf16.msra.mxu0 0
    %1949 = vmatprep.subr.bf16.mxu0 0
    %1950 = vmatpush1.bf16.msra.mxu0 0
    %1951 = vmatprep.subr.bf16.mxu0 0
    %1952 = vmatpush1.bf16.msra.mxu0 0
    %1953 = vmatprep.subr.bf16.mxu0 0
    %1954 = vmatpush1.bf16.msra.mxu0 0
    %1955 = vmatprep.subr.bf16.mxu0 0
    %1956 = vmatpush1.bf16.msra.mxu0 0
    %1957 = vmatprep.subr.bf16.mxu0 0
    %1958 = vmatpush1.bf16.msra.mxu0 0
    %1959 = vmatprep.subr.bf16.mxu0 0
    %1960 = vmatpush1.bf16.msra.mxu0 0
    %1961 = vmatprep.subr.bf16.mxu0 0
    %1962 = vmatpush1.bf16.msra.mxu0 0
    %1963 = vmatprep.mubr.bf16.mxu0 0
    %1964 = vmatmul.mubr.bf16.gmra.mrb[0].mxu0 %v1109
    %v1965 = vpop.f32.mrb[0].mxu0
    %v1966 = vadd.f32 0.0, %v1965
    %v1967 = vpop.f32.mrb[0].mxu0
    %v1968 = vadd.f32 0.0, %v1967
    %v1969 = vpop.f32.mrb[0].mxu0
    %v1970 = vpop.f32.mrb[0].mxu0
    %1971 = vdwg.mxu0
    %1972 = vmatprep.subr.bf16.mxu0 %v835
    %1973 = vmatpush1.bf16.msra.mxu0 %v834
    %1974 = vmatprep.subr.bf16.mxu0 %v914
    %1975 = vmatpush1.bf16.msra.mxu0 %v913
    %1976 = vmatprep.subr.bf16.mxu0 0
    %1977 = vmatpush1.bf16.msra.mxu0 0
    %1978 = vmatprep.subr.bf16.mxu0 0
    %1979 = vmatpush1.bf16.msra.mxu0 0
    %1980 = vmatprep.subr.bf16.mxu0 0
    %1981 = vmatpush1.bf16.msra.mxu0 0
    %1982 = vmatprep.subr.bf16.mxu0 0
    %1983 = vmatpush1.bf16.msra.mxu0 0
    %1984 = vmatprep.subr.bf16.mxu0 0
    %1985 = vmatpush1.bf16.msra.mxu0 0
    %1986 = vmatprep.subr.bf16.mxu0 0
    %1987 = vmatpush1.bf16.msra.mxu0 0
    %1988 = vmatprep.subr.bf16.mxu0 0
    %1989 = vmatpush1.bf16.msra.mxu0 0
    %1990 = vmatprep.subr.bf16.mxu0 0
    %1991 = vmatpush1.bf16.msra.mxu0 0
    %1992 = vmatprep.subr.bf16.mxu0 0
    %1993 = vmatpush1.bf16.msra.mxu0 0
    %1994 = vmatprep.subr.bf16.mxu0 0
    %1995 = vmatpush1.bf16.msra.mxu0 0
    %1996 = vmatprep.subr.bf16.mxu0 0
    %1997 = vmatpush1.bf16.msra.mxu0 0
    %1998 = vmatprep.subr.bf16.mxu0 0
    %1999 = vmatpush1.bf16.msra.mxu0 0
    %2000 = vmatprep.subr.bf16.mxu0 0
    %2001 = vmatpush1.bf16.msra.mxu0 0
    %2002 = vmatprep.subr.bf16.mxu0 0
    %2003 = vmatpush1.bf16.msra.mxu0 0
    %2004 = vmatprep.mubr.bf16.mxu0 0
    %2005 = vmatmul.mubr.bf16.gmra.mrb[0].mxu0 %v1109
    %v2006 = vpop.f32.mrb[0].mxu0
    %v2007 = vadd.f32 0.0, %v2006
    %v2008 = vpop.f32.mrb[0].mxu0
    %v2009 = vadd.f32 0.0, %v2008
    %v2010 = vpop.f32.mrb[0].mxu0
    %v2011 = vpop.f32.mrb[0].mxu0
    %2012 = vdwg.mxu0
    %2013 = vmatprep.subr.bf16.mxu0 %v837
    %2014 = vmatpush1.bf16.msra.mxu0 %v836
    %2015 = vmatprep.subr.bf16.mxu0 %v916
    %2016 = vmatpush1.bf16.msra.mxu0 %v915
    %2017 = vmatprep.subr.bf16.mxu0 0
    %2018 = vmatpush1.bf16.msra.mxu0 0
    %2019 = vmatprep.subr.bf16.mxu0 0
    %2020 = vmatpush1.bf16.msra.mxu0 0
    %2021 = vmatprep.subr.bf16.mxu0 0
    %2022 = vmatpush1.bf16.msra.mxu0 0
    %2023 = vmatprep.subr.bf16.mxu0 0
    %2024 = vmatpush1.bf16.msra.mxu0 0
    %2025 = vmatprep.subr.bf16.mxu0 0
    %2026 = vmatpush1.bf16.msra.mxu0 0
    %2027 = vmatprep.subr.bf16.mxu0 0
    %2028 = vmatpush1.bf16.msra.mxu0 0
    %2029 = vmatprep.subr.bf16.mxu0 0
    %2030 = vmatpush1.bf16.msra.mxu0 0
    %2031 = vmatprep.subr.bf16.mxu0 0
    %2032 = vmatpush1.bf16.msra.mxu0 0
    %2033 = vmatprep.subr.bf16.mxu0 0
    %2034 = vmatpush1.bf16.msra.mxu0 0
    %2035 = vmatprep.subr.bf16.mxu0 0
    %2036 = vmatpush1.bf16.msra.mxu0 0
    %2037 = vmatprep.subr.bf16.mxu0 0
    %2038 = vmatpush1.bf16.msra.mxu0 0
    %2039 = vmatprep.subr.bf16.mxu0 0
    %2040 = vmatpush1.bf16.msra.mxu0 0
    %2041 = vmatprep.subr.bf16.mxu0 0
    %2042 = vmatpush1.bf16.msra.mxu0 0
    %2043 = vmatprep.subr.bf16.mxu0 0
    %2044 = vmatpush1.bf16.msra.mxu0 0
    %2045 = vmatprep.mubr.bf16.mxu0 0
    %2046 = vmatmul.mubr.bf16.gmra.mrb[0].mxu0 %v1109
    %v2047 = vpop.f32.mrb[0].mxu0
    %v2048 = vadd.f32 0.0, %v2047
    %v2049 = vpop.f32.mrb[0].mxu0
    %v2050 = vadd.f32 0.0, %v2049
    %v2051 = vpop.f32.mrb[0].mxu0
    %v2052 = vpop.f32.mrb[0].mxu0
    %2053 = vdwg.mxu0
    %2054 = vmatprep.subr.bf16.mxu0 %v839
    %2055 = vmatpush1.bf16.msra.mxu0 %v838
    %2056 = vmatprep.subr.bf16.mxu0 %v918
    %2057 = vmatpush1.bf16.msra.mxu0 %v917
    %2058 = vmatprep.subr.bf16.mxu0 0
    %2059 = vmatpush1.bf16.msra.mxu0 0
    %2060 = vmatprep.subr.bf16.mxu0 0
    %2061 = vmatpush1.bf16.msra.mxu0 0
    %2062 = vmatprep.subr.bf16.mxu0 0
    %2063 = vmatpush1.bf16.msra.mxu0 0
    %2064 = vmatprep.subr.bf16.mxu0 0
    %2065 = vmatpush1.bf16.msra.mxu0 0
    %2066 = vmatprep.subr.bf16.mxu0 0
    %2067 = vmatpush1.bf16.msra.mxu0 0
    %2068 = vmatprep.subr.bf16.mxu0 0
    %2069 = vmatpush1.bf16.msra.mxu0 0
    %2070 = vmatprep.subr.bf16.mxu0 0
    %2071 = vmatpush1.bf16.msra.mxu0 0
    %2072 = vmatprep.subr.bf16.mxu0 0
    %2073 = vmatpush1.bf16.msra.mxu0 0
    %2074 = vmatprep.subr.bf16.mxu0 0
    %2075 = vmatpush1.bf16.msra.mxu0 0
    %2076 = vmatprep.subr.bf16.mxu0 0
    %2077 = vmatpush1.bf16.msra.mxu0 0
    %2078 = vmatprep.subr.bf16.mxu0 0
    %2079 = vmatpush1.bf16.msra.mxu0 0
    %2080 = vmatprep.subr.bf16.mxu0 0
    %2081 = vmatpush1.bf16.msra.mxu0 0
    %2082 = vmatprep.subr.bf16.mxu0 0
    %2083 = vmatpush1.bf16.msra.mxu0 0
    %2084 = vmatprep.subr.bf16.mxu0 0
    %2085 = vmatpush1.bf16.msra.mxu0 0
    %2086 = vmatprep.mubr.bf16.mxu0 0
    %2087 = vmatmul.mubr.bf16.gmra.mrb[0].mxu0 %v1109
    %v2088 = vpop.f32.mrb[0].mxu0
    %v2089 = vadd.f32 0.0, %v2088
    %v2090 = vpop.f32.mrb[0].mxu0
    %v2091 = vadd.f32 0.0, %v2090
    %v2092 = vpop.f32.mrb[0].mxu0
    %v2093 = vpop.f32.mrb[0].mxu0
    %2094 = vdwg.mxu0
    %2095 = vmatprep.subr.bf16.mxu0 %v841
    %2096 = vmatpush1.bf16.msra.mxu0 %v840
    %2097 = vmatprep.subr.bf16.mxu0 %v920
    %2098 = vmatpush1.bf16.msra.mxu0 %v919
    %2099 = vmatprep.subr.bf16.mxu0 0
    %2100 = vmatpush1.bf16.msra.mxu0 0
    %2101 = vmatprep.subr.bf16.mxu0 0
    %2102 = vmatpush1.bf16.msra.mxu0 0
    %2103 = vmatprep.subr.bf16.mxu0 0
    %2104 = vmatpush1.bf16.msra.mxu0 0
    %2105 = vmatprep.subr.bf16.mxu0 0
    %2106 = vmatpush1.bf16.msra.mxu0 0
    %2107 = vmatprep.subr.bf16.mxu0 0
    %2108 = vmatpush1.bf16.msra.mxu0 0
    %2109 = vmatprep.subr.bf16.mxu0 0
    %2110 = vmatpush1.bf16.msra.mxu0 0
    %2111 = vmatprep.subr.bf16.mxu0 0
    %2112 = vmatpush1.bf16.msra.mxu0 0
    %2113 = vmatprep.subr.bf16.mxu0 0
    %2114 = vmatpush1.bf16.msra.mxu0 0
    %2115 = vmatprep.subr.bf16.mxu0 0
    %2116 = vmatpush1.bf16.msra.mxu0 0
    %2117 = vmatprep.subr.bf16.mxu0 0
    %2118 = vmatpush1.bf16.msra.mxu0 0
    %2119 = vmatprep.subr.bf16.mxu0 0
    %2120 = vmatpush1.bf16.msra.mxu0 0
    %2121 = vmatprep.subr.bf16.mxu0 0
    %2122 = vmatpush1.bf16.msra.mxu0 0
    %2123 = vmatprep.subr.bf16.mxu0 0
    %2124 = vmatpush1.bf16.msra.mxu0 0
    %2125 = vmatprep.subr.bf16.mxu0 0
    %2126 = vmatpush1.bf16.msra.mxu0 0
    %2127 = vmatprep.mubr.bf16.mxu0 0
    %2128 = vmatmul.mubr.bf16.gmra.mrb[0].mxu0 %v1109
    %v2129 = vpop.f32.mrb[0].mxu0
    %v2130 = vadd.f32 0.0, %v2129
    %v2131 = vpop.f32.mrb[0].mxu0
    %v2132 = vadd.f32 0.0, %v2131
    %v2133 = vpop.f32.mrb[0].mxu0
    %v2134 = vpop.f32.mrb[0].mxu0
    %2135 = vdwg.mxu0
    %2136 = vmatprep.subr.bf16.mxu0 %v843
    %2137 = vmatpush1.bf16.msra.mxu0 %v842
    %2138 = vmatprep.subr.bf16.mxu0 %v922
    %2139 = vmatpush1.bf16.msra.mxu0 %v921
    %2140 = vmatprep.subr.bf16.mxu0 0
    %2141 = vmatpush1.bf16.msra.mxu0 0
    %2142 = vmatprep.subr.bf16.mxu0 0
    %2143 = vmatpush1.bf16.msra.mxu0 0
    %2144 = vmatprep.subr.bf16.mxu0 0
    %2145 = vmatpush1.bf16.msra.mxu0 0
    %2146 = vmatprep.subr.bf16.mxu0 0
    %2147 = vmatpush1.bf16.msra.mxu0 0
    %2148 = vmatprep.subr.bf16.mxu0 0
    %2149 = vmatpush1.bf16.msra.mxu0 0
    %2150 = vmatprep.subr.bf16.mxu0 0
    %2151 = vmatpush1.bf16.msra.mxu0 0
    %2152 = vmatprep.subr.bf16.mxu0 0
    %2153 = vmatpush1.bf16.msra.mxu0 0
    %2154 = vmatprep.subr.bf16.mxu0 0
    %2155 = vmatpush1.bf16.msra.mxu0 0
    %2156 = vmatprep.subr.bf16.mxu0 0
    %2157 = vmatpush1.bf16.msra.mxu0 0
    %2158 = vmatprep.subr.bf16.mxu0 0
    %2159 = vmatpush1.bf16.msra.mxu0 0
    %2160 = vmatprep.subr.bf16.mxu0 0
    %2161 = vmatpush1.bf16.msra.mxu0 0
    %2162 = vmatprep.subr.bf16.mxu0 0
    %2163 = vmatpush1.bf16.msra.mxu0 0
    %2164 = vmatprep.subr.bf16.mxu0 0
    %2165 = vmatpush1.bf16.msra.mxu0 0
    %2166 = vmatprep.subr.bf16.mxu0 0
    %2167 = vmatpush1.bf16.msra.mxu0 0
    %2168 = vmatprep.mubr.bf16.mxu0 0
    %2169 = vmatmul.mubr.bf16.gmra.mrb[0].mxu0 %v1109
    %v2170 = vpop.f32.mrb[0].mxu0
    %v2171 = vadd.f32 0.0, %v2170
    %v2172 = vpop.f32.mrb[0].mxu0
    %v2173 = vadd.f32 0.0, %v2172
    %v2174 = vpop.f32.mrb[0].mxu0
    %v2175 = vpop.f32.mrb[0].mxu0
    %2176 = vdwg.mxu0
    %2177 = vmatprep.subr.bf16.mxu0 %v845
    %2178 = vmatpush1.bf16.msra.mxu0 %v844
    %2179 = vmatprep.subr.bf16.mxu0 %v924
    %2180 = vmatpush1.bf16.msra.mxu0 %v923
    %2181 = vmatprep.subr.bf16.mxu0 0
    %2182 = vmatpush1.bf16.msra.mxu0 0
    %2183 = vmatprep.subr.bf16.mxu0 0
    %2184 = vmatpush1.bf16.msra.mxu0 0
    %2185 = vmatprep.subr.bf16.mxu0 0
    %2186 = vmatpush1.bf16.msra.mxu0 0
    %2187 = vmatprep.subr.bf16.mxu0 0
    %2188 = vmatpush1.bf16.msra.mxu0 0
    %2189 = vmatprep.subr.bf16.mxu0 0
    %2190 = vmatpush1.bf16.msra.mxu0 0
    %2191 = vmatprep.subr.bf16.mxu0 0
    %2192 = vmatpush1.bf16.msra.mxu0 0
    %2193 = vmatprep.subr.bf16.mxu0 0
    %2194 = vmatpush1.bf16.msra.mxu0 0
    %2195 = vmatprep.subr.bf16.mxu0 0
    %2196 = vmatpush1.bf16.msra.mxu0 0
    %2197 = vmatprep.subr.bf16.mxu0 0
    %2198 = vmatpush1.bf16.msra.mxu0 0
    %2199 = vmatprep.subr.bf16.mxu0 0
    %2200 = vmatpush1.bf16.msra.mxu0 0
    %2201 = vmatprep.subr.bf16.mxu0 0
    %2202 = vmatpush1.bf16.msra.mxu0 0
    %2203 = vmatprep.subr.bf16.mxu0 0
    %2204 = vmatpush1.bf16.msra.mxu0 0
    %2205 = vmatprep.subr.bf16.mxu0 0
    %2206 = vmatpush1.bf16.msra.mxu0 0
    %2207 = vmatprep.subr.bf16.mxu0 0
    %2208 = vmatpush1.bf16.msra.mxu0 0
    %2209 = vmatprep.mubr.bf16.mxu0 0
    %2210 = vmatmul.mubr.bf16.gmra.mrb[0].mxu0 %v1109
    %v2211 = vpop.f32.mrb[0].mxu0
    %v2212 = vadd.f32 0.0, %v2211
    %v2213 = vpop.f32.mrb[0].mxu0
    %v2214 = vadd.f32 0.0, %v2213
    %v2215 = vpop.f32.mrb[0].mxu0
    %v2216 = vpop.f32.mrb[0].mxu0
    %2217 = vdwg.mxu0
    %2218 = vmatprep.subr.bf16.mxu0 %v847
    %2219 = vmatpush1.bf16.msra.mxu0 %v846
    %2220 = vmatprep.subr.bf16.mxu0 %v926
    %2221 = vmatpush1.bf16.msra.mxu0 %v925
    %2222 = vmatprep.subr.bf16.mxu0 0
    %2223 = vmatpush1.bf16.msra.mxu0 0
    %2224 = vmatprep.subr.bf16.mxu0 0
    %2225 = vmatpush1.bf16.msra.mxu0 0
    %2226 = vmatprep.subr.bf16.mxu0 0
    %2227 = vmatpush1.bf16.msra.mxu0 0
    %2228 = vmatprep.subr.bf16.mxu0 0
    %2229 = vmatpush1.bf16.msra.mxu0 0
    %2230 = vmatprep.subr.bf16.mxu0 0
    %2231 = vmatpush1.bf16.msra.mxu0 0
    %2232 = vmatprep.subr.bf16.mxu0 0
    %2233 = vmatpush1.bf16.msra.mxu0 0
    %2234 = vmatprep.subr.bf16.mxu0 0
    %2235 = vmatpush1.bf16.msra.mxu0 0
    %2236 = vmatprep.subr.bf16.mxu0 0
    %2237 = vmatpush1.bf16.msra.mxu0 0
    %2238 = vmatprep.subr.bf16.mxu0 0
    %2239 = vmatpush1.bf16.msra.mxu0 0
    %2240 = vmatprep.subr.bf16.mxu0 0
    %2241 = vmatpush1.bf16.msra.mxu0 0
    %2242 = vmatprep.subr.bf16.mxu0 0
    %2243 = vmatpush1.bf16.msra.mxu0 0
    %2244 = vmatprep.subr.bf16.mxu0 0
    %2245 = vmatpush1.bf16.msra.mxu0 0
    %2246 = vmatprep.subr.bf16.mxu0 0
    %2247 = vmatpush1.bf16.msra.mxu0 0
    %2248 = vmatprep.subr.bf16.mxu0 0
    %2249 = vmatpush1.bf16.msra.mxu0 0
    %2250 = vmatprep.mubr.bf16.mxu0 0
    %2251 = vmatmul.mubr.bf16.gmra.mrb[0].mxu0 %v1109
    %v2252 = vpop.f32.mrb[0].mxu0
    %v2253 = vadd.f32 0.0, %v2252
    %v2254 = vpop.f32.mrb[0].mxu0
    %v2255 = vadd.f32 0.0, %v2254
    %v2256 = vpop.f32.mrb[0].mxu0
    %v2257 = vpop.f32.mrb[0].mxu0
    %2258 = vdwg.mxu0
    %2259 = vmatprep.subr.bf16.mxu0 %v849
    %2260 = vmatpush1.bf16.msra.mxu0 %v848
    %2261 = vmatprep.subr.bf16.mxu0 %v928
    %2262 = vmatpush1.bf16.msra.mxu0 %v927
    %2263 = vmatprep.subr.bf16.mxu0 0
    %2264 = vmatpush1.bf16.msra.mxu0 0
    %2265 = vmatprep.subr.bf16.mxu0 0
    %2266 = vmatpush1.bf16.msra.mxu0 0
    %2267 = vmatprep.subr.bf16.mxu0 0
    %2268 = vmatpush1.bf16.msra.mxu0 0
    %2269 = vmatprep.subr.bf16.mxu0 0
    %2270 = vmatpush1.bf16.msra.mxu0 0
    %2271 = vmatprep.subr.bf16.mxu0 0
    %2272 = vmatpush1.bf16.msra.mxu0 0
    %2273 = vmatprep.subr.bf16.mxu0 0
    %2274 = vmatpush1.bf16.msra.mxu0 0
    %2275 = vmatprep.subr.bf16.mxu0 0
    %2276 = vmatpush1.bf16.msra.mxu0 0
    %2277 = vmatprep.subr.bf16.mxu0 0
    %2278 = vmatpush1.bf16.msra.mxu0 0
    %2279 = vmatprep.subr.bf16.mxu0 0
    %2280 = vmatpush1.bf16.msra.mxu0 0
    %2281 = vmatprep.subr.bf16.mxu0 0
    %2282 = vmatpush1.bf16.msra.mxu0 0
    %2283 = vmatprep.subr.bf16.mxu0 0
    %2284 = vmatpush1.bf16.msra.mxu0 0
    %2285 = vmatprep.subr.bf16.mxu0 0
    %2286 = vmatpush1.bf16.msra.mxu0 0
    %2287 = vmatprep.subr.bf16.mxu0 0
    %2288 = vmatpush1.bf16.msra.mxu0 0
    %2289 = vmatprep.subr.bf16.mxu0 0
    %2290 = vmatpush1.bf16.msra.mxu0 0
    %2291 = vmatprep.mubr.bf16.mxu0 0
    %2292 = vmatmul.mubr.bf16.gmra.mrb[0].mxu0 %v1109
    %v2293 = vpop.f32.mrb[0].mxu0
    %v2294 = vadd.f32 0.0, %v2293
    %v2295 = vpop.f32.mrb[0].mxu0
    %v2296 = vadd.f32 0.0, %v2295
    %v2297 = vpop.f32.mrb[0].mxu0
    %v2298 = vpop.f32.mrb[0].mxu0
    %2299 = vdwg.mxu0
    %2300 = vmatprep.subr.bf16.mxu0 %v851
    %2301 = vmatpush1.bf16.msra.mxu0 %v850
    %2302 = vmatprep.subr.bf16.mxu0 %v930
    %2303 = vmatpush1.bf16.msra.mxu0 %v929
    %2304 = vmatprep.subr.bf16.mxu0 0
    %2305 = vmatpush1.bf16.msra.mxu0 0
    %2306 = vmatprep.subr.bf16.mxu0 0
    %2307 = vmatpush1.bf16.msra.mxu0 0
    %2308 = vmatprep.subr.bf16.mxu0 0
    %2309 = vmatpush1.bf16.msra.mxu0 0
    %2310 = vmatprep.subr.bf16.mxu0 0
    %2311 = vmatpush1.bf16.msra.mxu0 0
    %2312 = vmatprep.subr.bf16.mxu0 0
    %2313 = vmatpush1.bf16.msra.mxu0 0
    %2314 = vmatprep.subr.bf16.mxu0 0
    %2315 = vmatpush1.bf16.msra.mxu0 0
    %2316 = vmatprep.subr.bf16.mxu0 0
    %2317 = vmatpush1.bf16.msra.mxu0 0
    %2318 = vmatprep.subr.bf16.mxu0 0
    %2319 = vmatpush1.bf16.msra.mxu0 0
    %2320 = vmatprep.subr.bf16.mxu0 0
    %2321 = vmatpush1.bf16.msra.mxu0 0
    %2322 = vmatprep.subr.bf16.mxu0 0
    %2323 = vmatpush1.bf16.msra.mxu0 0
    %2324 = vmatprep.subr.bf16.mxu0 0
    %2325 = vmatpush1.bf16.msra.mxu0 0
    %2326 = vmatprep.subr.bf16.mxu0 0
    %2327 = vmatpush1.bf16.msra.mxu0 0
    %2328 = vmatprep.subr.bf16.mxu0 0
    %2329 = vmatpush1.bf16.msra.mxu0 0
    %2330 = vmatprep.subr.bf16.mxu0 0
    %2331 = vmatpush1.bf16.msra.mxu0 0
    %2332 = vmatprep.mubr.bf16.mxu0 0
    %2333 = vmatmul.mubr.bf16.gmra.mrb[0].mxu0 %v1109
    %v2334 = vpop.f32.mrb[0].mxu0
    %v2335 = vadd.f32 0.0, %v2334
    %v2336 = vpop.f32.mrb[0].mxu0
    %v2337 = vadd.f32 0.0, %v2336
    %v2338 = vpop.f32.mrb[0].mxu0
    %v2339 = vpop.f32.mrb[0].mxu0
    %2340 = vdwg.mxu0
    %2341 = vmatprep.subr.bf16.mxu0 %v853
    %2342 = vmatpush1.bf16.msra.mxu0 %v852
    %2343 = vmatprep.subr.bf16.mxu0 %v932
    %2344 = vmatpush1.bf16.msra.mxu0 %v931
    %2345 = vmatprep.subr.bf16.mxu0 0
    %2346 = vmatpush1.bf16.msra.mxu0 0
    %2347 = vmatprep.subr.bf16.mxu0 0
    %2348 = vmatpush1.bf16.msra.mxu0 0
    %2349 = vmatprep.subr.bf16.mxu0 0
    %2350 = vmatpush1.bf16.msra.mxu0 0
    %2351 = vmatprep.subr.bf16.mxu0 0
    %2352 = vmatpush1.bf16.msra.mxu0 0
    %2353 = vmatprep.subr.bf16.mxu0 0
    %2354 = vmatpush1.bf16.msra.mxu0 0
    %2355 = vmatprep.subr.bf16.mxu0 0
    %2356 = vmatpush1.bf16.msra.mxu0 0
    %2357 = vmatprep.subr.bf16.mxu0 0
    %2358 = vmatpush1.bf16.msra.mxu0 0
    %2359 = vmatprep.subr.bf16.mxu0 0
    %2360 = vmatpush1.bf16.msra.mxu0 0
    %2361 = vmatprep.subr.bf16.mxu0 0
    %2362 = vmatpush1.bf16.msra.mxu0 0
    %2363 = vmatprep.subr.bf16.mxu0 0
    %2364 = vmatpush1.bf16.msra.mxu0 0
    %2365 = vmatprep.subr.bf16.mxu0 0
    %2366 = vmatpush1.bf16.msra.mxu0 0
    %2367 = vmatprep.subr.bf16.mxu0 0
    %2368 = vmatpush1.bf16.msra.mxu0 0
    %2369 = vmatprep.subr.bf16.mxu0 0
    %2370 = vmatpush1.bf16.msra.mxu0 0
    %2371 = vmatprep.subr.bf16.mxu0 0
    %2372 = vmatpush1.bf16.msra.mxu0 0
    %2373 = vmatprep.mubr.bf16.mxu0 0
    %2374 = vmatmul.mubr.bf16.gmra.mrb[0].mxu0 %v1109
    %v2375 = vpop.f32.mrb[0].mxu0
    %v2376 = vadd.f32 0.0, %v2375
    %v2377 = vpop.f32.mrb[0].mxu0
    %v2378 = vadd.f32 0.0, %v2377
    %v2379 = vpop.f32.mrb[0].mxu0
    %v2380 = vpop.f32.mrb[0].mxu0
    %2381 = vdwg.mxu0
    %2382 = vmatprep.subr.bf16.mxu0 %v855
    %2383 = vmatpush1.bf16.msra.mxu0 %v854
    %2384 = vmatprep.subr.bf16.mxu0 %v934
    %2385 = vmatpush1.bf16.msra.mxu0 %v933
    %2386 = vmatprep.subr.bf16.mxu0 0
    %2387 = vmatpush1.bf16.msra.mxu0 0
    %2388 = vmatprep.subr.bf16.mxu0 0
    %2389 = vmatpush1.bf16.msra.mxu0 0
    %2390 = vmatprep.subr.bf16.mxu0 0
    %2391 = vmatpush1.bf16.msra.mxu0 0
    %2392 = vmatprep.subr.bf16.mxu0 0
    %2393 = vmatpush1.bf16.msra.mxu0 0
    %2394 = vmatprep.subr.bf16.mxu0 0
    %2395 = vmatpush1.bf16.msra.mxu0 0
    %2396 = vmatprep.subr.bf16.mxu0 0
    %2397 = vmatpush1.bf16.msra.mxu0 0
    %2398 = vmatprep.subr.bf16.mxu0 0
    %2399 = vmatpush1.bf16.msra.mxu0 0
    %2400 = vmatprep.subr.bf16.mxu0 0
    %2401 = vmatpush1.bf16.msra.mxu0 0
    %2402 = vmatprep.subr.bf16.mxu0 0
    %2403 = vmatpush1.bf16.msra.mxu0 0
    %2404 = vmatprep.subr.bf16.mxu0 0
    %2405 = vmatpush1.bf16.msra.mxu0 0
    %2406 = vmatprep.subr.bf16.mxu0 0
    %2407 = vmatpush1.bf16.msra.mxu0 0
    %2408 = vmatprep.subr.bf16.mxu0 0
    %2409 = vmatpush1.bf16.msra.mxu0 0
    %2410 = vmatprep.subr.bf16.mxu0 0
    %2411 = vmatpush1.bf16.msra.mxu0 0
    %2412 = vmatprep.subr.bf16.mxu0 0
    %2413 = vmatpush1.bf16.msra.mxu0 0
    %2414 = vmatprep.mubr.bf16.mxu0 0
    %2415 = vmatmul.mubr.bf16.gmra.mrb[0].mxu0 %v1109
    %v2416 = vpop.f32.mrb[0].mxu0
    %v2417 = vadd.f32 0.0, %v2416
    %v2418 = vpop.f32.mrb[0].mxu0
    %v2419 = vadd.f32 0.0, %v2418
    %v2420 = vpop.f32.mrb[0].mxu0
    %v2421 = vpop.f32.mrb[0].mxu0
    %2422 = vdwg.mxu0
    %2423 = vmatprep.subr.bf16.mxu0 %v857
    %2424 = vmatpush1.bf16.msra.mxu0 %v856
    %2425 = vmatprep.subr.bf16.mxu0 %v936
    %2426 = vmatpush1.bf16.msra.mxu0 %v935
    %2427 = vmatprep.subr.bf16.mxu0 0
    %2428 = vmatpush1.bf16.msra.mxu0 0
    %2429 = vmatprep.subr.bf16.mxu0 0
    %2430 = vmatpush1.bf16.msra.mxu0 0
    %2431 = vmatprep.subr.bf16.mxu0 0
    %2432 = vmatpush1.bf16.msra.mxu0 0
    %2433 = vmatprep.subr.bf16.mxu0 0
    %2434 = vmatpush1.bf16.msra.mxu0 0
    %2435 = vmatprep.subr.bf16.mxu0 0
    %2436 = vmatpush1.bf16.msra.mxu0 0
    %2437 = vmatprep.subr.bf16.mxu0 0
    %2438 = vmatpush1.bf16.msra.mxu0 0
    %2439 = vmatprep.subr.bf16.mxu0 0
    %2440 = vmatpush1.bf16.msra.mxu0 0
    %2441 = vmatprep.subr.bf16.mxu0 0
    %2442 = vmatpush1.bf16.msra.mxu0 0
    %2443 = vmatprep.subr.bf16.mxu0 0
    %2444 = vmatpush1.bf16.msra.mxu0 0
    %2445 = vmatprep.subr.bf16.mxu0 0
    %2446 = vmatpush1.bf16.msra.mxu0 0
    %2447 = vmatprep.subr.bf16.mxu0 0
    %2448 = vmatpush1.bf16.msra.mxu0 0
    %2449 = vmatprep.subr.bf16.mxu0 0
    %2450 = vmatpush1.bf16.msra.mxu0 0
    %2451 = vmatprep.subr.bf16.mxu0 0
    %2452 = vmatpush1.bf16.msra.mxu0 0
    %2453 = vmatprep.subr.bf16.mxu0 0
    %2454 = vmatpush1.bf16.msra.mxu0 0
    %2455 = vmatprep.mubr.bf16.mxu0 0
    %2456 = vmatmul.mubr.bf16.gmra.mrb[0].mxu0 %v1109
    %v2457 = vpop.f32.mrb[0].mxu0
    %v2458 = vadd.f32 0.0, %v2457
    %v2459 = vpop.f32.mrb[0].mxu0
    %v2460 = vadd.f32 0.0, %v2459
    %v2461 = vpop.f32.mrb[0].mxu0
    %v2462 = vpop.f32.mrb[0].mxu0
    %2463 = vdwg.mxu0
    %2464 = vmatprep.subr.bf16.mxu0 %v859
    %2465 = vmatpush1.bf16.msra.mxu0 %v858
    %2466 = vmatprep.subr.bf16.mxu0 %v938
    %2467 = vmatpush1.bf16.msra.mxu0 %v937
    %2468 = vmatprep.subr.bf16.mxu0 0
    %2469 = vmatpush1.bf16.msra.mxu0 0
    %2470 = vmatprep.subr.bf16.mxu0 0
    %2471 = vmatpush1.bf16.msra.mxu0 0
    %2472 = vmatprep.subr.bf16.mxu0 0
    %2473 = vmatpush1.bf16.msra.mxu0 0
    %2474 = vmatprep.subr.bf16.mxu0 0
    %2475 = vmatpush1.bf16.msra.mxu0 0
    %2476 = vmatprep.subr.bf16.mxu0 0
    %2477 = vmatpush1.bf16.msra.mxu0 0
    %2478 = vmatprep.subr.bf16.mxu0 0
    %2479 = vmatpush1.bf16.msra.mxu0 0
    %2480 = vmatprep.subr.bf16.mxu0 0
    %2481 = vmatpush1.bf16.msra.mxu0 0
    %2482 = vmatprep.subr.bf16.mxu0 0
    %2483 = vmatpush1.bf16.msra.mxu0 0
    %2484 = vmatprep.subr.bf16.mxu0 0
    %2485 = vmatpush1.bf16.msra.mxu0 0
    %2486 = vmatprep.subr.bf16.mxu0 0
    %2487 = vmatpush1.bf16.msra.mxu0 0
    %2488 = vmatprep.subr.bf16.mxu0 0
    %2489 = vmatpush1.bf16.msra.mxu0 0
    %2490 = vmatprep.subr.bf16.mxu0 0
    %2491 = vmatpush1.bf16.msra.mxu0 0
    %2492 = vmatprep.subr.bf16.mxu0 0
    %2493 = vmatpush1.bf16.msra.mxu0 0
    %2494 = vmatprep.subr.bf16.mxu0 0
    %2495 = vmatpush1.bf16.msra.mxu0 0
    %2496 = vmatprep.mubr.bf16.mxu0 0
    %2497 = vmatmul.mubr.bf16.gmra.mrb[0].mxu0 %v1109
    %v2498 = vpop.f32.mrb[0].mxu0
    %v2499 = vadd.f32 0.0, %v2498
    %v2500 = vpop.f32.mrb[0].mxu0
    %v2501 = vadd.f32 0.0, %v2500
    %v2502 = vpop.f32.mrb[0].mxu0
    %v2503 = vpop.f32.mrb[0].mxu0
    %2504 = vdwg.mxu0
    %2505 = vmatprep.subr.bf16.mxu0 %v861
    %2506 = vmatpush1.bf16.msra.mxu0 %v860
    %2507 = vmatprep.subr.bf16.mxu0 %v940
    %2508 = vmatpush1.bf16.msra.mxu0 %v939
    %2509 = vmatprep.subr.bf16.mxu0 0
    %2510 = vmatpush1.bf16.msra.mxu0 0
    %2511 = vmatprep.subr.bf16.mxu0 0
    %2512 = vmatpush1.bf16.msra.mxu0 0
    %2513 = vmatprep.subr.bf16.mxu0 0
    %2514 = vmatpush1.bf16.msra.mxu0 0
    %2515 = vmatprep.subr.bf16.mxu0 0
    %2516 = vmatpush1.bf16.msra.mxu0 0
    %2517 = vmatprep.subr.bf16.mxu0 0
    %2518 = vmatpush1.bf16.msra.mxu0 0
    %2519 = vmatprep.subr.bf16.mxu0 0
    %2520 = vmatpush1.bf16.msra.mxu0 0
    %2521 = vmatprep.subr.bf16.mxu0 0
    %2522 = vmatpush1.bf16.msra.mxu0 0
    %2523 = vmatprep.subr.bf16.mxu0 0
    %2524 = vmatpush1.bf16.msra.mxu0 0
    %2525 = vmatprep.subr.bf16.mxu0 0
    %2526 = vmatpush1.bf16.msra.mxu0 0
    %2527 = vmatprep.subr.bf16.mxu0 0
    %2528 = vmatpush1.bf16.msra.mxu0 0
    %2529 = vmatprep.subr.bf16.mxu0 0
    %2530 = vmatpush1.bf16.msra.mxu0 0
    %2531 = vmatprep.subr.bf16.mxu0 0
    %2532 = vmatpush1.bf16.msra.mxu0 0
    %2533 = vmatprep.subr.bf16.mxu0 0
    %2534 = vmatpush1.bf16.msra.mxu0 0
    %2535 = vmatprep.subr.bf16.mxu0 0
    %2536 = vmatpush1.bf16.msra.mxu0 0
    %2537 = vmatprep.mubr.bf16.mxu0 0
    %2538 = vmatmul.mubr.bf16.gmra.mrb[0].mxu0 %v1109
    %v2539 = vpop.f32.mrb[0].mxu0
    %v2540 = vadd.f32 0.0, %v2539
    %v2541 = vpop.f32.mrb[0].mxu0
    %v2542 = vadd.f32 0.0, %v2541
    %v2543 = vpop.f32.mrb[0].mxu0
    %v2544 = vpop.f32.mrb[0].mxu0
    %2545 = vdwg.mxu0
    %2546 = vmatprep.subr.bf16.mxu0 %v863
    %2547 = vmatpush1.bf16.msra.mxu0 %v862
    %2548 = vmatprep.subr.bf16.mxu0 %v942
    %2549 = vmatpush1.bf16.msra.mxu0 %v941
    %2550 = vmatprep.subr.bf16.mxu0 0
    %2551 = vmatpush1.bf16.msra.mxu0 0
    %2552 = vmatprep.subr.bf16.mxu0 0
    %2553 = vmatpush1.bf16.msra.mxu0 0
    %2554 = vmatprep.subr.bf16.mxu0 0
    %2555 = vmatpush1.bf16.msra.mxu0 0
    %2556 = vmatprep.subr.bf16.mxu0 0
    %2557 = vmatpush1.bf16.msra.mxu0 0
    %2558 = vmatprep.subr.bf16.mxu0 0
    %2559 = vmatpush1.bf16.msra.mxu0 0
    %2560 = vmatprep.subr.bf16.mxu0 0
    %2561 = vmatpush1.bf16.msra.mxu0 0
    %2562 = vmatprep.subr.bf16.mxu0 0
    %2563 = vmatpush1.bf16.msra.mxu0 0
    %2564 = vmatprep.subr.bf16.mxu0 0
    %2565 = vmatpush1.bf16.msra.mxu0 0
    %2566 = vmatprep.subr.bf16.mxu0 0
    %2567 = vmatpush1.bf16.msra.mxu0 0
    %2568 = vmatprep.subr.bf16.mxu0 0
    %2569 = vmatpush1.bf16.msra.mxu0 0
    %2570 = vmatprep.subr.bf16.mxu0 0
    %2571 = vmatpush1.bf16.msra.mxu0 0
    %2572 = vmatprep.subr.bf16.mxu0 0
    %2573 = vmatpush1.bf16.msra.mxu0 0
    %2574 = vmatprep.subr.bf16.mxu0 0
    %2575 = vmatpush1.bf16.msra.mxu0 0
    %2576 = vmatprep.subr.bf16.mxu0 0
    %2577 = vmatpush1.bf16.msra.mxu0 0
    %2578 = vmatprep.mubr.bf16.mxu0 0
    %2579 = vmatmul.mubr.bf16.gmra.mrb[0].mxu0 %v1109
    %v2580 = vpop.f32.mrb[0].mxu0
    %v2581 = vadd.f32 0.0, %v2580
    %v2582 = vpop.f32.mrb[0].mxu0
    %v2583 = vadd.f32 0.0, %v2582
    %v2584 = vpop.f32.mrb[0].mxu0
    %v2585 = vpop.f32.mrb[0].mxu0
    %2586 = vdwg.mxu0
    %2587 = vmatprep.subr.bf16.mxu0 %v865
    %2588 = vmatpush1.bf16.msra.mxu0 %v864
    %2589 = vmatprep.subr.bf16.mxu0 %v944
    %2590 = vmatpush1.bf16.msra.mxu0 %v943
    %2591 = vmatprep.subr.bf16.mxu0 0
    %2592 = vmatpush1.bf16.msra.mxu0 0
    %2593 = vmatprep.subr.bf16.mxu0 0
    %2594 = vmatpush1.bf16.msra.mxu0 0
    %2595 = vmatprep.subr.bf16.mxu0 0
    %2596 = vmatpush1.bf16.msra.mxu0 0
    %2597 = vmatprep.subr.bf16.mxu0 0
    %2598 = vmatpush1.bf16.msra.mxu0 0
    %2599 = vmatprep.subr.bf16.mxu0 0
    %2600 = vmatpush1.bf16.msra.mxu0 0
    %2601 = vmatprep.subr.bf16.mxu0 0
    %2602 = vmatpush1.bf16.msra.mxu0 0
    %2603 = vmatprep.subr.bf16.mxu0 0
    %2604 = vmatpush1.bf16.msra.mxu0 0
    %2605 = vmatprep.subr.bf16.mxu0 0
    %2606 = vmatpush1.bf16.msra.mxu0 0
    %2607 = vmatprep.subr.bf16.mxu0 0
    %2608 = vmatpush1.bf16.msra.mxu0 0
    %2609 = vmatprep.subr.bf16.mxu0 0
    %2610 = vmatpush1.bf16.msra.mxu0 0
    %2611 = vmatprep.subr.bf16.mxu0 0
    %2612 = vmatpush1.bf16.msra.mxu0 0
    %2613 = vmatprep.subr.bf16.mxu0 0
    %2614 = vmatpush1.bf16.msra.mxu0 0
    %2615 = vmatprep.subr.bf16.mxu0 0
    %2616 = vmatpush1.bf16.msra.mxu0 0
    %2617 = vmatprep.subr.bf16.mxu0 0
    %2618 = vmatpush1.bf16.msra.mxu0 0
    %2619 = vmatprep.mubr.bf16.mxu0 0
    %2620 = vmatmul.mubr.bf16.gmra.mrb[0].mxu0 %v1109
    %v2621 = vpop.f32.mrb[0].mxu0
    %v2622 = vadd.f32 0.0, %v2621
    %v2623 = vpop.f32.mrb[0].mxu0
    %v2624 = vadd.f32 0.0, %v2623
    %v2625 = vpop.f32.mrb[0].mxu0
    %v2626 = vpop.f32.mrb[0].mxu0
    %2627 = vdwg.mxu0
    %2628 = vmatprep.subr.bf16.mxu0 %v867
    %2629 = vmatpush1.bf16.msra.mxu0 %v866
    %2630 = vmatprep.subr.bf16.mxu0 %v946
    %2631 = vmatpush1.bf16.msra.mxu0 %v945
    %2632 = vmatprep.subr.bf16.mxu0 0
    %2633 = vmatpush1.bf16.msra.mxu0 0
    %2634 = vmatprep.subr.bf16.mxu0 0
    %2635 = vmatpush1.bf16.msra.mxu0 0
    %2636 = vmatprep.subr.bf16.mxu0 0
    %2637 = vmatpush1.bf16.msra.mxu0 0
    %2638 = vmatprep.subr.bf16.mxu0 0
    %2639 = vmatpush1.bf16.msra.mxu0 0
    %2640 = vmatprep.subr.bf16.mxu0 0
    %2641 = vmatpush1.bf16.msra.mxu0 0
    %2642 = vmatprep.subr.bf16.mxu0 0
    %2643 = vmatpush1.bf16.msra.mxu0 0
    %2644 = vmatprep.subr.bf16.mxu0 0
    %2645 = vmatpush1.bf16.msra.mxu0 0
    %2646 = vmatprep.subr.bf16.mxu0 0
    %2647 = vmatpush1.bf16.msra.mxu0 0
    %2648 = vmatprep.subr.bf16.mxu0 0
    %2649 = vmatpush1.bf16.msra.mxu0 0
    %2650 = vmatprep.subr.bf16.mxu0 0
    %2651 = vmatpush1.bf16.msra.mxu0 0
    %2652 = vmatprep.subr.bf16.mxu0 0
    %2653 = vmatpush1.bf16.msra.mxu0 0
    %2654 = vmatprep.subr.bf16.mxu0 0
    %2655 = vmatpush1.bf16.msra.mxu0 0
    %2656 = vmatprep.subr.bf16.mxu0 0
    %2657 = vmatpush1.bf16.msra.mxu0 0
    %2658 = vmatprep.subr.bf16.mxu0 0
    %2659 = vmatpush1.bf16.msra.mxu0 0
    %2660 = vmatprep.mubr.bf16.mxu0 0
    %2661 = vmatmul.mubr.bf16.gmra.mrb[0].mxu0 %v1109
    %v2662 = vpop.f32.mrb[0].mxu0
    %v2663 = vadd.f32 0.0, %v2662
    %v2664 = vpop.f32.mrb[0].mxu0
    %v2665 = vadd.f32 0.0, %v2664
    %v2666 = vpop.f32.mrb[0].mxu0
    %v2667 = vpop.f32.mrb[0].mxu0
    %2668 = vdwg.mxu0
    %2669 = vmatprep.subr.bf16.mxu0 %v869
    %2670 = vmatpush1.bf16.msra.mxu0 %v868
    %2671 = vmatprep.subr.bf16.mxu0 %v948
    %2672 = vmatpush1.bf16.msra.mxu0 %v947
    %2673 = vmatprep.subr.bf16.mxu0 0
    %2674 = vmatpush1.bf16.msra.mxu0 0
    %2675 = vmatprep.subr.bf16.mxu0 0
    %2676 = vmatpush1.bf16.msra.mxu0 0
    %2677 = vmatprep.subr.bf16.mxu0 0
    %2678 = vmatpush1.bf16.msra.mxu0 0
    %2679 = vmatprep.subr.bf16.mxu0 0
    %2680 = vmatpush1.bf16.msra.mxu0 0
    %2681 = vmatprep.subr.bf16.mxu0 0
    %2682 = vmatpush1.bf16.msra.mxu0 0
    %2683 = vmatprep.subr.bf16.mxu0 0
    %2684 = vmatpush1.bf16.msra.mxu0 0
    %2685 = vmatprep.subr.bf16.mxu0 0
    %2686 = vmatpush1.bf16.msra.mxu0 0
    %2687 = vmatprep.subr.bf16.mxu0 0
    %2688 = vmatpush1.bf16.msra.mxu0 0
    %2689 = vmatprep.subr.bf16.mxu0 0
    %2690 = vmatpush1.bf16.msra.mxu0 0
    %2691 = vmatprep.subr.bf16.mxu0 0
    %2692 = vmatpush1.bf16.msra.mxu0 0
    %2693 = vmatprep.subr.bf16.mxu0 0
    %2694 = vmatpush1.bf16.msra.mxu0 0
    %2695 = vmatprep.subr.bf16.mxu0 0
    %2696 = vmatpush1.bf16.msra.mxu0 0
    %2697 = vmatprep.subr.bf16.mxu0 0
    %2698 = vmatpush1.bf16.msra.mxu0 0
    %2699 = vmatprep.subr.bf16.mxu0 0
    %2700 = vmatpush1.bf16.msra.mxu0 0
    %2701 = vmatprep.mubr.bf16.mxu0 0
    %2702 = vmatmul.mubr.bf16.gmra.mrb[0].mxu0 %v1109
    %v2703 = vpop.f32.mrb[0].mxu0
    %v2704 = vadd.f32 0.0, %v2703
    %v2705 = vpop.f32.mrb[0].mxu0
    %v2706 = vadd.f32 0.0, %v2705
    %v2707 = vpop.f32.mrb[0].mxu0
    %v2708 = vpop.f32.mrb[0].mxu0
    %2709 = vdwg.mxu0
    %2710 = vmatprep.subr.bf16.mxu0 0
    %2711 = vmatpush1.bf16.msra.mxu0 %v870
    %2712 = vmatprep.subr.bf16.mxu0 0
    %2713 = vmatpush1.bf16.msra.mxu0 %v949
    %2714 = vmatprep.subr.bf16.mxu0 0
    %2715 = vmatpush1.bf16.msra.mxu0 0
    %2716 = vmatprep.subr.bf16.mxu0 0
    %2717 = vmatpush1.bf16.msra.mxu0 0
    %2718 = vmatprep.subr.bf16.mxu0 0
    %2719 = vmatpush1.bf16.msra.mxu0 0
    %2720 = vmatprep.subr.bf16.mxu0 0
    %2721 = vmatpush1.bf16.msra.mxu0 0
    %2722 = vmatprep.subr.bf16.mxu0 0
    %2723 = vmatpush1.bf16.msra.mxu0 0
    %2724 = vmatprep.subr.bf16.mxu0 0
    %2725 = vmatpush1.bf16.msra.mxu0 0
    %2726 = vmatprep.subr.bf16.mxu0 0
    %2727 = vmatpush1.bf16.msra.mxu0 0
    %2728 = vmatprep.subr.bf16.mxu0 0
    %2729 = vmatpush1.bf16.msra.mxu0 0
    %2730 = vmatprep.subr.bf16.mxu0 0
    %2731 = vmatpush1.bf16.msra.mxu0 0
    %2732 = vmatprep.subr.bf16.mxu0 0
    %2733 = vmatpush1.bf16.msra.mxu0 0
    %2734 = vmatprep.subr.bf16.mxu0 0
    %2735 = vmatpush1.bf16.msra.mxu0 0
    %2736 = vmatprep.subr.bf16.mxu0 0
    %2737 = vmatpush1.bf16.msra.mxu0 0
    %2738 = vmatprep.subr.bf16.mxu0 0
    %2739 = vmatpush1.bf16.msra.mxu0 0
    %2740 = vmatprep.subr.bf16.mxu0 0
    %2741 = vmatpush1.bf16.msra.mxu0 0
    %2742 = vmatprep.mubr.bf16.mxu0 0
    %2743 = vmatmul.mubr.bf16.gmra.mrb[0].mxu0 %v1109
    %v2744 = vpop.f32.mrb[0].mxu0
    %v2745 = vadd.f32 0.0, %v2744
    %v2746 = vpop.f32.mrb[0].mxu0
    %v2747 = vpop.f32.mrb[0].mxu0
    %v2748 = vpop.f32.mrb[0].mxu0
    %2749 = vdwg.mxu0
    %v2750 = vmul.f32 %v1146, 0.01
    %v2751 = vmul.f32 %v1148, 0.01
    %v2752 = vmul.f32 %v1187, 0.01
    %v2753 = vmul.f32 %v1189, 0.01
    %v2754 = vmul.f32 %v1228, 0.01
    %v2755 = vmul.f32 %v1230, 0.01
    %v2756 = vmul.f32 %v1269, 0.01
    %v2757 = vmul.f32 %v1271, 0.01
    %v2758 = vmul.f32 %v1310, 0.01
    %v2759 = vmul.f32 %v1312, 0.01
    %v2760 = vmul.f32 %v1351, 0.01
    %v2761 = vmul.f32 %v1353, 0.01
    %v2762 = vmul.f32 %v1392, 0.01
    %v2763 = vmul.f32 %v1394, 0.01
    %v2764 = vmul.f32 %v1433, 0.01
    %v2765 = vmul.f32 %v1435, 0.01
    %v2766 = vmul.f32 %v1474, 0.01
    %v2767 = vmul.f32 %v1476, 0.01
    %v2768 = vmul.f32 %v1515, 0.01
    %v2769 = vmul.f32 %v1517, 0.01
    %v2770 = vmul.f32 %v1556, 0.01
    %v2771 = vmul.f32 %v1558, 0.01
    %v2772 = vmul.f32 %v1597, 0.01
    %v2773 = vmul.f32 %v1599, 0.01
    %v2774 = vmul.f32 %v1638, 0.01
    %v2775 = vmul.f32 %v1640, 0.01
    %v2776 = vmul.f32 %v1679, 0.01
    %v2777 = vmul.f32 %v1681, 0.01
    %v2778 = vmul.f32 %v1720, 0.01
    %v2779 = vmul.f32 %v1722, 0.01
    %v2780 = vmul.f32 %v1761, 0.01
    %v2781 = vmul.f32 %v1763, 0.01
    %v2782 = vmul.f32 %v1802, 0.01
    %v2783 = vmul.f32 %v1804, 0.01
    %v2784 = vmul.f32 %v1843, 0.01
    %v2785 = vmul.f32 %v1845, 0.01
    %v2786 = vmul.f32 %v1884, 0.01
    %v2787 = vmul.f32 %v1886, 0.01
    %v2788 = vmul.f32 %v1925, 0.01
    %v2789 = vmul.f32 %v1927, 0.01
    %v2790 = vmul.f32 %v1966, 0.01
    %v2791 = vmul.f32 %v1968, 0.01
    %v2792 = vmul.f32 %v2007, 0.01
    %v2793 = vmul.f32 %v2009, 0.01
    %v2794 = vmul.f32 %v2048, 0.01
    %v2795 = vmul.f32 %v2050, 0.01
    %v2796 = vmul.f32 %v2089, 0.01
    %v2797 = vmul.f32 %v2091, 0.01
    %v2798 = vmul.f32 %v2130, 0.01
    %v2799 = vmul.f32 %v2132, 0.01
    %v2800 = vmul.f32 %v2171, 0.01
    %v2801 = vmul.f32 %v2173, 0.01
    %v2802 = vmul.f32 %v2212, 0.01
    %v2803 = vmul.f32 %v2214, 0.01
    %v2804 = vmul.f32 %v2253, 0.01
    %v2805 = vmul.f32 %v2255, 0.01
    %v2806 = vmul.f32 %v2294, 0.01
    %v2807 = vmul.f32 %v2296, 0.01
    %v2808 = vmul.f32 %v2335, 0.01
    %v2809 = vmul.f32 %v2337, 0.01
    %v2810 = vmul.f32 %v2376, 0.01
    %v2811 = vmul.f32 %v2378, 0.01
    %v2812 = vmul.f32 %v2417, 0.01
    %v2813 = vmul.f32 %v2419, 0.01
    %v2814 = vmul.f32 %v2458, 0.01
    %v2815 = vmul.f32 %v2460, 0.01
    %v2816 = vmul.f32 %v2499, 0.01
    %v2817 = vmul.f32 %v2501, 0.01
    %v2818 = vmul.f32 %v2540, 0.01
    %v2819 = vmul.f32 %v2542, 0.01
    %v2820 = vmul.f32 %v2581, 0.01
    %v2821 = vmul.f32 %v2583, 0.01
    %v2822 = vmul.f32 %v2622, 0.01
    %v2823 = vmul.f32 %v2624, 0.01
    %v2824 = vmul.f32 %v2663, 0.01
    %v2825 = vmul.f32 %v2665, 0.01
    %v2826 = vmul.f32 %v2704, 0.01
    %v2827 = vmul.f32 %v2706, 0.01
    %v2828 = vmul.f32 %v2745, 0.01
    %v2829 = vmax.f32 %v1146, %v2750
    %v2830 = vmax.f32 %v1148, %v2751
    %v2831 = vmax.f32 %v1187, %v2752
    %v2832 = vmax.f32 %v1189, %v2753
    %v2833 = vmax.f32 %v1228, %v2754
    %v2834 = vmax.f32 %v1230, %v2755
    %v2835 = vmax.f32 %v1269, %v2756
    %v2836 = vmax.f32 %v1271, %v2757
    %v2837 = vmax.f32 %v1310, %v2758
    %v2838 = vmax.f32 %v1312, %v2759
    %v2839 = vmax.f32 %v1351, %v2760
    %v2840 = vmax.f32 %v1353, %v2761
    %v2841 = vmax.f32 %v1392, %v2762
    %v2842 = vmax.f32 %v1394, %v2763
    %v2843 = vmax.f32 %v1433, %v2764
    %v2844 = vmax.f32 %v1435, %v2765
    %v2845 = vmax.f32 %v1474, %v2766
    %v2846 = vmax.f32 %v1476, %v2767
    %v2847 = vmax.f32 %v1515, %v2768
    %v2848 = vmax.f32 %v1517, %v2769
    %v2849 = vmax.f32 %v1556, %v2770
    %v2850 = vmax.f32 %v1558, %v2771
    %v2851 = vmax.f32 %v1597, %v2772
    %v2852 = vmax.f32 %v1599, %v2773
    %v2853 = vmax.f32 %v1638, %v2774
    %v2854 = vmax.f32 %v1640, %v2775
    %v2855 = vmax.f32 %v1679, %v2776
    %v2856 = vmax.f32 %v1681, %v2777
    %v2857 = vmax.f32 %v1720, %v2778
    %v2858 = vmax.f32 %v1722, %v2779
    %v2859 = vmax.f32 %v1761, %v2780
    %v2860 = vmax.f32 %v1763, %v2781
    %v2861 = vmax.f32 %v1802, %v2782
    %v2862 = vmax.f32 %v1804, %v2783
    %v2863 = vmax.f32 %v1843, %v2784
    %v2864 = vmax.f32 %v1845, %v2785
    %v2865 = vmax.f32 %v1884, %v2786
    %v2866 = vmax.f32 %v1886, %v2787
    %v2867 = vmax.f32 %v1925, %v2788
    %v2868 = vmax.f32 %v1927, %v2789
    %v2869 = vmax.f32 %v1966, %v2790
    %v2870 = vmax.f32 %v1968, %v2791
    %v2871 = vmax.f32 %v2007, %v2792
    %v2872 = vmax.f32 %v2009, %v2793
    %v2873 = vmax.f32 %v2048, %v2794
    %v2874 = vmax.f32 %v2050, %v2795
    %v2875 = vmax.f32 %v2089, %v2796
    %v2876 = vmax.f32 %v2091, %v2797
    %v2877 = vmax.f32 %v2130, %v2798
    %v2878 = vmax.f32 %v2132, %v2799
    %v2879 = vmax.f32 %v2171, %v2800
    %v2880 = vmax.f32 %v2173, %v2801
    %v2881 = vmax.f32 %v2212, %v2802
    %v2882 = vmax.f32 %v2214, %v2803
    %v2883 = vmax.f32 %v2253, %v2804
    %v2884 = vmax.f32 %v2255, %v2805
    %v2885 = vmax.f32 %v2294, %v2806
    %v2886 = vmax.f32 %v2296, %v2807
    %v2887 = vmax.f32 %v2335, %v2808
    %v2888 = vmax.f32 %v2337, %v2809
    %v2889 = vmax.f32 %v2376, %v2810
    %v2890 = vmax.f32 %v2378, %v2811
    %v2891 = vmax.f32 %v2417, %v2812
    %v2892 = vmax.f32 %v2419, %v2813
    %v2893 = vmax.f32 %v2458, %v2814
    %v2894 = vmax.f32 %v2460, %v2815
    %v2895 = vmax.f32 %v2499, %v2816
    %v2896 = vmax.f32 %v2501, %v2817
    %v2897 = vmax.f32 %v2540, %v2818
    %v2898 = vmax.f32 %v2542, %v2819
    %v2899 = vmax.f32 %v2581, %v2820
    %v2900 = vmax.f32 %v2583, %v2821
    %v2901 = vmax.f32 %v2622, %v2822
    %v2902 = vmax.f32 %v2624, %v2823
    %v2903 = vmax.f32 %v2663, %v2824
    %v2904 = vmax.f32 %v2665, %v2825
    %v2905 = vmax.f32 %v2704, %v2826
    %v2906 = vmax.f32 %v2706, %v2827
    %v2907 = vmax.f32 %v2745, %v2828
    %v2908 = vpack.c.bf16 %v2829, %v2829
    %v2909 = vpack.c.bf16 %v2830, %v2830
    %v2910 = vpack.c.bf16 %v2831, %v2831
    %v2911 = vpack.c.bf16 %v2832, %v2832
    %v2912 = vpack.c.bf16 %v2833, %v2833
    %v2913 = vpack.c.bf16 %v2834, %v2834
    %v2914 = vpack.c.bf16 %v2835, %v2835
    %v2915 = vpack.c.bf16 %v2836, %v2836
    %v2916 = vpack.c.bf16 %v2837, %v2837
    %v2917 = vpack.c.bf16 %v2838, %v2838
    %v2918 = vpack.c.bf16 %v2839, %v2839
    %v2919 = vpack.c.bf16 %v2840, %v2840
    %v2920 = vpack.c.bf16 %v2841, %v2841
    %v2921 = vpack.c.bf16 %v2842, %v2842
    %v2922 = vpack.c.bf16 %v2843, %v2843
    %v2923 = vpack.c.bf16 %v2844, %v2844
    %v2924 = vpack.c.bf16 %v2845, %v2845
    %v2925 = vpack.c.bf16 %v2846, %v2846
    %v2926 = vpack.c.bf16 %v2847, %v2847
    %v2927 = vpack.c.bf16 %v2848, %v2848
    %v2928 = vpack.c.bf16 %v2849, %v2849
    %v2929 = vpack.c.bf16 %v2850, %v2850
    %v2930 = vpack.c.bf16 %v2851, %v2851
    %v2931 = vpack.c.bf16 %v2852, %v2852
    %v2932 = vpack.c.bf16 %v2853, %v2853
    %v2933 = vpack.c.bf16 %v2854, %v2854
    %v2934 = vpack.c.bf16 %v2855, %v2855
    %v2935 = vpack.c.bf16 %v2856, %v2856
    %v2936 = vpack.c.bf16 %v2857, %v2857
    %v2937 = vpack.c.bf16 %v2858, %v2858
    %v2938 = vpack.c.bf16 %v2859, %v2859
    %v2939 = vpack.c.bf16 %v2860, %v2860
    %v2940 = vpack.c.bf16 %v2861, %v2861
    %v2941 = vpack.c.bf16 %v2862, %v2862
    %v2942 = vpack.c.bf16 %v2863, %v2863
    %v2943 = vpack.c.bf16 %v2864, %v2864
    %v2944 = vpack.c.bf16 %v2865, %v2865
    %v2945 = vpack.c.bf16 %v2866, %v2866
    %v2946 = vpack.c.bf16 %v2867, %v2867
    %v2947 = vpack.c.bf16 %v2868, %v2868
    %v2948 = vpack.c.bf16 %v2869, %v2869
    %v2949 = vpack.c.bf16 %v2870, %v2870
    %v2950 = vpack.c.bf16 %v2871, %v2871
    %v2951 = vpack.c.bf16 %v2872, %v2872
    %v2952 = vpack.c.bf16 %v2873, %v2873
    %v2953 = vpack.c.bf16 %v2874, %v2874
    %v2954 = vpack.c.bf16 %v2875, %v2875
    %v2955 = vpack.c.bf16 %v2876, %v2876
    %v2956 = vpack.c.bf16 %v2877, %v2877
    %v2957 = vpack.c.bf16 %v2878, %v2878
    %v2958 = vpack.c.bf16 %v2879, %v2879
    %v2959 = vpack.c.bf16 %v2880, %v2880
    %v2960 = vpack.c.bf16 %v2881, %v2881
    %v2961 = vpack.c.bf16 %v2882, %v2882
    %v2962 = vpack.c.bf16 %v2883, %v2883
    %v2963 = vpack.c.bf16 %v2884, %v2884
    %v2964 = vpack.c.bf16 %v2885, %v2885
    %v2965 = vpack.c.bf16 %v2886, %v2886
    %v2966 = vpack.c.bf16 %v2887, %v2887
    %v2967 = vpack.c.bf16 %v2888, %v2888
    %v2968 = vpack.c.bf16 %v2889, %v2889
    %v2969 = vpack.c.bf16 %v2890, %v2890
    %v2970 = vpack.c.bf16 %v2891, %v2891
    %v2971 = vpack.c.bf16 %v2892, %v2892
    %v2972 = vpack.c.bf16 %v2893, %v2893
    %v2973 = vpack.c.bf16 %v2894, %v2894
    %v2974 = vpack.c.bf16 %v2895, %v2895
    %v2975 = vpack.c.bf16 %v2896, %v2896
    %v2976 = vpack.c.bf16 %v2897, %v2897
    %v2977 = vpack.c.bf16 %v2898, %v2898
    %v2978 = vpack.c.bf16 %v2899, %v2899
    %v2979 = vpack.c.bf16 %v2900, %v2900
    %v2980 = vpack.c.bf16 %v2901, %v2901
    %v2981 = vpack.c.bf16 %v2902, %v2902
    %v2982 = vpack.c.bf16 %v2903, %v2903
    %v2983 = vpack.c.bf16 %v2904, %v2904
    %v2984 = vpack.c.bf16 %v2905, %v2905
    %v2985 = vpack.c.bf16 %v2906, %v2906
    %v2986 = vpack.c.bf16 %v2907, %v2907
    %v3066 = vunpack.c.l.b16 %v2908
    %v3067 = vunpack.c.l.b16 %v2909
    %v3068 = vunpack.c.l.b16 %v2910
    %v3069 = vunpack.c.l.b16 %v2911
    %v3070 = vunpack.c.l.b16 %v2912
    %v3071 = vunpack.c.l.b16 %v2913
    %v3072 = vunpack.c.l.b16 %v2914
    %v3073 = vunpack.c.l.b16 %v2915
    %v3074 = vunpack.c.l.b16 %v2916
    %v3075 = vunpack.c.l.b16 %v2917
    %v3076 = vunpack.c.l.b16 %v2918
    %v3077 = vunpack.c.l.b16 %v2919
    %v3078 = vunpack.c.l.b16 %v2920
    %v3079 = vunpack.c.l.b16 %v2921
    %v3080 = vunpack.c.l.b16 %v2922
    %v3081 = vunpack.c.l.b16 %v2923
    %v3082 = vunpack.c.l.b16 %v2924
    %v3083 = vunpack.c.l.b16 %v2925
    %v3084 = vunpack.c.l.b16 %v2926
    %v3085 = vunpack.c.l.b16 %v2927
    %v3086 = vunpack.c.l.b16 %v2928
    %v3087 = vunpack.c.l.b16 %v2929
    %v3088 = vunpack.c.l.b16 %v2930
    %v3089 = vunpack.c.l.b16 %v2931
    %v3090 = vunpack.c.l.b16 %v2932
    %v3091 = vunpack.c.l.b16 %v2933
    %v3092 = vunpack.c.l.b16 %v2934
    %v3093 = vunpack.c.l.b16 %v2935
    %v3094 = vunpack.c.l.b16 %v2936
    %v3095 = vunpack.c.l.b16 %v2937
    %v3096 = vunpack.c.l.b16 %v2938
    %v3097 = vunpack.c.l.b16 %v2939
    %v3098 = vunpack.c.l.b16 %v2940
    %v3099 = vunpack.c.l.b16 %v2941
    %v3100 = vunpack.c.l.b16 %v2942
    %v3101 = vunpack.c.l.b16 %v2943
    %v3102 = vunpack.c.l.b16 %v2944
    %v3103 = vunpack.c.l.b16 %v2945
    %v3104 = vunpack.c.l.b16 %v2946
    %v3105 = vunpack.c.l.b16 %v2947
    %v3106 = vunpack.c.l.b16 %v2948
    %v3107 = vunpack.c.l.b16 %v2949
    %v3108 = vunpack.c.l.b16 %v2950
    %v3109 = vunpack.c.l.b16 %v2951
    %v3110 = vunpack.c.l.b16 %v2952
    %v3111 = vunpack.c.l.b16 %v2953
    %v3112 = vunpack.c.l.b16 %v2954
    %v3113 = vunpack.c.l.b16 %v2955
    %v3114 = vunpack.c.l.b16 %v2956
    %v3115 = vunpack.c.l.b16 %v2957
    %v3116 = vunpack.c.l.b16 %v2958
    %v3117 = vunpack.c.l.b16 %v2959
    %v3118 = vunpack.c.l.b16 %v2960
    %v3119 = vunpack.c.l.b16 %v2961
    %v3120 = vunpack.c.l.b16 %v2962
    %v3121 = vunpack.c.l.b16 %v2963
    %v3122 = vunpack.c.l.b16 %v2964
    %v3123 = vunpack.c.l.b16 %v2965
    %v3124 = vunpack.c.l.b16 %v2966
    %v3125 = vunpack.c.l.b16 %v2967
    %v3126 = vunpack.c.l.b16 %v2968
    %v3127 = vunpack.c.l.b16 %v2969
    %v3128 = vunpack.c.l.b16 %v2970
    %v3129 = vunpack.c.l.b16 %v2971
    %v3130 = vunpack.c.l.b16 %v2972
    %v3131 = vunpack.c.l.b16 %v2973
    %v3132 = vunpack.c.l.b16 %v2974
    %v3133 = vunpack.c.l.b16 %v2975
    %v3134 = vunpack.c.l.b16 %v2976
    %v3135 = vunpack.c.l.b16 %v2977
    %v3136 = vunpack.c.l.b16 %v2978
    %v3137 = vunpack.c.l.b16 %v2979
    %v3138 = vunpack.c.l.b16 %v2980
    %v3139 = vunpack.c.l.b16 %v2981
    %v3140 = vunpack.c.l.b16 %v2982
    %v3141 = vunpack.c.l.b16 %v2983
    %v3142 = vunpack.c.l.b16 %v2984
    %v3143 = vunpack.c.l.b16 %v2985
    %v3144 = vunpack.c.l.b16 %v2986
    %v3145 = vpack.c.b16 %v3067, %v3066
    %v3146 = vpack.c.b16 %v3069, %v3068
    %v3147 = vpack.c.b16 %v3071, %v3070
    %v3148 = vpack.c.b16 %v3073, %v3072
    %v3149 = vpack.c.b16 %v3075, %v3074
    %v3150 = vpack.c.b16 %v3077, %v3076
    %v3151 = vpack.c.b16 %v3079, %v3078
    %v3152 = vpack.c.b16 %v3081, %v3080
    %v3153 = vpack.c.b16 %v3083, %v3082
    %v3154 = vpack.c.b16 %v3085, %v3084
    %v3155 = vpack.c.b16 %v3087, %v3086
    %v3156 = vpack.c.b16 %v3089, %v3088
    %v3157 = vpack.c.b16 %v3091, %v3090
    %v3158 = vpack.c.b16 %v3093, %v3092
    %v3159 = vpack.c.b16 %v3095, %v3094
    %v3160 = vpack.c.b16 %v3097, %v3096
    %v3161 = vpack.c.b16 %v3099, %v3098
    %v3162 = vpack.c.b16 %v3101, %v3100
    %v3163 = vpack.c.b16 %v3103, %v3102
    %v3164 = vpack.c.b16 %v3105, %v3104
    %v3165 = vpack.c.b16 %v3107, %v3106
    %v3166 = vpack.c.b16 %v3109, %v3108
    %v3167 = vpack.c.b16 %v3111, %v3110
    %v3168 = vpack.c.b16 %v3113, %v3112
    %v3169 = vpack.c.b16 %v3115, %v3114
    %v3170 = vpack.c.b16 %v3117, %v3116
    %v3171 = vpack.c.b16 %v3119, %v3118
    %v3172 = vpack.c.b16 %v3121, %v3120
    %v3173 = vpack.c.b16 %v3123, %v3122
    %v3174 = vpack.c.b16 %v3125, %v3124
    %v3175 = vpack.c.b16 %v3127, %v3126
    %v3176 = vpack.c.b16 %v3129, %v3128
    %v3177 = vpack.c.b16 %v3131, %v3130
    %v3178 = vpack.c.b16 %v3133, %v3132
    %v3179 = vpack.c.b16 %v3135, %v3134
    %v3180 = vpack.c.b16 %v3137, %v3136
    %v3181 = vpack.c.b16 %v3139, %v3138
    %v3182 = vpack.c.b16 %v3141, %v3140
    %v3183 = vpack.c.b16 %v3143, %v3142
    %v3184 = vpack.c.b16 %v3144, %v3144
    %3225 = vst [vmem:[%s4] sm:$0xff] %v3145
    %3226 = vst [vmem:[%s4 + $0x8] sm:$0xff] %v3146
    %3227 = vst [vmem:[%s4 + $0x10] sm:$0xff] %v3147
    %3228 = vst [vmem:[%s4 + $0x18] sm:$0xff] %v3148
    %3229 = vst [vmem:[%s4 + $0x20] sm:$0xff] %v3149
    %3230 = vst [vmem:[%s4 + $0x28] sm:$0xff] %v3150
    %3231 = vst [vmem:[%s4 + $0x30] sm:$0xff] %v3151
    %3232 = vst [vmem:[%s4 + $0x38] sm:$0xff] %v3152
    %3233 = vst [vmem:[%s4 + $0x40] sm:$0xff] %v3153
    %3234 = vst [vmem:[%s4 + $0x48] sm:$0xff] %v3154
    %3235 = vst [vmem:[%s4 + $0x50] sm:$0xff] %v3155
    %3236 = vst [vmem:[%s4 + $0x58] sm:$0xff] %v3156
    %3237 = vst [vmem:[%s4 + $0x60] sm:$0xff] %v3157
    %3238 = vst [vmem:[%s4 + $0x68] sm:$0xff] %v3158
    %3239 = vst [vmem:[%s4 + $0x70] sm:$0xff] %v3159
    %3240 = vst [vmem:[%s4 + $0x78] sm:$0xff] %v3160
    %3241 = vst [vmem:[%s4 + $0x80] sm:$0xff] %v3161
    %3242 = vst [vmem:[%s4 + $0x88] sm:$0xff] %v3162
    %3243 = vst [vmem:[%s4 + $0x90] sm:$0xff] %v3163
    %3244 = vst [vmem:[%s4 + $0x98] sm:$0xff] %v3164
    %3245 = vst [vmem:[%s4 + $0xa0] sm:$0xff] %v3165
    %3246 = vst [vmem:[%s4 + $0xa8] sm:$0xff] %v3166
    %3247 = vst [vmem:[%s4 + $0xb0] sm:$0xff] %v3167
    %3248 = vst [vmem:[%s4 + $0xb8] sm:$0xff] %v3168
    %3249 = vst [vmem:[%s4 + $0xc0] sm:$0xff] %v3169
    %3250 = vst [vmem:[%s4 + $0xc8] sm:$0xff] %v3170
    %3251 = vst [vmem:[%s4 + $0xd0] sm:$0xff] %v3171
    %3252 = vst [vmem:[%s4 + $0xd8] sm:$0xff] %v3172
    %3253 = vst [vmem:[%s4 + $0xe0] sm:$0xff] %v3173
    %3254 = vst [vmem:[%s4 + $0xe8] sm:$0xff] %v3174
    %3255 = vst [vmem:[%s4 + $0xf0] sm:$0xff] %v3175
    %3256 = vst [vmem:[%s4 + $0xf8] sm:$0xff] %v3176
    %3257 = vst [vmem:[%s4 + $0x100] sm:$0xff] %v3177
    %3258 = vst [vmem:[%s4 + $0x108] sm:$0xff] %v3178
    %3259 = vst [vmem:[%s4 + $0x110] sm:$0xff] %v3179
    %3260 = vst [vmem:[%s4 + $0x118] sm:$0xff] %v3180
    %3261 = vst [vmem:[%s4 + $0x120] sm:$0xff] %v3181
    %3262 = vst [vmem:[%s4 + $0x128] sm:$0xff] %v3182
    %3263 = vst [vmem:[%s4 + $0x130] sm:$0xff] %v3183
    %vm3264 = vcmask 125952
    %3265 = vst.msk [vmem:[%s4 + $0x138] sm:$0xf] %vm3264, %v3184
    // Predicated region
    $region34: #{metric_model_forward.2} parent=1 // pred_check
      _
    $region35: #{metric_model_forward.2} parent=1 // pred_check_branch
      %3267 = sbr.rel (0) target = $region37
    $region36: #{metric_model_forward.2} parent=1 // pred_region
      _
    $region37: #{metric_model_forward.2} parent=1 // pred_fallthru
      _
    // Predicated region
    $region38: #{metric_model_forward.2} parent=1 // pred_check
      _
    $region39: #{metric_model_forward.2} parent=1 // pred_check_branch
      %3269 = sbr.rel (0) target = $region41
    $region40: #{metric_model_forward.2} parent=1 // pred_region
      _
    $region41: #{metric_model_forward.2} parent=1 // pred_fallthru
      _
    %3270 = vsyncpa [#allocation3], 1
    %3271 = vsyncpa [#allocation5], 1
    %3272 = vsyncpa [#allocation8], 1

// kernel: metric_model_forward.3
$region0: #{metric_model_forward.3}
  #allocation0 [shape = 'u32[]', space=smem, size = 0x4, offset = 0x4, fixed_abs, tag = 'smem constant byte address 0x4 - core index']
  #allocation1 [shape = 'u32[144,128]{1,0:T(1,128)}', space=vmem, size = 0x12000, scoped, tag = 'internal scratch']
  %s0 = inlined_call_operand.vmem [shape: bf16[8,10000], index: 0, kind: input, shape index: {}]
  %s1 = inlined_call_operand.hbm [shape: bf16[5,10000,128], index: 1, kind: input, shape index: {}]
  %s2 = inlined_call_operand.hbm [shape: f32[8,640], index: 2, kind: output, shape index: {}]
  %s3 = sld [smem:[#allocation0]]
  $region45: #{metric_model_forward.3} parent=0
    _
  %s5 = ssub.s32 1, %s3
  %s6 = scalar_select 0, %s5, %s3
  $region1: #{metric_model_forward.3} parent=0
    #allocation2 [shape = 'u8[5120000]{0}', space=vmem, size = 0x4e2000, scoped, tag = 'input window, operand 1']
    #allocation3 [shape = 's32[2]{0}', space=sflag, size = 0x8, scoped, tag = 'scoped memory for metric_model_forward.3']
    #allocation4 [shape = 's32[2]{0}', space=sflag, size = 0x8, scoped, tag = 'scoped memory for metric_model_forward.3']
    #allocation5 [shape = 'u8[8192]{0}', space=vmem, size = 0x2000, scoped, tag = 'output window, operand 0']
    %7 = vsyncpa [#allocation3], 0
    %s8 = scalar_lea.sflag [#allocation3], 1
    %9 = vsyncpa %s8, 0
    %10 = vsyncpa [#allocation4], 0
    %s11 = scalar_lea.sflag [#allocation4], 1
    %12 = vsyncpa %s11, 0
    loop: start=0, step=1, limit=7
    $region2: #{metric_model_forward.3} parent=1 // loop_pre_header
      _
    $region3: #{metric_model_forward.3} parent=1 // loop_header
      %s14 = sphi 0, %s18
      %p15 = scmp.ge.s32.totalorder %s14, 7
      %s22 = sphi 0, %s22
      %s24 = sphi 0, %s22
      %s25 = sphi 0, %s24
      %s39 = sphi 0, %s25
      %s45 = sphi 0, %s47
      %s48 = sphi 0, %s45
      %s49 = sphi 0, %s48
      %s65 = sphi 0, %s49
      %s71 = sphi 0, %s73
      %s74 = sphi 0, %s71
      %s75 = sphi 0, %s74
      %s91 = sphi 0, %s75
    $region4: #{metric_model_forward.3} parent=1 // loop_header_branch
      %17 = sbr.rel (%p15) target = $region8
    $region5: #{metric_model_forward.3} parent=1 // loop_body
      %s19 = ssub.s32 %s14, 1
      %s20 = ssub.s32 %s14, 2
      %s21 = sadd.s32 %s14, 1
      %s23 = sadd.s32 %s22, 1
      %p26 = scmp.eq.s32.totalorder %s14, 4
      %p27 = scmp.ne.s32.totalorder %s22, %s24
      %p28 = scmp.eq.s32.totalorder %s14, 0
      %p29 = por %p27, %p28
      %p30 = scmp.ne.s32.totalorder %s22, %s24
      %p31 = scmp.eq.s32.totalorder %s19, 4
      %p32 = por %p30, %p31
      %p33 = scmp.ne.s32.totalorder %s24, %s25
      %p34 = scmp.eq.s32.totalorder %s19, 0
      %p35 = por %p33, %p34
      %p36 = scmp.ne.s32.totalorder %s24, %s25
      %p37 = scmp.eq.s32.totalorder %s20, 4
      %p38 = por %p36, %p37
      %p40 = scmp.ne.s32.totalorder %s25, %s39
      %p41 = scmp.eq.s32.totalorder %s20, 0
      %p42 = por %p40, %p41
      %s43 = ssub.s32 %s14, %s21
      %p44 = scmp.eq.s32.totalorder %s43, 0
      %s46 = sadd.s32 %s45, 1
      %s47 = scalar_select %p44, %s45, %s46
      %p50 = pneg %p44
      %p51 = scmp.eq.s32.totalorder %s14, 4
      %p52 = por %p50, %p51
      %p53 = scmp.ne.s32.totalorder %s45, %s48
      %p54 = scmp.eq.s32.totalorder %s14, 0
      %p55 = por %p53, %p54
      %p56 = scmp.ne.s32.totalorder %s45, %s48
      %p57 = scmp.eq.s32.totalorder %s19, 4
      %p58 = por %p56, %p57
      %p59 = scmp.ne.s32.totalorder %s48, %s49
      %p60 = scmp.eq.s32.totalorder %s19, 0
      %p61 = por %p59, %p60
      %p62 = scmp.ne.s32.totalorder %s48, %s49
      %p63 = scmp.eq.s32.totalorder %s20, 4
      %p64 = por %p62, %p63
      %p66 = scmp.ne.s32.totalorder %s49, %s65
      %p67 = scmp.eq.s32.totalorder %s20, 0
      %p68 = por %p66, %p67
      %s69 = ssub.s32 %s14, %s21
      %p70 = scmp.eq.s32.totalorder %s69, 0
      %s72 = sadd.s32 %s71, 1
      %s73 = scalar_select %p70, %s71, %s72
      %p76 = pneg %p70
      %p77 = scmp.eq.s32.totalorder %s14, 4
      %p78 = por %p76, %p77
      %p79 = scmp.ne.s32.totalorder %s71, %s74
      %p80 = scmp.eq.s32.totalorder %s14, 0
      %p81 = por %p79, %p80
      %p82 = scmp.ne.s32.totalorder %s71, %s74
      %p83 = scmp.eq.s32.totalorder %s19, 4
      %p84 = por %p82, %p83
      %p85 = scmp.ne.s32.totalorder %s74, %s75
      %p86 = scmp.eq.s32.totalorder %s19, 0
      %p87 = por %p85, %p86
      %p88 = scmp.ne.s32.totalorder %s74, %s75
      %p89 = scmp.eq.s32.totalorder %s20, 4
      %p90 = por %p88, %p89
      %p92 = scmp.ne.s32.totalorder %s75, %s91
      %p93 = scmp.eq.s32.totalorder %s20, 0
      %p94 = por %p92, %p93
      %p95 = scmp.le.s32.totalorder 1, %s14
      %p96 = scmp.lt.s32.totalorder %s14, 6
      %p97 = pnand %p95, %p96
      %p98 = pneg %p97
      // Predicated region
      $region9: #{metric_model_forward.3} parent=5 // pred_check
        _
      $region10: #{metric_model_forward.3} parent=5 // pred_check_branch
        %100 = sbr.rel (%p97) target = $region12
      $region11: #{metric_model_forward.3} parent=5 // pred_region
        %s101 = ssub.s32 %s14, 1
        // Predicated region
        $region13: #{metric_model_forward.3} parent=11 // pred_check
          %p102 = pneg %p35
        $region14: #{metric_model_forward.3} parent=11 // pred_check_branch
          %104 = sbr.rel (%p102) target = $region16
        $region15: #{metric_model_forward.3} parent=11 // pred_region
          _
        $region16: #{metric_model_forward.3} parent=11 // pred_fallthru
          _
      $region12: #{metric_model_forward.3} parent=5 // pred_fallthru
        _
      %p105 = scmp.lt.s32.totalorder %s14, 5
      // Predicated region
      $region17: #{metric_model_forward.3} parent=5 // pred_check
        %p106 = pneg %p105
      $region18: #{metric_model_forward.3} parent=5 // pred_check_branch
        %108 = sbr.rel (%p106) target = $region20
      $region19: #{metric_model_forward.3} parent=5 // pred_region
        // Predicated region
        $region21: #{metric_model_forward.3} parent=19 // pred_check
          %p109 = pneg %p55
        $region22: #{metric_model_forward.3} parent=19 // pred_check_branch
          %111 = sbr.rel (%p109) target = $region24
        $region23: #{metric_model_forward.3} parent=19 // pred_region
          %s112 = sand.u32 %s45, 1
          %s113 = scalar_lea.sflag [#allocation3], %s112
          %s114 = sand.u32 %s45, 1
          %s115 = smul.addr %s114, 5000
          %s116 = scalar_lea.vmem [#allocation2], %s115
          %s118 = ssub.s32 80000, 80000
          %119 = vsyncadd %s113, %s118
          %s120 = smul.addr %s14, 1250
          %s121 = smul.addr %s120, 64
          %s122 = scalar_lea.hbm %s1, %s121
          %s123 = sshll.u32 %s116, 4
          %s124 = int_to_ptr.vmem [resolvable:$true] %s123
          %129 = dma.hbm_to_vmem [thread:$0]  %s122, 80000, %s124, %s113, 64, 64, 4
        $region24: #{metric_model_forward.3} parent=19 // pred_fallthru
          _
      $region20: #{metric_model_forward.3} parent=5 // pred_fallthru
        _
      %p130 = scmp.le.s32.totalorder 1, %s14
      %p131 = scmp.lt.s32.totalorder %s14, 6
      %p132 = pnand %p130, %p131
      %p133 = pneg %p132
      // Predicated region
      $region25: #{metric_model_forward.3} parent=5 // pred_check
        _
      $region26: #{metric_model_forward.3} parent=5 // pred_check_branch
        %135 = sbr.rel (%p132) target = $region28
      $region27: #{metric_model_forward.3} parent=5 // pred_region
        %s136 = ssub.s32 %s14, 1
        %s137 = sand.u32 %s48, 1
        %s138 = scalar_lea.sflag [#allocation3], %s137
        %s139 = sand.u32 %s48, 1
        %s140 = smul.addr %s139, 5000
        %s141 = scalar_lea.vmem [#allocation2], %s140
        // Predicated region
        $region29: #{metric_model_forward.3} parent=27 // pred_check
          %p142 = pneg %p61
        $region30: #{metric_model_forward.3} parent=27 // pred_check_branch
          %144 = sbr.rel (%p142) target = $region32
        $region31: #{metric_model_forward.3} parent=27 // pred_region
          %145 = dma.done %s138, 80000
        $region32: #{metric_model_forward.3} parent=27 // pred_fallthru
          _
        %p146 = pneg %p35
        %p147 = pneg %p32
        %s148 = sand.u32 %s48, 1
        %s149 = scalar_lea.sflag [#allocation3], %s148
        %s150 = sand.u32 %s48, 1
        %s151 = smul.addr %s150, 5000
        %s152 = scalar_lea.vmem [#allocation2], %s151
        %p153 = pneg %p61
        %p154 = pneg %p58
        %p155 = pneg %p87
        %p156 = pneg %p84
        %s157 = sand.u32 %s74, 1
        %s158 = scalar_lea.sflag [#allocation4], %s157
        %s159 = sand.u32 %s74, 1
        %s160 = smul.addr %s159, 8
        %s161 = scalar_lea.vmem [#allocation5], %s160
        %v163 = vld [vmem:[%s0] sm:$0xff]
        %v164 = vld [vmem:[%s0 + $0x8] sm:$0xff]
        %v165 = vld [vmem:[%s0 + $0x10] sm:$0xff]
        %v166 = vld [vmem:[%s0 + $0x18] sm:$0xff]
        %v167 = vld [vmem:[%s0 + $0x20] sm:$0xff]
        %v168 = vld [vmem:[%s0 + $0x28] sm:$0xff]
        %v169 = vld [vmem:[%s0 + $0x30] sm:$0xff]
        %v170 = vld [vmem:[%s0 + $0x38] sm:$0xff]
        %v171 = vld [vmem:[%s0 + $0x40] sm:$0xff]
        %v172 = vld [vmem:[%s0 + $0x48] sm:$0xff]
        %v173 = vld [vmem:[%s0 + $0x50] sm:$0xff]
        %v174 = vld [vmem:[%s0 + $0x58] sm:$0xff]
        %v175 = vld [vmem:[%s0 + $0x60] sm:$0xff]
        %v176 = vld [vmem:[%s0 + $0x68] sm:$0xff]
        %v177 = vld [vmem:[%s0 + $0x70] sm:$0xff]
        %v178 = vld [vmem:[%s0 + $0x78] sm:$0xff]
        %v179 = vld [vmem:[%s0 + $0x80] sm:$0xff]
        %v180 = vld [vmem:[%s0 + $0x88] sm:$0xff]
        %v181 = vld [vmem:[%s0 + $0x90] sm:$0xff]
        %v182 = vld [vmem:[%s0 + $0x98] sm:$0xff]
        %v183 = vld [vmem:[%s0 + $0xa0] sm:$0xff]
        %v184 = vld [vmem:[%s0 + $0xa8] sm:$0xff]
        %v185 = vld [vmem:[%s0 + $0xb0] sm:$0xff]
        %v186 = vld [vmem:[%s0 + $0xb8] sm:$0xff]
        %v187 = vld [vmem:[%s0 + $0xc0] sm:$0xff]
        %v188 = vld [vmem:[%s0 + $0xc8] sm:$0xff]
        %v189 = vld [vmem:[%s0 + $0xd0] sm:$0xff]
        %v190 = vld [vmem:[%s0 + $0xd8] sm:$0xff]
        %v191 = vld [vmem:[%s0 + $0xe0] sm:$0xff]
        %v192 = vld [vmem:[%s0 + $0xe8] sm:$0xff]
        %v193 = vld [vmem:[%s0 + $0xf0] sm:$0xff]
        %v194 = vld [vmem:[%s0 + $0xf8] sm:$0xff]
        %v195 = vld [vmem:[%s0 + $0x100] sm:$0xff]
        %v196 = vld [vmem:[%s0 + $0x108] sm:$0xff]
        %v197 = vld [vmem:[%s0 + $0x110] sm:$0xff]
        %v198 = vld [vmem:[%s0 + $0x118] sm:$0xff]
        %v199 = vld [vmem:[%s0 + $0x120] sm:$0xff]
        %v200 = vld [vmem:[%s0 + $0x128] sm:$0xff]
        %v201 = vld [vmem:[%s0 + $0x130] sm:$0xff]
        %v202 = vld [vmem:[%s0 + $0x138] sm:$0xf]
        %v203 = vld [vmem:[%s141] sm:$0xf]
        %v204 = vld [vmem:[%s141 + $0x4] sm:$0xf]
        %v205 = vld [vmem:[%s141 + $0x8] sm:$0xf]
        %v206 = vld [vmem:[%s141 + $0xc] sm:$0xf]
        %v207 = vld [vmem:[%s141 + $0x10] sm:$0xf]
        %v208 = vld [vmem:[%s141 + $0x14] sm:$0xf]
        %v209 = vld [vmem:[%s141 + $0x18] sm:$0xf]
        %v210 = vld [vmem:[%s141 + $0x1c] sm:$0xf]
        %v211 = vld [vmem:[%s141 + $0x20] sm:$0xf]
        %v212 = vld [vmem:[%s141 + $0x24] sm:$0xf]
        %v213 = vld [vmem:[%s141 + $0x28] sm:$0xf]
        %v214 = vld [vmem:[%s141 + $0x2c] sm:$0xf]
        %v215 = vld [vmem:[%s141 + $0x30] sm:$0xf]
        %v216 = vld [vmem:[%s141 + $0x34] sm:$0xf]
        %v217 = vld [vmem:[%s141 + $0x38] sm:$0xf]
        %v218 = vld [vmem:[%s141 + $0x3c] sm:$0xf]
        %v219 = vld [vmem:[%s141 + $0x40] sm:$0xf]
        %v220 = vld [vmem:[%s141 + $0x44] sm:$0xf]
        %v221 = vld [vmem:[%s141 + $0x48] sm:$0xf]
        %v222 = vld [vmem:[%s141 + $0x4c] sm:$0xf]
        %v223 = vld [vmem:[%s141 + $0x50] sm:$0xf]
        %v224 = vld [vmem:[%s141 + $0x54] sm:$0xf]
        %v225 = vld [vmem:[%s141 + $0x58] sm:$0xf]
        %v226 = vld [vmem:[%s141 + $0x5c] sm:$0xf]
        %v227 = vld [vmem:[%s141 + $0x60] sm:$0xf]
        %v228 = vld [vmem:[%s141 + $0x64] sm:$0xf]
        %v229 = vld [vmem:[%s141 + $0x68] sm:$0xf]
        %v230 = vld [vmem:[%s141 + $0x6c] sm:$0xf]
        %v231 = vld [vmem:[%s141 + $0x70] sm:$0xf]
        %v232 = vld [vmem:[%s141 + $0x74] sm:$0xf]
        %v233 = vld [vmem:[%s141 + $0x78] sm:$0xf]
        %v234 = vld [vmem:[%s141 + $0x7c] sm:$0xf]
        %v235 = vld [vmem:[%s141 + $0x80] sm:$0xf]
        %v236 = vld [vmem:[%s141 + $0x84] sm:$0xf]
        %v237 = vld [vmem:[%s141 + $0x88] sm:$0xf]
        %v238 = vld [vmem:[%s141 + $0x8c] sm:$0xf]
        %v239 = vld [vmem:[%s141 + $0x90] sm:$0xf]
        %v240 = vld [vmem:[%s141 + $0x94] sm:$0xf]
        %v241 = vld [vmem:[%s141 + $0x98] sm:$0xf]
        %v242 = vld [vmem:[%s141 + $0x9c] sm:$0xf]
        %v243 = vld [vmem:[%s141 + $0xa0] sm:$0xf]
        %v244 = vld [vmem:[%s141 + $0xa4] sm:$0xf]
        %v245 = vld [vmem:[%s141 + $0xa8] sm:$0xf]
        %v246 = vld [vmem:[%s141 + $0xac] sm:$0xf]
        %v247 = vld [vmem:[%s141 + $0xb0] sm:$0xf]
        %v248 = vld [vmem:[%s141 + $0xb4] sm:$0xf]
        %v249 = vld [vmem:[%s141 + $0xb8] sm:$0xf]
        %v250 = vld [vmem:[%s141 + $0xbc] sm:$0xf]
        %v251 = vld [vmem:[%s141 + $0xc0] sm:$0xf]
        %v252 = vld [vmem:[%s141 + $0xc4] sm:$0xf]
        %v253 = vld [vmem:[%s141 + $0xc8] sm:$0xf]
        %v254 = vld [vmem:[%s141 + $0xcc] sm:$0xf]
        %v255 = vld [vmem:[%s141 + $0xd0] sm:$0xf]
        %v256 = vld [vmem:[%s141 + $0xd4] sm:$0xf]
        %v257 = vld [vmem:[%s141 + $0xd8] sm:$0xf]
        %v258 = vld [vmem:[%s141 + $0xdc] sm:$0xf]
        %v259 = vld [vmem:[%s141 + $0xe0] sm:$0xf]
        %v260 = vld [vmem:[%s141 + $0xe4] sm:$0xf]
        %v261 = vld [vmem:[%s141 + $0xe8] sm:$0xf]
        %v262 = vld [vmem:[%s141 + $0xec] sm:$0xf]
        %v263 = vld [vmem:[%s141 + $0xf0] sm:$0xf]
        %v264 = vld [vmem:[%s141 + $0xf4] sm:$0xf]
        %v265 = vld [vmem:[%s141 + $0xf8] sm:$0xf]
        %v266 = vld [vmem:[%s141 + $0xfc] sm:$0xf]
        %v267 = vld [vmem:[%s141 + $0x100] sm:$0xf]
        %v268 = vld [vmem:[%s141 + $0x104] sm:$0xf]
        %v269 = vld [vmem:[%s141 + $0x108] sm:$0xf]
        %v270 = vld [vmem:[%s141 + $0x10c] sm:$0xf]
        %v271 = vld [vmem:[%s141 + $0x110] sm:$0xf]
        %v272 = vld [vmem:[%s141 + $0x114] sm:$0xf]
        %v273 = vld [vmem:[%s141 + $0x118] sm:$0xf]
        %v274 = vld [vmem:[%s141 + $0x11c] sm:$0xf]
        %v275 = vld [vmem:[%s141 + $0x120] sm:$0xf]
        %v276 = vld [vmem:[%s141 + $0x124] sm:$0xf]
        %v277 = vld [vmem:[%s141 + $0x128] sm:$0xf]
        %v278 = vld [vmem:[%s141 + $0x12c] sm:$0xf]
        %v279 = vld [vmem:[%s141 + $0x130] sm:$0xf]
        %v280 = vld [vmem:[%s141 + $0x134] sm:$0xf]
        %v281 = vld [vmem:[%s141 + $0x138] sm:$0xf]
        %v282 = vld [vmem:[%s141 + $0x13c] sm:$0xf]
        %v283 = vld [vmem:[%s141 + $0x140] sm:$0xf]
        %v284 = vld [vmem:[%s141 + $0x144] sm:$0xf]
        %v285 = vld [vmem:[%s141 + $0x148] sm:$0xf]
        %v286 = vld [vmem:[%s141 + $0x14c] sm:$0xf]
        %v287 = vld [vmem:[%s141 + $0x150] sm:$0xf]
        %v288 = vld [vmem:[%s141 + $0x154] sm:$0xf]
        %v289 = vld [vmem:[%s141 + $0x158] sm:$0xf]
        %v290 = vld [vmem:[%s141 + $0x15c] sm:$0xf]
        %v291 = vld [vmem:[%s141 + $0x160] sm:$0xf]
        %v292 = vld [vmem:[%s141 + $0x164] sm:$0xf]
        %v293 = vld [vmem:[%s141 + $0x168] sm:$0xf]
        %v294 = vld [vmem:[%s141 + $0x16c] sm:$0xf]
        %v295 = vld [vmem:[%s141 + $0x170] sm:$0xf]
        %v296 = vld [vmem:[%s141 + $0x174] sm:$0xf]
        %v297 = vld [vmem:[%s141 + $0x178] sm:$0xf]
        %v298 = vld [vmem:[%s141 + $0x17c] sm:$0xf]
        %v299 = vld [vmem:[%s141 + $0x180] sm:$0xf]
        %v300 = vld [vmem:[%s141 + $0x184] sm:$0xf]
        %v301 = vld [vmem:[%s141 + $0x188] sm:$0xf]
        %v302 = vld [vmem:[%s141 + $0x18c] sm:$0xf]
        %v303 = vld [vmem:[%s141 + $0x190] sm:$0xf]
        %v304 = vld [vmem:[%s141 + $0x194] sm:$0xf]
        %v305 = vld [vmem:[%s141 + $0x198] sm:$0xf]
        %v306 = vld [vmem:[%s141 + $0x19c] sm:$0xf]
        %v307 = vld [vmem:[%s141 + $0x1a0] sm:$0xf]
        %v308 = vld [vmem:[%s141 + $0x1a4] sm:$0xf]
        %v309 = vld [vmem:[%s141 + $0x1a8] sm:$0xf]
        %v310 = vld [vmem:[%s141 + $0x1ac] sm:$0xf]
        %v311 = vld [vmem:[%s141 + $0x1b0] sm:$0xf]
        %v312 = vld [vmem:[%s141 + $0x1b4] sm:$0xf]
        %v313 = vld [vmem:[%s141 + $0x1b8] sm:$0xf]
        %v314 = vld [vmem:[%s141 + $0x1bc] sm:$0xf]
        %v315 = vld [vmem:[%s141 + $0x1c0] sm:$0xf]
        %v316 = vld [vmem:[%s141 + $0x1c4] sm:$0xf]
        %v317 = vld [vmem:[%s141 + $0x1c8] sm:$0xf]
        %v318 = vld [vmem:[%s141 + $0x1cc] sm:$0xf]
        %v319 = vld [vmem:[%s141 + $0x1d0] sm:$0xf]
        %v320 = vld [vmem:[%s141 + $0x1d4] sm:$0xf]
        %v321 = vld [vmem:[%s141 + $0x1d8] sm:$0xf]
        %v322 = vld [vmem:[%s141 + $0x1dc] sm:$0xf]
        %v323 = vld [vmem:[%s141 + $0x1e0] sm:$0xf]
        %v324 = vld [vmem:[%s141 + $0x1e4] sm:$0xf]
        %v325 = vld [vmem:[%s141 + $0x1e8] sm:$0xf]
        %v326 = vld [vmem:[%s141 + $0x1ec] sm:$0xf]
        %v327 = vld [vmem:[%s141 + $0x1f0] sm:$0xf]
        %v328 = vld [vmem:[%s141 + $0x1f4] sm:$0xf]
        %v329 = vld [vmem:[%s141 + $0x1f8] sm:$0xf]
        %v330 = vld [vmem:[%s141 + $0x1fc] sm:$0xf]
        %v331 = vld [vmem:[%s141 + $0x200] sm:$0xf]
        %v332 = vld [vmem:[%s141 + $0x204] sm:$0xf]
        %v333 = vld [vmem:[%s141 + $0x208] sm:$0xf]
        %v334 = vld [vmem:[%s141 + $0x20c] sm:$0xf]
        %v335 = vld [vmem:[%s141 + $0x210] sm:$0xf]
        %v336 = vld [vmem:[%s141 + $0x214] sm:$0xf]
        %v337 = vld [vmem:[%s141 + $0x218] sm:$0xf]
        %v338 = vld [vmem:[%s141 + $0x21c] sm:$0xf]
        %v339 = vld [vmem:[%s141 + $0x220] sm:$0xf]
        %v340 = vld [vmem:[%s141 + $0x224] sm:$0xf]
        %v341 = vld [vmem:[%s141 + $0x228] sm:$0xf]
        %v342 = vld [vmem:[%s141 + $0x22c] sm:$0xf]
        %v343 = vld [vmem:[%s141 + $0x230] sm:$0xf]
        %v344 = vld [vmem:[%s141 + $0x234] sm:$0xf]
        %v345 = vld [vmem:[%s141 + $0x238] sm:$0xf]
        %v346 = vld [vmem:[%s141 + $0x23c] sm:$0xf]
        %v347 = vld [vmem:[%s141 + $0x240] sm:$0xf]
        %v348 = vld [vmem:[%s141 + $0x244] sm:$0xf]
        %v349 = vld [vmem:[%s141 + $0x248] sm:$0xf]
        %v350 = vld [vmem:[%s141 + $0x24c] sm:$0xf]
        %v351 = vld [vmem:[%s141 + $0x250] sm:$0xf]
        %v352 = vld [vmem:[%s141 + $0x254] sm:$0xf]
        %v353 = vld [vmem:[%s141 + $0x258] sm:$0xf]
        %v354 = vld [vmem:[%s141 + $0x25c] sm:$0xf]
        %v355 = vld [vmem:[%s141 + $0x260] sm:$0xf]
        %v356 = vld [vmem:[%s141 + $0x264] sm:$0xf]
        %v357 = vld [vmem:[%s141 + $0x268] sm:$0xf]
        %v358 = vld [vmem:[%s141 + $0x26c] sm:$0xf]
        %v359 = vld [vmem:[%s141 + $0x270] sm:$0xf]
        %v360 = vld [vmem:[%s141 + $0x274] sm:$0xf]
        %v361 = vld [vmem:[%s141 + $0x278] sm:$0xf]
        %v362 = vld [vmem:[%s141 + $0x27c] sm:$0xf]
        %v363 = vld [vmem:[%s141 + $0x280] sm:$0xf]
        %v364 = vld [vmem:[%s141 + $0x284] sm:$0xf]
        %v365 = vld [vmem:[%s141 + $0x288] sm:$0xf]
        %v366 = vld [vmem:[%s141 + $0x28c] sm:$0xf]
        %v367 = vld [vmem:[%s141 + $0x290] sm:$0xf]
        %v368 = vld [vmem:[%s141 + $0x294] sm:$0xf]
        %v369 = vld [vmem:[%s141 + $0x298] sm:$0xf]
        %v370 = vld [vmem:[%s141 + $0x29c] sm:$0xf]
        %v371 = vld [vmem:[%s141 + $0x2a0] sm:$0xf]
        %v372 = vld [vmem:[%s141 + $0x2a4] sm:$0xf]
        %v373 = vld [vmem:[%s141 + $0x2a8] sm:$0xf]
        %v374 = vld [vmem:[%s141 + $0x2ac] sm:$0xf]
        %v375 = vld [vmem:[%s141 + $0x2b0] sm:$0xf]
        %v376 = vld [vmem:[%s141 + $0x2b4] sm:$0xf]
        %v377 = vld [vmem:[%s141 + $0x2b8] sm:$0xf]
        %v378 = vld [vmem:[%s141 + $0x2bc] sm:$0xf]
        %v379 = vld [vmem:[%s141 + $0x2c0] sm:$0xf]
        %v380 = vld [vmem:[%s141 + $0x2c4] sm:$0xf]
        %v381 = vld [vmem:[%s141 + $0x2c8] sm:$0xf]
        %v382 = vld [vmem:[%s141 + $0x2cc] sm:$0xf]
        %v383 = vld [vmem:[%s141 + $0x2d0] sm:$0xf]
        %v384 = vld [vmem:[%s141 + $0x2d4] sm:$0xf]
        %v385 = vld [vmem:[%s141 + $0x2d8] sm:$0xf]
        %v386 = vld [vmem:[%s141 + $0x2dc] sm:$0xf]
        %v387 = vld [vmem:[%s141 + $0x2e0] sm:$0xf]
        %v388 = vld [vmem:[%s141 + $0x2e4] sm:$0xf]
        %v389 = vld [vmem:[%s141 + $0x2e8] sm:$0xf]
        %v390 = vld [vmem:[%s141 + $0x2ec] sm:$0xf]
        %v391 = vld [vmem:[%s141 + $0x2f0] sm:$0xf]
        %v392 = vld [vmem:[%s141 + $0x2f4] sm:$0xf]
        %v393 = vld [vmem:[%s141 + $0x2f8] sm:$0xf]
        %v394 = vld [vmem:[%s141 + $0x2fc] sm:$0xf]
        %v395 = vld [vmem:[%s141 + $0x300] sm:$0xf]
        %v396 = vld [vmem:[%s141 + $0x304] sm:$0xf]
        %v397 = vld [vmem:[%s141 + $0x308] sm:$0xf]
        %v398 = vld [vmem:[%s141 + $0x30c] sm:$0xf]
        %v399 = vld [vmem:[%s141 + $0x310] sm:$0xf]
        %v400 = vld [vmem:[%s141 + $0x314] sm:$0xf]
        %v401 = vld [vmem:[%s141 + $0x318] sm:$0xf]
        %v402 = vld [vmem:[%s141 + $0x31c] sm:$0xf]
        %v403 = vld [vmem:[%s141 + $0x320] sm:$0xf]
        %v404 = vld [vmem:[%s141 + $0x324] sm:$0xf]
        %v405 = vld [vmem:[%s141 + $0x328] sm:$0xf]
        %v406 = vld [vmem:[%s141 + $0x32c] sm:$0xf]
        %v407 = vld [vmem:[%s141 + $0x330] sm:$0xf]
        %v408 = vld [vmem:[%s141 + $0x334] sm:$0xf]
        %v409 = vld [vmem:[%s141 + $0x338] sm:$0xf]
        %v410 = vld [vmem:[%s141 + $0x33c] sm:$0xf]
        %v411 = vld [vmem:[%s141 + $0x340] sm:$0xf]
        %v412 = vld [vmem:[%s141 + $0x344] sm:$0xf]
        %v413 = vld [vmem:[%s141 + $0x348] sm:$0xf]
        %v414 = vld [vmem:[%s141 + $0x34c] sm:$0xf]
        %v415 = vld [vmem:[%s141 + $0x350] sm:$0xf]
        %v416 = vld [vmem:[%s141 + $0x354] sm:$0xf]
        %v417 = vld [vmem:[%s141 + $0x358] sm:$0xf]
        %v418 = vld [vmem:[%s141 + $0x35c] sm:$0xf]
        %v419 = vld [vmem:[%s141 + $0x360] sm:$0xf]
        %v420 = vld [vmem:[%s141 + $0x364] sm:$0xf]
        %v421 = vld [vmem:[%s141 + $0x368] sm:$0xf]
        %v422 = vld [vmem:[%s141 + $0x36c] sm:$0xf]
        %v423 = vld [vmem:[%s141 + $0x370] sm:$0xf]
        %v424 = vld [vmem:[%s141 + $0x374] sm:$0xf]
        %v425 = vld [vmem:[%s141 + $0x378] sm:$0xf]
        %v426 = vld [vmem:[%s141 + $0x37c] sm:$0xf]
        %v427 = vld [vmem:[%s141 + $0x380] sm:$0xf]
        %v428 = vld [vmem:[%s141 + $0x384] sm:$0xf]
        %v429 = vld [vmem:[%s141 + $0x388] sm:$0xf]
        %v430 = vld [vmem:[%s141 + $0x38c] sm:$0xf]
        %v431 = vld [vmem:[%s141 + $0x390] sm:$0xf]
        %v432 = vld [vmem:[%s141 + $0x394] sm:$0xf]
        %v433 = vld [vmem:[%s141 + $0x398] sm:$0xf]
        %v434 = vld [vmem:[%s141 + $0x39c] sm:$0xf]
        %v435 = vld [vmem:[%s141 + $0x3a0] sm:$0xf]
        %v436 = vld [vmem:[%s141 + $0x3a4] sm:$0xf]
        %v437 = vld [vmem:[%s141 + $0x3a8] sm:$0xf]
        %v438 = vld [vmem:[%s141 + $0x3ac] sm:$0xf]
        %v439 = vld [vmem:[%s141 + $0x3b0] sm:$0xf]
        %v440 = vld [vmem:[%s141 + $0x3b4] sm:$0xf]
        %v441 = vld [vmem:[%s141 + $0x3b8] sm:$0xf]
        %v442 = vld [vmem:[%s141 + $0x3bc] sm:$0xf]
        %v443 = vld [vmem:[%s141 + $0x3c0] sm:$0xf]
        %v444 = vld [vmem:[%s141 + $0x3c4] sm:$0xf]
        %v445 = vld [vmem:[%s141 + $0x3c8] sm:$0xf]
        %v446 = vld [vmem:[%s141 + $0x3cc] sm:$0xf]
        %v447 = vld [vmem:[%s141 + $0x3d0] sm:$0xf]
        %v448 = vld [vmem:[%s141 + $0x3d4] sm:$0xf]
        %v449 = vld [vmem:[%s141 + $0x3d8] sm:$0xf]
        %v450 = vld [vmem:[%s141 + $0x3dc] sm:$0xf]
        %v451 = vld [vmem:[%s141 + $0x3e0] sm:$0xf]
        %v452 = vld [vmem:[%s141 + $0x3e4] sm:$0xf]
        %v453 = vld [vmem:[%s141 + $0x3e8] sm:$0xf]
        %v454 = vld [vmem:[%s141 + $0x3ec] sm:$0xf]
        %v455 = vld [vmem:[%s141 + $0x3f0] sm:$0xf]
        %v456 = vld [vmem:[%s141 + $0x3f4] sm:$0xf]
        %v457 = vld [vmem:[%s141 + $0x3f8] sm:$0xf]
        %v458 = vld [vmem:[%s141 + $0x3fc] sm:$0xf]
        %v459 = vld [vmem:[%s141 + $0x400] sm:$0xf]
        %v460 = vld [vmem:[%s141 + $0x404] sm:$0xf]
        %v461 = vld [vmem:[%s141 + $0x408] sm:$0xf]
        %v462 = vld [vmem:[%s141 + $0x40c] sm:$0xf]
        %v463 = vld [vmem:[%s141 + $0x410] sm:$0xf]
        %v464 = vld [vmem:[%s141 + $0x414] sm:$0xf]
        %v465 = vld [vmem:[%s141 + $0x418] sm:$0xf]
        %v466 = vld [vmem:[%s141 + $0x41c] sm:$0xf]
        %v467 = vld [vmem:[%s141 + $0x420] sm:$0xf]
        %v468 = vld [vmem:[%s141 + $0x424] sm:$0xf]
        %v469 = vld [vmem:[%s141 + $0x428] sm:$0xf]
        %v470 = vld [vmem:[%s141 + $0x42c] sm:$0xf]
        %v471 = vld [vmem:[%s141 + $0x430] sm:$0xf]
        %v472 = vld [vmem:[%s141 + $0x434] sm:$0xf]
        %v473 = vld [vmem:[%s141 + $0x438] sm:$0xf]
        %v474 = vld [vmem:[%s141 + $0x43c] sm:$0xf]
        %v475 = vld [vmem:[%s141 + $0x440] sm:$0xf]
        %v476 = vld [vmem:[%s141 + $0x444] sm:$0xf]
        %v477 = vld [vmem:[%s141 + $0x448] sm:$0xf]
        %v478 = vld [vmem:[%s141 + $0x44c] sm:$0xf]
        %v479 = vld [vmem:[%s141 + $0x450] sm:$0xf]
        %v480 = vld [vmem:[%s141 + $0x454] sm:$0xf]
        %v481 = vld [vmem:[%s141 + $0x458] sm:$0xf]
        %v482 = vld [vmem:[%s141 + $0x45c] sm:$0xf]
        %v483 = vld [vmem:[%s141 + $0x460] sm:$0xf]
        %v484 = vld [vmem:[%s141 + $0x464] sm:$0xf]
        %v485 = vld [vmem:[%s141 + $0x468] sm:$0xf]
        %v486 = vld [vmem:[%s141 + $0x46c] sm:$0xf]
        %v487 = vld [vmem:[%s141 + $0x470] sm:$0xf]
        %v488 = vld [vmem:[%s141 + $0x474] sm:$0xf]
        %v489 = vld [vmem:[%s141 + $0x478] sm:$0xf]
        %v490 = vld [vmem:[%s141 + $0x47c] sm:$0xf]
        %v491 = vld [vmem:[%s141 + $0x480] sm:$0xf]
        %v492 = vld [vmem:[%s141 + $0x484] sm:$0xf]
        %v493 = vld [vmem:[%s141 + $0x488] sm:$0xf]
        %v494 = vld [vmem:[%s141 + $0x48c] sm:$0xf]
        %v495 = vld [vmem:[%s141 + $0x490] sm:$0xf]
        %v496 = vld [vmem:[%s141 + $0x494] sm:$0xf]
        %v497 = vld [vmem:[%s141 + $0x498] sm:$0xf]
        %v498 = vld [vmem:[%s141 + $0x49c] sm:$0xf]
        %v499 = vld [vmem:[%s141 + $0x4a0] sm:$0xf]
        %v500 = vld [vmem:[%s141 + $0x4a4] sm:$0xf]
        %v501 = vld [vmem:[%s141 + $0x4a8] sm:$0xf]
        %v502 = vld [vmem:[%s141 + $0x4ac] sm:$0xf]
        %v503 = vld [vmem:[%s141 + $0x4b0] sm:$0xf]
        %v504 = vld [vmem:[%s141 + $0x4b4] sm:$0xf]
        %v505 = vld [vmem:[%s141 + $0x4b8] sm:$0xf]
        %v506 = vld [vmem:[%s141 + $0x4bc] sm:$0xf]
        %v507 = vld [vmem:[%s141 + $0x4c0] sm:$0xf]
        %v508 = vld [vmem:[%s141 + $0x4c4] sm:$0xf]
        %v509 = vld [vmem:[%s141 + $0x4c8] sm:$0xf]
        %v510 = vld [vmem:[%s141 + $0x4cc] sm:$0xf]
        %v511 = vld [vmem:[%s141 + $0x4d0] sm:$0xf]
        %v512 = vld [vmem:[%s141 + $0x4d4] sm:$0xf]
        %v513 = vld [vmem:[%s141 + $0x4d8] sm:$0xf]
        %v514 = vld [vmem:[%s141 + $0x4dc] sm:$0xf]
        %v515 = vld [vmem:[%s141 + $0x4e0] sm:$0xf]
        %v516 = vld [vmem:[%s141 + $0x4e4] sm:$0xf]
        %v517 = vld [vmem:[%s141 + $0x4e8] sm:$0xf]
        %v518 = vld [vmem:[%s141 + $0x4ec] sm:$0xf]
        %v519 = vld [vmem:[%s141 + $0x4f0] sm:$0xf]
        %v520 = vld [vmem:[%s141 + $0x4f4] sm:$0xf]
        %v521 = vld [vmem:[%s141 + $0x4f8] sm:$0xf]
        %v522 = vld [vmem:[%s141 + $0x4fc] sm:$0xf]
        %v523 = vld [vmem:[%s141 + $0x500] sm:$0xf]
        %v524 = vld [vmem:[%s141 + $0x504] sm:$0xf]
        %v525 = vld [vmem:[%s141 + $0x508] sm:$0xf]
        %v526 = vld [vmem:[%s141 + $0x50c] sm:$0xf]
        %v527 = vld [vmem:[%s141 + $0x510] sm:$0xf]
        %v528 = vld [vmem:[%s141 + $0x514] sm:$0xf]
        %v529 = vld [vmem:[%s141 + $0x518] sm:$0xf]
        %v530 = vld [vmem:[%s141 + $0x51c] sm:$0xf]
        %v531 = vld [vmem:[%s141 + $0x520] sm:$0xf]
        %v532 = vld [vmem:[%s141 + $0x524] sm:$0xf]
        %v533 = vld [vmem:[%s141 + $0x528] sm:$0xf]
        %v534 = vld [vmem:[%s141 + $0x52c] sm:$0xf]
        %v535 = vld [vmem:[%s141 + $0x530] sm:$0xf]
        %v536 = vld [vmem:[%s141 + $0x534] sm:$0xf]
        %v537 = vld [vmem:[%s141 + $0x538] sm:$0xf]
        %v538 = vld [vmem:[%s141 + $0x53c] sm:$0xf]
        %v539 = vld [vmem:[%s141 + $0x540] sm:$0xf]
        %v540 = vld [vmem:[%s141 + $0x544] sm:$0xf]
        %v541 = vld [vmem:[%s141 + $0x548] sm:$0xf]
        %v542 = vld [vmem:[%s141 + $0x54c] sm:$0xf]
        %v543 = vld [vmem:[%s141 + $0x550] sm:$0xf]
        %v544 = vld [vmem:[%s141 + $0x554] sm:$0xf]
        %v545 = vld [vmem:[%s141 + $0x558] sm:$0xf]
        %v546 = vld [vmem:[%s141 + $0x55c] sm:$0xf]
        %v547 = vld [vmem:[%s141 + $0x560] sm:$0xf]
        %v548 = vld [vmem:[%s141 + $0x564] sm:$0xf]
        %v549 = vld [vmem:[%s141 + $0x568] sm:$0xf]
        %v550 = vld [vmem:[%s141 + $0x56c] sm:$0xf]
        %v551 = vld [vmem:[%s141 + $0x570] sm:$0xf]
        %v552 = vld [vmem:[%s141 + $0x574] sm:$0xf]
        %v553 = vld [vmem:[%s141 + $0x578] sm:$0xf]
        %v554 = vld [vmem:[%s141 + $0x57c] sm:$0xf]
        %v555 = vld [vmem:[%s141 + $0x580] sm:$0xf]
        %v556 = vld [vmem:[%s141 + $0x584] sm:$0xf]
        %v557 = vld [vmem:[%s141 + $0x588] sm:$0xf]
        %v558 = vld [vmem:[%s141 + $0x58c] sm:$0xf]
        %v559 = vld [vmem:[%s141 + $0x590] sm:$0xf]
        %v560 = vld [vmem:[%s141 + $0x594] sm:$0xf]
        %v561 = vld [vmem:[%s141 + $0x598] sm:$0xf]
        %v562 = vld [vmem:[%s141 + $0x59c] sm:$0xf]
        %v563 = vld [vmem:[%s141 + $0x5a0] sm:$0xf]
        %v564 = vld [vmem:[%s141 + $0x5a4] sm:$0xf]
        %v565 = vld [vmem:[%s141 + $0x5a8] sm:$0xf]
        %v566 = vld [vmem:[%s141 + $0x5ac] sm:$0xf]
        %v567 = vld [vmem:[%s141 + $0x5b0] sm:$0xf]
        %v568 = vld [vmem:[%s141 + $0x5b4] sm:$0xf]
        %v569 = vld [vmem:[%s141 + $0x5b8] sm:$0xf]
        %v570 = vld [vmem:[%s141 + $0x5bc] sm:$0xf]
        %v571 = vld [vmem:[%s141 + $0x5c0] sm:$0xf]
        %v572 = vld [vmem:[%s141 + $0x5c4] sm:$0xf]
        %v573 = vld [vmem:[%s141 + $0x5c8] sm:$0xf]
        %v574 = vld [vmem:[%s141 + $0x5cc] sm:$0xf]
        %v575 = vld [vmem:[%s141 + $0x5d0] sm:$0xf]
        %v576 = vld [vmem:[%s141 + $0x5d4] sm:$0xf]
        %v577 = vld [vmem:[%s141 + $0x5d8] sm:$0xf]
        %v578 = vld [vmem:[%s141 + $0x5dc] sm:$0xf]
        %v579 = vld [vmem:[%s141 + $0x5e0] sm:$0xf]
        %v580 = vld [vmem:[%s141 + $0x5e4] sm:$0xf]
        %v581 = vld [vmem:[%s141 + $0x5e8] sm:$0xf]
        %v582 = vld [vmem:[%s141 + $0x5ec] sm:$0xf]
        %v583 = vld [vmem:[%s141 + $0x5f0] sm:$0xf]
        %v584 = vld [vmem:[%s141 + $0x5f4] sm:$0xf]
        %v585 = vld [vmem:[%s141 + $0x5f8] sm:$0xf]
        %v586 = vld [vmem:[%s141 + $0x5fc] sm:$0xf]
        %v587 = vld [vmem:[%s141 + $0x600] sm:$0xf]
        %v588 = vld [vmem:[%s141 + $0x604] sm:$0xf]
        %v589 = vld [vmem:[%s141 + $0x608] sm:$0xf]
        %v590 = vld [vmem:[%s141 + $0x60c] sm:$0xf]
        %v591 = vld [vmem:[%s141 + $0x610] sm:$0xf]
        %v592 = vld [vmem:[%s141 + $0x614] sm:$0xf]
        %v593 = vld [vmem:[%s141 + $0x618] sm:$0xf]
        %v594 = vld [vmem:[%s141 + $0x61c] sm:$0xf]
        %v595 = vld [vmem:[%s141 + $0x620] sm:$0xf]
        %v596 = vld [vmem:[%s141 + $0x624] sm:$0xf]
        %v597 = vld [vmem:[%s141 + $0x628] sm:$0xf]
        %v598 = vld [vmem:[%s141 + $0x62c] sm:$0xf]
        %v599 = vld [vmem:[%s141 + $0x630] sm:$0xf]
        %v600 = vld [vmem:[%s141 + $0x634] sm:$0xf]
        %v601 = vld [vmem:[%s141 + $0x638] sm:$0xf]
        %v602 = vld [vmem:[%s141 + $0x63c] sm:$0xf]
        %v603 = vld [vmem:[%s141 + $0x640] sm:$0xf]
        %v604 = vld [vmem:[%s141 + $0x644] sm:$0xf]
        %v605 = vld [vmem:[%s141 + $0x648] sm:$0xf]
        %v606 = vld [vmem:[%s141 + $0x64c] sm:$0xf]
        %v607 = vld [vmem:[%s141 + $0x650] sm:$0xf]
        %v608 = vld [vmem:[%s141 + $0x654] sm:$0xf]
        %v609 = vld [vmem:[%s141 + $0x658] sm:$0xf]
        %v610 = vld [vmem:[%s141 + $0x65c] sm:$0xf]
        %v611 = vld [vmem:[%s141 + $0x660] sm:$0xf]
        %v612 = vld [vmem:[%s141 + $0x664] sm:$0xf]
        %v613 = vld [vmem:[%s141 + $0x668] sm:$0xf]
        %v614 = vld [vmem:[%s141 + $0x66c] sm:$0xf]
        %v615 = vld [vmem:[%s141 + $0x670] sm:$0xf]
        %v616 = vld [vmem:[%s141 + $0x674] sm:$0xf]
        %v617 = vld [vmem:[%s141 + $0x678] sm:$0xf]
        %v618 = vld [vmem:[%s141 + $0x67c] sm:$0xf]
        %v619 = vld [vmem:[%s141 + $0x680] sm:$0xf]
        %v620 = vld [vmem:[%s141 + $0x684] sm:$0xf]
        %v621 = vld [vmem:[%s141 + $0x688] sm:$0xf]
        %v622 = vld [vmem:[%s141 + $0x68c] sm:$0xf]
        %v623 = vld [vmem:[%s141 + $0x690] sm:$0xf]
        %v624 = vld [vmem:[%s141 + $0x694] sm:$0xf]
        %v625 = vld [vmem:[%s141 + $0x698] sm:$0xf]
        %v626 = vld [vmem:[%s141 + $0x69c] sm:$0xf]
        %v627 = vld [vmem:[%s141 + $0x6a0] sm:$0xf]
        %v628 = vld [vmem:[%s141 + $0x6a4] sm:$0xf]
        %v629 = vld [vmem:[%s141 + $0x6a8] sm:$0xf]
        %v630 = vld [vmem:[%s141 + $0x6ac] sm:$0xf]
        %v631 = vld [vmem:[%s141 + $0x6b0] sm:$0xf]
        %v632 = vld [vmem:[%s141 + $0x6b4] sm:$0xf]
        %v633 = vld [vmem:[%s141 + $0x6b8] sm:$0xf]
        %v634 = vld [vmem:[%s141 + $0x6bc] sm:$0xf]
        %v635 = vld [vmem:[%s141 + $0x6c0] sm:$0xf]
        %v636 = vld [vmem:[%s141 + $0x6c4] sm:$0xf]
        %v637 = vld [vmem:[%s141 + $0x6c8] sm:$0xf]
        %v638 = vld [vmem:[%s141 + $0x6cc] sm:$0xf]
        %v639 = vld [vmem:[%s141 + $0x6d0] sm:$0xf]
        %v640 = vld [vmem:[%s141 + $0x6d4] sm:$0xf]
        %v641 = vld [vmem:[%s141 + $0x6d8] sm:$0xf]
        %v642 = vld [vmem:[%s141 + $0x6dc] sm:$0xf]
        %v643 = vld [vmem:[%s141 + $0x6e0] sm:$0xf]
        %v644 = vld [vmem:[%s141 + $0x6e4] sm:$0xf]
        %v645 = vld [vmem:[%s141 + $0x6e8] sm:$0xf]
        %v646 = vld [vmem:[%s141 + $0x6ec] sm:$0xf]
        %v647 = vld [vmem:[%s141 + $0x6f0] sm:$0xf]
        %v648 = vld [vmem:[%s141 + $0x6f4] sm:$0xf]
        %v649 = vld [vmem:[%s141 + $0x6f8] sm:$0xf]
        %v650 = vld [vmem:[%s141 + $0x6fc] sm:$0xf]
        %v651 = vld [vmem:[%s141 + $0x700] sm:$0xf]
        %v652 = vld [vmem:[%s141 + $0x704] sm:$0xf]
        %v653 = vld [vmem:[%s141 + $0x708] sm:$0xf]
        %v654 = vld [vmem:[%s141 + $0x70c] sm:$0xf]
        %v655 = vld [vmem:[%s141 + $0x710] sm:$0xf]
        %v656 = vld [vmem:[%s141 + $0x714] sm:$0xf]
        %v657 = vld [vmem:[%s141 + $0x718] sm:$0xf]
        %v658 = vld [vmem:[%s141 + $0x71c] sm:$0xf]
        %v659 = vld [vmem:[%s141 + $0x720] sm:$0xf]
        %v660 = vld [vmem:[%s141 + $0x724] sm:$0xf]
        %v661 = vld [vmem:[%s141 + $0x728] sm:$0xf]
        %v662 = vld [vmem:[%s141 + $0x72c] sm:$0xf]
        %v663 = vld [vmem:[%s141 + $0x730] sm:$0xf]
        %v664 = vld [vmem:[%s141 + $0x734] sm:$0xf]
        %v665 = vld [vmem:[%s141 + $0x738] sm:$0xf]
        %v666 = vld [vmem:[%s141 + $0x73c] sm:$0xf]
        %v667 = vld [vmem:[%s141 + $0x740] sm:$0xf]
        %v668 = vld [vmem:[%s141 + $0x744] sm:$0xf]
        %v669 = vld [vmem:[%s141 + $0x748] sm:$0xf]
        %v670 = vld [vmem:[%s141 + $0x74c] sm:$0xf]
        %v671 = vld [vmem:[%s141 + $0x750] sm:$0xf]
        %v672 = vld [vmem:[%s141 + $0x754] sm:$0xf]
        %v673 = vld [vmem:[%s141 + $0x758] sm:$0xf]
        %v674 = vld [vmem:[%s141 + $0x75c] sm:$0xf]
        %v675 = vld [vmem:[%s141 + $0x760] sm:$0xf]
        %v676 = vld [vmem:[%s141 + $0x764] sm:$0xf]
        %v677 = vld [vmem:[%s141 + $0x768] sm:$0xf]
        %v678 = vld [vmem:[%s141 + $0x76c] sm:$0xf]
        %v679 = vld [vmem:[%s141 + $0x770] sm:$0xf]
        %v680 = vld [vmem:[%s141 + $0x774] sm:$0xf]
        %v681 = vld [vmem:[%s141 + $0x778] sm:$0xf]
        %v682 = vld [vmem:[%s141 + $0x77c] sm:$0xf]
        %v683 = vld [vmem:[%s141 + $0x780] sm:$0xf]
        %v684 = vld [vmem:[%s141 + $0x784] sm:$0xf]
        %v685 = vld [vmem:[%s141 + $0x788] sm:$0xf]
        %v686 = vld [vmem:[%s141 + $0x78c] sm:$0xf]
        %v687 = vld [vmem:[%s141 + $0x790] sm:$0xf]
        %v688 = vld [vmem:[%s141 + $0x794] sm:$0xf]
        %v689 = vld [vmem:[%s141 + $0x798] sm:$0xf]
        %v690 = vld [vmem:[%s141 + $0x79c] sm:$0xf]
        %v691 = vld [vmem:[%s141 + $0x7a0] sm:$0xf]
        %v692 = vld [vmem:[%s141 + $0x7a4] sm:$0xf]
        %v693 = vld [vmem:[%s141 + $0x7a8] sm:$0xf]
        %v694 = vld [vmem:[%s141 + $0x7ac] sm:$0xf]
        %v695 = vld [vmem:[%s141 + $0x7b0] sm:$0xf]
        %v696 = vld [vmem:[%s141 + $0x7b4] sm:$0xf]
        %v697 = vld [vmem:[%s141 + $0x7b8] sm:$0xf]
        %v698 = vld [vmem:[%s141 + $0x7bc] sm:$0xf]
        %v699 = vld [vmem:[%s141 + $0x7c0] sm:$0xf]
        %v700 = vld [vmem:[%s141 + $0x7c4] sm:$0xf]
        %v701 = vld [vmem:[%s141 + $0x7c8] sm:$0xf]
        %v702 = vld [vmem:[%s141 + $0x7cc] sm:$0xf]
        %v703 = vld [vmem:[%s141 + $0x7d0] sm:$0xf]
        %v704 = vld [vmem:[%s141 + $0x7d4] sm:$0xf]
        %v705 = vld [vmem:[%s141 + $0x7d8] sm:$0xf]
        %v706 = vld [vmem:[%s141 + $0x7dc] sm:$0xf]
        %v707 = vld [vmem:[%s141 + $0x7e0] sm:$0xf]
        %v708 = vld [vmem:[%s141 + $0x7e4] sm:$0xf]
        %v709 = vld [vmem:[%s141 + $0x7e8] sm:$0xf]
        %v710 = vld [vmem:[%s141 + $0x7ec] sm:$0xf]
        %v711 = vld [vmem:[%s141 + $0x7f0] sm:$0xf]
        %v712 = vld [vmem:[%s141 + $0x7f4] sm:$0xf]
        %v713 = vld [vmem:[%s141 + $0x7f8] sm:$0xf]
        %v714 = vld [vmem:[%s141 + $0x7fc] sm:$0xf]
        %v715 = vld [vmem:[%s141 + $0x800] sm:$0xf]
        %v716 = vld [vmem:[%s141 + $0x804] sm:$0xf]
        %v717 = vld [vmem:[%s141 + $0x808] sm:$0xf]
        %v718 = vld [vmem:[%s141 + $0x80c] sm:$0xf]
        %v719 = vld [vmem:[%s141 + $0x810] sm:$0xf]
        %v720 = vld [vmem:[%s141 + $0x814] sm:$0xf]
        %v721 = vld [vmem:[%s141 + $0x818] sm:$0xf]
        %v722 = vld [vmem:[%s141 + $0x81c] sm:$0xf]
        %v723 = vld [vmem:[%s141 + $0x820] sm:$0xf]
        %v724 = vld [vmem:[%s141 + $0x824] sm:$0xf]
        %v725 = vld [vmem:[%s141 + $0x828] sm:$0xf]
        %v726 = vld [vmem:[%s141 + $0x82c] sm:$0xf]
        %v727 = vld [vmem:[%s141 + $0x830] sm:$0xf]
        %v728 = vld [vmem:[%s141 + $0x834] sm:$0xf]
        %v729 = vld [vmem:[%s141 + $0x838] sm:$0xf]
        %v730 = vld [vmem:[%s141 + $0x83c] sm:$0xf]
        %v731 = vld [vmem:[%s141 + $0x840] sm:$0xf]
        %v732 = vld [vmem:[%s141 + $0x844] sm:$0xf]
        %v733 = vld [vmem:[%s141 + $0x848] sm:$0xf]
        %v734 = vld [vmem:[%s141 + $0x84c] sm:$0xf]
        %v735 = vld [vmem:[%s141 + $0x850] sm:$0xf]
        %v736 = vld [vmem:[%s141 + $0x854] sm:$0xf]
        %v737 = vld [vmem:[%s141 + $0x858] sm:$0xf]
        %v738 = vld [vmem:[%s141 + $0x85c] sm:$0xf]
        %v739 = vld [vmem:[%s141 + $0x860] sm:$0xf]
        %v740 = vld [vmem:[%s141 + $0x864] sm:$0xf]
        %v741 = vld [vmem:[%s141 + $0x868] sm:$0xf]
        %v742 = vld [vmem:[%s141 + $0x86c] sm:$0xf]
        %v743 = vld [vmem:[%s141 + $0x870] sm:$0xf]
        %v744 = vld [vmem:[%s141 + $0x874] sm:$0xf]
        %v745 = vld [vmem:[%s141 + $0x878] sm:$0xf]
        %v746 = vld [vmem:[%s141 + $0x87c] sm:$0xf]
        %v747 = vld [vmem:[%s141 + $0x880] sm:$0xf]
        %v748 = vld [vmem:[%s141 + $0x884] sm:$0xf]
        %v749 = vld [vmem:[%s141 + $0x888] sm:$0xf]
        %v750 = vld [vmem:[%s141 + $0x88c] sm:$0xf]
        %v751 = vld [vmem:[%s141 + $0x890] sm:$0xf]
        %v752 = vld [vmem:[%s141 + $0x894] sm:$0xf]
        %v753 = vld [vmem:[%s141 + $0x898] sm:$0xf]
        %v754 = vld [vmem:[%s141 + $0x89c] sm:$0xf]
        %v755 = vld [vmem:[%s141 + $0x8a0] sm:$0xf]
        %v756 = vld [vmem:[%s141 + $0x8a4] sm:$0xf]
        %v757 = vld [vmem:[%s141 + $0x8a8] sm:$0xf]
        %v758 = vld [vmem:[%s141 + $0x8ac] sm:$0xf]
        %v759 = vld [vmem:[%s141 + $0x8b0] sm:$0xf]
        %v760 = vld [vmem:[%s141 + $0x8b4] sm:$0xf]
        %v761 = vld [vmem:[%s141 + $0x8b8] sm:$0xf]
        %v762 = vld [vmem:[%s141 + $0x8bc] sm:$0xf]
        %v763 = vld [vmem:[%s141 + $0x8c0] sm:$0xf]
        %v764 = vld [vmem:[%s141 + $0x8c4] sm:$0xf]
        %v765 = vld [vmem:[%s141 + $0x8c8] sm:$0xf]
        %v766 = vld [vmem:[%s141 + $0x8cc] sm:$0xf]
        %v767 = vld [vmem:[%s141 + $0x8d0] sm:$0xf]
        %v768 = vld [vmem:[%s141 + $0x8d4] sm:$0xf]
        %v769 = vld [vmem:[%s141 + $0x8d8] sm:$0xf]
        %v770 = vld [vmem:[%s141 + $0x8dc] sm:$0xf]
        %v771 = vld [vmem:[%s141 + $0x8e0] sm:$0xf]
        %v772 = vld [vmem:[%s141 + $0x8e4] sm:$0xf]
        %v773 = vld [vmem:[%s141 + $0x8e8] sm:$0xf]
        %v774 = vld [vmem:[%s141 + $0x8ec] sm:$0xf]
        %v775 = vld [vmem:[%s141 + $0x8f0] sm:$0xf]
        %v776 = vld [vmem:[%s141 + $0x8f4] sm:$0xf]
        %v777 = vld [vmem:[%s141 + $0x8f8] sm:$0xf]
        %v778 = vld [vmem:[%s141 + $0x8fc] sm:$0xf]
        %v779 = vld [vmem:[%s141 + $0x900] sm:$0xf]
        %v780 = vld [vmem:[%s141 + $0x904] sm:$0xf]
        %v781 = vld [vmem:[%s141 + $0x908] sm:$0xf]
        %v782 = vld [vmem:[%s141 + $0x90c] sm:$0xf]
        %v783 = vld [vmem:[%s141 + $0x910] sm:$0xf]
        %v784 = vld [vmem:[%s141 + $0x914] sm:$0xf]
        %v785 = vld [vmem:[%s141 + $0x918] sm:$0xf]
        %v786 = vld [vmem:[%s141 + $0x91c] sm:$0xf]
        %v787 = vld [vmem:[%s141 + $0x920] sm:$0xf]
        %v788 = vld [vmem:[%s141 + $0x924] sm:$0xf]
        %v789 = vld [vmem:[%s141 + $0x928] sm:$0xf]
        %v790 = vld [vmem:[%s141 + $0x92c] sm:$0xf]
        %v791 = vld [vmem:[%s141 + $0x930] sm:$0xf]
        %v792 = vld [vmem:[%s141 + $0x934] sm:$0xf]
        %v793 = vld [vmem:[%s141 + $0x938] sm:$0xf]
        %v794 = vld [vmem:[%s141 + $0x93c] sm:$0xf]
        %v795 = vld [vmem:[%s141 + $0x940] sm:$0xf]
        %v796 = vld [vmem:[%s141 + $0x944] sm:$0xf]
        %v797 = vld [vmem:[%s141 + $0x948] sm:$0xf]
        %v798 = vld [vmem:[%s141 + $0x94c] sm:$0xf]
        %v799 = vld [vmem:[%s141 + $0x950] sm:$0xf]
        %v800 = vld [vmem:[%s141 + $0x954] sm:$0xf]
        %v801 = vld [vmem:[%s141 + $0x958] sm:$0xf]
        %v802 = vld [vmem:[%s141 + $0x95c] sm:$0xf]
        %v803 = vld [vmem:[%s141 + $0x960] sm:$0xf]
        %v804 = vld [vmem:[%s141 + $0x964] sm:$0xf]
        %v805 = vld [vmem:[%s141 + $0x968] sm:$0xf]
        %v806 = vld [vmem:[%s141 + $0x96c] sm:$0xf]
        %v807 = vld [vmem:[%s141 + $0x970] sm:$0xf]
        %v808 = vld [vmem:[%s141 + $0x974] sm:$0xf]
        %v809 = vld [vmem:[%s141 + $0x978] sm:$0xf]
        %v810 = vld [vmem:[%s141 + $0x97c] sm:$0xf]
        %v811 = vld [vmem:[%s141 + $0x980] sm:$0xf]
        %v812 = vld [vmem:[%s141 + $0x984] sm:$0xf]
        %v813 = vld [vmem:[%s141 + $0x988] sm:$0xf]
        %v814 = vld [vmem:[%s141 + $0x98c] sm:$0xf]
        %v815 = vld [vmem:[%s141 + $0x990] sm:$0xf]
        %v816 = vld [vmem:[%s141 + $0x994] sm:$0xf]
        %v817 = vld [vmem:[%s141 + $0x998] sm:$0xf]
        %v818 = vld [vmem:[%s141 + $0x99c] sm:$0xf]
        %v819 = vld [vmem:[%s141 + $0x9a0] sm:$0xf]
        %v820 = vld [vmem:[%s141 + $0x9a4] sm:$0xf]
        %v821 = vld [vmem:[%s141 + $0x9a8] sm:$0xf]
        %v822 = vld [vmem:[%s141 + $0x9ac] sm:$0xf]
        %v823 = vld [vmem:[%s141 + $0x9b0] sm:$0xf]
        %v824 = vld [vmem:[%s141 + $0x9b4] sm:$0xf]
        %v825 = vld [vmem:[%s141 + $0x9b8] sm:$0xf]
        %v826 = vld [vmem:[%s141 + $0x9bc] sm:$0xf]
        %v827 = vld [vmem:[%s141 + $0x9c0] sm:$0xf]
        %v828 = vld [vmem:[%s141 + $0x9c4] sm:$0xf]
        %v829 = vld [vmem:[%s141 + $0x9c8] sm:$0xf]
        %v830 = vld [vmem:[%s141 + $0x9cc] sm:$0xf]
        %v831 = vld [vmem:[%s141 + $0x9d0] sm:$0xf]
        %v832 = vld [vmem:[%s141 + $0x9d4] sm:$0xf]
        %v833 = vld [vmem:[%s141 + $0x9d8] sm:$0xf]
        %v834 = vld [vmem:[%s141 + $0x9dc] sm:$0xf]
        %v835 = vld [vmem:[%s141 + $0x9e0] sm:$0xf]
        %v836 = vld [vmem:[%s141 + $0x9e4] sm:$0xf]
        %v837 = vld [vmem:[%s141 + $0x9e8] sm:$0xf]
        %v838 = vld [vmem:[%s141 + $0x9ec] sm:$0xf]
        %v839 = vld [vmem:[%s141 + $0x9f0] sm:$0xf]
        %v840 = vld [vmem:[%s141 + $0x9f4] sm:$0xf]
        %v841 = vld [vmem:[%s141 + $0x9f8] sm:$0xf]
        %v842 = vld [vmem:[%s141 + $0x9fc] sm:$0xf]
        %v843 = vld [vmem:[%s141 + $0xa00] sm:$0xf]
        %v844 = vld [vmem:[%s141 + $0xa04] sm:$0xf]
        %v845 = vld [vmem:[%s141 + $0xa08] sm:$0xf]
        %v846 = vld [vmem:[%s141 + $0xa0c] sm:$0xf]
        %v847 = vld [vmem:[%s141 + $0xa10] sm:$0xf]
        %v848 = vld [vmem:[%s141 + $0xa14] sm:$0xf]
        %v849 = vld [vmem:[%s141 + $0xa18] sm:$0xf]
        %v850 = vld [vmem:[%s141 + $0xa1c] sm:$0xf]
        %v851 = vld [vmem:[%s141 + $0xa20] sm:$0xf]
        %v852 = vld [vmem:[%s141 + $0xa24] sm:$0xf]
        %v853 = vld [vmem:[%s141 + $0xa28] sm:$0xf]
        %v854 = vld [vmem:[%s141 + $0xa2c] sm:$0xf]
        %v855 = vld [vmem:[%s141 + $0xa30] sm:$0xf]
        %v856 = vld [vmem:[%s141 + $0xa34] sm:$0xf]
        %v857 = vld [vmem:[%s141 + $0xa38] sm:$0xf]
        %v858 = vld [vmem:[%s141 + $0xa3c] sm:$0xf]
        %v859 = vld [vmem:[%s141 + $0xa40] sm:$0xf]
        %v860 = vld [vmem:[%s141 + $0xa44] sm:$0xf]
        %v861 = vld [vmem:[%s141 + $0xa48] sm:$0xf]
        %v862 = vld [vmem:[%s141 + $0xa4c] sm:$0xf]
        %v863 = vld [vmem:[%s141 + $0xa50] sm:$0xf]
        %v864 = vld [vmem:[%s141 + $0xa54] sm:$0xf]
        %v865 = vld [vmem:[%s141 + $0xa58] sm:$0xf]
        %v866 = vld [vmem:[%s141 + $0xa5c] sm:$0xf]
        %v867 = vld [vmem:[%s141 + $0xa60] sm:$0xf]
        %v868 = vld [vmem:[%s141 + $0xa64] sm:$0xf]
        %v869 = vld [vmem:[%s141 + $0xa68] sm:$0xf]
        %v870 = vld [vmem:[%s141 + $0xa6c] sm:$0xf]
        %v871 = vld [vmem:[%s141 + $0xa70] sm:$0xf]
        %v872 = vld [vmem:[%s141 + $0xa74] sm:$0xf]
        %v873 = vld [vmem:[%s141 + $0xa78] sm:$0xf]
        %v874 = vld [vmem:[%s141 + $0xa7c] sm:$0xf]
        %v875 = vld [vmem:[%s141 + $0xa80] sm:$0xf]
        %v876 = vld [vmem:[%s141 + $0xa84] sm:$0xf]
        %v877 = vld [vmem:[%s141 + $0xa88] sm:$0xf]
        %v878 = vld [vmem:[%s141 + $0xa8c] sm:$0xf]
        %v879 = vld [vmem:[%s141 + $0xa90] sm:$0xf]
        %v880 = vld [vmem:[%s141 + $0xa94] sm:$0xf]
        %v881 = vld [vmem:[%s141 + $0xa98] sm:$0xf]
        %v882 = vld [vmem:[%s141 + $0xa9c] sm:$0xf]
        %v883 = vld [vmem:[%s141 + $0xaa0] sm:$0xf]
        %v884 = vld [vmem:[%s141 + $0xaa4] sm:$0xf]
        %v885 = vld [vmem:[%s141 + $0xaa8] sm:$0xf]
        %v886 = vld [vmem:[%s141 + $0xaac] sm:$0xf]
        %v887 = vld [vmem:[%s141 + $0xab0] sm:$0xf]
        %v888 = vld [vmem:[%s141 + $0xab4] sm:$0xf]
        %v889 = vld [vmem:[%s141 + $0xab8] sm:$0xf]
        %v890 = vld [vmem:[%s141 + $0xabc] sm:$0xf]
        %v891 = vld [vmem:[%s141 + $0xac0] sm:$0xf]
        %v892 = vld [vmem:[%s141 + $0xac4] sm:$0xf]
        %v893 = vld [vmem:[%s141 + $0xac8] sm:$0xf]
        %v894 = vld [vmem:[%s141 + $0xacc] sm:$0xf]
        %v895 = vld [vmem:[%s141 + $0xad0] sm:$0xf]
        %v896 = vld [vmem:[%s141 + $0xad4] sm:$0xf]
        %v897 = vld [vmem:[%s141 + $0xad8] sm:$0xf]
        %v898 = vld [vmem:[%s141 + $0xadc] sm:$0xf]
        %v899 = vld [vmem:[%s141 + $0xae0] sm:$0xf]
        %v900 = vld [vmem:[%s141 + $0xae4] sm:$0xf]
        %v901 = vld [vmem:[%s141 + $0xae8] sm:$0xf]
        %v902 = vld [vmem:[%s141 + $0xaec] sm:$0xf]
        %v903 = vld [vmem:[%s141 + $0xaf0] sm:$0xf]
        %v904 = vld [vmem:[%s141 + $0xaf4] sm:$0xf]
        %v905 = vld [vmem:[%s141 + $0xaf8] sm:$0xf]
        %v906 = vld [vmem:[%s141 + $0xafc] sm:$0xf]
        %v907 = vld [vmem:[%s141 + $0xb00] sm:$0xf]
        %v908 = vld [vmem:[%s141 + $0xb04] sm:$0xf]
        %v909 = vld [vmem:[%s141 + $0xb08] sm:$0xf]
        %v910 = vld [vmem:[%s141 + $0xb0c] sm:$0xf]
        %v911 = vld [vmem:[%s141 + $0xb10] sm:$0xf]
        %v912 = vld [vmem:[%s141 + $0xb14] sm:$0xf]
        %v913 = vld [vmem:[%s141 + $0xb18] sm:$0xf]
        %v914 = vld [vmem:[%s141 + $0xb1c] sm:$0xf]
        %v915 = vld [vmem:[%s141 + $0xb20] sm:$0xf]
        %v916 = vld [vmem:[%s141 + $0xb24] sm:$0xf]
        %v917 = vld [vmem:[%s141 + $0xb28] sm:$0xf]
        %v918 = vld [vmem:[%s141 + $0xb2c] sm:$0xf]
        %v919 = vld [vmem:[%s141 + $0xb30] sm:$0xf]
        %v920 = vld [vmem:[%s141 + $0xb34] sm:$0xf]
        %v921 = vld [vmem:[%s141 + $0xb38] sm:$0xf]
        %v922 = vld [vmem:[%s141 + $0xb3c] sm:$0xf]
        %v923 = vld [vmem:[%s141 + $0xb40] sm:$0xf]
        %v924 = vld [vmem:[%s141 + $0xb44] sm:$0xf]
        %v925 = vld [vmem:[%s141 + $0xb48] sm:$0xf]
        %v926 = vld [vmem:[%s141 + $0xb4c] sm:$0xf]
        %v927 = vld [vmem:[%s141 + $0xb50] sm:$0xf]
        %v928 = vld [vmem:[%s141 + $0xb54] sm:$0xf]
        %v929 = vld [vmem:[%s141 + $0xb58] sm:$0xf]
        %v930 = vld [vmem:[%s141 + $0xb5c] sm:$0xf]
        %v931 = vld [vmem:[%s141 + $0xb60] sm:$0xf]
        %v932 = vld [vmem:[%s141 + $0xb64] sm:$0xf]
        %v933 = vld [vmem:[%s141 + $0xb68] sm:$0xf]
        %v934 = vld [vmem:[%s141 + $0xb6c] sm:$0xf]
        %v935 = vld [vmem:[%s141 + $0xb70] sm:$0xf]
        %v936 = vld [vmem:[%s141 + $0xb74] sm:$0xf]
        %v937 = vld [vmem:[%s141 + $0xb78] sm:$0xf]
        %v938 = vld [vmem:[%s141 + $0xb7c] sm:$0xf]
        %v939 = vld [vmem:[%s141 + $0xb80] sm:$0xf]
        %v940 = vld [vmem:[%s141 + $0xb84] sm:$0xf]
        %v941 = vld [vmem:[%s141 + $0xb88] sm:$0xf]
        %v942 = vld [vmem:[%s141 + $0xb8c] sm:$0xf]
        %v943 = vld [vmem:[%s141 + $0xb90] sm:$0xf]
        %v944 = vld [vmem:[%s141 + $0xb94] sm:$0xf]
        %v945 = vld [vmem:[%s141 + $0xb98] sm:$0xf]
        %v946 = vld [vmem:[%s141 + $0xb9c] sm:$0xf]
        %v947 = vld [vmem:[%s141 + $0xba0] sm:$0xf]
        %v948 = vld [vmem:[%s141 + $0xba4] sm:$0xf]
        %v949 = vld [vmem:[%s141 + $0xba8] sm:$0xf]
        %v950 = vld [vmem:[%s141 + $0xbac] sm:$0xf]
        %v951 = vld [vmem:[%s141 + $0xbb0] sm:$0xf]
        %v952 = vld [vmem:[%s141 + $0xbb4] sm:$0xf]
        %v953 = vld [vmem:[%s141 + $0xbb8] sm:$0xf]
        %v954 = vld [vmem:[%s141 + $0xbbc] sm:$0xf]
        %v955 = vld [vmem:[%s141 + $0xbc0] sm:$0xf]
        %v956 = vld [vmem:[%s141 + $0xbc4] sm:$0xf]
        %v957 = vld [vmem:[%s141 + $0xbc8] sm:$0xf]
        %v958 = vld [vmem:[%s141 + $0xbcc] sm:$0xf]
        %v959 = vld [vmem:[%s141 + $0xbd0] sm:$0xf]
        %v960 = vld [vmem:[%s141 + $0xbd4] sm:$0xf]
        %v961 = vld [vmem:[%s141 + $0xbd8] sm:$0xf]
        %v962 = vld [vmem:[%s141 + $0xbdc] sm:$0xf]
        %v963 = vld [vmem:[%s141 + $0xbe0] sm:$0xf]
        %v964 = vld [vmem:[%s141 + $0xbe4] sm:$0xf]
        %v965 = vld [vmem:[%s141 + $0xbe8] sm:$0xf]
        %v966 = vld [vmem:[%s141 + $0xbec] sm:$0xf]
        %v967 = vld [vmem:[%s141 + $0xbf0] sm:$0xf]
        %v968 = vld [vmem:[%s141 + $0xbf4] sm:$0xf]
        %v969 = vld [vmem:[%s141 + $0xbf8] sm:$0xf]
        %v970 = vld [vmem:[%s141 + $0xbfc] sm:$0xf]
        %v971 = vld [vmem:[%s141 + $0xc00] sm:$0xf]
        %v972 = vld [vmem:[%s141 + $0xc04] sm:$0xf]
        %v973 = vld [vmem:[%s141 + $0xc08] sm:$0xf]
        %v974 = vld [vmem:[%s141 + $0xc0c] sm:$0xf]
        %v975 = vld [vmem:[%s141 + $0xc10] sm:$0xf]
        %v976 = vld [vmem:[%s141 + $0xc14] sm:$0xf]
        %v977 = vld [vmem:[%s141 + $0xc18] sm:$0xf]
        %v978 = vld [vmem:[%s141 + $0xc1c] sm:$0xf]
        %v979 = vld [vmem:[%s141 + $0xc20] sm:$0xf]
        %v980 = vld [vmem:[%s141 + $0xc24] sm:$0xf]
        %v981 = vld [vmem:[%s141 + $0xc28] sm:$0xf]
        %v982 = vld [vmem:[%s141 + $0xc2c] sm:$0xf]
        %v983 = vld [vmem:[%s141 + $0xc30] sm:$0xf]
        %v984 = vld [vmem:[%s141 + $0xc34] sm:$0xf]
        %v985 = vld [vmem:[%s141 + $0xc38] sm:$0xf]
        %v986 = vld [vmem:[%s141 + $0xc3c] sm:$0xf]
        %v987 = vld [vmem:[%s141 + $0xc40] sm:$0xf]
        %v988 = vld [vmem:[%s141 + $0xc44] sm:$0xf]
        %v989 = vld [vmem:[%s141 + $0xc48] sm:$0xf]
        %v990 = vld [vmem:[%s141 + $0xc4c] sm:$0xf]
        %v991 = vld [vmem:[%s141 + $0xc50] sm:$0xf]
        %v992 = vld [vmem:[%s141 + $0xc54] sm:$0xf]
        %v993 = vld [vmem:[%s141 + $0xc58] sm:$0xf]
        %v994 = vld [vmem:[%s141 + $0xc5c] sm:$0xf]
        %v995 = vld [vmem:[%s141 + $0xc60] sm:$0xf]
        %v996 = vld [vmem:[%s141 + $0xc64] sm:$0xf]
        %v997 = vld [vmem:[%s141 + $0xc68] sm:$0xf]
        %v998 = vld [vmem:[%s141 + $0xc6c] sm:$0xf]
        %v999 = vld [vmem:[%s141 + $0xc70] sm:$0xf]
        %v1000 = vld [vmem:[%s141 + $0xc74] sm:$0xf]
        %v1001 = vld [vmem:[%s141 + $0xc78] sm:$0xf]
        %v1002 = vld [vmem:[%s141 + $0xc7c] sm:$0xf]
        %v1003 = vld [vmem:[%s141 + $0xc80] sm:$0xf]
        %v1004 = vld [vmem:[%s141 + $0xc84] sm:$0xf]
        %v1005 = vld [vmem:[%s141 + $0xc88] sm:$0xf]
        %v1006 = vld [vmem:[%s141 + $0xc8c] sm:$0xf]
        %v1007 = vld [vmem:[%s141 + $0xc90] sm:$0xf]
        %v1008 = vld [vmem:[%s141 + $0xc94] sm:$0xf]
        %v1009 = vld [vmem:[%s141 + $0xc98] sm:$0xf]
        %v1010 = vld [vmem:[%s141 + $0xc9c] sm:$0xf]
        %v1011 = vld [vmem:[%s141 + $0xca0] sm:$0xf]
        %v1012 = vld [vmem:[%s141 + $0xca4] sm:$0xf]
        %v1013 = vld [vmem:[%s141 + $0xca8] sm:$0xf]
        %v1014 = vld [vmem:[%s141 + $0xcac] sm:$0xf]
        %v1015 = vld [vmem:[%s141 + $0xcb0] sm:$0xf]
        %v1016 = vld [vmem:[%s141 + $0xcb4] sm:$0xf]
        %v1017 = vld [vmem:[%s141 + $0xcb8] sm:$0xf]
        %v1018 = vld [vmem:[%s141 + $0xcbc] sm:$0xf]
        %v1019 = vld [vmem:[%s141 + $0xcc0] sm:$0xf]
        %v1020 = vld [vmem:[%s141 + $0xcc4] sm:$0xf]
        %v1021 = vld [vmem:[%s141 + $0xcc8] sm:$0xf]
        %v1022 = vld [vmem:[%s141 + $0xccc] sm:$0xf]
        %v1023 = vld [vmem:[%s141 + $0xcd0] sm:$0xf]
        %v1024 = vld [vmem:[%s141 + $0xcd4] sm:$0xf]
        %v1025 = vld [vmem:[%s141 + $0xcd8] sm:$0xf]
        %v1026 = vld [vmem:[%s141 + $0xcdc] sm:$0xf]
        %v1027 = vld [vmem:[%s141 + $0xce0] sm:$0xf]
        %v1028 = vld [vmem:[%s141 + $0xce4] sm:$0xf]
        %v1029 = vld [vmem:[%s141 + $0xce8] sm:$0xf]
        %v1030 = vld [vmem:[%s141 + $0xcec] sm:$0xf]
        %v1031 = vld [vmem:[%s141 + $0xcf0] sm:$0xf]
        %v1032 = vld [vmem:[%s141 + $0xcf4] sm:$0xf]
        %v1033 = vld [vmem:[%s141 + $0xcf8] sm:$0xf]
        %v1034 = vld [vmem:[%s141 + $0xcfc] sm:$0xf]
        %v1035 = vld [vmem:[%s141 + $0xd00] sm:$0xf]
        %v1036 = vld [vmem:[%s141 + $0xd04] sm:$0xf]
        %v1037 = vld [vmem:[%s141 + $0xd08] sm:$0xf]
        %v1038 = vld [vmem:[%s141 + $0xd0c] sm:$0xf]
        %v1039 = vld [vmem:[%s141 + $0xd10] sm:$0xf]
        %v1040 = vld [vmem:[%s141 + $0xd14] sm:$0xf]
        %v1041 = vld [vmem:[%s141 + $0xd18] sm:$0xf]
        %v1042 = vld [vmem:[%s141 + $0xd1c] sm:$0xf]
        %v1043 = vld [vmem:[%s141 + $0xd20] sm:$0xf]
        %v1044 = vld [vmem:[%s141 + $0xd24] sm:$0xf]
        %v1045 = vld [vmem:[%s141 + $0xd28] sm:$0xf]
        %v1046 = vld [vmem:[%s141 + $0xd2c] sm:$0xf]
        %v1047 = vld [vmem:[%s141 + $0xd30] sm:$0xf]
        %v1048 = vld [vmem:[%s141 + $0xd34] sm:$0xf]
        %v1049 = vld [vmem:[%s141 + $0xd38] sm:$0xf]
        %v1050 = vld [vmem:[%s141 + $0xd3c] sm:$0xf]
        %v1051 = vld [vmem:[%s141 + $0xd40] sm:$0xf]
        %v1052 = vld [vmem:[%s141 + $0xd44] sm:$0xf]
        %v1053 = vld [vmem:[%s141 + $0xd48] sm:$0xf]
        %v1054 = vld [vmem:[%s141 + $0xd4c] sm:$0xf]
        %v1055 = vld [vmem:[%s141 + $0xd50] sm:$0xf]
        %v1056 = vld [vmem:[%s141 + $0xd54] sm:$0xf]
        %v1057 = vld [vmem:[%s141 + $0xd58] sm:$0xf]
        %v1058 = vld [vmem:[%s141 + $0xd5c] sm:$0xf]
        %v1059 = vld [vmem:[%s141 + $0xd60] sm:$0xf]
        %v1060 = vld [vmem:[%s141 + $0xd64] sm:$0xf]
        %v1061 = vld [vmem:[%s141 + $0xd68] sm:$0xf]
        %v1062 = vld [vmem:[%s141 + $0xd6c] sm:$0xf]
        %v1063 = vld [vmem:[%s141 + $0xd70] sm:$0xf]
        %v1064 = vld [vmem:[%s141 + $0xd74] sm:$0xf]
        %v1065 = vld [vmem:[%s141 + $0xd78] sm:$0xf]
        %v1066 = vld [vmem:[%s141 + $0xd7c] sm:$0xf]
        %v1067 = vld [vmem:[%s141 + $0xd80] sm:$0xf]
        %v1068 = vld [vmem:[%s141 + $0xd84] sm:$0xf]
        %v1069 = vld [vmem:[%s141 + $0xd88] sm:$0xf]
        %v1070 = vld [vmem:[%s141 + $0xd8c] sm:$0xf]
        %v1071 = vld [vmem:[%s141 + $0xd90] sm:$0xf]
        %v1072 = vld [vmem:[%s141 + $0xd94] sm:$0xf]
        %v1073 = vld [vmem:[%s141 + $0xd98] sm:$0xf]
        %v1074 = vld [vmem:[%s141 + $0xd9c] sm:$0xf]
        %v1075 = vld [vmem:[%s141 + $0xda0] sm:$0xf]
        %v1076 = vld [vmem:[%s141 + $0xda4] sm:$0xf]
        %v1077 = vld [vmem:[%s141 + $0xda8] sm:$0xf]
        %v1078 = vld [vmem:[%s141 + $0xdac] sm:$0xf]
        %v1079 = vld [vmem:[%s141 + $0xdb0] sm:$0xf]
        %v1080 = vld [vmem:[%s141 + $0xdb4] sm:$0xf]
        %v1081 = vld [vmem:[%s141 + $0xdb8] sm:$0xf]
        %v1082 = vld [vmem:[%s141 + $0xdbc] sm:$0xf]
        %v1083 = vld [vmem:[%s141 + $0xdc0] sm:$0xf]
        %v1084 = vld [vmem:[%s141 + $0xdc4] sm:$0xf]
        %v1085 = vld [vmem:[%s141 + $0xdc8] sm:$0xf]
        %v1086 = vld [vmem:[%s141 + $0xdcc] sm:$0xf]
        %v1087 = vld [vmem:[%s141 + $0xdd0] sm:$0xf]
        %v1088 = vld [vmem:[%s141 + $0xdd4] sm:$0xf]
        %v1089 = vld [vmem:[%s141 + $0xdd8] sm:$0xf]
        %v1090 = vld [vmem:[%s141 + $0xddc] sm:$0xf]
        %v1091 = vld [vmem:[%s141 + $0xde0] sm:$0xf]
        %v1092 = vld [vmem:[%s141 + $0xde4] sm:$0xf]
        %v1093 = vld [vmem:[%s141 + $0xde8] sm:$0xf]
        %v1094 = vld [vmem:[%s141 + $0xdec] sm:$0xf]
        %v1095 = vld [vmem:[%s141 + $0xdf0] sm:$0xf]
        %v1096 = vld [vmem:[%s141 + $0xdf4] sm:$0xf]
        %v1097 = vld [vmem:[%s141 + $0xdf8] sm:$0xf]
        %v1098 = vld [vmem:[%s141 + $0xdfc] sm:$0xf]
        %v1099 = vld [vmem:[%s141 + $0xe00] sm:$0xf]
        %v1100 = vld [vmem:[%s141 + $0xe04] sm:$0xf]
        %v1101 = vld [vmem:[%s141 + $0xe08] sm:$0xf]
        %v1102 = vld [vmem:[%s141 + $0xe0c] sm:$0xf]
        %v1103 = vld [vmem:[%s141 + $0xe10] sm:$0xf]
        %v1104 = vld [vmem:[%s141 + $0xe14] sm:$0xf]
        %v1105 = vld [vmem:[%s141 + $0xe18] sm:$0xf]
        %v1106 = vld [vmem:[%s141 + $0xe1c] sm:$0xf]
        %v1107 = vld [vmem:[%s141 + $0xe20] sm:$0xf]
        %v1108 = vld [vmem:[%s141 + $0xe24] sm:$0xf]
        %v1109 = vld [vmem:[%s141 + $0xe28] sm:$0xf]
        %v1110 = vld [vmem:[%s141 + $0xe2c] sm:$0xf]
        %v1111 = vld [vmem:[%s141 + $0xe30] sm:$0xf]
        %v1112 = vld [vmem:[%s141 + $0xe34] sm:$0xf]
        %v1113 = vld [vmem:[%s141 + $0xe38] sm:$0xf]
        %v1114 = vld [vmem:[%s141 + $0xe3c] sm:$0xf]
        %v1115 = vld [vmem:[%s141 + $0xe40] sm:$0xf]
        %v1116 = vld [vmem:[%s141 + $0xe44] sm:$0xf]
        %v1117 = vld [vmem:[%s141 + $0xe48] sm:$0xf]
        %v1118 = vld [vmem:[%s141 + $0xe4c] sm:$0xf]
        %v1119 = vld [vmem:[%s141 + $0xe50] sm:$0xf]
        %v1120 = vld [vmem:[%s141 + $0xe54] sm:$0xf]
        %v1121 = vld [vmem:[%s141 + $0xe58] sm:$0xf]
        %v1122 = vld [vmem:[%s141 + $0xe5c] sm:$0xf]
        %v1123 = vld [vmem:[%s141 + $0xe60] sm:$0xf]
        %v1124 = vld [vmem:[%s141 + $0xe64] sm:$0xf]
        %v1125 = vld [vmem:[%s141 + $0xe68] sm:$0xf]
        %v1126 = vld [vmem:[%s141 + $0xe6c] sm:$0xf]
        %v1127 = vld [vmem:[%s141 + $0xe70] sm:$0xf]
        %v1128 = vld [vmem:[%s141 + $0xe74] sm:$0xf]
        %v1129 = vld [vmem:[%s141 + $0xe78] sm:$0xf]
        %v1130 = vld [vmem:[%s141 + $0xe7c] sm:$0xf]
        %v1131 = vld [vmem:[%s141 + $0xe80] sm:$0xf]
        %v1132 = vld [vmem:[%s141 + $0xe84] sm:$0xf]
        %v1133 = vld [vmem:[%s141 + $0xe88] sm:$0xf]
        %v1134 = vld [vmem:[%s141 + $0xe8c] sm:$0xf]
        %v1135 = vld [vmem:[%s141 + $0xe90] sm:$0xf]
        %v1136 = vld [vmem:[%s141 + $0xe94] sm:$0xf]
        %v1137 = vld [vmem:[%s141 + $0xe98] sm:$0xf]
        %v1138 = vld [vmem:[%s141 + $0xe9c] sm:$0xf]
        %v1139 = vld [vmem:[%s141 + $0xea0] sm:$0xf]
        %v1140 = vld [vmem:[%s141 + $0xea4] sm:$0xf]
        %v1141 = vld [vmem:[%s141 + $0xea8] sm:$0xf]
        %v1142 = vld [vmem:[%s141 + $0xeac] sm:$0xf]
        %v1143 = vld [vmem:[%s141 + $0xeb0] sm:$0xf]
        %v1144 = vld [vmem:[%s141 + $0xeb4] sm:$0xf]
        %v1145 = vld [vmem:[%s141 + $0xeb8] sm:$0xf]
        %v1146 = vld [vmem:[%s141 + $0xebc] sm:$0xf]
        %v1147 = vld [vmem:[%s141 + $0xec0] sm:$0xf]
        %v1148 = vld [vmem:[%s141 + $0xec4] sm:$0xf]
        %v1149 = vld [vmem:[%s141 + $0xec8] sm:$0xf]
        %v1150 = vld [vmem:[%s141 + $0xecc] sm:$0xf]
        %v1151 = vld [vmem:[%s141 + $0xed0] sm:$0xf]
        %v1152 = vld [vmem:[%s141 + $0xed4] sm:$0xf]
        %v1153 = vld [vmem:[%s141 + $0xed8] sm:$0xf]
        %v1154 = vld [vmem:[%s141 + $0xedc] sm:$0xf]
        %v1155 = vld [vmem:[%s141 + $0xee0] sm:$0xf]
        %v1156 = vld [vmem:[%s141 + $0xee4] sm:$0xf]
        %v1157 = vld [vmem:[%s141 + $0xee8] sm:$0xf]
        %v1158 = vld [vmem:[%s141 + $0xeec] sm:$0xf]
        %v1159 = vld [vmem:[%s141 + $0xef0] sm:$0xf]
        %v1160 = vld [vmem:[%s141 + $0xef4] sm:$0xf]
        %v1161 = vld [vmem:[%s141 + $0xef8] sm:$0xf]
        %v1162 = vld [vmem:[%s141 + $0xefc] sm:$0xf]
        %v1163 = vld [vmem:[%s141 + $0xf00] sm:$0xf]
        %v1164 = vld [vmem:[%s141 + $0xf04] sm:$0xf]
        %v1165 = vld [vmem:[%s141 + $0xf08] sm:$0xf]
        %v1166 = vld [vmem:[%s141 + $0xf0c] sm:$0xf]
        %v1167 = vld [vmem:[%s141 + $0xf10] sm:$0xf]
        %v1168 = vld [vmem:[%s141 + $0xf14] sm:$0xf]
        %v1169 = vld [vmem:[%s141 + $0xf18] sm:$0xf]
        %v1170 = vld [vmem:[%s141 + $0xf1c] sm:$0xf]
        %v1171 = vld [vmem:[%s141 + $0xf20] sm:$0xf]
        %v1172 = vld [vmem:[%s141 + $0xf24] sm:$0xf]
        %v1173 = vld [vmem:[%s141 + $0xf28] sm:$0xf]
        %v1174 = vld [vmem:[%s141 + $0xf2c] sm:$0xf]
        %v1175 = vld [vmem:[%s141 + $0xf30] sm:$0xf]
        %v1176 = vld [vmem:[%s141 + $0xf34] sm:$0xf]
        %v1177 = vld [vmem:[%s141 + $0xf38] sm:$0xf]
        %v1178 = vld [vmem:[%s141 + $0xf3c] sm:$0xf]
        %v1179 = vld [vmem:[%s141 + $0xf40] sm:$0xf]
        %v1180 = vld [vmem:[%s141 + $0xf44] sm:$0xf]
        %v1181 = vld [vmem:[%s141 + $0xf48] sm:$0xf]
        %v1182 = vld [vmem:[%s141 + $0xf4c] sm:$0xf]
        %v1183 = vld [vmem:[%s141 + $0xf50] sm:$0xf]
        %v1184 = vld [vmem:[%s141 + $0xf54] sm:$0xf]
        %v1185 = vld [vmem:[%s141 + $0xf58] sm:$0xf]
        %v1186 = vld [vmem:[%s141 + $0xf5c] sm:$0xf]
        %v1187 = vld [vmem:[%s141 + $0xf60] sm:$0xf]
        %v1188 = vld [vmem:[%s141 + $0xf64] sm:$0xf]
        %v1189 = vld [vmem:[%s141 + $0xf68] sm:$0xf]
        %v1190 = vld [vmem:[%s141 + $0xf6c] sm:$0xf]
        %v1191 = vld [vmem:[%s141 + $0xf70] sm:$0xf]
        %v1192 = vld [vmem:[%s141 + $0xf74] sm:$0xf]
        %v1193 = vld [vmem:[%s141 + $0xf78] sm:$0xf]
        %v1194 = vld [vmem:[%s141 + $0xf7c] sm:$0xf]
        %v1195 = vld [vmem:[%s141 + $0xf80] sm:$0xf]
        %v1196 = vld [vmem:[%s141 + $0xf84] sm:$0xf]
        %v1197 = vld [vmem:[%s141 + $0xf88] sm:$0xf]
        %v1198 = vld [vmem:[%s141 + $0xf8c] sm:$0xf]
        %v1199 = vld [vmem:[%s141 + $0xf90] sm:$0xf]
        %v1200 = vld [vmem:[%s141 + $0xf94] sm:$0xf]
        %v1201 = vld [vmem:[%s141 + $0xf98] sm:$0xf]
        %v1202 = vld [vmem:[%s141 + $0xf9c] sm:$0xf]
        %v1203 = vld [vmem:[%s141 + $0xfa0] sm:$0xf]
        %v1204 = vld [vmem:[%s141 + $0xfa4] sm:$0xf]
        %v1205 = vld [vmem:[%s141 + $0xfa8] sm:$0xf]
        %v1206 = vld [vmem:[%s141 + $0xfac] sm:$0xf]
        %v1207 = vld [vmem:[%s141 + $0xfb0] sm:$0xf]
        %v1208 = vld [vmem:[%s141 + $0xfb4] sm:$0xf]
        %v1209 = vld [vmem:[%s141 + $0xfb8] sm:$0xf]
        %v1210 = vld [vmem:[%s141 + $0xfbc] sm:$0xf]
        %v1211 = vld [vmem:[%s141 + $0xfc0] sm:$0xf]
        %v1212 = vld [vmem:[%s141 + $0xfc4] sm:$0xf]
        %v1213 = vld [vmem:[%s141 + $0xfc8] sm:$0xf]
        %v1214 = vld [vmem:[%s141 + $0xfcc] sm:$0xf]
        %v1215 = vld [vmem:[%s141 + $0xfd0] sm:$0xf]
        %v1216 = vld [vmem:[%s141 + $0xfd4] sm:$0xf]
        %v1217 = vld [vmem:[%s141 + $0xfd8] sm:$0xf]
        %v1218 = vld [vmem:[%s141 + $0xfdc] sm:$0xf]
        %v1219 = vld [vmem:[%s141 + $0xfe0] sm:$0xf]
        %v1220 = vld [vmem:[%s141 + $0xfe4] sm:$0xf]
        %v1221 = vld [vmem:[%s141 + $0xfe8] sm:$0xf]
        %v1222 = vld [vmem:[%s141 + $0xfec] sm:$0xf]
        %v1223 = vld [vmem:[%s141 + $0xff0] sm:$0xf]
        %v1224 = vld [vmem:[%s141 + $0xff4] sm:$0xf]
        %v1225 = vld [vmem:[%s141 + $0xff8] sm:$0xf]
        %v1226 = vld [vmem:[%s141 + $0xffc] sm:$0xf]
        %v1227 = vld [vmem:[%s141 + $0x1000] sm:$0xf]
        %v1228 = vld [vmem:[%s141 + $0x1004] sm:$0xf]
        %v1229 = vld [vmem:[%s141 + $0x1008] sm:$0xf]
        %v1230 = vld [vmem:[%s141 + $0x100c] sm:$0xf]
        %v1231 = vld [vmem:[%s141 + $0x1010] sm:$0xf]
        %v1232 = vld [vmem:[%s141 + $0x1014] sm:$0xf]
        %v1233 = vld [vmem:[%s141 + $0x1018] sm:$0xf]
        %v1234 = vld [vmem:[%s141 + $0x101c] sm:$0xf]
        %v1235 = vld [vmem:[%s141 + $0x1020] sm:$0xf]
        %v1236 = vld [vmem:[%s141 + $0x1024] sm:$0xf]
        %v1237 = vld [vmem:[%s141 + $0x1028] sm:$0xf]
        %v1238 = vld [vmem:[%s141 + $0x102c] sm:$0xf]
        %v1239 = vld [vmem:[%s141 + $0x1030] sm:$0xf]
        %v1240 = vld [vmem:[%s141 + $0x1034] sm:$0xf]
        %v1241 = vld [vmem:[%s141 + $0x1038] sm:$0xf]
        %v1242 = vld [vmem:[%s141 + $0x103c] sm:$0xf]
        %v1243 = vld [vmem:[%s141 + $0x1040] sm:$0xf]
        %v1244 = vld [vmem:[%s141 + $0x1044] sm:$0xf]
        %v1245 = vld [vmem:[%s141 + $0x1048] sm:$0xf]
        %v1246 = vld [vmem:[%s141 + $0x104c] sm:$0xf]
        %v1247 = vld [vmem:[%s141 + $0x1050] sm:$0xf]
        %v1248 = vld [vmem:[%s141 + $0x1054] sm:$0xf]
        %v1249 = vld [vmem:[%s141 + $0x1058] sm:$0xf]
        %v1250 = vld [vmem:[%s141 + $0x105c] sm:$0xf]
        %v1251 = vld [vmem:[%s141 + $0x1060] sm:$0xf]
        %v1252 = vld [vmem:[%s141 + $0x1064] sm:$0xf]
        %v1253 = vld [vmem:[%s141 + $0x1068] sm:$0xf]
        %v1254 = vld [vmem:[%s141 + $0x106c] sm:$0xf]
        %v1255 = vld [vmem:[%s141 + $0x1070] sm:$0xf]
        %v1256 = vld [vmem:[%s141 + $0x1074] sm:$0xf]
        %v1257 = vld [vmem:[%s141 + $0x1078] sm:$0xf]
        %v1258 = vld [vmem:[%s141 + $0x107c] sm:$0xf]
        %v1259 = vld [vmem:[%s141 + $0x1080] sm:$0xf]
        %v1260 = vld [vmem:[%s141 + $0x1084] sm:$0xf]
        %v1261 = vld [vmem:[%s141 + $0x1088] sm:$0xf]
        %v1262 = vld [vmem:[%s141 + $0x108c] sm:$0xf]
        %v1263 = vld [vmem:[%s141 + $0x1090] sm:$0xf]
        %v1264 = vld [vmem:[%s141 + $0x1094] sm:$0xf]
        %v1265 = vld [vmem:[%s141 + $0x1098] sm:$0xf]
        %v1266 = vld [vmem:[%s141 + $0x109c] sm:$0xf]
        %v1267 = vld [vmem:[%s141 + $0x10a0] sm:$0xf]
        %v1268 = vld [vmem:[%s141 + $0x10a4] sm:$0xf]
        %v1269 = vld [vmem:[%s141 + $0x10a8] sm:$0xf]
        %v1270 = vld [vmem:[%s141 + $0x10ac] sm:$0xf]
        %v1271 = vld [vmem:[%s141 + $0x10b0] sm:$0xf]
        %v1272 = vld [vmem:[%s141 + $0x10b4] sm:$0xf]
        %v1273 = vld [vmem:[%s141 + $0x10b8] sm:$0xf]
        %v1274 = vld [vmem:[%s141 + $0x10bc] sm:$0xf]
        %v1275 = vld [vmem:[%s141 + $0x10c0] sm:$0xf]
        %v1276 = vld [vmem:[%s141 + $0x10c4] sm:$0xf]
        %v1277 = vld [vmem:[%s141 + $0x10c8] sm:$0xf]
        %v1278 = vld [vmem:[%s141 + $0x10cc] sm:$0xf]
        %v1279 = vld [vmem:[%s141 + $0x10d0] sm:$0xf]
        %v1280 = vld [vmem:[%s141 + $0x10d4] sm:$0xf]
        %v1281 = vld [vmem:[%s141 + $0x10d8] sm:$0xf]
        %v1282 = vld [vmem:[%s141 + $0x10dc] sm:$0xf]
        %v1283 = vld [vmem:[%s141 + $0x10e0] sm:$0xf]
        %v1284 = vld [vmem:[%s141 + $0x10e4] sm:$0xf]
        %v1285 = vld [vmem:[%s141 + $0x10e8] sm:$0xf]
        %v1286 = vld [vmem:[%s141 + $0x10ec] sm:$0xf]
        %v1287 = vld [vmem:[%s141 + $0x10f0] sm:$0xf]
        %v1288 = vld [vmem:[%s141 + $0x10f4] sm:$0xf]
        %v1289 = vld [vmem:[%s141 + $0x10f8] sm:$0xf]
        %v1290 = vld [vmem:[%s141 + $0x10fc] sm:$0xf]
        %v1291 = vld [vmem:[%s141 + $0x1100] sm:$0xf]
        %v1292 = vld [vmem:[%s141 + $0x1104] sm:$0xf]
        %v1293 = vld [vmem:[%s141 + $0x1108] sm:$0xf]
        %v1294 = vld [vmem:[%s141 + $0x110c] sm:$0xf]
        %v1295 = vld [vmem:[%s141 + $0x1110] sm:$0xf]
        %v1296 = vld [vmem:[%s141 + $0x1114] sm:$0xf]
        %v1297 = vld [vmem:[%s141 + $0x1118] sm:$0xf]
        %v1298 = vld [vmem:[%s141 + $0x111c] sm:$0xf]
        %v1299 = vld [vmem:[%s141 + $0x1120] sm:$0xf]
        %v1300 = vld [vmem:[%s141 + $0x1124] sm:$0xf]
        %v1301 = vld [vmem:[%s141 + $0x1128] sm:$0xf]
        %v1302 = vld [vmem:[%s141 + $0x112c] sm:$0xf]
        %v1303 = vld [vmem:[%s141 + $0x1130] sm:$0xf]
        %v1304 = vld [vmem:[%s141 + $0x1134] sm:$0xf]
        %v1305 = vld [vmem:[%s141 + $0x1138] sm:$0xf]
        %v1306 = vld [vmem:[%s141 + $0x113c] sm:$0xf]
        %v1307 = vld [vmem:[%s141 + $0x1140] sm:$0xf]
        %v1308 = vld [vmem:[%s141 + $0x1144] sm:$0xf]
        %v1309 = vld [vmem:[%s141 + $0x1148] sm:$0xf]
        %v1310 = vld [vmem:[%s141 + $0x114c] sm:$0xf]
        %v1311 = vld [vmem:[%s141 + $0x1150] sm:$0xf]
        %v1312 = vld [vmem:[%s141 + $0x1154] sm:$0xf]
        %v1313 = vld [vmem:[%s141 + $0x1158] sm:$0xf]
        %v1314 = vld [vmem:[%s141 + $0x115c] sm:$0xf]
        %v1315 = vld [vmem:[%s141 + $0x1160] sm:$0xf]
        %v1316 = vld [vmem:[%s141 + $0x1164] sm:$0xf]
        %v1317 = vld [vmem:[%s141 + $0x1168] sm:$0xf]
        %v1318 = vld [vmem:[%s141 + $0x116c] sm:$0xf]
        %v1319 = vld [vmem:[%s141 + $0x1170] sm:$0xf]
        %v1320 = vld [vmem:[%s141 + $0x1174] sm:$0xf]
        %v1321 = vld [vmem:[%s141 + $0x1178] sm:$0xf]
        %v1322 = vld [vmem:[%s141 + $0x117c] sm:$0xf]
        %v1323 = vld [vmem:[%s141 + $0x1180] sm:$0xf]
        %v1324 = vld [vmem:[%s141 + $0x1184] sm:$0xf]
        %v1325 = vld [vmem:[%s141 + $0x1188] sm:$0xf]
        %v1326 = vld [vmem:[%s141 + $0x118c] sm:$0xf]
        %v1327 = vld [vmem:[%s141 + $0x1190] sm:$0xf]
        %v1328 = vld [vmem:[%s141 + $0x1194] sm:$0xf]
        %v1329 = vld [vmem:[%s141 + $0x1198] sm:$0xf]
        %v1330 = vld [vmem:[%s141 + $0x119c] sm:$0xf]
        %v1331 = vld [vmem:[%s141 + $0x11a0] sm:$0xf]
        %v1332 = vld [vmem:[%s141 + $0x11a4] sm:$0xf]
        %v1333 = vld [vmem:[%s141 + $0x11a8] sm:$0xf]
        %v1334 = vld [vmem:[%s141 + $0x11ac] sm:$0xf]
        %v1335 = vld [vmem:[%s141 + $0x11b0] sm:$0xf]
        %v1336 = vld [vmem:[%s141 + $0x11b4] sm:$0xf]
        %v1337 = vld [vmem:[%s141 + $0x11b8] sm:$0xf]
        %v1338 = vld [vmem:[%s141 + $0x11bc] sm:$0xf]
        %v1339 = vld [vmem:[%s141 + $0x11c0] sm:$0xf]
        %v1340 = vld [vmem:[%s141 + $0x11c4] sm:$0xf]
        %v1341 = vld [vmem:[%s141 + $0x11c8] sm:$0xf]
        %v1342 = vld [vmem:[%s141 + $0x11cc] sm:$0xf]
        %v1343 = vld [vmem:[%s141 + $0x11d0] sm:$0xf]
        %v1344 = vld [vmem:[%s141 + $0x11d4] sm:$0xf]
        %v1345 = vld [vmem:[%s141 + $0x11d8] sm:$0xf]
        %v1346 = vld [vmem:[%s141 + $0x11dc] sm:$0xf]
        %v1347 = vld [vmem:[%s141 + $0x11e0] sm:$0xf]
        %v1348 = vld [vmem:[%s141 + $0x11e4] sm:$0xf]
        %v1349 = vld [vmem:[%s141 + $0x11e8] sm:$0xf]
        %v1350 = vld [vmem:[%s141 + $0x11ec] sm:$0xf]
        %v1351 = vld [vmem:[%s141 + $0x11f0] sm:$0xf]
        %v1352 = vld [vmem:[%s141 + $0x11f4] sm:$0xf]
        %v1353 = vld [vmem:[%s141 + $0x11f8] sm:$0xf]
        %v1354 = vld [vmem:[%s141 + $0x11fc] sm:$0xf]
        %v1355 = vld [vmem:[%s141 + $0x1200] sm:$0xf]
        %v1356 = vld [vmem:[%s141 + $0x1204] sm:$0xf]
        %v1357 = vld [vmem:[%s141 + $0x1208] sm:$0xf]
        %v1358 = vld [vmem:[%s141 + $0x120c] sm:$0xf]
        %v1359 = vld [vmem:[%s141 + $0x1210] sm:$0xf]
        %v1360 = vld [vmem:[%s141 + $0x1214] sm:$0xf]
        %v1361 = vld [vmem:[%s141 + $0x1218] sm:$0xf]
        %v1362 = vld [vmem:[%s141 + $0x121c] sm:$0xf]
        %v1363 = vld [vmem:[%s141 + $0x1220] sm:$0xf]
        %v1364 = vld [vmem:[%s141 + $0x1224] sm:$0xf]
        %v1365 = vld [vmem:[%s141 + $0x1228] sm:$0xf]
        %v1366 = vld [vmem:[%s141 + $0x122c] sm:$0xf]
        %v1367 = vld [vmem:[%s141 + $0x1230] sm:$0xf]
        %v1368 = vld [vmem:[%s141 + $0x1234] sm:$0xf]
        %v1369 = vld [vmem:[%s141 + $0x1238] sm:$0xf]
        %v1370 = vld [vmem:[%s141 + $0x123c] sm:$0xf]
        %v1371 = vld [vmem:[%s141 + $0x1240] sm:$0xf]
        %v1372 = vld [vmem:[%s141 + $0x1244] sm:$0xf]
        %v1373 = vld [vmem:[%s141 + $0x1248] sm:$0xf]
        %v1374 = vld [vmem:[%s141 + $0x124c] sm:$0xf]
        %v1375 = vld [vmem:[%s141 + $0x1250] sm:$0xf]
        %v1376 = vld [vmem:[%s141 + $0x1254] sm:$0xf]
        %v1377 = vld [vmem:[%s141 + $0x1258] sm:$0xf]
        %v1378 = vld [vmem:[%s141 + $0x125c] sm:$0xf]
        %v1379 = vld [vmem:[%s141 + $0x1260] sm:$0xf]
        %v1380 = vld [vmem:[%s141 + $0x1264] sm:$0xf]
        %v1381 = vld [vmem:[%s141 + $0x1268] sm:$0xf]
        %v1382 = vld [vmem:[%s141 + $0x126c] sm:$0xf]
        %v1383 = vld [vmem:[%s141 + $0x1270] sm:$0xf]
        %v1384 = vld [vmem:[%s141 + $0x1274] sm:$0xf]
        %v1385 = vld [vmem:[%s141 + $0x1278] sm:$0xf]
        %v1386 = vld [vmem:[%s141 + $0x127c] sm:$0xf]
        %v1387 = vld [vmem:[%s141 + $0x1280] sm:$0xf]
        %v1388 = vld [vmem:[%s141 + $0x1284] sm:$0xf]
        %v1389 = vld [vmem:[%s141 + $0x1288] sm:$0xf]
        %v1390 = vld [vmem:[%s141 + $0x128c] sm:$0xf]
        %v1391 = vld [vmem:[%s141 + $0x1290] sm:$0xf]
        %v1392 = vld [vmem:[%s141 + $0x1294] sm:$0xf]
        %v1393 = vld [vmem:[%s141 + $0x1298] sm:$0xf]
        %v1394 = vld [vmem:[%s141 + $0x129c] sm:$0xf]
        %v1395 = vld [vmem:[%s141 + $0x12a0] sm:$0xf]
        %v1396 = vld [vmem:[%s141 + $0x12a4] sm:$0xf]
        %v1397 = vld [vmem:[%s141 + $0x12a8] sm:$0xf]
        %v1398 = vld [vmem:[%s141 + $0x12ac] sm:$0xf]
        %v1399 = vld [vmem:[%s141 + $0x12b0] sm:$0xf]
        %v1400 = vld [vmem:[%s141 + $0x12b4] sm:$0xf]
        %v1401 = vld [vmem:[%s141 + $0x12b8] sm:$0xf]
        %v1402 = vld [vmem:[%s141 + $0x12bc] sm:$0xf]
        %v1403 = vld [vmem:[%s141 + $0x12c0] sm:$0xf]
        %v1404 = vld [vmem:[%s141 + $0x12c4] sm:$0xf]
        %v1405 = vld [vmem:[%s141 + $0x12c8] sm:$0xf]
        %v1406 = vld [vmem:[%s141 + $0x12cc] sm:$0xf]
        %v1407 = vld [vmem:[%s141 + $0x12d0] sm:$0xf]
        %v1408 = vld [vmem:[%s141 + $0x12d4] sm:$0xf]
        %v1409 = vld [vmem:[%s141 + $0x12d8] sm:$0xf]
        %v1410 = vld [vmem:[%s141 + $0x12dc] sm:$0xf]
        %v1411 = vld [vmem:[%s141 + $0x12e0] sm:$0xf]
        %v1412 = vld [vmem:[%s141 + $0x12e4] sm:$0xf]
        %v1413 = vld [vmem:[%s141 + $0x12e8] sm:$0xf]
        %v1414 = vld [vmem:[%s141 + $0x12ec] sm:$0xf]
        %v1415 = vld [vmem:[%s141 + $0x12f0] sm:$0xf]
        %v1416 = vld [vmem:[%s141 + $0x12f4] sm:$0xf]
        %v1417 = vld [vmem:[%s141 + $0x12f8] sm:$0xf]
        %v1418 = vld [vmem:[%s141 + $0x12fc] sm:$0xf]
        %v1419 = vld [vmem:[%s141 + $0x1300] sm:$0xf]
        %v1420 = vld [vmem:[%s141 + $0x1304] sm:$0xf]
        %v1421 = vld [vmem:[%s141 + $0x1308] sm:$0xf]
        %v1422 = vld [vmem:[%s141 + $0x130c] sm:$0xf]
        %v1423 = vld [vmem:[%s141 + $0x1310] sm:$0xf]
        %v1424 = vld [vmem:[%s141 + $0x1314] sm:$0xf]
        %v1425 = vld [vmem:[%s141 + $0x1318] sm:$0xf]
        %v1426 = vld [vmem:[%s141 + $0x131c] sm:$0xf]
        %v1427 = vld [vmem:[%s141 + $0x1320] sm:$0xf]
        %v1428 = vld [vmem:[%s141 + $0x1324] sm:$0xf]
        %v1429 = vld [vmem:[%s141 + $0x1328] sm:$0xf]
        %v1430 = vld [vmem:[%s141 + $0x132c] sm:$0xf]
        %v1431 = vld [vmem:[%s141 + $0x1330] sm:$0xf]
        %v1432 = vld [vmem:[%s141 + $0x1334] sm:$0xf]
        %v1433 = vld [vmem:[%s141 + $0x1338] sm:$0xf]
        %v1434 = vld [vmem:[%s141 + $0x133c] sm:$0xf]
        %v1435 = vld [vmem:[%s141 + $0x1340] sm:$0xf]
        %v1436 = vld [vmem:[%s141 + $0x1344] sm:$0xf]
        %v1437 = vld [vmem:[%s141 + $0x1348] sm:$0xf]
        %v1438 = vld [vmem:[%s141 + $0x134c] sm:$0xf]
        %v1439 = vld [vmem:[%s141 + $0x1350] sm:$0xf]
        %v1440 = vld [vmem:[%s141 + $0x1354] sm:$0xf]
        %v1441 = vld [vmem:[%s141 + $0x1358] sm:$0xf]
        %v1442 = vld [vmem:[%s141 + $0x135c] sm:$0xf]
        %v1443 = vld [vmem:[%s141 + $0x1360] sm:$0xf]
        %v1444 = vld [vmem:[%s141 + $0x1364] sm:$0xf]
        %v1445 = vld [vmem:[%s141 + $0x1368] sm:$0xf]
        %v1446 = vld [vmem:[%s141 + $0x136c] sm:$0xf]
        %v1447 = vld [vmem:[%s141 + $0x1370] sm:$0xf]
        %v1448 = vld [vmem:[%s141 + $0x1374] sm:$0xf]
        %v1449 = vld [vmem:[%s141 + $0x1378] sm:$0xf]
        %v1450 = vld [vmem:[%s141 + $0x137c] sm:$0xf]
        %v1451 = vld [vmem:[%s141 + $0x1380] sm:$0xf]
        %v1452 = vld [vmem:[%s141 + $0x1384] sm:$0xf]
        %v1493 = vunpack.c.l.b16 %v163
        %v1494 = vunpack.c.h.b16 %v163
        %v1495 = vunpack.c.l.b16 %v164
        %v1496 = vunpack.c.h.b16 %v164
        %v1497 = vunpack.c.l.b16 %v165
        %v1498 = vunpack.c.h.b16 %v165
        %v1499 = vunpack.c.l.b16 %v166
        %v1500 = vunpack.c.h.b16 %v166
        %v1501 = vunpack.c.l.b16 %v167
        %v1502 = vunpack.c.h.b16 %v167
        %v1503 = vunpack.c.l.b16 %v168
        %v1504 = vunpack.c.h.b16 %v168
        %v1505 = vunpack.c.l.b16 %v169
        %v1506 = vunpack.c.h.b16 %v169
        %v1507 = vunpack.c.l.b16 %v170
        %v1508 = vunpack.c.h.b16 %v170
        %v1509 = vunpack.c.l.b16 %v171
        %v1510 = vunpack.c.h.b16 %v171
        %v1511 = vunpack.c.l.b16 %v172
        %v1512 = vunpack.c.h.b16 %v172
        %v1513 = vunpack.c.l.b16 %v173
        %v1514 = vunpack.c.h.b16 %v173
        %v1515 = vunpack.c.l.b16 %v174
        %v1516 = vunpack.c.h.b16 %v174
        %v1517 = vunpack.c.l.b16 %v175
        %v1518 = vunpack.c.h.b16 %v175
        %v1519 = vunpack.c.l.b16 %v176
        %v1520 = vunpack.c.h.b16 %v176
        %v1521 = vunpack.c.l.b16 %v177
        %v1522 = vunpack.c.h.b16 %v177
        %v1523 = vunpack.c.l.b16 %v178
        %v1524 = vunpack.c.h.b16 %v178
        %v1525 = vunpack.c.l.b16 %v179
        %v1526 = vunpack.c.h.b16 %v179
        %v1527 = vunpack.c.l.b16 %v180
        %v1528 = vunpack.c.h.b16 %v180
        %v1529 = vunpack.c.l.b16 %v181
        %v1530 = vunpack.c.h.b16 %v181
        %v1531 = vunpack.c.l.b16 %v182
        %v1532 = vunpack.c.h.b16 %v182
        %v1533 = vunpack.c.l.b16 %v183
        %v1534 = vunpack.c.h.b16 %v183
        %v1535 = vunpack.c.l.b16 %v184
        %v1536 = vunpack.c.h.b16 %v184
        %v1537 = vunpack.c.l.b16 %v185
        %v1538 = vunpack.c.h.b16 %v185
        %v1539 = vunpack.c.l.b16 %v186
        %v1540 = vunpack.c.h.b16 %v186
        %v1541 = vunpack.c.l.b16 %v187
        %v1542 = vunpack.c.h.b16 %v187
        %v1543 = vunpack.c.l.b16 %v188
        %v1544 = vunpack.c.h.b16 %v188
        %v1545 = vunpack.c.l.b16 %v189
        %v1546 = vunpack.c.h.b16 %v189
        %v1547 = vunpack.c.l.b16 %v190
        %v1548 = vunpack.c.h.b16 %v190
        %v1549 = vunpack.c.l.b16 %v191
        %v1550 = vunpack.c.h.b16 %v191
        %v1551 = vunpack.c.l.b16 %v192
        %v1552 = vunpack.c.h.b16 %v192
        %v1553 = vunpack.c.l.b16 %v193
        %v1554 = vunpack.c.h.b16 %v193
        %v1555 = vunpack.c.l.b16 %v194
        %v1556 = vunpack.c.h.b16 %v194
        %v1557 = vunpack.c.l.b16 %v195
        %v1558 = vunpack.c.h.b16 %v195
        %v1559 = vunpack.c.l.b16 %v196
        %v1560 = vunpack.c.h.b16 %v196
        %v1561 = vunpack.c.l.b16 %v197
        %v1562 = vunpack.c.h.b16 %v197
        %v1563 = vunpack.c.l.b16 %v198
        %v1564 = vunpack.c.h.b16 %v198
        %v1565 = vunpack.c.l.b16 %v199
        %v1566 = vunpack.c.h.b16 %v199
        %v1567 = vunpack.c.l.b16 %v200
        %v1568 = vunpack.c.h.b16 %v200
        %v1569 = vunpack.c.l.b16 %v201
        %v1570 = vunpack.c.h.b16 %v201
        %v1571 = vunpack.c.l.b16 %v202
        %v1572 = vpack.c.b16 %v1493, %v1493
        %v1573 = vpack.c.b16 %v1494, %v1494
        %v1574 = vpack.c.b16 %v1495, %v1495
        %v1575 = vpack.c.b16 %v1496, %v1496
        %v1576 = vpack.c.b16 %v1497, %v1497
        %v1577 = vpack.c.b16 %v1498, %v1498
        %v1578 = vpack.c.b16 %v1499, %v1499
        %v1579 = vpack.c.b16 %v1500, %v1500
        %v1580 = vpack.c.b16 %v1501, %v1501
        %v1581 = vpack.c.b16 %v1502, %v1502
        %v1582 = vpack.c.b16 %v1503, %v1503
        %v1583 = vpack.c.b16 %v1504, %v1504
        %v1584 = vpack.c.b16 %v1505, %v1505
        %v1585 = vpack.c.b16 %v1506, %v1506
        %v1586 = vpack.c.b16 %v1507, %v1507
        %v1587 = vpack.c.b16 %v1508, %v1508
        %v1588 = vpack.c.b16 %v1509, %v1509
        %v1589 = vpack.c.b16 %v1510, %v1510
        %v1590 = vpack.c.b16 %v1511, %v1511
        %v1591 = vpack.c.b16 %v1512, %v1512
        %v1592 = vpack.c.b16 %v1513, %v1513
        %v1593 = vpack.c.b16 %v1514, %v1514
        %v1594 = vpack.c.b16 %v1515, %v1515
        %v1595 = vpack.c.b16 %v1516, %v1516
        %v1596 = vpack.c.b16 %v1517, %v1517
        %v1597 = vpack.c.b16 %v1518, %v1518
        %v1598 = vpack.c.b16 %v1519, %v1519
        %v1599 = vpack.c.b16 %v1520, %v1520
        %v1600 = vpack.c.b16 %v1521, %v1521
        %v1601 = vpack.c.b16 %v1522, %v1522
        %v1602 = vpack.c.b16 %v1523, %v1523
        %v1603 = vpack.c.b16 %v1524, %v1524
        %v1604 = vpack.c.b16 %v1525, %v1525
        %v1605 = vpack.c.b16 %v1526, %v1526
        %v1606 = vpack.c.b16 %v1527, %v1527
        %v1607 = vpack.c.b16 %v1528, %v1528
        %v1608 = vpack.c.b16 %v1529, %v1529
        %v1609 = vpack.c.b16 %v1530, %v1530
        %v1610 = vpack.c.b16 %v1531, %v1531
        %v1611 = vpack.c.b16 %v1532, %v1532
        %v1612 = vpack.c.b16 %v1533, %v1533
        %v1613 = vpack.c.b16 %v1534, %v1534
        %v1614 = vpack.c.b16 %v1535, %v1535
        %v1615 = vpack.c.b16 %v1536, %v1536
        %v1616 = vpack.c.b16 %v1537, %v1537
        %v1617 = vpack.c.b16 %v1538, %v1538
        %v1618 = vpack.c.b16 %v1539, %v1539
        %v1619 = vpack.c.b16 %v1540, %v1540
        %v1620 = vpack.c.b16 %v1541, %v1541
        %v1621 = vpack.c.b16 %v1542, %v1542
        %v1622 = vpack.c.b16 %v1543, %v1543
        %v1623 = vpack.c.b16 %v1544, %v1544
        %v1624 = vpack.c.b16 %v1545, %v1545
        %v1625 = vpack.c.b16 %v1546, %v1546
        %v1626 = vpack.c.b16 %v1547, %v1547
        %v1627 = vpack.c.b16 %v1548, %v1548
        %v1628 = vpack.c.b16 %v1549, %v1549
        %v1629 = vpack.c.b16 %v1550, %v1550
        %v1630 = vpack.c.b16 %v1551, %v1551
        %v1631 = vpack.c.b16 %v1552, %v1552
        %v1632 = vpack.c.b16 %v1553, %v1553
        %v1633 = vpack.c.b16 %v1554, %v1554
        %v1634 = vpack.c.b16 %v1555, %v1555
        %v1635 = vpack.c.b16 %v1556, %v1556
        %v1636 = vpack.c.b16 %v1557, %v1557
        %v1637 = vpack.c.b16 %v1558, %v1558
        %v1638 = vpack.c.b16 %v1559, %v1559
        %v1639 = vpack.c.b16 %v1560, %v1560
        %v1640 = vpack.c.b16 %v1561, %v1561
        %v1641 = vpack.c.b16 %v1562, %v1562
        %v1642 = vpack.c.b16 %v1563, %v1563
        %v1643 = vpack.c.b16 %v1564, %v1564
        %v1644 = vpack.c.b16 %v1565, %v1565
        %v1645 = vpack.c.b16 %v1566, %v1566
        %v1646 = vpack.c.b16 %v1567, %v1567
        %v1647 = vpack.c.b16 %v1568, %v1568
        %v1648 = vpack.c.b16 %v1569, %v1569
        %v1649 = vpack.c.b16 %v1570, %v1570
        %v1650 = vpack.c.b16 %v1571, %v1571
        %v2979 = vunpack.c.l.b16 %v203
        %v2980 = vunpack.c.l.b16 %v204
        %v2981 = vunpack.c.l.b16 %v205
        %v2982 = vunpack.c.l.b16 %v206
        %v2983 = vunpack.c.l.b16 %v207
        %v2984 = vunpack.c.l.b16 %v208
        %v2985 = vunpack.c.l.b16 %v209
        %v2986 = vunpack.c.l.b16 %v210
        %v2987 = vunpack.c.l.b16 %v211
        %v2988 = vunpack.c.l.b16 %v212
        %v2989 = vunpack.c.l.b16 %v213
        %v2990 = vunpack.c.l.b16 %v214
        %v2991 = vunpack.c.l.b16 %v215
        %v2992 = vunpack.c.l.b16 %v216
        %v2993 = vunpack.c.l.b16 %v217
        %v2994 = vunpack.c.l.b16 %v218
        %v2995 = vunpack.c.l.b16 %v219
        %v2996 = vunpack.c.l.b16 %v220
        %v2997 = vunpack.c.l.b16 %v221
        %v2998 = vunpack.c.l.b16 %v222
        %v2999 = vunpack.c.l.b16 %v223
        %v3000 = vunpack.c.l.b16 %v224
        %v3001 = vunpack.c.l.b16 %v225
        %v3002 = vunpack.c.l.b16 %v226
        %v3003 = vunpack.c.l.b16 %v227
        %v3004 = vunpack.c.l.b16 %v228
        %v3005 = vunpack.c.l.b16 %v229
        %v3006 = vunpack.c.l.b16 %v230
        %v3007 = vunpack.c.l.b16 %v231
        %v3008 = vunpack.c.l.b16 %v232
        %v3009 = vunpack.c.l.b16 %v233
        %v3010 = vunpack.c.l.b16 %v234
        %v3011 = vunpack.c.l.b16 %v235
        %v3012 = vunpack.c.l.b16 %v236
        %v3013 = vunpack.c.l.b16 %v237
        %v3014 = vunpack.c.l.b16 %v238
        %v3015 = vunpack.c.l.b16 %v239
        %v3016 = vunpack.c.l.b16 %v240
        %v3017 = vunpack.c.l.b16 %v241
        %v3018 = vunpack.c.l.b16 %v242
        %v3019 = vunpack.c.l.b16 %v243
        %v3020 = vunpack.c.l.b16 %v244
        %v3021 = vunpack.c.l.b16 %v245
        %v3022 = vunpack.c.l.b16 %v246
        %v3023 = vunpack.c.l.b16 %v247
        %v3024 = vunpack.c.l.b16 %v248
        %v3025 = vunpack.c.l.b16 %v249
        %v3026 = vunpack.c.l.b16 %v250
        %v3027 = vunpack.c.l.b16 %v251
        %v3028 = vunpack.c.l.b16 %v252
        %v3029 = vunpack.c.l.b16 %v253
        %v3030 = vunpack.c.l.b16 %v254
        %v3031 = vunpack.c.l.b16 %v255
        %v3032 = vunpack.c.l.b16 %v256
        %v3033 = vunpack.c.l.b16 %v257
        %v3034 = vunpack.c.l.b16 %v258
        %v3035 = vunpack.c.l.b16 %v259
        %v3036 = vunpack.c.l.b16 %v260
        %v3037 = vunpack.c.l.b16 %v261
        %v3038 = vunpack.c.l.b16 %v262
        %v3039 = vunpack.c.l.b16 %v263
        %v3040 = vunpack.c.l.b16 %v264
        %v3041 = vunpack.c.l.b16 %v265
        %v3042 = vunpack.c.l.b16 %v266
        %v3043 = vunpack.c.l.b16 %v267
        %v3044 = vunpack.c.l.b16 %v268
        %v3045 = vunpack.c.l.b16 %v269
        %v3046 = vunpack.c.l.b16 %v270
        %v3047 = vunpack.c.l.b16 %v271
        %v3048 = vunpack.c.l.b16 %v272
        %v3049 = vunpack.c.l.b16 %v273
        %v3050 = vunpack.c.l.b16 %v274
        %v3051 = vunpack.c.l.b16 %v275
        %v3052 = vunpack.c.l.b16 %v276
        %v3053 = vunpack.c.l.b16 %v277
        %v3054 = vunpack.c.l.b16 %v278
        %v3055 = vunpack.c.l.b16 %v279
        %v3056 = vunpack.c.l.b16 %v280
        %v3057 = vunpack.c.l.b16 %v281
        %v3058 = vunpack.c.l.b16 %v282
        %v3059 = vunpack.c.l.b16 %v283
        %v3060 = vunpack.c.l.b16 %v284
        %v3061 = vunpack.c.l.b16 %v285
        %v3062 = vunpack.c.l.b16 %v286
        %v3063 = vunpack.c.l.b16 %v287
        %v3064 = vunpack.c.l.b16 %v288
        %v3065 = vunpack.c.l.b16 %v289
        %v3066 = vunpack.c.l.b16 %v290
        %v3067 = vunpack.c.l.b16 %v291
        %v3068 = vunpack.c.l.b16 %v292
        %v3069 = vunpack.c.l.b16 %v293
        %v3070 = vunpack.c.l.b16 %v294
        %v3071 = vunpack.c.l.b16 %v295
        %v3072 = vunpack.c.l.b16 %v296
        %v3073 = vunpack.c.l.b16 %v297
        %v3074 = vunpack.c.l.b16 %v298
        %v3075 = vunpack.c.l.b16 %v299
        %v3076 = vunpack.c.l.b16 %v300
        %v3077 = vunpack.c.l.b16 %v301
        %v3078 = vunpack.c.l.b16 %v302
        %v3079 = vunpack.c.l.b16 %v303
        %v3080 = vunpack.c.l.b16 %v304
        %v3081 = vunpack.c.l.b16 %v305
        %v3082 = vunpack.c.l.b16 %v306
        %v3083 = vunpack.c.l.b16 %v307
        %v3084 = vunpack.c.l.b16 %v308
        %v3085 = vunpack.c.l.b16 %v309
        %v3086 = vunpack.c.l.b16 %v310
        %v3087 = vunpack.c.l.b16 %v311
        %v3088 = vunpack.c.l.b16 %v312
        %v3089 = vunpack.c.l.b16 %v313
        %v3090 = vunpack.c.l.b16 %v314
        %v3091 = vunpack.c.l.b16 %v315
        %v3092 = vunpack.c.l.b16 %v316
        %v3093 = vunpack.c.l.b16 %v317
        %v3094 = vunpack.c.l.b16 %v318
        %v3095 = vunpack.c.l.b16 %v319
        %v3096 = vunpack.c.l.b16 %v320
        %v3097 = vunpack.c.l.b16 %v321
        %v3098 = vunpack.c.l.b16 %v322
        %v3099 = vunpack.c.l.b16 %v323
        %v3100 = vunpack.c.l.b16 %v324
        %v3101 = vunpack.c.l.b16 %v325
        %v3102 = vunpack.c.l.b16 %v326
        %v3103 = vunpack.c.l.b16 %v327
        %v3104 = vunpack.c.l.b16 %v328
        %v3105 = vunpack.c.l.b16 %v329
        %v3106 = vunpack.c.l.b16 %v330
        %v3107 = vunpack.c.l.b16 %v331
        %v3108 = vunpack.c.l.b16 %v332
        %v3109 = vunpack.c.l.b16 %v333
        %v3110 = vunpack.c.l.b16 %v334
        %v3111 = vunpack.c.l.b16 %v335
        %v3112 = vunpack.c.l.b16 %v336
        %v3113 = vunpack.c.l.b16 %v337
        %v3114 = vunpack.c.l.b16 %v338
        %v3115 = vunpack.c.l.b16 %v339
        %v3116 = vunpack.c.l.b16 %v340
        %v3117 = vunpack.c.l.b16 %v341
        %v3118 = vunpack.c.l.b16 %v342
        %v3119 = vunpack.c.l.b16 %v343
        %v3120 = vunpack.c.l.b16 %v344
        %v3121 = vunpack.c.l.b16 %v345
        %v3122 = vunpack.c.l.b16 %v346
        %v3123 = vunpack.c.l.b16 %v347
        %v3124 = vunpack.c.l.b16 %v348
        %v3125 = vunpack.c.l.b16 %v349
        %v3126 = vunpack.c.l.b16 %v350
        %v3127 = vunpack.c.l.b16 %v351
        %v3128 = vunpack.c.l.b16 %v352
        %v3129 = vunpack.c.l.b16 %v353
        %v3130 = vunpack.c.l.b16 %v354
        %v3131 = vunpack.c.l.b16 %v355
        %v3132 = vunpack.c.l.b16 %v356
        %v3133 = vunpack.c.l.b16 %v357
        %v3134 = vunpack.c.l.b16 %v358
        %v3135 = vunpack.c.l.b16 %v359
        %v3136 = vunpack.c.l.b16 %v360
        %v3137 = vunpack.c.l.b16 %v361
        %v3138 = vunpack.c.l.b16 %v362
        %v3139 = vunpack.c.l.b16 %v363
        %v3140 = vunpack.c.l.b16 %v364
        %v3141 = vunpack.c.l.b16 %v365
        %v3142 = vunpack.c.l.b16 %v366
        %v3143 = vunpack.c.l.b16 %v367
        %v3144 = vunpack.c.l.b16 %v368
        %v3145 = vunpack.c.l.b16 %v369
        %v3146 = vunpack.c.l.b16 %v370
        %v3147 = vunpack.c.l.b16 %v371
        %v3148 = vunpack.c.l.b16 %v372
        %v3149 = vunpack.c.l.b16 %v373
        %v3150 = vunpack.c.l.b16 %v374
        %v3151 = vunpack.c.l.b16 %v375
        %v3152 = vunpack.c.l.b16 %v376
        %v3153 = vunpack.c.l.b16 %v377
        %v3154 = vunpack.c.l.b16 %v378
        %v3155 = vunpack.c.l.b16 %v379
        %v3156 = vunpack.c.l.b16 %v380
        %v3157 = vunpack.c.l.b16 %v381
        %v3158 = vunpack.c.l.b16 %v382
        %v3159 = vunpack.c.l.b16 %v383
        %v3160 = vunpack.c.l.b16 %v384
        %v3161 = vunpack.c.l.b16 %v385
        %v3162 = vunpack.c.l.b16 %v386
        %v3163 = vunpack.c.l.b16 %v387
        %v3164 = vunpack.c.l.b16 %v388
        %v3165 = vunpack.c.l.b16 %v389
        %v3166 = vunpack.c.l.b16 %v390
        %v3167 = vunpack.c.l.b16 %v391
        %v3168 = vunpack.c.l.b16 %v392
        %v3169 = vunpack.c.l.b16 %v393
        %v3170 = vunpack.c.l.b16 %v394
        %v3171 = vunpack.c.l.b16 %v395
        %v3172 = vunpack.c.l.b16 %v396
        %v3173 = vunpack.c.l.b16 %v397
        %v3174 = vunpack.c.l.b16 %v398
        %v3175 = vunpack.c.l.b16 %v399
        %v3176 = vunpack.c.l.b16 %v400
        %v3177 = vunpack.c.l.b16 %v401
        %v3178 = vunpack.c.l.b16 %v402
        %v3179 = vunpack.c.l.b16 %v403
        %v3180 = vunpack.c.l.b16 %v404
        %v3181 = vunpack.c.l.b16 %v405
        %v3182 = vunpack.c.l.b16 %v406
        %v3183 = vunpack.c.l.b16 %v407
        %v3184 = vunpack.c.l.b16 %v408
        %v3185 = vunpack.c.l.b16 %v409
        %v3186 = vunpack.c.l.b16 %v410
        %v3187 = vunpack.c.l.b16 %v411
        %v3188 = vunpack.c.l.b16 %v412
        %v3189 = vunpack.c.l.b16 %v413
        %v3190 = vunpack.c.l.b16 %v414
        %v3191 = vunpack.c.l.b16 %v415
        %v3192 = vunpack.c.l.b16 %v416
        %v3193 = vunpack.c.l.b16 %v417
        %v3194 = vunpack.c.l.b16 %v418
        %v3195 = vunpack.c.l.b16 %v419
        %v3196 = vunpack.c.l.b16 %v420
        %v3197 = vunpack.c.l.b16 %v421
        %v3198 = vunpack.c.l.b16 %v422
        %v3199 = vunpack.c.l.b16 %v423
        %v3200 = vunpack.c.l.b16 %v424
        %v3201 = vunpack.c.l.b16 %v425
        %v3202 = vunpack.c.l.b16 %v426
        %v3203 = vunpack.c.l.b16 %v427
        %v3204 = vunpack.c.l.b16 %v428
        %v3205 = vunpack.c.l.b16 %v429
        %v3206 = vunpack.c.l.b16 %v430
        %v3207 = vunpack.c.l.b16 %v431
        %v3208 = vunpack.c.l.b16 %v432
        %v3209 = vunpack.c.l.b16 %v433
        %v3210 = vunpack.c.l.b16 %v434
        %v3211 = vunpack.c.l.b16 %v435
        %v3212 = vunpack.c.l.b16 %v436
        %v3213 = vunpack.c.l.b16 %v437
        %v3214 = vunpack.c.l.b16 %v438
        %v3215 = vunpack.c.l.b16 %v439
        %v3216 = vunpack.c.l.b16 %v440
        %v3217 = vunpack.c.l.b16 %v441
        %v3218 = vunpack.c.l.b16 %v442
        %v3219 = vunpack.c.l.b16 %v443
        %v3220 = vunpack.c.l.b16 %v444
        %v3221 = vunpack.c.l.b16 %v445
        %v3222 = vunpack.c.l.b16 %v446
        %v3223 = vunpack.c.l.b16 %v447
        %v3224 = vunpack.c.l.b16 %v448
        %v3225 = vunpack.c.l.b16 %v449
        %v3226 = vunpack.c.l.b16 %v450
        %v3227 = vunpack.c.l.b16 %v451
        %v3228 = vunpack.c.l.b16 %v452
        %v3229 = vunpack.c.l.b16 %v453
        %v3230 = vunpack.c.l.b16 %v454
        %v3231 = vunpack.c.l.b16 %v455
        %v3232 = vunpack.c.l.b16 %v456
        %v3233 = vunpack.c.l.b16 %v457
        %v3234 = vunpack.c.l.b16 %v458
        %v3235 = vunpack.c.l.b16 %v459
        %v3236 = vunpack.c.l.b16 %v460
        %v3237 = vunpack.c.l.b16 %v461
        %v3238 = vunpack.c.l.b16 %v462
        %v3239 = vunpack.c.l.b16 %v463
        %v3240 = vunpack.c.l.b16 %v464
        %v3241 = vunpack.c.l.b16 %v465
        %v3242 = vunpack.c.l.b16 %v466
        %v3243 = vunpack.c.l.b16 %v467
        %v3244 = vunpack.c.l.b16 %v468
        %v3245 = vunpack.c.l.b16 %v469
        %v3246 = vunpack.c.l.b16 %v470
        %v3247 = vunpack.c.l.b16 %v471
        %v3248 = vunpack.c.l.b16 %v472
        %v3249 = vunpack.c.l.b16 %v473
        %v3250 = vunpack.c.l.b16 %v474
        %v3251 = vunpack.c.l.b16 %v475
        %v3252 = vunpack.c.l.b16 %v476
        %v3253 = vunpack.c.l.b16 %v477
        %v3254 = vunpack.c.l.b16 %v478
        %v3255 = vunpack.c.l.b16 %v479
        %v3256 = vunpack.c.l.b16 %v480
        %v3257 = vunpack.c.l.b16 %v481
        %v3258 = vunpack.c.l.b16 %v482
        %v3259 = vunpack.c.l.b16 %v483
        %v3260 = vunpack.c.l.b16 %v484
        %v3261 = vunpack.c.l.b16 %v485
        %v3262 = vunpack.c.l.b16 %v486
        %v3263 = vunpack.c.l.b16 %v487
        %v3264 = vunpack.c.l.b16 %v488
        %v3265 = vunpack.c.l.b16 %v489
        %v3266 = vunpack.c.l.b16 %v490
        %v3267 = vunpack.c.l.b16 %v491
        %v3268 = vunpack.c.l.b16 %v492
        %v3269 = vunpack.c.l.b16 %v493
        %v3270 = vunpack.c.l.b16 %v494
        %v3271 = vunpack.c.l.b16 %v495
        %v3272 = vunpack.c.l.b16 %v496
        %v3273 = vunpack.c.l.b16 %v497
        %v3274 = vunpack.c.l.b16 %v498
        %v3275 = vunpack.c.l.b16 %v499
        %v3276 = vunpack.c.l.b16 %v500
        %v3277 = vunpack.c.l.b16 %v501
        %v3278 = vunpack.c.l.b16 %v502
        %v3279 = vunpack.c.l.b16 %v503
        %v3280 = vunpack.c.l.b16 %v504
        %v3281 = vunpack.c.l.b16 %v505
        %v3282 = vunpack.c.l.b16 %v506
        %v3283 = vunpack.c.l.b16 %v507
        %v3284 = vunpack.c.l.b16 %v508
        %v3285 = vunpack.c.l.b16 %v509
        %v3286 = vunpack.c.l.b16 %v510
        %v3287 = vunpack.c.l.b16 %v511
        %v3288 = vunpack.c.l.b16 %v512
        %v3289 = vunpack.c.l.b16 %v513
        %v3290 = vunpack.c.l.b16 %v514
        %v3291 = vunpack.c.l.b16 %v515
        %v3292 = vunpack.c.l.b16 %v516
        %v3293 = vunpack.c.l.b16 %v517
        %v3294 = vunpack.c.l.b16 %v518
        %v3295 = vunpack.c.l.b16 %v519
        %v3296 = vunpack.c.l.b16 %v520
        %v3297 = vunpack.c.l.b16 %v521
        %v3298 = vunpack.c.l.b16 %v522
        %v3299 = vunpack.c.l.b16 %v523
        %v3300 = vunpack.c.l.b16 %v524
        %v3301 = vunpack.c.l.b16 %v525
        %v3302 = vunpack.c.l.b16 %v526
        %v3303 = vunpack.c.l.b16 %v527
        %v3304 = vunpack.c.l.b16 %v528
        %v3305 = vunpack.c.l.b16 %v529
        %v3306 = vunpack.c.l.b16 %v530
        %v3307 = vunpack.c.l.b16 %v531
        %v3308 = vunpack.c.l.b16 %v532
        %v3309 = vunpack.c.l.b16 %v533
        %v3310 = vunpack.c.l.b16 %v534
        %v3311 = vunpack.c.l.b16 %v535
        %v3312 = vunpack.c.l.b16 %v536
        %v3313 = vunpack.c.l.b16 %v537
        %v3314 = vunpack.c.l.b16 %v538
        %v3315 = vunpack.c.l.b16 %v539
        %v3316 = vunpack.c.l.b16 %v540
        %v3317 = vunpack.c.l.b16 %v541
        %v3318 = vunpack.c.l.b16 %v542
        %v3319 = vunpack.c.l.b16 %v543
        %v3320 = vunpack.c.l.b16 %v544
        %v3321 = vunpack.c.l.b16 %v545
        %v3322 = vunpack.c.l.b16 %v546
        %v3323 = vunpack.c.l.b16 %v547
        %v3324 = vunpack.c.l.b16 %v548
        %v3325 = vunpack.c.l.b16 %v549
        %v3326 = vunpack.c.l.b16 %v550
        %v3327 = vunpack.c.l.b16 %v551
        %v3328 = vunpack.c.l.b16 %v552
        %v3329 = vunpack.c.l.b16 %v553
        %v3330 = vunpack.c.l.b16 %v554
        %v3331 = vunpack.c.l.b16 %v555
        %v3332 = vunpack.c.l.b16 %v556
        %v3333 = vunpack.c.l.b16 %v557
        %v3334 = vunpack.c.l.b16 %v558
        %v3335 = vunpack.c.l.b16 %v559
        %v3336 = vunpack.c.l.b16 %v560
        %v3337 = vunpack.c.l.b16 %v561
        %v3338 = vunpack.c.l.b16 %v562
        %v3339 = vunpack.c.l.b16 %v563
        %v3340 = vunpack.c.l.b16 %v564
        %v3341 = vunpack.c.l.b16 %v565
        %v3342 = vunpack.c.l.b16 %v566
        %v3343 = vunpack.c.l.b16 %v567
        %v3344 = vunpack.c.l.b16 %v568
        %v3345 = vunpack.c.l.b16 %v569
        %v3346 = vunpack.c.l.b16 %v570
        %v3347 = vunpack.c.l.b16 %v571
        %v3348 = vunpack.c.l.b16 %v572
        %v3349 = vunpack.c.l.b16 %v573
        %v3350 = vunpack.c.l.b16 %v574
        %v3351 = vunpack.c.l.b16 %v575
        %v3352 = vunpack.c.l.b16 %v576
        %v3353 = vunpack.c.l.b16 %v577
        %v3354 = vunpack.c.l.b16 %v578
        %v3355 = vunpack.c.l.b16 %v579
        %v3356 = vunpack.c.l.b16 %v580
        %v3357 = vunpack.c.l.b16 %v581
        %v3358 = vunpack.c.l.b16 %v582
        %v3359 = vunpack.c.l.b16 %v583
        %v3360 = vunpack.c.l.b16 %v584
        %v3361 = vunpack.c.l.b16 %v585
        %v3362 = vunpack.c.l.b16 %v586
        %v3363 = vunpack.c.l.b16 %v587
        %v3364 = vunpack.c.l.b16 %v588
        %v3365 = vunpack.c.l.b16 %v589
        %v3366 = vunpack.c.l.b16 %v590
        %v3367 = vunpack.c.l.b16 %v591
        %v3368 = vunpack.c.l.b16 %v592
        %v3369 = vunpack.c.l.b16 %v593
        %v3370 = vunpack.c.l.b16 %v594
        %v3371 = vunpack.c.l.b16 %v595
        %v3372 = vunpack.c.l.b16 %v596
        %v3373 = vunpack.c.l.b16 %v597
        %v3374 = vunpack.c.l.b16 %v598
        %v3375 = vunpack.c.l.b16 %v599
        %v3376 = vunpack.c.l.b16 %v600
        %v3377 = vunpack.c.l.b16 %v601
        %v3378 = vunpack.c.l.b16 %v602
        %v3379 = vunpack.c.l.b16 %v603
        %v3380 = vunpack.c.l.b16 %v604
        %v3381 = vunpack.c.l.b16 %v605
        %v3382 = vunpack.c.l.b16 %v606
        %v3383 = vunpack.c.l.b16 %v607
        %v3384 = vunpack.c.l.b16 %v608
        %v3385 = vunpack.c.l.b16 %v609
        %v3386 = vunpack.c.l.b16 %v610
        %v3387 = vunpack.c.l.b16 %v611
        %v3388 = vunpack.c.l.b16 %v612
        %v3389 = vunpack.c.l.b16 %v613
        %v3390 = vunpack.c.l.b16 %v614
        %v3391 = vunpack.c.l.b16 %v615
        %v3392 = vunpack.c.l.b16 %v616
        %v3393 = vunpack.c.l.b16 %v617
        %v3394 = vunpack.c.l.b16 %v618
        %v3395 = vunpack.c.l.b16 %v619
        %v3396 = vunpack.c.l.b16 %v620
        %v3397 = vunpack.c.l.b16 %v621
        %v3398 = vunpack.c.l.b16 %v622
        %v3399 = vunpack.c.l.b16 %v623
        %v3400 = vunpack.c.l.b16 %v624
        %v3401 = vunpack.c.l.b16 %v625
        %v3402 = vunpack.c.l.b16 %v626
        %v3403 = vunpack.c.l.b16 %v627
        %v3404 = vunpack.c.l.b16 %v628
        %v3405 = vunpack.c.l.b16 %v629
        %v3406 = vunpack.c.l.b16 %v630
        %v3407 = vunpack.c.l.b16 %v631
        %v3408 = vunpack.c.l.b16 %v632
        %v3409 = vunpack.c.l.b16 %v633
        %v3410 = vunpack.c.l.b16 %v634
        %v3411 = vunpack.c.l.b16 %v635
        %v3412 = vunpack.c.l.b16 %v636
        %v3413 = vunpack.c.l.b16 %v637
        %v3414 = vunpack.c.l.b16 %v638
        %v3415 = vunpack.c.l.b16 %v639
        %v3416 = vunpack.c.l.b16 %v640
        %v3417 = vunpack.c.l.b16 %v641
        %v3418 = vunpack.c.l.b16 %v642
        %v3419 = vunpack.c.l.b16 %v643
        %v3420 = vunpack.c.l.b16 %v644
        %v3421 = vunpack.c.l.b16 %v645
        %v3422 = vunpack.c.l.b16 %v646
        %v3423 = vunpack.c.l.b16 %v647
        %v3424 = vunpack.c.l.b16 %v648
        %v3425 = vunpack.c.l.b16 %v649
        %v3426 = vunpack.c.l.b16 %v650
        %v3427 = vunpack.c.l.b16 %v651
        %v3428 = vunpack.c.l.b16 %v652
        %v3429 = vunpack.c.l.b16 %v653
        %v3430 = vunpack.c.l.b16 %v654
        %v3431 = vunpack.c.l.b16 %v655
        %v3432 = vunpack.c.l.b16 %v656
        %v3433 = vunpack.c.l.b16 %v657
        %v3434 = vunpack.c.l.b16 %v658
        %v3435 = vunpack.c.l.b16 %v659
        %v3436 = vunpack.c.l.b16 %v660
        %v3437 = vunpack.c.l.b16 %v661
        %v3438 = vunpack.c.l.b16 %v662
        %v3439 = vunpack.c.l.b16 %v663
        %v3440 = vunpack.c.l.b16 %v664
        %v3441 = vunpack.c.l.b16 %v665
        %v3442 = vunpack.c.l.b16 %v666
        %v3443 = vunpack.c.l.b16 %v667
        %v3444 = vunpack.c.l.b16 %v668
        %v3445 = vunpack.c.l.b16 %v669
        %v3446 = vunpack.c.l.b16 %v670
        %v3447 = vunpack.c.l.b16 %v671
        %v3448 = vunpack.c.l.b16 %v672
        %v3449 = vunpack.c.l.b16 %v673
        %v3450 = vunpack.c.l.b16 %v674
        %v3451 = vunpack.c.l.b16 %v675
        %v3452 = vunpack.c.l.b16 %v676
        %v3453 = vunpack.c.l.b16 %v677
        %v3454 = vunpack.c.l.b16 %v678
        %v3455 = vunpack.c.l.b16 %v679
        %v3456 = vunpack.c.l.b16 %v680
        %v3457 = vunpack.c.l.b16 %v681
        %v3458 = vunpack.c.l.b16 %v682
        %v3459 = vunpack.c.l.b16 %v683
        %v3460 = vunpack.c.l.b16 %v684
        %v3461 = vunpack.c.l.b16 %v685
        %v3462 = vunpack.c.l.b16 %v686
        %v3463 = vunpack.c.l.b16 %v687
        %v3464 = vunpack.c.l.b16 %v688
        %v3465 = vunpack.c.l.b16 %v689
        %v3466 = vunpack.c.l.b16 %v690
        %v3467 = vunpack.c.l.b16 %v691
        %v3468 = vunpack.c.l.b16 %v692
        %v3469 = vunpack.c.l.b16 %v693
        %v3470 = vunpack.c.l.b16 %v694
        %v3471 = vunpack.c.l.b16 %v695
        %v3472 = vunpack.c.l.b16 %v696
        %v3473 = vunpack.c.l.b16 %v697
        %v3474 = vunpack.c.l.b16 %v698
        %v3475 = vunpack.c.l.b16 %v699
        %v3476 = vunpack.c.l.b16 %v700
        %v3477 = vunpack.c.l.b16 %v701
        %v3478 = vunpack.c.l.b16 %v702
        %v3479 = vunpack.c.l.b16 %v703
        %v3480 = vunpack.c.l.b16 %v704
        %v3481 = vunpack.c.l.b16 %v705
        %v3482 = vunpack.c.l.b16 %v706
        %v3483 = vunpack.c.l.b16 %v707
        %v3484 = vunpack.c.l.b16 %v708
        %v3485 = vunpack.c.l.b16 %v709
        %v3486 = vunpack.c.l.b16 %v710
        %v3487 = vunpack.c.l.b16 %v711
        %v3488 = vunpack.c.l.b16 %v712
        %v3489 = vunpack.c.l.b16 %v713
        %v3490 = vunpack.c.l.b16 %v714
        %v3491 = vunpack.c.l.b16 %v715
        %v3492 = vunpack.c.l.b16 %v716
        %v3493 = vunpack.c.l.b16 %v717
        %v3494 = vunpack.c.l.b16 %v718
        %v3495 = vunpack.c.l.b16 %v719
        %v3496 = vunpack.c.l.b16 %v720
        %v3497 = vunpack.c.l.b16 %v721
        %v3498 = vunpack.c.l.b16 %v722
        %v3499 = vunpack.c.l.b16 %v723
        %v3500 = vunpack.c.l.b16 %v724
        %v3501 = vunpack.c.l.b16 %v725
        %v3502 = vunpack.c.l.b16 %v726
        %v3503 = vunpack.c.l.b16 %v727
        %v3504 = vunpack.c.l.b16 %v728
        %v3505 = vunpack.c.l.b16 %v729
        %v3506 = vunpack.c.l.b16 %v730
        %v3507 = vunpack.c.l.b16 %v731
        %v3508 = vunpack.c.l.b16 %v732
        %v3509 = vunpack.c.l.b16 %v733
        %v3510 = vunpack.c.l.b16 %v734
        %v3511 = vunpack.c.l.b16 %v735
        %v3512 = vunpack.c.l.b16 %v736
        %v3513 = vunpack.c.l.b16 %v737
        %v3514 = vunpack.c.l.b16 %v738
        %v3515 = vunpack.c.l.b16 %v739
        %v3516 = vunpack.c.l.b16 %v740
        %v3517 = vunpack.c.l.b16 %v741
        %v3518 = vunpack.c.l.b16 %v742
        %v3519 = vunpack.c.l.b16 %v743
        %v3520 = vunpack.c.l.b16 %v744
        %v3521 = vunpack.c.l.b16 %v745
        %v3522 = vunpack.c.l.b16 %v746
        %v3523 = vunpack.c.l.b16 %v747
        %v3524 = vunpack.c.l.b16 %v748
        %v3525 = vunpack.c.l.b16 %v749
        %v3526 = vunpack.c.l.b16 %v750
        %v3527 = vunpack.c.l.b16 %v751
        %v3528 = vunpack.c.l.b16 %v752
        %v3529 = vunpack.c.l.b16 %v753
        %v3530 = vunpack.c.l.b16 %v754
        %v3531 = vunpack.c.l.b16 %v755
        %v3532 = vunpack.c.l.b16 %v756
        %v3533 = vunpack.c.l.b16 %v757
        %v3534 = vunpack.c.l.b16 %v758
        %v3535 = vunpack.c.l.b16 %v759
        %v3536 = vunpack.c.l.b16 %v760
        %v3537 = vunpack.c.l.b16 %v761
        %v3538 = vunpack.c.l.b16 %v762
        %v3539 = vunpack.c.l.b16 %v763
        %v3540 = vunpack.c.l.b16 %v764
        %v3541 = vunpack.c.l.b16 %v765
        %v3542 = vunpack.c.l.b16 %v766
        %v3543 = vunpack.c.l.b16 %v767
        %v3544 = vunpack.c.l.b16 %v768
        %v3545 = vunpack.c.l.b16 %v769
        %v3546 = vunpack.c.l.b16 %v770
        %v3547 = vunpack.c.l.b16 %v771
        %v3548 = vunpack.c.l.b16 %v772
        %v3549 = vunpack.c.l.b16 %v773
        %v3550 = vunpack.c.l.b16 %v774
        %v3551 = vunpack.c.l.b16 %v775
        %v3552 = vunpack.c.l.b16 %v776
        %v3553 = vunpack.c.l.b16 %v777
        %v3554 = vunpack.c.l.b16 %v778
        %v3555 = vunpack.c.l.b16 %v779
        %v3556 = vunpack.c.l.b16 %v780
        %v3557 = vunpack.c.l.b16 %v781
        %v3558 = vunpack.c.l.b16 %v782
        %v3559 = vunpack.c.l.b16 %v783
        %v3560 = vunpack.c.l.b16 %v784
        %v3561 = vunpack.c.l.b16 %v785
        %v3562 = vunpack.c.l.b16 %v786
        %v3563 = vunpack.c.l.b16 %v787
        %v3564 = vunpack.c.l.b16 %v788
        %v3565 = vunpack.c.l.b16 %v789
        %v3566 = vunpack.c.l.b16 %v790
        %v3567 = vunpack.c.l.b16 %v791
        %v3568 = vunpack.c.l.b16 %v792
        %v3569 = vunpack.c.l.b16 %v793
        %v3570 = vunpack.c.l.b16 %v794
        %v3571 = vunpack.c.l.b16 %v795
        %v3572 = vunpack.c.l.b16 %v796
        %v3573 = vunpack.c.l.b16 %v797
        %v3574 = vunpack.c.l.b16 %v798
        %v3575 = vunpack.c.l.b16 %v799
        %v3576 = vunpack.c.l.b16 %v800
        %v3577 = vunpack.c.l.b16 %v801
        %v3578 = vunpack.c.l.b16 %v802
        %v3579 = vunpack.c.l.b16 %v803
        %v3580 = vunpack.c.l.b16 %v804
        %v3581 = vunpack.c.l.b16 %v805
        %v3582 = vunpack.c.l.b16 %v806
        %v3583 = vunpack.c.l.b16 %v807
        %v3584 = vunpack.c.l.b16 %v808
        %v3585 = vunpack.c.l.b16 %v809
        %v3586 = vunpack.c.l.b16 %v810
        %v3587 = vunpack.c.l.b16 %v811
        %v3588 = vunpack.c.l.b16 %v812
        %v3589 = vunpack.c.l.b16 %v813
        %v3590 = vunpack.c.l.b16 %v814
        %v3591 = vunpack.c.l.b16 %v815
        %v3592 = vunpack.c.l.b16 %v816
        %v3593 = vunpack.c.l.b16 %v817
        %v3594 = vunpack.c.l.b16 %v818
        %v3595 = vunpack.c.l.b16 %v819
        %v3596 = vunpack.c.l.b16 %v820
        %v3597 = vunpack.c.l.b16 %v821
        %v3598 = vunpack.c.l.b16 %v822
        %v3599 = vunpack.c.l.b16 %v823
        %v3600 = vunpack.c.l.b16 %v824
        %v3601 = vunpack.c.l.b16 %v825
        %v3602 = vunpack.c.l.b16 %v826
        %v3603 = vunpack.c.l.b16 %v827
        %v3604 = vunpack.c.l.b16 %v828
        %v3605 = vunpack.c.l.b16 %v829
        %v3606 = vunpack.c.l.b16 %v830
        %v3607 = vunpack.c.l.b16 %v831
        %v3608 = vunpack.c.l.b16 %v832
        %v3609 = vunpack.c.l.b16 %v833
        %v3610 = vunpack.c.l.b16 %v834
        %v3611 = vunpack.c.l.b16 %v835
        %v3612 = vunpack.c.l.b16 %v836
        %v3613 = vunpack.c.l.b16 %v837
        %v3614 = vunpack.c.l.b16 %v838
        %v3615 = vunpack.c.l.b16 %v839
        %v3616 = vunpack.c.l.b16 %v840
        %v3617 = vunpack.c.l.b16 %v841
        %v3618 = vunpack.c.l.b16 %v842
        %v3619 = vunpack.c.l.b16 %v843
        %v3620 = vunpack.c.l.b16 %v844
        %v3621 = vunpack.c.l.b16 %v845
        %v3622 = vunpack.c.l.b16 %v846
        %v3623 = vunpack.c.l.b16 %v847
        %v3624 = vunpack.c.l.b16 %v848
        %v3625 = vunpack.c.l.b16 %v849
        %v3626 = vunpack.c.l.b16 %v850
        %v3627 = vunpack.c.l.b16 %v851
        %v3628 = vunpack.c.l.b16 %v852
        %v3629 = vunpack.c.l.b16 %v853
        %v3630 = vunpack.c.l.b16 %v854
        %v3631 = vunpack.c.l.b16 %v855
        %v3632 = vunpack.c.l.b16 %v856
        %v3633 = vunpack.c.l.b16 %v857
        %v3634 = vunpack.c.l.b16 %v858
        %v3635 = vunpack.c.l.b16 %v859
        %v3636 = vunpack.c.l.b16 %v860
        %v3637 = vunpack.c.l.b16 %v861
        %v3638 = vunpack.c.l.b16 %v862
        %v3639 = vunpack.c.l.b16 %v863
        %v3640 = vunpack.c.l.b16 %v864
        %v3641 = vunpack.c.l.b16 %v865
        %v3642 = vunpack.c.l.b16 %v866
        %v3643 = vunpack.c.l.b16 %v867
        %v3644 = vunpack.c.l.b16 %v868
        %v3645 = vunpack.c.l.b16 %v869
        %v3646 = vunpack.c.l.b16 %v870
        %v3647 = vunpack.c.l.b16 %v871
        %v3648 = vunpack.c.l.b16 %v872
        %v3649 = vunpack.c.l.b16 %v873
        %v3650 = vunpack.c.l.b16 %v874
        %v3651 = vunpack.c.l.b16 %v875
        %v3652 = vunpack.c.l.b16 %v876
        %v3653 = vunpack.c.l.b16 %v877
        %v3654 = vunpack.c.l.b16 %v878
        %v3655 = vunpack.c.l.b16 %v879
        %v3656 = vunpack.c.l.b16 %v880
        %v3657 = vunpack.c.l.b16 %v881
        %v3658 = vunpack.c.l.b16 %v882
        %v3659 = vunpack.c.l.b16 %v883
        %v3660 = vunpack.c.l.b16 %v884
        %v3661 = vunpack.c.l.b16 %v885
        %v3662 = vunpack.c.l.b16 %v886
        %v3663 = vunpack.c.l.b16 %v887
        %v3664 = vunpack.c.l.b16 %v888
        %v3665 = vunpack.c.l.b16 %v889
        %v3666 = vunpack.c.l.b16 %v890
        %v3667 = vunpack.c.l.b16 %v891
        %v3668 = vunpack.c.l.b16 %v892
        %v3669 = vunpack.c.l.b16 %v893
        %v3670 = vunpack.c.l.b16 %v894
        %v3671 = vunpack.c.l.b16 %v895
        %v3672 = vunpack.c.l.b16 %v896
        %v3673 = vunpack.c.l.b16 %v897
        %v3674 = vunpack.c.l.b16 %v898
        %v3675 = vunpack.c.l.b16 %v899
        %v3676 = vunpack.c.l.b16 %v900
        %v3677 = vunpack.c.l.b16 %v901
        %v3678 = vunpack.c.l.b16 %v902
        %v3679 = vunpack.c.l.b16 %v903
        %v3680 = vunpack.c.l.b16 %v904
        %v3681 = vunpack.c.l.b16 %v905
        %v3682 = vunpack.c.l.b16 %v906
        %v3683 = vunpack.c.l.b16 %v907
        %v3684 = vunpack.c.l.b16 %v908
        %v3685 = vunpack.c.l.b16 %v909
        %v3686 = vunpack.c.l.b16 %v910
        %v3687 = vunpack.c.l.b16 %v911
        %v3688 = vunpack.c.l.b16 %v912
        %v3689 = vunpack.c.l.b16 %v913
        %v3690 = vunpack.c.l.b16 %v914
        %v3691 = vunpack.c.l.b16 %v915
        %v3692 = vunpack.c.l.b16 %v916
        %v3693 = vunpack.c.l.b16 %v917
        %v3694 = vunpack.c.l.b16 %v918
        %v3695 = vunpack.c.l.b16 %v919
        %v3696 = vunpack.c.l.b16 %v920
        %v3697 = vunpack.c.l.b16 %v921
        %v3698 = vunpack.c.l.b16 %v922
        %v3699 = vunpack.c.l.b16 %v923
        %v3700 = vunpack.c.l.b16 %v924
        %v3701 = vunpack.c.l.b16 %v925
        %v3702 = vunpack.c.l.b16 %v926
        %v3703 = vunpack.c.l.b16 %v927
        %v3704 = vunpack.c.l.b16 %v928
        %v3705 = vunpack.c.l.b16 %v929
        %v3706 = vunpack.c.l.b16 %v930
        %v3707 = vunpack.c.l.b16 %v931
        %v3708 = vunpack.c.l.b16 %v932
        %v3709 = vunpack.c.l.b16 %v933
        %v3710 = vunpack.c.l.b16 %v934
        %v3711 = vunpack.c.l.b16 %v935
        %v3712 = vunpack.c.l.b16 %v936
        %v3713 = vunpack.c.l.b16 %v937
        %v3714 = vunpack.c.l.b16 %v938
        %v3715 = vunpack.c.l.b16 %v939
        %v3716 = vunpack.c.l.b16 %v940
        %v3717 = vunpack.c.l.b16 %v941
        %v3718 = vunpack.c.l.b16 %v942
        %v3719 = vunpack.c.l.b16 %v943
        %v3720 = vunpack.c.l.b16 %v944
        %v3721 = vunpack.c.l.b16 %v945
        %v3722 = vunpack.c.l.b16 %v946
        %v3723 = vunpack.c.l.b16 %v947
        %v3724 = vunpack.c.l.b16 %v948
        %v3725 = vunpack.c.l.b16 %v949
        %v3726 = vunpack.c.l.b16 %v950
        %v3727 = vunpack.c.l.b16 %v951
        %v3728 = vunpack.c.l.b16 %v952
        %v3729 = vunpack.c.l.b16 %v953
        %v3730 = vunpack.c.l.b16 %v954
        %v3731 = vunpack.c.l.b16 %v955
        %v3732 = vunpack.c.l.b16 %v956
        %v3733 = vunpack.c.l.b16 %v957
        %v3734 = vunpack.c.l.b16 %v958
        %v3735 = vunpack.c.l.b16 %v959
        %v3736 = vunpack.c.l.b16 %v960
        %v3737 = vunpack.c.l.b16 %v961
        %v3738 = vunpack.c.l.b16 %v962
        %v3739 = vunpack.c.l.b16 %v963
        %v3740 = vunpack.c.l.b16 %v964
        %v3741 = vunpack.c.l.b16 %v965
        %v3742 = vunpack.c.l.b16 %v966
        %v3743 = vunpack.c.l.b16 %v967
        %v3744 = vunpack.c.l.b16 %v968
        %v3745 = vunpack.c.l.b16 %v969
        %v3746 = vunpack.c.l.b16 %v970
        %v3747 = vunpack.c.l.b16 %v971
        %v3748 = vunpack.c.l.b16 %v972
        %v3749 = vunpack.c.l.b16 %v973
        %v3750 = vunpack.c.l.b16 %v974
        %v3751 = vunpack.c.l.b16 %v975
        %v3752 = vunpack.c.l.b16 %v976
        %v3753 = vunpack.c.l.b16 %v977
        %v3754 = vunpack.c.l.b16 %v978
        %v3755 = vunpack.c.l.b16 %v979
        %v3756 = vunpack.c.l.b16 %v980
        %v3757 = vunpack.c.l.b16 %v981
        %v3758 = vunpack.c.l.b16 %v982
        %v3759 = vunpack.c.l.b16 %v983
        %v3760 = vunpack.c.l.b16 %v984
        %v3761 = vunpack.c.l.b16 %v985
        %v3762 = vunpack.c.l.b16 %v986
        %v3763 = vunpack.c.l.b16 %v987
        %v3764 = vunpack.c.l.b16 %v988
        %v3765 = vunpack.c.l.b16 %v989
        %v3766 = vunpack.c.l.b16 %v990
        %v3767 = vunpack.c.l.b16 %v991
        %v3768 = vunpack.c.l.b16 %v992
        %v3769 = vunpack.c.l.b16 %v993
        %v3770 = vunpack.c.l.b16 %v994
        %v3771 = vunpack.c.l.b16 %v995
        %v3772 = vunpack.c.l.b16 %v996
        %v3773 = vunpack.c.l.b16 %v997
        %v3774 = vunpack.c.l.b16 %v998
        %v3775 = vunpack.c.l.b16 %v999
        %v3776 = vunpack.c.l.b16 %v1000
        %v3777 = vunpack.c.l.b16 %v1001
        %v3778 = vunpack.c.l.b16 %v1002
        %v3779 = vunpack.c.l.b16 %v1003
        %v3780 = vunpack.c.l.b16 %v1004
        %v3781 = vunpack.c.l.b16 %v1005
        %v3782 = vunpack.c.l.b16 %v1006
        %v3783 = vunpack.c.l.b16 %v1007
        %v3784 = vunpack.c.l.b16 %v1008
        %v3785 = vunpack.c.l.b16 %v1009
        %v3786 = vunpack.c.l.b16 %v1010
        %v3787 = vunpack.c.l.b16 %v1011
        %v3788 = vunpack.c.l.b16 %v1012
        %v3789 = vunpack.c.l.b16 %v1013
        %v3790 = vunpack.c.l.b16 %v1014
        %v3791 = vunpack.c.l.b16 %v1015
        %v3792 = vunpack.c.l.b16 %v1016
        %v3793 = vunpack.c.l.b16 %v1017
        %v3794 = vunpack.c.l.b16 %v1018
        %v3795 = vunpack.c.l.b16 %v1019
        %v3796 = vunpack.c.l.b16 %v1020
        %v3797 = vunpack.c.l.b16 %v1021
        %v3798 = vunpack.c.l.b16 %v1022
        %v3799 = vunpack.c.l.b16 %v1023
        %v3800 = vunpack.c.l.b16 %v1024
        %v3801 = vunpack.c.l.b16 %v1025
        %v3802 = vunpack.c.l.b16 %v1026
        %v3803 = vunpack.c.l.b16 %v1027
        %v3804 = vunpack.c.l.b16 %v1028
        %v3805 = vunpack.c.l.b16 %v1029
        %v3806 = vunpack.c.l.b16 %v1030
        %v3807 = vunpack.c.l.b16 %v1031
        %v3808 = vunpack.c.l.b16 %v1032
        %v3809 = vunpack.c.l.b16 %v1033
        %v3810 = vunpack.c.l.b16 %v1034
        %v3811 = vunpack.c.l.b16 %v1035
        %v3812 = vunpack.c.l.b16 %v1036
        %v3813 = vunpack.c.l.b16 %v1037
        %v3814 = vunpack.c.l.b16 %v1038
        %v3815 = vunpack.c.l.b16 %v1039
        %v3816 = vunpack.c.l.b16 %v1040
        %v3817 = vunpack.c.l.b16 %v1041
        %v3818 = vunpack.c.l.b16 %v1042
        %v3819 = vunpack.c.l.b16 %v1043
        %v3820 = vunpack.c.l.b16 %v1044
        %v3821 = vunpack.c.l.b16 %v1045
        %v3822 = vunpack.c.l.b16 %v1046
        %v3823 = vunpack.c.l.b16 %v1047
        %v3824 = vunpack.c.l.b16 %v1048
        %v3825 = vunpack.c.l.b16 %v1049
        %v3826 = vunpack.c.l.b16 %v1050
        %v3827 = vunpack.c.l.b16 %v1051
        %v3828 = vunpack.c.l.b16 %v1052
        %v3829 = vunpack.c.l.b16 %v1053
        %v3830 = vunpack.c.l.b16 %v1054
        %v3831 = vunpack.c.l.b16 %v1055
        %v3832 = vunpack.c.l.b16 %v1056
        %v3833 = vunpack.c.l.b16 %v1057
        %v3834 = vunpack.c.l.b16 %v1058
        %v3835 = vunpack.c.l.b16 %v1059
        %v3836 = vunpack.c.l.b16 %v1060
        %v3837 = vunpack.c.l.b16 %v1061
        %v3838 = vunpack.c.l.b16 %v1062
        %v3839 = vunpack.c.l.b16 %v1063
        %v3840 = vunpack.c.l.b16 %v1064
        %v3841 = vunpack.c.l.b16 %v1065
        %v3842 = vunpack.c.l.b16 %v1066
        %v3843 = vunpack.c.l.b16 %v1067
        %v3844 = vunpack.c.l.b16 %v1068
        %v3845 = vunpack.c.l.b16 %v1069
        %v3846 = vunpack.c.l.b16 %v1070
        %v3847 = vunpack.c.l.b16 %v1071
        %v3848 = vunpack.c.l.b16 %v1072
        %v3849 = vunpack.c.l.b16 %v1073
        %v3850 = vunpack.c.l.b16 %v1074
        %v3851 = vunpack.c.l.b16 %v1075
        %v3852 = vunpack.c.l.b16 %v1076
        %v3853 = vunpack.c.l.b16 %v1077
        %v3854 = vunpack.c.l.b16 %v1078
        %v3855 = vunpack.c.l.b16 %v1079
        %v3856 = vunpack.c.l.b16 %v1080
        %v3857 = vunpack.c.l.b16 %v1081
        %v3858 = vunpack.c.l.b16 %v1082
        %v3859 = vunpack.c.l.b16 %v1083
        %v3860 = vunpack.c.l.b16 %v1084
        %v3861 = vunpack.c.l.b16 %v1085
        %v3862 = vunpack.c.l.b16 %v1086
        %v3863 = vunpack.c.l.b16 %v1087
        %v3864 = vunpack.c.l.b16 %v1088
        %v3865 = vunpack.c.l.b16 %v1089
        %v3866 = vunpack.c.l.b16 %v1090
        %v3867 = vunpack.c.l.b16 %v1091
        %v3868 = vunpack.c.l.b16 %v1092
        %v3869 = vunpack.c.l.b16 %v1093
        %v3870 = vunpack.c.l.b16 %v1094
        %v3871 = vunpack.c.l.b16 %v1095
        %v3872 = vunpack.c.l.b16 %v1096
        %v3873 = vunpack.c.l.b16 %v1097
        %v3874 = vunpack.c.l.b16 %v1098
        %v3875 = vunpack.c.l.b16 %v1099
        %v3876 = vunpack.c.l.b16 %v1100
        %v3877 = vunpack.c.l.b16 %v1101
        %v3878 = vunpack.c.l.b16 %v1102
        %v3879 = vunpack.c.l.b16 %v1103
        %v3880 = vunpack.c.l.b16 %v1104
        %v3881 = vunpack.c.l.b16 %v1105
        %v3882 = vunpack.c.l.b16 %v1106
        %v3883 = vunpack.c.l.b16 %v1107
        %v3884 = vunpack.c.l.b16 %v1108
        %v3885 = vunpack.c.l.b16 %v1109
        %v3886 = vunpack.c.l.b16 %v1110
        %v3887 = vunpack.c.l.b16 %v1111
        %v3888 = vunpack.c.l.b16 %v1112
        %v3889 = vunpack.c.l.b16 %v1113
        %v3890 = vunpack.c.l.b16 %v1114
        %v3891 = vunpack.c.l.b16 %v1115
        %v3892 = vunpack.c.l.b16 %v1116
        %v3893 = vunpack.c.l.b16 %v1117
        %v3894 = vunpack.c.l.b16 %v1118
        %v3895 = vunpack.c.l.b16 %v1119
        %v3896 = vunpack.c.l.b16 %v1120
        %v3897 = vunpack.c.l.b16 %v1121
        %v3898 = vunpack.c.l.b16 %v1122
        %v3899 = vunpack.c.l.b16 %v1123
        %v3900 = vunpack.c.l.b16 %v1124
        %v3901 = vunpack.c.l.b16 %v1125
        %v3902 = vunpack.c.l.b16 %v1126
        %v3903 = vunpack.c.l.b16 %v1127
        %v3904 = vunpack.c.l.b16 %v1128
        %v3905 = vunpack.c.l.b16 %v1129
        %v3906 = vunpack.c.l.b16 %v1130
        %v3907 = vunpack.c.l.b16 %v1131
        %v3908 = vunpack.c.l.b16 %v1132
        %v3909 = vunpack.c.l.b16 %v1133
        %v3910 = vunpack.c.l.b16 %v1134
        %v3911 = vunpack.c.l.b16 %v1135
        %v3912 = vunpack.c.l.b16 %v1136
        %v3913 = vunpack.c.l.b16 %v1137
        %v3914 = vunpack.c.l.b16 %v1138
        %v3915 = vunpack.c.l.b16 %v1139
        %v3916 = vunpack.c.l.b16 %v1140
        %v3917 = vunpack.c.l.b16 %v1141
        %v3918 = vunpack.c.l.b16 %v1142
        %v3919 = vunpack.c.l.b16 %v1143
        %v3920 = vunpack.c.l.b16 %v1144
        %v3921 = vunpack.c.l.b16 %v1145
        %v3922 = vunpack.c.l.b16 %v1146
        %v3923 = vunpack.c.l.b16 %v1147
        %v3924 = vunpack.c.l.b16 %v1148
        %v3925 = vunpack.c.l.b16 %v1149
        %v3926 = vunpack.c.l.b16 %v1150
        %v3927 = vunpack.c.l.b16 %v1151
        %v3928 = vunpack.c.l.b16 %v1152
        %v3929 = vunpack.c.l.b16 %v1153
        %v3930 = vunpack.c.l.b16 %v1154
        %v3931 = vunpack.c.l.b16 %v1155
        %v3932 = vunpack.c.l.b16 %v1156
        %v3933 = vunpack.c.l.b16 %v1157
        %v3934 = vunpack.c.l.b16 %v1158
        %v3935 = vunpack.c.l.b16 %v1159
        %v3936 = vunpack.c.l.b16 %v1160
        %v3937 = vunpack.c.l.b16 %v1161
        %v3938 = vunpack.c.l.b16 %v1162
        %v3939 = vunpack.c.l.b16 %v1163
        %v3940 = vunpack.c.l.b16 %v1164
        %v3941 = vunpack.c.l.b16 %v1165
        %v3942 = vunpack.c.l.b16 %v1166
        %v3943 = vunpack.c.l.b16 %v1167
        %v3944 = vunpack.c.l.b16 %v1168
        %v3945 = vunpack.c.l.b16 %v1169
        %v3946 = vunpack.c.l.b16 %v1170
        %v3947 = vunpack.c.l.b16 %v1171
        %v3948 = vunpack.c.l.b16 %v1172
        %v3949 = vunpack.c.l.b16 %v1173
        %v3950 = vunpack.c.l.b16 %v1174
        %v3951 = vunpack.c.l.b16 %v1175
        %v3952 = vunpack.c.l.b16 %v1176
        %v3953 = vunpack.c.l.b16 %v1177
        %v3954 = vunpack.c.l.b16 %v1178
        %v3955 = vunpack.c.l.b16 %v1179
        %v3956 = vunpack.c.l.b16 %v1180
        %v3957 = vunpack.c.l.b16 %v1181
        %v3958 = vunpack.c.l.b16 %v1182
        %v3959 = vunpack.c.l.b16 %v1183
        %v3960 = vunpack.c.l.b16 %v1184
        %v3961 = vunpack.c.l.b16 %v1185
        %v3962 = vunpack.c.l.b16 %v1186
        %v3963 = vunpack.c.l.b16 %v1187
        %v3964 = vunpack.c.l.b16 %v1188
        %v3965 = vunpack.c.l.b16 %v1189
        %v3966 = vunpack.c.l.b16 %v1190
        %v3967 = vunpack.c.l.b16 %v1191
        %v3968 = vunpack.c.l.b16 %v1192
        %v3969 = vunpack.c.l.b16 %v1193
        %v3970 = vunpack.c.l.b16 %v1194
        %v3971 = vunpack.c.l.b16 %v1195
        %v3972 = vunpack.c.l.b16 %v1196
        %v3973 = vunpack.c.l.b16 %v1197
        %v3974 = vunpack.c.l.b16 %v1198
        %v3975 = vunpack.c.l.b16 %v1199
        %v3976 = vunpack.c.l.b16 %v1200
        %v3977 = vunpack.c.l.b16 %v1201
        %v3978 = vunpack.c.l.b16 %v1202
        %v3979 = vunpack.c.l.b16 %v1203
        %v3980 = vunpack.c.l.b16 %v1204
        %v3981 = vunpack.c.l.b16 %v1205
        %v3982 = vunpack.c.l.b16 %v1206
        %v3983 = vunpack.c.l.b16 %v1207
        %v3984 = vunpack.c.l.b16 %v1208
        %v3985 = vunpack.c.l.b16 %v1209
        %v3986 = vunpack.c.l.b16 %v1210
        %v3987 = vunpack.c.l.b16 %v1211
        %v3988 = vunpack.c.l.b16 %v1212
        %v3989 = vunpack.c.l.b16 %v1213
        %v3990 = vunpack.c.l.b16 %v1214
        %v3991 = vunpack.c.l.b16 %v1215
        %v3992 = vunpack.c.l.b16 %v1216
        %v3993 = vunpack.c.l.b16 %v1217
        %v3994 = vunpack.c.l.b16 %v1218
        %v3995 = vunpack.c.l.b16 %v1219
        %v3996 = vunpack.c.l.b16 %v1220
        %v3997 = vunpack.c.l.b16 %v1221
        %v3998 = vunpack.c.l.b16 %v1222
        %v3999 = vunpack.c.l.b16 %v1223
        %v4000 = vunpack.c.l.b16 %v1224
        %v4001 = vunpack.c.l.b16 %v1225
        %v4002 = vunpack.c.l.b16 %v1226
        %v4003 = vunpack.c.l.b16 %v1227
        %v4004 = vunpack.c.l.b16 %v1228
        %v4005 = vunpack.c.l.b16 %v1229
        %v4006 = vunpack.c.l.b16 %v1230
        %v4007 = vunpack.c.l.b16 %v1231
        %v4008 = vunpack.c.l.b16 %v1232
        %v4009 = vunpack.c.l.b16 %v1233
        %v4010 = vunpack.c.l.b16 %v1234
        %v4011 = vunpack.c.l.b16 %v1235
        %v4012 = vunpack.c.l.b16 %v1236
        %v4013 = vunpack.c.l.b16 %v1237
        %v4014 = vunpack.c.l.b16 %v1238
        %v4015 = vunpack.c.l.b16 %v1239
        %v4016 = vunpack.c.l.b16 %v1240
        %v4017 = vunpack.c.l.b16 %v1241
        %v4018 = vunpack.c.l.b16 %v1242
        %v4019 = vunpack.c.l.b16 %v1243
        %v4020 = vunpack.c.l.b16 %v1244
        %v4021 = vunpack.c.l.b16 %v1245
        %v4022 = vunpack.c.l.b16 %v1246
        %v4023 = vunpack.c.l.b16 %v1247
        %v4024 = vunpack.c.l.b16 %v1248
        %v4025 = vunpack.c.l.b16 %v1249
        %v4026 = vunpack.c.l.b16 %v1250
        %v4027 = vunpack.c.l.b16 %v1251
        %v4028 = vunpack.c.l.b16 %v1252
        %v4029 = vunpack.c.l.b16 %v1253
        %v4030 = vunpack.c.l.b16 %v1254
        %v4031 = vunpack.c.l.b16 %v1255
        %v4032 = vunpack.c.l.b16 %v1256
        %v4033 = vunpack.c.l.b16 %v1257
        %v4034 = vunpack.c.l.b16 %v1258
        %v4035 = vunpack.c.l.b16 %v1259
        %v4036 = vunpack.c.l.b16 %v1260
        %v4037 = vunpack.c.l.b16 %v1261
        %v4038 = vunpack.c.l.b16 %v1262
        %v4039 = vunpack.c.l.b16 %v1263
        %v4040 = vunpack.c.l.b16 %v1264
        %v4041 = vunpack.c.l.b16 %v1265
        %v4042 = vunpack.c.l.b16 %v1266
        %v4043 = vunpack.c.l.b16 %v1267
        %v4044 = vunpack.c.l.b16 %v1268
        %v4045 = vunpack.c.l.b16 %v1269
        %v4046 = vunpack.c.l.b16 %v1270
        %v4047 = vunpack.c.l.b16 %v1271
        %v4048 = vunpack.c.l.b16 %v1272
        %v4049 = vunpack.c.l.b16 %v1273
        %v4050 = vunpack.c.l.b16 %v1274
        %v4051 = vunpack.c.l.b16 %v1275
        %v4052 = vunpack.c.l.b16 %v1276
        %v4053 = vunpack.c.l.b16 %v1277
        %v4054 = vunpack.c.l.b16 %v1278
        %v4055 = vunpack.c.l.b16 %v1279
        %v4056 = vunpack.c.l.b16 %v1280
        %v4057 = vunpack.c.l.b16 %v1281
        %v4058 = vunpack.c.l.b16 %v1282
        %v4059 = vunpack.c.l.b16 %v1283
        %v4060 = vunpack.c.l.b16 %v1284
        %v4061 = vunpack.c.l.b16 %v1285
        %v4062 = vunpack.c.l.b16 %v1286
        %v4063 = vunpack.c.l.b16 %v1287
        %v4064 = vunpack.c.l.b16 %v1288
        %v4065 = vunpack.c.l.b16 %v1289
        %v4066 = vunpack.c.l.b16 %v1290
        %v4067 = vunpack.c.l.b16 %v1291
        %v4068 = vunpack.c.l.b16 %v1292
        %v4069 = vunpack.c.l.b16 %v1293
        %v4070 = vunpack.c.l.b16 %v1294
        %v4071 = vunpack.c.l.b16 %v1295
        %v4072 = vunpack.c.l.b16 %v1296
        %v4073 = vunpack.c.l.b16 %v1297
        %v4074 = vunpack.c.l.b16 %v1298
        %v4075 = vunpack.c.l.b16 %v1299
        %v4076 = vunpack.c.l.b16 %v1300
        %v4077 = vunpack.c.l.b16 %v1301
        %v4078 = vunpack.c.l.b16 %v1302
        %v4079 = vunpack.c.l.b16 %v1303
        %v4080 = vunpack.c.l.b16 %v1304
        %v4081 = vunpack.c.l.b16 %v1305
        %v4082 = vunpack.c.l.b16 %v1306
        %v4083 = vunpack.c.l.b16 %v1307
        %v4084 = vunpack.c.l.b16 %v1308
        %v4085 = vunpack.c.l.b16 %v1309
        %v4086 = vunpack.c.l.b16 %v1310
        %v4087 = vunpack.c.l.b16 %v1311
        %v4088 = vunpack.c.l.b16 %v1312
        %v4089 = vunpack.c.l.b16 %v1313
        %v4090 = vunpack.c.l.b16 %v1314
        %v4091 = vunpack.c.l.b16 %v1315
        %v4092 = vunpack.c.l.b16 %v1316
        %v4093 = vunpack.c.l.b16 %v1317
        %v4094 = vunpack.c.l.b16 %v1318
        %v4095 = vunpack.c.l.b16 %v1319
        %v4096 = vunpack.c.l.b16 %v1320
        %v4097 = vunpack.c.l.b16 %v1321
        %v4098 = vunpack.c.l.b16 %v1322
        %v4099 = vunpack.c.l.b16 %v1323
        %v4100 = vunpack.c.l.b16 %v1324
        %v4101 = vunpack.c.l.b16 %v1325
        %v4102 = vunpack.c.l.b16 %v1326
        %v4103 = vunpack.c.l.b16 %v1327
        %v4104 = vunpack.c.l.b16 %v1328
        %v4105 = vunpack.c.l.b16 %v1329
        %v4106 = vunpack.c.l.b16 %v1330
        %v4107 = vunpack.c.l.b16 %v1331
        %v4108 = vunpack.c.l.b16 %v1332
        %v4109 = vunpack.c.l.b16 %v1333
        %v4110 = vunpack.c.l.b16 %v1334
        %v4111 = vunpack.c.l.b16 %v1335
        %v4112 = vunpack.c.l.b16 %v1336
        %v4113 = vunpack.c.l.b16 %v1337
        %v4114 = vunpack.c.l.b16 %v1338
        %v4115 = vunpack.c.l.b16 %v1339
        %v4116 = vunpack.c.l.b16 %v1340
        %v4117 = vunpack.c.l.b16 %v1341
        %v4118 = vunpack.c.l.b16 %v1342
        %v4119 = vunpack.c.l.b16 %v1343
        %v4120 = vunpack.c.l.b16 %v1344
        %v4121 = vunpack.c.l.b16 %v1345
        %v4122 = vunpack.c.l.b16 %v1346
        %v4123 = vunpack.c.l.b16 %v1347
        %v4124 = vunpack.c.l.b16 %v1348
        %v4125 = vunpack.c.l.b16 %v1349
        %v4126 = vunpack.c.l.b16 %v1350
        %v4127 = vunpack.c.l.b16 %v1351
        %v4128 = vunpack.c.l.b16 %v1352
        %v4129 = vunpack.c.l.b16 %v1353
        %v4130 = vunpack.c.l.b16 %v1354
        %v4131 = vunpack.c.l.b16 %v1355
        %v4132 = vunpack.c.l.b16 %v1356
        %v4133 = vunpack.c.l.b16 %v1357
        %v4134 = vunpack.c.l.b16 %v1358
        %v4135 = vunpack.c.l.b16 %v1359
        %v4136 = vunpack.c.l.b16 %v1360
        %v4137 = vunpack.c.l.b16 %v1361
        %v4138 = vunpack.c.l.b16 %v1362
        %v4139 = vunpack.c.l.b16 %v1363
        %v4140 = vunpack.c.l.b16 %v1364
        %v4141 = vunpack.c.l.b16 %v1365
        %v4142 = vunpack.c.l.b16 %v1366
        %v4143 = vunpack.c.l.b16 %v1367
        %v4144 = vunpack.c.l.b16 %v1368
        %v4145 = vunpack.c.l.b16 %v1369
        %v4146 = vunpack.c.l.b16 %v1370
        %v4147 = vunpack.c.l.b16 %v1371
        %v4148 = vunpack.c.l.b16 %v1372
        %v4149 = vunpack.c.l.b16 %v1373
        %v4150 = vunpack.c.l.b16 %v1374
        %v4151 = vunpack.c.l.b16 %v1375
        %v4152 = vunpack.c.l.b16 %v1376
        %v4153 = vunpack.c.l.b16 %v1377
        %v4154 = vunpack.c.l.b16 %v1378
        %v4155 = vunpack.c.l.b16 %v1379
        %v4156 = vunpack.c.l.b16 %v1380
        %v4157 = vunpack.c.l.b16 %v1381
        %v4158 = vunpack.c.l.b16 %v1382
        %v4159 = vunpack.c.l.b16 %v1383
        %v4160 = vunpack.c.l.b16 %v1384
        %v4161 = vunpack.c.l.b16 %v1385
        %v4162 = vunpack.c.l.b16 %v1386
        %v4163 = vunpack.c.l.b16 %v1387
        %v4164 = vunpack.c.l.b16 %v1388
        %v4165 = vunpack.c.l.b16 %v1389
        %v4166 = vunpack.c.l.b16 %v1390
        %v4167 = vunpack.c.l.b16 %v1391
        %v4168 = vunpack.c.l.b16 %v1392
        %v4169 = vunpack.c.l.b16 %v1393
        %v4170 = vunpack.c.l.b16 %v1394
        %v4171 = vunpack.c.l.b16 %v1395
        %v4172 = vunpack.c.l.b16 %v1396
        %v4173 = vunpack.c.l.b16 %v1397
        %v4174 = vunpack.c.l.b16 %v1398
        %v4175 = vunpack.c.l.b16 %v1399
        %v4176 = vunpack.c.l.b16 %v1400
        %v4177 = vunpack.c.l.b16 %v1401
        %v4178 = vunpack.c.l.b16 %v1402
        %v4179 = vunpack.c.l.b16 %v1403
        %v4180 = vunpack.c.l.b16 %v1404
        %v4181 = vunpack.c.l.b16 %v1405
        %v4182 = vunpack.c.l.b16 %v1406
        %v4183 = vunpack.c.l.b16 %v1407
        %v4184 = vunpack.c.l.b16 %v1408
        %v4185 = vunpack.c.l.b16 %v1409
        %v4186 = vunpack.c.l.b16 %v1410
        %v4187 = vunpack.c.l.b16 %v1411
        %v4188 = vunpack.c.l.b16 %v1412
        %v4189 = vunpack.c.l.b16 %v1413
        %v4190 = vunpack.c.l.b16 %v1414
        %v4191 = vunpack.c.l.b16 %v1415
        %v4192 = vunpack.c.l.b16 %v1416
        %v4193 = vunpack.c.l.b16 %v1417
        %v4194 = vunpack.c.l.b16 %v1418
        %v4195 = vunpack.c.l.b16 %v1419
        %v4196 = vunpack.c.l.b16 %v1420
        %v4197 = vunpack.c.l.b16 %v1421
        %v4198 = vunpack.c.l.b16 %v1422
        %v4199 = vunpack.c.l.b16 %v1423
        %v4200 = vunpack.c.l.b16 %v1424
        %v4201 = vunpack.c.l.b16 %v1425
        %v4202 = vunpack.c.l.b16 %v1426
        %v4203 = vunpack.c.l.b16 %v1427
        %v4204 = vunpack.c.l.b16 %v1428
        %v4205 = vunpack.c.l.b16 %v1429
        %v4206 = vunpack.c.l.b16 %v1430
        %v4207 = vunpack.c.l.b16 %v1431
        %v4208 = vunpack.c.l.b16 %v1432
        %v4209 = vunpack.c.l.b16 %v1433
        %v4210 = vunpack.c.l.b16 %v1434
        %v4211 = vunpack.c.l.b16 %v1435
        %v4212 = vunpack.c.l.b16 %v1436
        %v4213 = vunpack.c.l.b16 %v1437
        %v4214 = vunpack.c.l.b16 %v1438
        %v4215 = vunpack.c.l.b16 %v1439
        %v4216 = vunpack.c.l.b16 %v1440
        %v4217 = vunpack.c.l.b16 %v1441
        %v4218 = vunpack.c.l.b16 %v1442
        %v4219 = vunpack.c.l.b16 %v1443
        %v4220 = vunpack.c.l.b16 %v1444
        %v4221 = vunpack.c.l.b16 %v1445
        %v4222 = vunpack.c.l.b16 %v1446
        %v4223 = vunpack.c.l.b16 %v1447
        %v4224 = vunpack.c.l.b16 %v1448
        %v4225 = vunpack.c.l.b16 %v1449
        %v4226 = vunpack.c.l.b16 %v1450
        %v4227 = vunpack.c.l.b16 %v1451
        %v4228 = vunpack.c.l.b16 %v1452
        %v4229 = vpack.c.b16 %v2980, %v2979
        %v4230 = vpack.c.b16 %v2982, %v2981
        %v4231 = vpack.c.b16 %v2984, %v2983
        %v4232 = vpack.c.b16 %v2986, %v2985
        %v4233 = vpack.c.b16 %v2988, %v2987
        %v4234 = vpack.c.b16 %v2990, %v2989
        %v4235 = vpack.c.b16 %v2992, %v2991
        %v4236 = vpack.c.b16 %v2994, %v2993
        %v4237 = vpack.c.b16 %v2996, %v2995
        %v4238 = vpack.c.b16 %v2998, %v2997
        %v4239 = vpack.c.b16 %v3000, %v2999
        %v4240 = vpack.c.b16 %v3002, %v3001
        %v4241 = vpack.c.b16 %v3004, %v3003
        %v4242 = vpack.c.b16 %v3006, %v3005
        %v4243 = vpack.c.b16 %v3008, %v3007
        %v4244 = vpack.c.b16 %v3010, %v3009
        %v4245 = vpack.c.b16 %v3012, %v3011
        %v4246 = vpack.c.b16 %v3014, %v3013
        %v4247 = vpack.c.b16 %v3016, %v3015
        %v4248 = vpack.c.b16 %v3018, %v3017
        %v4249 = vpack.c.b16 %v3020, %v3019
        %v4250 = vpack.c.b16 %v3022, %v3021
        %v4251 = vpack.c.b16 %v3024, %v3023
        %v4252 = vpack.c.b16 %v3026, %v3025
        %v4253 = vpack.c.b16 %v3028, %v3027
        %v4254 = vpack.c.b16 %v3030, %v3029
        %v4255 = vpack.c.b16 %v3032, %v3031
        %v4256 = vpack.c.b16 %v3034, %v3033
        %v4257 = vpack.c.b16 %v3036, %v3035
        %v4258 = vpack.c.b16 %v3038, %v3037
        %v4259 = vpack.c.b16 %v3040, %v3039
        %v4260 = vpack.c.b16 %v3042, %v3041
        %v4261 = vpack.c.b16 %v3044, %v3043
        %v4262 = vpack.c.b16 %v3046, %v3045
        %v4263 = vpack.c.b16 %v3048, %v3047
        %v4264 = vpack.c.b16 %v3050, %v3049
        %v4265 = vpack.c.b16 %v3052, %v3051
        %v4266 = vpack.c.b16 %v3054, %v3053
        %v4267 = vpack.c.b16 %v3056, %v3055
        %v4268 = vpack.c.b16 %v3058, %v3057
        %v4269 = vpack.c.b16 %v3060, %v3059
        %v4270 = vpack.c.b16 %v3062, %v3061
        %v4271 = vpack.c.b16 %v3064, %v3063
        %v4272 = vpack.c.b16 %v3066, %v3065
        %v4273 = vpack.c.b16 %v3068, %v3067
        %v4274 = vpack.c.b16 %v3070, %v3069
        %v4275 = vpack.c.b16 %v3072, %v3071
        %v4276 = vpack.c.b16 %v3074, %v3073
        %v4277 = vpack.c.b16 %v3076, %v3075
        %v4278 = vpack.c.b16 %v3078, %v3077
        %v4279 = vpack.c.b16 %v3080, %v3079
        %v4280 = vpack.c.b16 %v3082, %v3081
        %v4281 = vpack.c.b16 %v3084, %v3083
        %v4282 = vpack.c.b16 %v3086, %v3085
        %v4283 = vpack.c.b16 %v3088, %v3087
        %v4284 = vpack.c.b16 %v3090, %v3089
        %v4285 = vpack.c.b16 %v3092, %v3091
        %v4286 = vpack.c.b16 %v3094, %v3093
        %v4287 = vpack.c.b16 %v3096, %v3095
        %v4288 = vpack.c.b16 %v3098, %v3097
        %v4289 = vpack.c.b16 %v3100, %v3099
        %v4290 = vpack.c.b16 %v3102, %v3101
        %v4291 = vpack.c.b16 %v3104, %v3103
        %v4292 = vpack.c.b16 %v3106, %v3105
        %v4293 = vpack.c.b16 %v3108, %v3107
        %v4294 = vpack.c.b16 %v3110, %v3109
        %v4295 = vpack.c.b16 %v3112, %v3111
        %v4296 = vpack.c.b16 %v3114, %v3113
        %v4297 = vpack.c.b16 %v3116, %v3115
        %v4298 = vpack.c.b16 %v3118, %v3117
        %v4299 = vpack.c.b16 %v3120, %v3119
        %v4300 = vpack.c.b16 %v3122, %v3121
        %v4301 = vpack.c.b16 %v3124, %v3123
        %v4302 = vpack.c.b16 %v3126, %v3125
        %v4303 = vpack.c.b16 %v3128, %v3127
        %v4304 = vpack.c.b16 %v3130, %v3129
        %v4305 = vpack.c.b16 %v3132, %v3131
        %v4306 = vpack.c.b16 %v3134, %v3133
        %v4307 = vpack.c.b16 %v3136, %v3135
        %v4308 = vpack.c.b16 %v3138, %v3137
        %v4309 = vpack.c.b16 %v3140, %v3139
        %v4310 = vpack.c.b16 %v3142, %v3141
        %v4311 = vpack.c.b16 %v3144, %v3143
        %v4312 = vpack.c.b16 %v3146, %v3145
        %v4313 = vpack.c.b16 %v3148, %v3147
        %v4314 = vpack.c.b16 %v3150, %v3149
        %v4315 = vpack.c.b16 %v3152, %v3151
        %v4316 = vpack.c.b16 %v3154, %v3153
        %v4317 = vpack.c.b16 %v3156, %v3155
        %v4318 = vpack.c.b16 %v3158, %v3157
        %v4319 = vpack.c.b16 %v3160, %v3159
        %v4320 = vpack.c.b16 %v3162, %v3161
        %v4321 = vpack.c.b16 %v3164, %v3163
        %v4322 = vpack.c.b16 %v3166, %v3165
        %v4323 = vpack.c.b16 %v3168, %v3167
        %v4324 = vpack.c.b16 %v3170, %v3169
        %v4325 = vpack.c.b16 %v3172, %v3171
        %v4326 = vpack.c.b16 %v3174, %v3173
        %v4327 = vpack.c.b16 %v3176, %v3175
        %v4328 = vpack.c.b16 %v3178, %v3177
        %v4329 = vpack.c.b16 %v3180, %v3179
        %v4330 = vpack.c.b16 %v3182, %v3181
        %v4331 = vpack.c.b16 %v3184, %v3183
        %v4332 = vpack.c.b16 %v3186, %v3185
        %v4333 = vpack.c.b16 %v3188, %v3187
        %v4334 = vpack.c.b16 %v3190, %v3189
        %v4335 = vpack.c.b16 %v3192, %v3191
        %v4336 = vpack.c.b16 %v3194, %v3193
        %v4337 = vpack.c.b16 %v3196, %v3195
        %v4338 = vpack.c.b16 %v3198, %v3197
        %v4339 = vpack.c.b16 %v3200, %v3199
        %v4340 = vpack.c.b16 %v3202, %v3201
        %v4341 = vpack.c.b16 %v3204, %v3203
        %v4342 = vpack.c.b16 %v3206, %v3205
        %v4343 = vpack.c.b16 %v3208, %v3207
        %v4344 = vpack.c.b16 %v3210, %v3209
        %v4345 = vpack.c.b16 %v3212, %v3211
        %v4346 = vpack.c.b16 %v3214, %v3213
        %v4347 = vpack.c.b16 %v3216, %v3215
        %v4348 = vpack.c.b16 %v3218, %v3217
        %v4349 = vpack.c.b16 %v3220, %v3219
        %v4350 = vpack.c.b16 %v3222, %v3221
        %v4351 = vpack.c.b16 %v3224, %v3223
        %v4352 = vpack.c.b16 %v3226, %v3225
        %v4353 = vpack.c.b16 %v3228, %v3227
        %v4354 = vpack.c.b16 %v3230, %v3229
        %v4355 = vpack.c.b16 %v3232, %v3231
        %v4356 = vpack.c.b16 %v3234, %v3233
        %v4357 = vpack.c.b16 %v3236, %v3235
        %v4358 = vpack.c.b16 %v3238, %v3237
        %v4359 = vpack.c.b16 %v3240, %v3239
        %v4360 = vpack.c.b16 %v3242, %v3241
        %v4361 = vpack.c.b16 %v3244, %v3243
        %v4362 = vpack.c.b16 %v3246, %v3245
        %v4363 = vpack.c.b16 %v3248, %v3247
        %v4364 = vpack.c.b16 %v3250, %v3249
        %v4365 = vpack.c.b16 %v3252, %v3251
        %v4366 = vpack.c.b16 %v3254, %v3253
        %v4367 = vpack.c.b16 %v3256, %v3255
        %v4368 = vpack.c.b16 %v3258, %v3257
        %v4369 = vpack.c.b16 %v3260, %v3259
        %v4370 = vpack.c.b16 %v3262, %v3261
        %v4371 = vpack.c.b16 %v3264, %v3263
        %v4372 = vpack.c.b16 %v3266, %v3265
        %v4373 = vpack.c.b16 %v3268, %v3267
        %v4374 = vpack.c.b16 %v3270, %v3269
        %v4375 = vpack.c.b16 %v3272, %v3271
        %v4376 = vpack.c.b16 %v3274, %v3273
        %v4377 = vpack.c.b16 %v3276, %v3275
        %v4378 = vpack.c.b16 %v3278, %v3277
        %v4379 = vpack.c.b16 %v3280, %v3279
        %v4380 = vpack.c.b16 %v3282, %v3281
        %v4381 = vpack.c.b16 %v3284, %v3283
        %v4382 = vpack.c.b16 %v3286, %v3285
        %v4383 = vpack.c.b16 %v3288, %v3287
        %v4384 = vpack.c.b16 %v3290, %v3289
        %v4385 = vpack.c.b16 %v3292, %v3291
        %v4386 = vpack.c.b16 %v3294, %v3293
        %v4387 = vpack.c.b16 %v3296, %v3295
        %v4388 = vpack.c.b16 %v3298, %v3297
        %v4389 = vpack.c.b16 %v3300, %v3299
        %v4390 = vpack.c.b16 %v3302, %v3301
        %v4391 = vpack.c.b16 %v3304, %v3303
        %v4392 = vpack.c.b16 %v3306, %v3305
        %v4393 = vpack.c.b16 %v3308, %v3307
        %v4394 = vpack.c.b16 %v3310, %v3309
        %v4395 = vpack.c.b16 %v3312, %v3311
        %v4396 = vpack.c.b16 %v3314, %v3313
        %v4397 = vpack.c.b16 %v3316, %v3315
        %v4398 = vpack.c.b16 %v3318, %v3317
        %v4399 = vpack.c.b16 %v3320, %v3319
        %v4400 = vpack.c.b16 %v3322, %v3321
        %v4401 = vpack.c.b16 %v3324, %v3323
        %v4402 = vpack.c.b16 %v3326, %v3325
        %v4403 = vpack.c.b16 %v3328, %v3327
        %v4404 = vpack.c.b16 %v3330, %v3329
        %v4405 = vpack.c.b16 %v3332, %v3331
        %v4406 = vpack.c.b16 %v3334, %v3333
        %v4407 = vpack.c.b16 %v3336, %v3335
        %v4408 = vpack.c.b16 %v3338, %v3337
        %v4409 = vpack.c.b16 %v3340, %v3339
        %v4410 = vpack.c.b16 %v3342, %v3341
        %v4411 = vpack.c.b16 %v3344, %v3343
        %v4412 = vpack.c.b16 %v3346, %v3345
        %v4413 = vpack.c.b16 %v3348, %v3347
        %v4414 = vpack.c.b16 %v3350, %v3349
        %v4415 = vpack.c.b16 %v3352, %v3351
        %v4416 = vpack.c.b16 %v3354, %v3353
        %v4417 = vpack.c.b16 %v3356, %v3355
        %v4418 = vpack.c.b16 %v3358, %v3357
        %v4419 = vpack.c.b16 %v3360, %v3359
        %v4420 = vpack.c.b16 %v3362, %v3361
        %v4421 = vpack.c.b16 %v3364, %v3363
        %v4422 = vpack.c.b16 %v3366, %v3365
        %v4423 = vpack.c.b16 %v3368, %v3367
        %v4424 = vpack.c.b16 %v3370, %v3369
        %v4425 = vpack.c.b16 %v3372, %v3371
        %v4426 = vpack.c.b16 %v3374, %v3373
        %v4427 = vpack.c.b16 %v3376, %v3375
        %v4428 = vpack.c.b16 %v3378, %v3377
        %v4429 = vpack.c.b16 %v3380, %v3379
        %v4430 = vpack.c.b16 %v3382, %v3381
        %v4431 = vpack.c.b16 %v3384, %v3383
        %v4432 = vpack.c.b16 %v3386, %v3385
        %v4433 = vpack.c.b16 %v3388, %v3387
        %v4434 = vpack.c.b16 %v3390, %v3389
        %v4435 = vpack.c.b16 %v3392, %v3391
        %v4436 = vpack.c.b16 %v3394, %v3393
        %v4437 = vpack.c.b16 %v3396, %v3395
        %v4438 = vpack.c.b16 %v3398, %v3397
        %v4439 = vpack.c.b16 %v3400, %v3399
        %v4440 = vpack.c.b16 %v3402, %v3401
        %v4441 = vpack.c.b16 %v3404, %v3403
        %v4442 = vpack.c.b16 %v3406, %v3405
        %v4443 = vpack.c.b16 %v3408, %v3407
        %v4444 = vpack.c.b16 %v3410, %v3409
        %v4445 = vpack.c.b16 %v3412, %v3411
        %v4446 = vpack.c.b16 %v3414, %v3413
        %v4447 = vpack.c.b16 %v3416, %v3415
        %v4448 = vpack.c.b16 %v3418, %v3417
        %v4449 = vpack.c.b16 %v3420, %v3419
        %v4450 = vpack.c.b16 %v3422, %v3421
        %v4451 = vpack.c.b16 %v3424, %v3423
        %v4452 = vpack.c.b16 %v3426, %v3425
        %v4453 = vpack.c.b16 %v3428, %v3427
        %v4454 = vpack.c.b16 %v3430, %v3429
        %v4455 = vpack.c.b16 %v3432, %v3431
        %v4456 = vpack.c.b16 %v3434, %v3433
        %v4457 = vpack.c.b16 %v3436, %v3435
        %v4458 = vpack.c.b16 %v3438, %v3437
        %v4459 = vpack.c.b16 %v3440, %v3439
        %v4460 = vpack.c.b16 %v3442, %v3441
        %v4461 = vpack.c.b16 %v3444, %v3443
        %v4462 = vpack.c.b16 %v3446, %v3445
        %v4463 = vpack.c.b16 %v3448, %v3447
        %v4464 = vpack.c.b16 %v3450, %v3449
        %v4465 = vpack.c.b16 %v3452, %v3451
        %v4466 = vpack.c.b16 %v3454, %v3453
        %v4467 = vpack.c.b16 %v3456, %v3455
        %v4468 = vpack.c.b16 %v3458, %v3457
        %v4469 = vpack.c.b16 %v3460, %v3459
        %v4470 = vpack.c.b16 %v3462, %v3461
        %v4471 = vpack.c.b16 %v3464, %v3463
        %v4472 = vpack.c.b16 %v3466, %v3465
        %v4473 = vpack.c.b16 %v3468, %v3467
        %v4474 = vpack.c.b16 %v3470, %v3469
        %v4475 = vpack.c.b16 %v3472, %v3471
        %v4476 = vpack.c.b16 %v3474, %v3473
        %v4477 = vpack.c.b16 %v3476, %v3475
        %v4478 = vpack.c.b16 %v3478, %v3477
        %v4479 = vpack.c.b16 %v3480, %v3479
        %v4480 = vpack.c.b16 %v3482, %v3481
        %v4481 = vpack.c.b16 %v3484, %v3483
        %v4482 = vpack.c.b16 %v3486, %v3485
        %v4483 = vpack.c.b16 %v3488, %v3487
        %v4484 = vpack.c.b16 %v3490, %v3489
        %v4485 = vpack.c.b16 %v3492, %v3491
        %v4486 = vpack.c.b16 %v3494, %v3493
        %v4487 = vpack.c.b16 %v3496, %v3495
        %v4488 = vpack.c.b16 %v3498, %v3497
        %v4489 = vpack.c.b16 %v3500, %v3499
        %v4490 = vpack.c.b16 %v3502, %v3501
        %v4491 = vpack.c.b16 %v3504, %v3503
        %v4492 = vpack.c.b16 %v3506, %v3505
        %v4493 = vpack.c.b16 %v3508, %v3507
        %v4494 = vpack.c.b16 %v3510, %v3509
        %v4495 = vpack.c.b16 %v3512, %v3511
        %v4496 = vpack.c.b16 %v3514, %v3513
        %v4497 = vpack.c.b16 %v3516, %v3515
        %v4498 = vpack.c.b16 %v3518, %v3517
        %v4499 = vpack.c.b16 %v3520, %v3519
        %v4500 = vpack.c.b16 %v3522, %v3521
        %v4501 = vpack.c.b16 %v3524, %v3523
        %v4502 = vpack.c.b16 %v3526, %v3525
        %v4503 = vpack.c.b16 %v3528, %v3527
        %v4504 = vpack.c.b16 %v3530, %v3529
        %v4505 = vpack.c.b16 %v3532, %v3531
        %v4506 = vpack.c.b16 %v3534, %v3533
        %v4507 = vpack.c.b16 %v3536, %v3535
        %v4508 = vpack.c.b16 %v3538, %v3537
        %v4509 = vpack.c.b16 %v3540, %v3539
        %v4510 = vpack.c.b16 %v3542, %v3541
        %v4511 = vpack.c.b16 %v3544, %v3543
        %v4512 = vpack.c.b16 %v3546, %v3545
        %v4513 = vpack.c.b16 %v3548, %v3547
        %v4514 = vpack.c.b16 %v3550, %v3549
        %v4515 = vpack.c.b16 %v3552, %v3551
        %v4516 = vpack.c.b16 %v3554, %v3553
        %v4517 = vpack.c.b16 %v3556, %v3555
        %v4518 = vpack.c.b16 %v3558, %v3557
        %v4519 = vpack.c.b16 %v3560, %v3559
        %v4520 = vpack.c.b16 %v3562, %v3561
        %v4521 = vpack.c.b16 %v3564, %v3563
        %v4522 = vpack.c.b16 %v3566, %v3565
        %v4523 = vpack.c.b16 %v3568, %v3567
        %v4524 = vpack.c.b16 %v3570, %v3569
        %v4525 = vpack.c.b16 %v3572, %v3571
        %v4526 = vpack.c.b16 %v3574, %v3573
        %v4527 = vpack.c.b16 %v3576, %v3575
        %v4528 = vpack.c.b16 %v3578, %v3577
        %v4529 = vpack.c.b16 %v3580, %v3579
        %v4530 = vpack.c.b16 %v3582, %v3581
        %v4531 = vpack.c.b16 %v3584, %v3583
        %v4532 = vpack.c.b16 %v3586, %v3585
        %v4533 = vpack.c.b16 %v3588, %v3587
        %v4534 = vpack.c.b16 %v3590, %v3589
        %v4535 = vpack.c.b16 %v3592, %v3591
        %v4536 = vpack.c.b16 %v3594, %v3593
        %v4537 = vpack.c.b16 %v3596, %v3595
        %v4538 = vpack.c.b16 %v3598, %v3597
        %v4539 = vpack.c.b16 %v3600, %v3599
        %v4540 = vpack.c.b16 %v3602, %v3601
        %v4541 = vpack.c.b16 %v3604, %v3603
        %v4542 = vpack.c.b16 %v3606, %v3605
        %v4543 = vpack.c.b16 %v3608, %v3607
        %v4544 = vpack.c.b16 %v3610, %v3609
        %v4545 = vpack.c.b16 %v3612, %v3611
        %v4546 = vpack.c.b16 %v3614, %v3613
        %v4547 = vpack.c.b16 %v3616, %v3615
        %v4548 = vpack.c.b16 %v3618, %v3617
        %v4549 = vpack.c.b16 %v3620, %v3619
        %v4550 = vpack.c.b16 %v3622, %v3621
        %v4551 = vpack.c.b16 %v3624, %v3623
        %v4552 = vpack.c.b16 %v3626, %v3625
        %v4553 = vpack.c.b16 %v3628, %v3627
        %v4554 = vpack.c.b16 %v3630, %v3629
        %v4555 = vpack.c.b16 %v3632, %v3631
        %v4556 = vpack.c.b16 %v3634, %v3633
        %v4557 = vpack.c.b16 %v3636, %v3635
        %v4558 = vpack.c.b16 %v3638, %v3637
        %v4559 = vpack.c.b16 %v3640, %v3639
        %v4560 = vpack.c.b16 %v3642, %v3641
        %v4561 = vpack.c.b16 %v3644, %v3643
        %v4562 = vpack.c.b16 %v3646, %v3645
        %v4563 = vpack.c.b16 %v3648, %v3647
        %v4564 = vpack.c.b16 %v3650, %v3649
        %v4565 = vpack.c.b16 %v3652, %v3651
        %v4566 = vpack.c.b16 %v3654, %v3653
        %v4567 = vpack.c.b16 %v3656, %v3655
        %v4568 = vpack.c.b16 %v3658, %v3657
        %v4569 = vpack.c.b16 %v3660, %v3659
        %v4570 = vpack.c.b16 %v3662, %v3661
        %v4571 = vpack.c.b16 %v3664, %v3663
        %v4572 = vpack.c.b16 %v3666, %v3665
        %v4573 = vpack.c.b16 %v3668, %v3667
        %v4574 = vpack.c.b16 %v3670, %v3669
        %v4575 = vpack.c.b16 %v3672, %v3671
        %v4576 = vpack.c.b16 %v3674, %v3673
        %v4577 = vpack.c.b16 %v3676, %v3675
        %v4578 = vpack.c.b16 %v3678, %v3677
        %v4579 = vpack.c.b16 %v3680, %v3679
        %v4580 = vpack.c.b16 %v3682, %v3681
        %v4581 = vpack.c.b16 %v3684, %v3683
        %v4582 = vpack.c.b16 %v3686, %v3685
        %v4583 = vpack.c.b16 %v3688, %v3687
        %v4584 = vpack.c.b16 %v3690, %v3689
        %v4585 = vpack.c.b16 %v3692, %v3691
        %v4586 = vpack.c.b16 %v3694, %v3693
        %v4587 = vpack.c.b16 %v3696, %v3695
        %v4588 = vpack.c.b16 %v3698, %v3697
        %v4589 = vpack.c.b16 %v3700, %v3699
        %v4590 = vpack.c.b16 %v3702, %v3701
        %v4591 = vpack.c.b16 %v3704, %v3703
        %v4592 = vpack.c.b16 %v3706, %v3705
        %v4593 = vpack.c.b16 %v3708, %v3707
        %v4594 = vpack.c.b16 %v3710, %v3709
        %v4595 = vpack.c.b16 %v3712, %v3711
        %v4596 = vpack.c.b16 %v3714, %v3713
        %v4597 = vpack.c.b16 %v3716, %v3715
        %v4598 = vpack.c.b16 %v3718, %v3717
        %v4599 = vpack.c.b16 %v3720, %v3719
        %v4600 = vpack.c.b16 %v3722, %v3721
        %v4601 = vpack.c.b16 %v3724, %v3723
        %v4602 = vpack.c.b16 %v3726, %v3725
        %v4603 = vpack.c.b16 %v3728, %v3727
        %v4604 = vpack.c.b16 %v3730, %v3729
        %v4605 = vpack.c.b16 %v3732, %v3731
        %v4606 = vpack.c.b16 %v3734, %v3733
        %v4607 = vpack.c.b16 %v3736, %v3735
        %v4608 = vpack.c.b16 %v3738, %v3737
        %v4609 = vpack.c.b16 %v3740, %v3739
        %v4610 = vpack.c.b16 %v3742, %v3741
        %v4611 = vpack.c.b16 %v3744, %v3743
        %v4612 = vpack.c.b16 %v3746, %v3745
        %v4613 = vpack.c.b16 %v3748, %v3747
        %v4614 = vpack.c.b16 %v3750, %v3749
        %v4615 = vpack.c.b16 %v3752, %v3751
        %v4616 = vpack.c.b16 %v3754, %v3753
        %v4617 = vpack.c.b16 %v3756, %v3755
        %v4618 = vpack.c.b16 %v3758, %v3757
        %v4619 = vpack.c.b16 %v3760, %v3759
        %v4620 = vpack.c.b16 %v3762, %v3761
        %v4621 = vpack.c.b16 %v3764, %v3763
        %v4622 = vpack.c.b16 %v3766, %v3765
        %v4623 = vpack.c.b16 %v3768, %v3767
        %v4624 = vpack.c.b16 %v3770, %v3769
        %v4625 = vpack.c.b16 %v3772, %v3771
        %v4626 = vpack.c.b16 %v3774, %v3773
        %v4627 = vpack.c.b16 %v3776, %v3775
        %v4628 = vpack.c.b16 %v3778, %v3777
        %v4629 = vpack.c.b16 %v3780, %v3779
        %v4630 = vpack.c.b16 %v3782, %v3781
        %v4631 = vpack.c.b16 %v3784, %v3783
        %v4632 = vpack.c.b16 %v3786, %v3785
        %v4633 = vpack.c.b16 %v3788, %v3787
        %v4634 = vpack.c.b16 %v3790, %v3789
        %v4635 = vpack.c.b16 %v3792, %v3791
        %v4636 = vpack.c.b16 %v3794, %v3793
        %v4637 = vpack.c.b16 %v3796, %v3795
        %v4638 = vpack.c.b16 %v3798, %v3797
        %v4639 = vpack.c.b16 %v3800, %v3799
        %v4640 = vpack.c.b16 %v3802, %v3801
        %v4641 = vpack.c.b16 %v3804, %v3803
        %v4642 = vpack.c.b16 %v3806, %v3805
        %v4643 = vpack.c.b16 %v3808, %v3807
        %v4644 = vpack.c.b16 %v3810, %v3809
        %v4645 = vpack.c.b16 %v3812, %v3811
        %v4646 = vpack.c.b16 %v3814, %v3813
        %v4647 = vpack.c.b16 %v3816, %v3815
        %v4648 = vpack.c.b16 %v3818, %v3817
        %v4649 = vpack.c.b16 %v3820, %v3819
        %v4650 = vpack.c.b16 %v3822, %v3821
        %v4651 = vpack.c.b16 %v3824, %v3823
        %v4652 = vpack.c.b16 %v3826, %v3825
        %v4653 = vpack.c.b16 %v3828, %v3827
        %v4654 = vpack.c.b16 %v3830, %v3829
        %v4655 = vpack.c.b16 %v3832, %v3831
        %v4656 = vpack.c.b16 %v3834, %v3833
        %v4657 = vpack.c.b16 %v3836, %v3835
        %v4658 = vpack.c.b16 %v3838, %v3837
        %v4659 = vpack.c.b16 %v3840, %v3839
        %v4660 = vpack.c.b16 %v3842, %v3841
        %v4661 = vpack.c.b16 %v3844, %v3843
        %v4662 = vpack.c.b16 %v3846, %v3845
        %v4663 = vpack.c.b16 %v3848, %v3847
        %v4664 = vpack.c.b16 %v3850, %v3849
        %v4665 = vpack.c.b16 %v3852, %v3851
        %v4666 = vpack.c.b16 %v3854, %v3853
        %v4667 = vpack.c.b16 %v3856, %v3855
        %v4668 = vpack.c.b16 %v3858, %v3857
        %v4669 = vpack.c.b16 %v3860, %v3859
        %v4670 = vpack.c.b16 %v3862, %v3861
        %v4671 = vpack.c.b16 %v3864, %v3863
        %v4672 = vpack.c.b16 %v3866, %v3865
        %v4673 = vpack.c.b16 %v3868, %v3867
        %v4674 = vpack.c.b16 %v3870, %v3869
        %v4675 = vpack.c.b16 %v3872, %v3871
        %v4676 = vpack.c.b16 %v3874, %v3873
        %v4677 = vpack.c.b16 %v3876, %v3875
        %v4678 = vpack.c.b16 %v3878, %v3877
        %v4679 = vpack.c.b16 %v3880, %v3879
        %v4680 = vpack.c.b16 %v3882, %v3881
        %v4681 = vpack.c.b16 %v3884, %v3883
        %v4682 = vpack.c.b16 %v3886, %v3885
        %v4683 = vpack.c.b16 %v3888, %v3887
        %v4684 = vpack.c.b16 %v3890, %v3889
        %v4685 = vpack.c.b16 %v3892, %v3891
        %v4686 = vpack.c.b16 %v3894, %v3893
        %v4687 = vpack.c.b16 %v3896, %v3895
        %v4688 = vpack.c.b16 %v3898, %v3897
        %v4689 = vpack.c.b16 %v3900, %v3899
        %v4690 = vpack.c.b16 %v3902, %v3901
        %v4691 = vpack.c.b16 %v3904, %v3903
        %v4692 = vpack.c.b16 %v3906, %v3905
        %v4693 = vpack.c.b16 %v3908, %v3907
        %v4694 = vpack.c.b16 %v3910, %v3909
        %v4695 = vpack.c.b16 %v3912, %v3911
        %v4696 = vpack.c.b16 %v3914, %v3913
        %v4697 = vpack.c.b16 %v3916, %v3915
        %v4698 = vpack.c.b16 %v3918, %v3917
        %v4699 = vpack.c.b16 %v3920, %v3919
        %v4700 = vpack.c.b16 %v3922, %v3921
        %v4701 = vpack.c.b16 %v3924, %v3923
        %v4702 = vpack.c.b16 %v3926, %v3925
        %v4703 = vpack.c.b16 %v3928, %v3927
        %v4704 = vpack.c.b16 %v3930, %v3929
        %v4705 = vpack.c.b16 %v3932, %v3931
        %v4706 = vpack.c.b16 %v3934, %v3933
        %v4707 = vpack.c.b16 %v3936, %v3935
        %v4708 = vpack.c.b16 %v3938, %v3937
        %v4709 = vpack.c.b16 %v3940, %v3939
        %v4710 = vpack.c.b16 %v3942, %v3941
        %v4711 = vpack.c.b16 %v3944, %v3943
        %v4712 = vpack.c.b16 %v3946, %v3945
        %v4713 = vpack.c.b16 %v3948, %v3947
        %v4714 = vpack.c.b16 %v3950, %v3949
        %v4715 = vpack.c.b16 %v3952, %v3951
        %v4716 = vpack.c.b16 %v3954, %v3953
        %v4717 = vpack.c.b16 %v3956, %v3955
        %v4718 = vpack.c.b16 %v3958, %v3957
        %v4719 = vpack.c.b16 %v3960, %v3959
        %v4720 = vpack.c.b16 %v3962, %v3961
        %v4721 = vpack.c.b16 %v3964, %v3963
        %v4722 = vpack.c.b16 %v3966, %v3965
        %v4723 = vpack.c.b16 %v3968, %v3967
        %v4724 = vpack.c.b16 %v3970, %v3969
        %v4725 = vpack.c.b16 %v3972, %v3971
        %v4726 = vpack.c.b16 %v3974, %v3973
        %v4727 = vpack.c.b16 %v3976, %v3975
        %v4728 = vpack.c.b16 %v3978, %v3977
        %v4729 = vpack.c.b16 %v3980, %v3979
        %v4730 = vpack.c.b16 %v3982, %v3981
        %v4731 = vpack.c.b16 %v3984, %v3983
        %v4732 = vpack.c.b16 %v3986, %v3985
        %v4733 = vpack.c.b16 %v3988, %v3987
        %v4734 = vpack.c.b16 %v3990, %v3989
        %v4735 = vpack.c.b16 %v3992, %v3991
        %v4736 = vpack.c.b16 %v3994, %v3993
        %v4737 = vpack.c.b16 %v3996, %v3995
        %v4738 = vpack.c.b16 %v3998, %v3997
        %v4739 = vpack.c.b16 %v4000, %v3999
        %v4740 = vpack.c.b16 %v4002, %v4001
        %v4741 = vpack.c.b16 %v4004, %v4003
        %v4742 = vpack.c.b16 %v4006, %v4005
        %v4743 = vpack.c.b16 %v4008, %v4007
        %v4744 = vpack.c.b16 %v4010, %v4009
        %v4745 = vpack.c.b16 %v4012, %v4011
        %v4746 = vpack.c.b16 %v4014, %v4013
        %v4747 = vpack.c.b16 %v4016, %v4015
        %v4748 = vpack.c.b16 %v4018, %v4017
        %v4749 = vpack.c.b16 %v4020, %v4019
        %v4750 = vpack.c.b16 %v4022, %v4021
        %v4751 = vpack.c.b16 %v4024, %v4023
        %v4752 = vpack.c.b16 %v4026, %v4025
        %v4753 = vpack.c.b16 %v4028, %v4027
        %v4754 = vpack.c.b16 %v4030, %v4029
        %v4755 = vpack.c.b16 %v4032, %v4031
        %v4756 = vpack.c.b16 %v4034, %v4033
        %v4757 = vpack.c.b16 %v4036, %v4035
        %v4758 = vpack.c.b16 %v4038, %v4037
        %v4759 = vpack.c.b16 %v4040, %v4039
        %v4760 = vpack.c.b16 %v4042, %v4041
        %v4761 = vpack.c.b16 %v4044, %v4043
        %v4762 = vpack.c.b16 %v4046, %v4045
        %v4763 = vpack.c.b16 %v4048, %v4047
        %v4764 = vpack.c.b16 %v4050, %v4049
        %v4765 = vpack.c.b16 %v4052, %v4051
        %v4766 = vpack.c.b16 %v4054, %v4053
        %v4767 = vpack.c.b16 %v4056, %v4055
        %v4768 = vpack.c.b16 %v4058, %v4057
        %v4769 = vpack.c.b16 %v4060, %v4059
        %v4770 = vpack.c.b16 %v4062, %v4061
        %v4771 = vpack.c.b16 %v4064, %v4063
        %v4772 = vpack.c.b16 %v4066, %v4065
        %v4773 = vpack.c.b16 %v4068, %v4067
        %v4774 = vpack.c.b16 %v4070, %v4069
        %v4775 = vpack.c.b16 %v4072, %v4071
        %v4776 = vpack.c.b16 %v4074, %v4073
        %v4777 = vpack.c.b16 %v4076, %v4075
        %v4778 = vpack.c.b16 %v4078, %v4077
        %v4779 = vpack.c.b16 %v4080, %v4079
        %v4780 = vpack.c.b16 %v4082, %v4081
        %v4781 = vpack.c.b16 %v4084, %v4083
        %v4782 = vpack.c.b16 %v4086, %v4085
        %v4783 = vpack.c.b16 %v4088, %v4087
        %v4784 = vpack.c.b16 %v4090, %v4089
        %v4785 = vpack.c.b16 %v4092, %v4091
        %v4786 = vpack.c.b16 %v4094, %v4093
        %v4787 = vpack.c.b16 %v4096, %v4095
        %v4788 = vpack.c.b16 %v4098, %v4097
        %v4789 = vpack.c.b16 %v4100, %v4099
        %v4790 = vpack.c.b16 %v4102, %v4101
        %v4791 = vpack.c.b16 %v4104, %v4103
        %v4792 = vpack.c.b16 %v4106, %v4105
        %v4793 = vpack.c.b16 %v4108, %v4107
        %v4794 = vpack.c.b16 %v4110, %v4109
        %v4795 = vpack.c.b16 %v4112, %v4111
        %v4796 = vpack.c.b16 %v4114, %v4113
        %v4797 = vpack.c.b16 %v4116, %v4115
        %v4798 = vpack.c.b16 %v4118, %v4117
        %v4799 = vpack.c.b16 %v4120, %v4119
        %v4800 = vpack.c.b16 %v4122, %v4121
        %v4801 = vpack.c.b16 %v4124, %v4123
        %v4802 = vpack.c.b16 %v4126, %v4125
        %v4803 = vpack.c.b16 %v4128, %v4127
        %v4804 = vpack.c.b16 %v4130, %v4129
        %v4805 = vpack.c.b16 %v4132, %v4131
        %v4806 = vpack.c.b16 %v4134, %v4133
        %v4807 = vpack.c.b16 %v4136, %v4135
        %v4808 = vpack.c.b16 %v4138, %v4137
        %v4809 = vpack.c.b16 %v4140, %v4139
        %v4810 = vpack.c.b16 %v4142, %v4141
        %v4811 = vpack.c.b16 %v4144, %v4143
        %v4812 = vpack.c.b16 %v4146, %v4145
        %v4813 = vpack.c.b16 %v4148, %v4147
        %v4814 = vpack.c.b16 %v4150, %v4149
        %v4815 = vpack.c.b16 %v4152, %v4151
        %v4816 = vpack.c.b16 %v4154, %v4153
        %v4817 = vpack.c.b16 %v4156, %v4155
        %v4818 = vpack.c.b16 %v4158, %v4157
        %v4819 = vpack.c.b16 %v4160, %v4159
        %v4820 = vpack.c.b16 %v4162, %v4161
        %v4821 = vpack.c.b16 %v4164, %v4163
        %v4822 = vpack.c.b16 %v4166, %v4165
        %v4823 = vpack.c.b16 %v4168, %v4167
        %v4824 = vpack.c.b16 %v4170, %v4169
        %v4825 = vpack.c.b16 %v4172, %v4171
        %v4826 = vpack.c.b16 %v4174, %v4173
        %v4827 = vpack.c.b16 %v4176, %v4175
        %v4828 = vpack.c.b16 %v4178, %v4177
        %v4829 = vpack.c.b16 %v4180, %v4179
        %v4830 = vpack.c.b16 %v4182, %v4181
        %v4831 = vpack.c.b16 %v4184, %v4183
        %v4832 = vpack.c.b16 %v4186, %v4185
        %v4833 = vpack.c.b16 %v4188, %v4187
        %v4834 = vpack.c.b16 %v4190, %v4189
        %v4835 = vpack.c.b16 %v4192, %v4191
        %v4836 = vpack.c.b16 %v4194, %v4193
        %v4837 = vpack.c.b16 %v4196, %v4195
        %v4838 = vpack.c.b16 %v4198, %v4197
        %v4839 = vpack.c.b16 %v4200, %v4199
        %v4840 = vpack.c.b16 %v4202, %v4201
        %v4841 = vpack.c.b16 %v4204, %v4203
        %v4842 = vpack.c.b16 %v4206, %v4205
        %v4843 = vpack.c.b16 %v4208, %v4207
        %v4844 = vpack.c.b16 %v4210, %v4209
        %v4845 = vpack.c.b16 %v4212, %v4211
        %v4846 = vpack.c.b16 %v4214, %v4213
        %v4847 = vpack.c.b16 %v4216, %v4215
        %v4848 = vpack.c.b16 %v4218, %v4217
        %v4849 = vpack.c.b16 %v4220, %v4219
        %v4850 = vpack.c.b16 %v4222, %v4221
        %v4851 = vpack.c.b16 %v4224, %v4223
        %v4852 = vpack.c.b16 %v4226, %v4225
        %v4853 = vpack.c.b16 %v4228, %v4227
        %vm5479 = vcmask 130048
        %v5481 = vsel %vm5479, %v1650, 0
        %5483 = vmatprep.subr.bf16.mxu0 0
        %5484 = vmatpush1.bf16.msra.mxu0 %v4229
        %5485 = vmatprep.subr.bf16.mxu0 0
        %5486 = vmatpush1.bf16.msra.mxu0 %v4230
        %5487 = vmatprep.subr.bf16.mxu0 0
        %5488 = vmatpush1.bf16.msra.mxu0 %v4231
        %5489 = vmatprep.subr.bf16.mxu0 0
        %5490 = vmatpush1.bf16.msra.mxu0 %v4232
        %5491 = vmatprep.subr.bf16.mxu0 0
        %5492 = vmatpush1.bf16.msra.mxu0 %v4233
        %5493 = vmatprep.subr.bf16.mxu0 0
        %5494 = vmatpush1.bf16.msra.mxu0 %v4234
        %5495 = vmatprep.subr.bf16.mxu0 0
        %5496 = vmatpush1.bf16.msra.mxu0 %v4235
        %5497 = vmatprep.subr.bf16.mxu0 0
        %5498 = vmatpush1.bf16.msra.mxu0 %v4236
        %5499 = vmatprep.subr.bf16.mxu0 0
        %5500 = vmatpush1.bf16.msra.mxu0 %v4237
        %5501 = vmatprep.subr.bf16.mxu0 0
        %5502 = vmatpush1.bf16.msra.mxu0 %v4238
        %5503 = vmatprep.subr.bf16.mxu0 0
        %5504 = vmatpush1.bf16.msra.mxu0 %v4239
        %5505 = vmatprep.subr.bf16.mxu0 0
        %5506 = vmatpush1.bf16.msra.mxu0 %v4240
        %5507 = vmatprep.subr.bf16.mxu0 0
        %5508 = vmatpush1.bf16.msra.mxu0 %v4241
        %5509 = vmatprep.subr.bf16.mxu0 0
        %5510 = vmatpush1.bf16.msra.mxu0 %v4242
        %5511 = vmatprep.subr.bf16.mxu0 0
        %5512 = vmatpush1.bf16.msra.mxu0 %v4243
        %5513 = vmatprep.subr.bf16.mxu0 0
        %5514 = vmatpush1.bf16.msra.mxu0 %v4244
        %5515 = vmatprep.mubr.bf16.mxu0 %v1573
        %5516 = vmatmul.mubr.bf16.gmra.mrb[0].mxu0 %v1572
        %v5517 = vpop.f32.mrb[0].mxu0
        %v5518 = vadd.f32 0.0, %v5517
        %v5519 = vpop.f32.mrb[0].mxu0
        %v5520 = vpop.f32.mrb[0].mxu0
        %v5521 = vpop.f32.mrb[0].mxu0
        %5522 = vdwg.mxu0
        %5523 = vmatprep.subr.bf16.mxu0 0
        %5524 = vmatpush1.bf16.msra.mxu0 %v4245
        %5525 = vmatprep.subr.bf16.mxu0 0
        %5526 = vmatpush1.bf16.msra.mxu0 %v4246
        %5527 = vmatprep.subr.bf16.mxu0 0
        %5528 = vmatpush1.bf16.msra.mxu0 %v4247
        %5529 = vmatprep.subr.bf16.mxu0 0
        %5530 = vmatpush1.bf16.msra.mxu0 %v4248
        %5531 = vmatprep.subr.bf16.mxu0 0
        %5532 = vmatpush1.bf16.msra.mxu0 %v4249
        %5533 = vmatprep.subr.bf16.mxu0 0
        %5534 = vmatpush1.bf16.msra.mxu0 %v4250
        %5535 = vmatprep.subr.bf16.mxu0 0
        %5536 = vmatpush1.bf16.msra.mxu0 %v4251
        %5537 = vmatprep.subr.bf16.mxu0 0
        %5538 = vmatpush1.bf16.msra.mxu0 %v4252
        %5539 = vmatprep.subr.bf16.mxu0 0
        %5540 = vmatpush1.bf16.msra.mxu0 %v4253
        %5541 = vmatprep.subr.bf16.mxu0 0
        %5542 = vmatpush1.bf16.msra.mxu0 %v4254
        %5543 = vmatprep.subr.bf16.mxu0 0
        %5544 = vmatpush1.bf16.msra.mxu0 %v4255
        %5545 = vmatprep.subr.bf16.mxu0 0
        %5546 = vmatpush1.bf16.msra.mxu0 %v4256
        %5547 = vmatprep.subr.bf16.mxu0 0
        %5548 = vmatpush1.bf16.msra.mxu0 %v4257
        %5549 = vmatprep.subr.bf16.mxu0 0
        %5550 = vmatpush1.bf16.msra.mxu0 %v4258
        %5551 = vmatprep.subr.bf16.mxu0 0
        %5552 = vmatpush1.bf16.msra.mxu0 %v4259
        %5553 = vmatprep.subr.bf16.mxu0 0
        %5554 = vmatpush1.bf16.msra.mxu0 %v4260
        %5555 = vmatprep.mubr.bf16.mxu0 %v1575
        %5556 = vmatmul.mubr.bf16.gmra.mrb[0].mxu0 %v1574
        %v5557 = vpop.f32.mrb[0].mxu0
        %v5558 = vadd.f32 %v5518, %v5557
        %v5559 = vpop.f32.mrb[0].mxu0
        %v5560 = vpop.f32.mrb[0].mxu0
        %v5561 = vpop.f32.mrb[0].mxu0
        %5562 = vdwg.mxu0
        %5563 = vmatprep.subr.bf16.mxu0 0
        %5564 = vmatpush1.bf16.msra.mxu0 %v4261
        %5565 = vmatprep.subr.bf16.mxu0 0
        %5566 = vmatpush1.bf16.msra.mxu0 %v4262
        %5567 = vmatprep.subr.bf16.mxu0 0
        %5568 = vmatpush1.bf16.msra.mxu0 %v4263
        %5569 = vmatprep.subr.bf16.mxu0 0
        %5570 = vmatpush1.bf16.msra.mxu0 %v4264
        %5571 = vmatprep.subr.bf16.mxu0 0
        %5572 = vmatpush1.bf16.msra.mxu0 %v4265
        %5573 = vmatprep.subr.bf16.mxu0 0
        %5574 = vmatpush1.bf16.msra.mxu0 %v4266
        %5575 = vmatprep.subr.bf16.mxu0 0
        %5576 = vmatpush1.bf16.msra.mxu0 %v4267
        %5577 = vmatprep.subr.bf16.mxu0 0
        %5578 = vmatpush1.bf16.msra.mxu0 %v4268
        %5579 = vmatprep.subr.bf16.mxu0 0
        %5580 = vmatpush1.bf16.msra.mxu0 %v4269
        %5581 = vmatprep.subr.bf16.mxu0 0
        %5582 = vmatpush1.bf16.msra.mxu0 %v4270
        %5583 = vmatprep.subr.bf16.mxu0 0
        %5584 = vmatpush1.bf16.msra.mxu0 %v4271
        %5585 = vmatprep.subr.bf16.mxu0 0
        %5586 = vmatpush1.bf16.msra.mxu0 %v4272
        %5587 = vmatprep.subr.bf16.mxu0 0
        %5588 = vmatpush1.bf16.msra.mxu0 %v4273
        %5589 = vmatprep.subr.bf16.mxu0 0
        %5590 = vmatpush1.bf16.msra.mxu0 %v4274
        %5591 = vmatprep.subr.bf16.mxu0 0
        %5592 = vmatpush1.bf16.msra.mxu0 %v4275
        %5593 = vmatprep.subr.bf16.mxu0 0
        %5594 = vmatpush1.bf16.msra.mxu0 %v4276
        %5595 = vmatprep.mubr.bf16.mxu0 %v1577
        %5596 = vmatmul.mubr.bf16.gmra.mrb[0].mxu0 %v1576
        %v5597 = vpop.f32.mrb[0].mxu0
        %v5598 = vadd.f32 %v5558, %v5597
        %v5599 = vpop.f32.mrb[0].mxu0
        %v5600 = vpop.f32.mrb[0].mxu0
        %v5601 = vpop.f32.mrb[0].mxu0
        %5602 = vdwg.mxu0
        %5603 = vmatprep.subr.bf16.mxu0 0
        %5604 = vmatpush1.bf16.msra.mxu0 %v4277
        %5605 = vmatprep.subr.bf16.mxu0 0
        %5606 = vmatpush1.bf16.msra.mxu0 %v4278
        %5607 = vmatprep.subr.bf16.mxu0 0
        %5608 = vmatpush1.bf16.msra.mxu0 %v4279
        %5609 = vmatprep.subr.bf16.mxu0 0
        %5610 = vmatpush1.bf16.msra.mxu0 %v4280
        %5611 = vmatprep.subr.bf16.mxu0 0
        %5612 = vmatpush1.bf16.msra.mxu0 %v4281
        %5613 = vmatprep.subr.bf16.mxu0 0
        %5614 = vmatpush1.bf16.msra.mxu0 %v4282
        %5615 = vmatprep.subr.bf16.mxu0 0
        %5616 = vmatpush1.bf16.msra.mxu0 %v4283
        %5617 = vmatprep.subr.bf16.mxu0 0
        %5618 = vmatpush1.bf16.msra.mxu0 %v4284
        %5619 = vmatprep.subr.bf16.mxu0 0
        %5620 = vmatpush1.bf16.msra.mxu0 %v4285
        %5621 = vmatprep.subr.bf16.mxu0 0
        %5622 = vmatpush1.bf16.msra.mxu0 %v4286
        %5623 = vmatprep.subr.bf16.mxu0 0
        %5624 = vmatpush1.bf16.msra.mxu0 %v4287
        %5625 = vmatprep.subr.bf16.mxu0 0
        %5626 = vmatpush1.bf16.msra.mxu0 %v4288
        %5627 = vmatprep.subr.bf16.mxu0 0
        %5628 = vmatpush1.bf16.msra.mxu0 %v4289
        %5629 = vmatprep.subr.bf16.mxu0 0
        %5630 = vmatpush1.bf16.msra.mxu0 %v4290
        %5631 = vmatprep.subr.bf16.mxu0 0
        %5632 = vmatpush1.bf16.msra.mxu0 %v4291
        %5633 = vmatprep.subr.bf16.mxu0 0
        %5634 = vmatpush1.bf16.msra.mxu0 %v4292
        %5635 = vmatprep.mubr.bf16.mxu0 %v1579
        %5636 = vmatmul.mubr.bf16.gmra.mrb[0].mxu0 %v1578
        %v5637 = vpop.f32.mrb[0].mxu0
        %v5638 = vadd.f32 %v5598, %v5637
        %v5639 = vpop.f32.mrb[0].mxu0
        %v5640 = vpop.f32.mrb[0].mxu0
        %v5641 = vpop.f32.mrb[0].mxu0
        %5642 = vdwg.mxu0
        %5643 = vmatprep.subr.bf16.mxu0 0
        %5644 = vmatpush1.bf16.msra.mxu0 %v4293
        %5645 = vmatprep.subr.bf16.mxu0 0
        %5646 = vmatpush1.bf16.msra.mxu0 %v4294
        %5647 = vmatprep.subr.bf16.mxu0 0
        %5648 = vmatpush1.bf16.msra.mxu0 %v4295
        %5649 = vmatprep.subr.bf16.mxu0 0
        %5650 = vmatpush1.bf16.msra.mxu0 %v4296
        %5651 = vmatprep.subr.bf16.mxu0 0
        %5652 = vmatpush1.bf16.msra.mxu0 %v4297
        %5653 = vmatprep.subr.bf16.mxu0 0
        %5654 = vmatpush1.bf16.msra.mxu0 %v4298
        %5655 = vmatprep.subr.bf16.mxu0 0
        %5656 = vmatpush1.bf16.msra.mxu0 %v4299
        %5657 = vmatprep.subr.bf16.mxu0 0
        %5658 = vmatpush1.bf16.msra.mxu0 %v4300
        %5659 = vmatprep.subr.bf16.mxu0 0
        %5660 = vmatpush1.bf16.msra.mxu0 %v4301
        %5661 = vmatprep.subr.bf16.mxu0 0
        %5662 = vmatpush1.bf16.msra.mxu0 %v4302
        %5663 = vmatprep.subr.bf16.mxu0 0
        %5664 = vmatpush1.bf16.msra.mxu0 %v4303
        %5665 = vmatprep.subr.bf16.mxu0 0
        %5666 = vmatpush1.bf16.msra.mxu0 %v4304
        %5667 = vmatprep.subr.bf16.mxu0 0
        %5668 = vmatpush1.bf16.msra.mxu0 %v4305
        %5669 = vmatprep.subr.bf16.mxu0 0
        %5670 = vmatpush1.bf16.msra.mxu0 %v4306
        %5671 = vmatprep.subr.bf16.mxu0 0
        %5672 = vmatpush1.bf16.msra.mxu0 %v4307
        %5673 = vmatprep.subr.bf16.mxu0 0
        %5674 = vmatpush1.bf16.msra.mxu0 %v4308
        %5675 = vmatprep.mubr.bf16.mxu0 %v1581
        %5676 = vmatmul.mubr.bf16.gmra.mrb[0].mxu0 %v1580
        %v5677 = vpop.f32.mrb[0].mxu0
        %v5678 = vadd.f32 %v5638, %v5677
        %v5679 = vpop.f32.mrb[0].mxu0
        %v5680 = vpop.f32.mrb[0].mxu0
        %v5681 = vpop.f32.mrb[0].mxu0
        %5682 = vdwg.mxu0
        %5683 = vmatprep.subr.bf16.mxu0 0
        %5684 = vmatpush1.bf16.msra.mxu0 %v4309
        %5685 = vmatprep.subr.bf16.mxu0 0
        %5686 = vmatpush1.bf16.msra.mxu0 %v4310
        %5687 = vmatprep.subr.bf16.mxu0 0
        %5688 = vmatpush1.bf16.msra.mxu0 %v4311
        %5689 = vmatprep.subr.bf16.mxu0 0
        %5690 = vmatpush1.bf16.msra.mxu0 %v4312
        %5691 = vmatprep.subr.bf16.mxu0 0
        %5692 = vmatpush1.bf16.msra.mxu0 %v4313
        %5693 = vmatprep.subr.bf16.mxu0 0
        %5694 = vmatpush1.bf16.msra.mxu0 %v4314
        %5695 = vmatprep.subr.bf16.mxu0 0
        %5696 = vmatpush1.bf16.msra.mxu0 %v4315
        %5697 = vmatprep.subr.bf16.mxu0 0
        %5698 = vmatpush1.bf16.msra.mxu0 %v4316
        %5699 = vmatprep.subr.bf16.mxu0 0
        %5700 = vmatpush1.bf16.msra.mxu0 %v4317
        %5701 = vmatprep.subr.bf16.mxu0 0
        %5702 = vmatpush1.bf16.msra.mxu0 %v4318
        %5703 = vmatprep.subr.bf16.mxu0 0
        %5704 = vmatpush1.bf16.msra.mxu0 %v4319
        %5705 = vmatprep.subr.bf16.mxu0 0
        %5706 = vmatpush1.bf16.msra.mxu0 %v4320
        %5707 = vmatprep.subr.bf16.mxu0 0
        %5708 = vmatpush1.bf16.msra.mxu0 %v4321
        %5709 = vmatprep.subr.bf16.mxu0 0
        %5710 = vmatpush1.bf16.msra.mxu0 %v4322
        %5711 = vmatprep.subr.bf16.mxu0 0
        %5712 = vmatpush1.bf16.msra.mxu0 %v4323
        %5713 = vmatprep.subr.bf16.mxu0 0
        %5714 = vmatpush1.bf16.msra.mxu0 %v4324
        %5715 = vmatprep.mubr.bf16.mxu0 %v1583
        %5716 = vmatmul.mubr.bf16.gmra.mrb[0].mxu0 %v1582
        %v5717 = vpop.f32.mrb[0].mxu0
        %v5718 = vadd.f32 %v5678, %v5717
        %v5719 = vpop.f32.mrb[0].mxu0
        %v5720 = vpop.f32.mrb[0].mxu0
        %v5721 = vpop.f32.mrb[0].mxu0
        %5722 = vdwg.mxu0
        %5723 = vmatprep.subr.bf16.mxu0 0
        %5724 = vmatpush1.bf16.msra.mxu0 %v4325
        %5725 = vmatprep.subr.bf16.mxu0 0
        %5726 = vmatpush1.bf16.msra.mxu0 %v4326
        %5727 = vmatprep.subr.bf16.mxu0 0
        %5728 = vmatpush1.bf16.msra.mxu0 %v4327
        %5729 = vmatprep.subr.bf16.mxu0 0
        %5730 = vmatpush1.bf16.msra.mxu0 %v4328
        %5731 = vmatprep.subr.bf16.mxu0 0
        %5732 = vmatpush1.bf16.msra.mxu0 %v4329
        %5733 = vmatprep.subr.bf16.mxu0 0
        %5734 = vmatpush1.bf16.msra.mxu0 %v4330
        %5735 = vmatprep.subr.bf16.mxu0 0
        %5736 = vmatpush1.bf16.msra.mxu0 %v4331
        %5737 = vmatprep.subr.bf16.mxu0 0
        %5738 = vmatpush1.bf16.msra.mxu0 %v4332
        %5739 = vmatprep.subr.bf16.mxu0 0
        %5740 = vmatpush1.bf16.msra.mxu0 %v4333
        %5741 = vmatprep.subr.bf16.mxu0 0
        %5742 = vmatpush1.bf16.msra.mxu0 %v4334
        %5743 = vmatprep.subr.bf16.mxu0 0
        %5744 = vmatpush1.bf16.msra.mxu0 %v4335
        %5745 = vmatprep.subr.bf16.mxu0 0
        %5746 = vmatpush1.bf16.msra.mxu0 %v4336
        %5747 = vmatprep.subr.bf16.mxu0 0
        %5748 = vmatpush1.bf16.msra.mxu0 %v4337
        %5749 = vmatprep.subr.bf16.mxu0 0
        %5750 = vmatpush1.bf16.msra.mxu0 %v4338
        %5751 = vmatprep.subr.bf16.mxu0 0
        %5752 = vmatpush1.bf16.msra.mxu0 %v4339
        %5753 = vmatprep.subr.bf16.mxu0 0
        %5754 = vmatpush1.bf16.msra.mxu0 %v4340
        %5755 = vmatprep.mubr.bf16.mxu0 %v1585
        %5756 = vmatmul.mubr.bf16.gmra.mrb[0].mxu0 %v1584
        %v5757 = vpop.f32.mrb[0].mxu0
        %v5758 = vadd.f32 %v5718, %v5757
        %v5759 = vpop.f32.mrb[0].mxu0
        %v5760 = vpop.f32.mrb[0].mxu0
        %v5761 = vpop.f32.mrb[0].mxu0
        %5762 = vdwg.mxu0
        %5763 = vmatprep.subr.bf16.mxu0 0
        %5764 = vmatpush1.bf16.msra.mxu0 %v4341
        %5765 = vmatprep.subr.bf16.mxu0 0
        %5766 = vmatpush1.bf16.msra.mxu0 %v4342
        %5767 = vmatprep.subr.bf16.mxu0 0
        %5768 = vmatpush1.bf16.msra.mxu0 %v4343
        %5769 = vmatprep.subr.bf16.mxu0 0
        %5770 = vmatpush1.bf16.msra.mxu0 %v4344
        %5771 = vmatprep.subr.bf16.mxu0 0
        %5772 = vmatpush1.bf16.msra.mxu0 %v4345
        %5773 = vmatprep.subr.bf16.mxu0 0
        %5774 = vmatpush1.bf16.msra.mxu0 %v4346
        %5775 = vmatprep.subr.bf16.mxu0 0
        %5776 = vmatpush1.bf16.msra.mxu0 %v4347
        %5777 = vmatprep.subr.bf16.mxu0 0
        %5778 = vmatpush1.bf16.msra.mxu0 %v4348
        %5779 = vmatprep.subr.bf16.mxu0 0
        %5780 = vmatpush1.bf16.msra.mxu0 %v4349
        %5781 = vmatprep.subr.bf16.mxu0 0
        %5782 = vmatpush1.bf16.msra.mxu0 %v4350
        %5783 = vmatprep.subr.bf16.mxu0 0
        %5784 = vmatpush1.bf16.msra.mxu0 %v4351
        %5785 = vmatprep.subr.bf16.mxu0 0
        %5786 = vmatpush1.bf16.msra.mxu0 %v4352
        %5787 = vmatprep.subr.bf16.mxu0 0
        %5788 = vmatpush1.bf16.msra.mxu0 %v4353
        %5789 = vmatprep.subr.bf16.mxu0 0
        %5790 = vmatpush1.bf16.msra.mxu0 %v4354
        %5791 = vmatprep.subr.bf16.mxu0 0
        %5792 = vmatpush1.bf16.msra.mxu0 %v4355
        %5793 = vmatprep.subr.bf16.mxu0 0
        %5794 = vmatpush1.bf16.msra.mxu0 %v4356
        %5795 = vmatprep.mubr.bf16.mxu0 %v1587
        %5796 = vmatmul.mubr.bf16.gmra.mrb[0].mxu0 %v1586
        %v5797 = vpop.f32.mrb[0].mxu0
        %v5798 = vadd.f32 %v5758, %v5797
        %v5799 = vpop.f32.mrb[0].mxu0
        %v5800 = vpop.f32.mrb[0].mxu0
        %v5801 = vpop.f32.mrb[0].mxu0
        %5802 = vdwg.mxu0
        %5803 = vmatprep.subr.bf16.mxu0 0
        %5804 = vmatpush1.bf16.msra.mxu0 %v4357
        %5805 = vmatprep.subr.bf16.mxu0 0
        %5806 = vmatpush1.bf16.msra.mxu0 %v4358
        %5807 = vmatprep.subr.bf16.mxu0 0
        %5808 = vmatpush1.bf16.msra.mxu0 %v4359
        %5809 = vmatprep.subr.bf16.mxu0 0
        %5810 = vmatpush1.bf16.msra.mxu0 %v4360
        %5811 = vmatprep.subr.bf16.mxu0 0
        %5812 = vmatpush1.bf16.msra.mxu0 %v4361
        %5813 = vmatprep.subr.bf16.mxu0 0
        %5814 = vmatpush1.bf16.msra.mxu0 %v4362
        %5815 = vmatprep.subr.bf16.mxu0 0
        %5816 = vmatpush1.bf16.msra.mxu0 %v4363
        %5817 = vmatprep.subr.bf16.mxu0 0
        %5818 = vmatpush1.bf16.msra.mxu0 %v4364
        %5819 = vmatprep.subr.bf16.mxu0 0
        %5820 = vmatpush1.bf16.msra.mxu0 %v4365
        %5821 = vmatprep.subr.bf16.mxu0 0
        %5822 = vmatpush1.bf16.msra.mxu0 %v4366
        %5823 = vmatprep.subr.bf16.mxu0 0
        %5824 = vmatpush1.bf16.msra.mxu0 %v4367
        %5825 = vmatprep.subr.bf16.mxu0 0
        %5826 = vmatpush1.bf16.msra.mxu0 %v4368
        %5827 = vmatprep.subr.bf16.mxu0 0
        %5828 = vmatpush1.bf16.msra.mxu0 %v4369
        %5829 = vmatprep.subr.bf16.mxu0 0
        %5830 = vmatpush1.bf16.msra.mxu0 %v4370
        %5831 = vmatprep.subr.bf16.mxu0 0
        %5832 = vmatpush1.bf16.msra.mxu0 %v4371
        %5833 = vmatprep.subr.bf16.mxu0 0
        %5834 = vmatpush1.bf16.msra.mxu0 %v4372
        %5835 = vmatprep.mubr.bf16.mxu0 %v1589
        %5836 = vmatmul.mubr.bf16.gmra.mrb[0].mxu0 %v1588
        %v5837 = vpop.f32.mrb[0].mxu0
        %v5838 = vadd.f32 %v5798, %v5837
        %v5839 = vpop.f32.mrb[0].mxu0
        %v5840 = vpop.f32.mrb[0].mxu0
        %v5841 = vpop.f32.mrb[0].mxu0
        %5842 = vdwg.mxu0
        %5843 = vmatprep.subr.bf16.mxu0 0
        %5844 = vmatpush1.bf16.msra.mxu0 %v4373
        %5845 = vmatprep.subr.bf16.mxu0 0
        %5846 = vmatpush1.bf16.msra.mxu0 %v4374
        %5847 = vmatprep.subr.bf16.mxu0 0
        %5848 = vmatpush1.bf16.msra.mxu0 %v4375
        %5849 = vmatprep.subr.bf16.mxu0 0
        %5850 = vmatpush1.bf16.msra.mxu0 %v4376
        %5851 = vmatprep.subr.bf16.mxu0 0
        %5852 = vmatpush1.bf16.msra.mxu0 %v4377
        %5853 = vmatprep.subr.bf16.mxu0 0
        %5854 = vmatpush1.bf16.msra.mxu0 %v4378
        %5855 = vmatprep.subr.bf16.mxu0 0
        %5856 = vmatpush1.bf16.msra.mxu0 %v4379
        %5857 = vmatprep.subr.bf16.mxu0 0
        %5858 = vmatpush1.bf16.msra.mxu0 %v4380
        %5859 = vmatprep.subr.bf16.mxu0 0
        %5860 = vmatpush1.bf16.msra.mxu0 %v4381
        %5861 = vmatprep.subr.bf16.mxu0 0
        %5862 = vmatpush1.bf16.msra.mxu0 %v4382
        %5863 = vmatprep.subr.bf16.mxu0 0
        %5864 = vmatpush1.bf16.msra.mxu0 %v4383
        %5865 = vmatprep.subr.bf16.mxu0 0
        %5866 = vmatpush1.bf16.msra.mxu0 %v4384
        %5867 = vmatprep.subr.bf16.mxu0 0
        %5868 = vmatpush1.bf16.msra.mxu0 %v4385
        %5869 = vmatprep.subr.bf16.mxu0 0
        %5870 = vmatpush1.bf16.msra.mxu0 %v4386
        %5871 = vmatprep.subr.bf16.mxu0 0
        %5872 = vmatpush1.bf16.msra.mxu0 %v4387
        %5873 = vmatprep.subr.bf16.mxu0 0
        %5874 = vmatpush1.bf16.msra.mxu0 %v4388
        %5875 = vmatprep.mubr.bf16.mxu0 %v1591
        %5876 = vmatmul.mubr.bf16.gmra.mrb[0].mxu0 %v1590
        %v5877 = vpop.f32.mrb[0].mxu0
        %v5878 = vadd.f32 %v5838, %v5877
        %v5879 = vpop.f32.mrb[0].mxu0
        %v5880 = vpop.f32.mrb[0].mxu0
        %v5881 = vpop.f32.mrb[0].mxu0
        %5882 = vdwg.mxu0
        %5883 = vmatprep.subr.bf16.mxu0 0
        %5884 = vmatpush1.bf16.msra.mxu0 %v4389
        %5885 = vmatprep.subr.bf16.mxu0 0
        %5886 = vmatpush1.bf16.msra.mxu0 %v4390
        %5887 = vmatprep.subr.bf16.mxu0 0
        %5888 = vmatpush1.bf16.msra.mxu0 %v4391
        %5889 = vmatprep.subr.bf16.mxu0 0
        %5890 = vmatpush1.bf16.msra.mxu0 %v4392
        %5891 = vmatprep.subr.bf16.mxu0 0
        %5892 = vmatpush1.bf16.msra.mxu0 %v4393
        %5893 = vmatprep.subr.bf16.mxu0 0
        %5894 = vmatpush1.bf16.msra.mxu0 %v4394
        %5895 = vmatprep.subr.bf16.mxu0 0
        %5896 = vmatpush1.bf16.msra.mxu0 %v4395
        %5897 = vmatprep.subr.bf16.mxu0 0
        %5898 = vmatpush1.bf16.msra.mxu0 %v4396
        %5899 = vmatprep.subr.bf16.mxu0 0
        %5900 = vmatpush1.bf16.msra.mxu0 %v4397
        %5901 = vmatprep.subr.bf16.mxu0 0
        %5902 = vmatpush1.bf16.msra.mxu0 %v4398
        %5903 = vmatprep.subr.bf16.mxu0 0
        %5904 = vmatpush1.bf16.msra.mxu0 %v4399
        %5905 = vmatprep.subr.bf16.mxu0 0
        %5906 = vmatpush1.bf16.msra.mxu0 %v4400
        %5907 = vmatprep.subr.bf16.mxu0 0
        %5908 = vmatpush1.bf16.msra.mxu0 %v4401
        %5909 = vmatprep.subr.bf16.mxu0 0
        %5910 = vmatpush1.bf16.msra.mxu0 %v4402
        %5911 = vmatprep.subr.bf16.mxu0 0
        %5912 = vmatpush1.bf16.msra.mxu0 %v4403
        %5913 = vmatprep.subr.bf16.mxu0 0
        %5914 = vmatpush1.bf16.msra.mxu0 %v4404
        %5915 = vmatprep.mubr.bf16.mxu0 %v1593
        %5916 = vmatmul.mubr.bf16.gmra.mrb[0].mxu0 %v1592
        %v5917 = vpop.f32.mrb[0].mxu0
        %v5918 = vadd.f32 %v5878, %v5917
        %v5919 = vpop.f32.mrb[0].mxu0
        %v5920 = vpop.f32.mrb[0].mxu0
        %v5921 = vpop.f32.mrb[0].mxu0
        %5922 = vdwg.mxu0
        %5923 = vmatprep.subr.bf16.mxu0 0
        %5924 = vmatpush1.bf16.msra.mxu0 %v4405
        %5925 = vmatprep.subr.bf16.mxu0 0
        %5926 = vmatpush1.bf16.msra.mxu0 %v4406
        %5927 = vmatprep.subr.bf16.mxu0 0
        %5928 = vmatpush1.bf16.msra.mxu0 %v4407
        %5929 = vmatprep.subr.bf16.mxu0 0
        %5930 = vmatpush1.bf16.msra.mxu0 %v4408
        %5931 = vmatprep.subr.bf16.mxu0 0
        %5932 = vmatpush1.bf16.msra.mxu0 %v4409
        %5933 = vmatprep.subr.bf16.mxu0 0
        %5934 = vmatpush1.bf16.msra.mxu0 %v4410
        %5935 = vmatprep.subr.bf16.mxu0 0
        %5936 = vmatpush1.bf16.msra.mxu0 %v4411
        %5937 = vmatprep.subr.bf16.mxu0 0
        %5938 = vmatpush1.bf16.msra.mxu0 %v4412
        %5939 = vmatprep.subr.bf16.mxu0 0
        %5940 = vmatpush1.bf16.msra.mxu0 %v4413
        %5941 = vmatprep.subr.bf16.mxu0 0
        %5942 = vmatpush1.bf16.msra.mxu0 %v4414
        %5943 = vmatprep.subr.bf16.mxu0 0
        %5944 = vmatpush1.bf16.msra.mxu0 %v4415
        %5945 = vmatprep.subr.bf16.mxu0 0
        %5946 = vmatpush1.bf16.msra.mxu0 %v4416
        %5947 = vmatprep.subr.bf16.mxu0 0
        %5948 = vmatpush1.bf16.msra.mxu0 %v4417
        %5949 = vmatprep.subr.bf16.mxu0 0
        %5950 = vmatpush1.bf16.msra.mxu0 %v4418
        %5951 = vmatprep.subr.bf16.mxu0 0
        %5952 = vmatpush1.bf16.msra.mxu0 %v4419
        %5953 = vmatprep.subr.bf16.mxu0 0
        %5954 = vmatpush1.bf16.msra.mxu0 %v4420
        %5955 = vmatprep.mubr.bf16.mxu0 %v1595
        %5956 = vmatmul.mubr.bf16.gmra.mrb[0].mxu0 %v1594
        %v5957 = vpop.f32.mrb[0].mxu0
        %v5958 = vadd.f32 %v5918, %v5957
        %v5959 = vpop.f32.mrb[0].mxu0
        %v5960 = vpop.f32.mrb[0].mxu0
        %v5961 = vpop.f32.mrb[0].mxu0
        %5962 = vdwg.mxu0
        %5963 = vmatprep.subr.bf16.mxu0 0
        %5964 = vmatpush1.bf16.msra.mxu0 %v4421
        %5965 = vmatprep.subr.bf16.mxu0 0
        %5966 = vmatpush1.bf16.msra.mxu0 %v4422
        %5967 = vmatprep.subr.bf16.mxu0 0
        %5968 = vmatpush1.bf16.msra.mxu0 %v4423
        %5969 = vmatprep.subr.bf16.mxu0 0
        %5970 = vmatpush1.bf16.msra.mxu0 %v4424
        %5971 = vmatprep.subr.bf16.mxu0 0
        %5972 = vmatpush1.bf16.msra.mxu0 %v4425
        %5973 = vmatprep.subr.bf16.mxu0 0
        %5974 = vmatpush1.bf16.msra.mxu0 %v4426
        %5975 = vmatprep.subr.bf16.mxu0 0
        %5976 = vmatpush1.bf16.msra.mxu0 %v4427
        %5977 = vmatprep.subr.bf16.mxu0 0
        %5978 = vmatpush1.bf16.msra.mxu0 %v4428
        %5979 = vmatprep.subr.bf16.mxu0 0
        %5980 = vmatpush1.bf16.msra.mxu0 %v4429
        %5981 = vmatprep.subr.bf16.mxu0 0
        %5982 = vmatpush1.bf16.msra.mxu0 %v4430
        %5983 = vmatprep.subr.bf16.mxu0 0
        %5984 = vmatpush1.bf16.msra.mxu0 %v4431
        %5985 = vmatprep.subr.bf16.mxu0 0
        %5986 = vmatpush1.bf16.msra.mxu0 %v4432
        %5987 = vmatprep.subr.bf16.mxu0 0
        %5988 = vmatpush1.bf16.msra.mxu0 %v4433
        %5989 = vmatprep.subr.bf16.mxu0 0
        %5990 = vmatpush1.bf16.msra.mxu0 %v4434
        %5991 = vmatprep.subr.bf16.mxu0 0
        %5992 = vmatpush1.bf16.msra.mxu0 %v4435
        %5993 = vmatprep.subr.bf16.mxu0 0
        %5994 = vmatpush1.bf16.msra.mxu0 %v4436
        %5995 = vmatprep.mubr.bf16.mxu0 %v1597
        %5996 = vmatmul.mubr.bf16.gmra.mrb[0].mxu0 %v1596
        %v5997 = vpop.f32.mrb[0].mxu0
        %v5998 = vadd.f32 %v5958, %v5997
        %v5999 = vpop.f32.mrb[0].mxu0
        %v6000 = vpop.f32.mrb[0].mxu0
        %v6001 = vpop.f32.mrb[0].mxu0
        %6002 = vdwg.mxu0
        %6003 = vmatprep.subr.bf16.mxu0 0
        %6004 = vmatpush1.bf16.msra.mxu0 %v4437
        %6005 = vmatprep.subr.bf16.mxu0 0
        %6006 = vmatpush1.bf16.msra.mxu0 %v4438
        %6007 = vmatprep.subr.bf16.mxu0 0
        %6008 = vmatpush1.bf16.msra.mxu0 %v4439
        %6009 = vmatprep.subr.bf16.mxu0 0
        %6010 = vmatpush1.bf16.msra.mxu0 %v4440
        %6011 = vmatprep.subr.bf16.mxu0 0
        %6012 = vmatpush1.bf16.msra.mxu0 %v4441
        %6013 = vmatprep.subr.bf16.mxu0 0
        %6014 = vmatpush1.bf16.msra.mxu0 %v4442
        %6015 = vmatprep.subr.bf16.mxu0 0
        %6016 = vmatpush1.bf16.msra.mxu0 %v4443
        %6017 = vmatprep.subr.bf16.mxu0 0
        %6018 = vmatpush1.bf16.msra.mxu0 %v4444
        %6019 = vmatprep.subr.bf16.mxu0 0
        %6020 = vmatpush1.bf16.msra.mxu0 %v4445
        %6021 = vmatprep.subr.bf16.mxu0 0
        %6022 = vmatpush1.bf16.msra.mxu0 %v4446
        %6023 = vmatprep.subr.bf16.mxu0 0
        %6024 = vmatpush1.bf16.msra.mxu0 %v4447
        %6025 = vmatprep.subr.bf16.mxu0 0
        %6026 = vmatpush1.bf16.msra.mxu0 %v4448
        %6027 = vmatprep.subr.bf16.mxu0 0
        %6028 = vmatpush1.bf16.msra.mxu0 %v4449
        %6029 = vmatprep.subr.bf16.mxu0 0
        %6030 = vmatpush1.bf16.msra.mxu0 %v4450
        %6031 = vmatprep.subr.bf16.mxu0 0
        %6032 = vmatpush1.bf16.msra.mxu0 %v4451
        %6033 = vmatprep.subr.bf16.mxu0 0
        %6034 = vmatpush1.bf16.msra.mxu0 %v4452
        %6035 = vmatprep.mubr.bf16.mxu0 %v1599
        %6036 = vmatmul.mubr.bf16.gmra.mrb[0].mxu0 %v1598
        %v6037 = vpop.f32.mrb[0].mxu0
        %v6038 = vadd.f32 %v5998, %v6037
        %v6039 = vpop.f32.mrb[0].mxu0
        %v6040 = vpop.f32.mrb[0].mxu0
        %v6041 = vpop.f32.mrb[0].mxu0
        %6042 = vdwg.mxu0
        %6043 = vmatprep.subr.bf16.mxu0 0
        %6044 = vmatpush1.bf16.msra.mxu0 %v4453
        %6045 = vmatprep.subr.bf16.mxu0 0
        %6046 = vmatpush1.bf16.msra.mxu0 %v4454
        %6047 = vmatprep.subr.bf16.mxu0 0
        %6048 = vmatpush1.bf16.msra.mxu0 %v4455
        %6049 = vmatprep.subr.bf16.mxu0 0
        %6050 = vmatpush1.bf16.msra.mxu0 %v4456
        %6051 = vmatprep.subr.bf16.mxu0 0
        %6052 = vmatpush1.bf16.msra.mxu0 %v4457
        %6053 = vmatprep.subr.bf16.mxu0 0
        %6054 = vmatpush1.bf16.msra.mxu0 %v4458
        %6055 = vmatprep.subr.bf16.mxu0 0
        %6056 = vmatpush1.bf16.msra.mxu0 %v4459
        %6057 = vmatprep.subr.bf16.mxu0 0
        %6058 = vmatpush1.bf16.msra.mxu0 %v4460
        %6059 = vmatprep.subr.bf16.mxu0 0
        %6060 = vmatpush1.bf16.msra.mxu0 %v4461
        %6061 = vmatprep.subr.bf16.mxu0 0
        %6062 = vmatpush1.bf16.msra.mxu0 %v4462
        %6063 = vmatprep.subr.bf16.mxu0 0
        %6064 = vmatpush1.bf16.msra.mxu0 %v4463
        %6065 = vmatprep.subr.bf16.mxu0 0
        %6066 = vmatpush1.bf16.msra.mxu0 %v4464
        %6067 = vmatprep.subr.bf16.mxu0 0
        %6068 = vmatpush1.bf16.msra.mxu0 %v4465
        %6069 = vmatprep.subr.bf16.mxu0 0
        %6070 = vmatpush1.bf16.msra.mxu0 %v4466
        %6071 = vmatprep.subr.bf16.mxu0 0
        %6072 = vmatpush1.bf16.msra.mxu0 %v4467
        %6073 = vmatprep.subr.bf16.mxu0 0
        %6074 = vmatpush1.bf16.msra.mxu0 %v4468
        %6075 = vmatprep.mubr.bf16.mxu0 %v1601
        %6076 = vmatmul.mubr.bf16.gmra.mrb[0].mxu0 %v1600
        %v6077 = vpop.f32.mrb[0].mxu0
        %v6078 = vadd.f32 %v6038, %v6077
        %v6079 = vpop.f32.mrb[0].mxu0
        %v6080 = vpop.f32.mrb[0].mxu0
        %v6081 = vpop.f32.mrb[0].mxu0
        %6082 = vdwg.mxu0
        %6083 = vmatprep.subr.bf16.mxu0 0
        %6084 = vmatpush1.bf16.msra.mxu0 %v4469
        %6085 = vmatprep.subr.bf16.mxu0 0
        %6086 = vmatpush1.bf16.msra.mxu0 %v4470
        %6087 = vmatprep.subr.bf16.mxu0 0
        %6088 = vmatpush1.bf16.msra.mxu0 %v4471
        %6089 = vmatprep.subr.bf16.mxu0 0
        %6090 = vmatpush1.bf16.msra.mxu0 %v4472
        %6091 = vmatprep.subr.bf16.mxu0 0
        %6092 = vmatpush1.bf16.msra.mxu0 %v4473
        %6093 = vmatprep.subr.bf16.mxu0 0
        %6094 = vmatpush1.bf16.msra.mxu0 %v4474
        %6095 = vmatprep.subr.bf16.mxu0 0
        %6096 = vmatpush1.bf16.msra.mxu0 %v4475
        %6097 = vmatprep.subr.bf16.mxu0 0
        %6098 = vmatpush1.bf16.msra.mxu0 %v4476
        %6099 = vmatprep.subr.bf16.mxu0 0
        %6100 = vmatpush1.bf16.msra.mxu0 %v4477
        %6101 = vmatprep.subr.bf16.mxu0 0
        %6102 = vmatpush1.bf16.msra.mxu0 %v4478
        %6103 = vmatprep.subr.bf16.mxu0 0
        %6104 = vmatpush1.bf16.msra.mxu0 %v4479
        %6105 = vmatprep.subr.bf16.mxu0 0
        %6106 = vmatpush1.bf16.msra.mxu0 %v4480
        %6107 = vmatprep.subr.bf16.mxu0 0
        %6108 = vmatpush1.bf16.msra.mxu0 %v4481
        %6109 = vmatprep.subr.bf16.mxu0 0
        %6110 = vmatpush1.bf16.msra.mxu0 %v4482
        %6111 = vmatprep.subr.bf16.mxu0 0
        %6112 = vmatpush1.bf16.msra.mxu0 %v4483
        %6113 = vmatprep.subr.bf16.mxu0 0
        %6114 = vmatpush1.bf16.msra.mxu0 %v4484
        %6115 = vmatprep.mubr.bf16.mxu0 %v1603
        %6116 = vmatmul.mubr.bf16.gmra.mrb[0].mxu0 %v1602
        %v6117 = vpop.f32.mrb[0].mxu0
        %v6118 = vadd.f32 %v6078, %v6117
        %v6119 = vpop.f32.mrb[0].mxu0
        %v6120 = vpop.f32.mrb[0].mxu0
        %v6121 = vpop.f32.mrb[0].mxu0
        %6122 = vdwg.mxu0
        %6123 = vmatprep.subr.bf16.mxu0 0
        %6124 = vmatpush1.bf16.msra.mxu0 %v4485
        %6125 = vmatprep.subr.bf16.mxu0 0
        %6126 = vmatpush1.bf16.msra.mxu0 %v4486
        %6127 = vmatprep.subr.bf16.mxu0 0
        %6128 = vmatpush1.bf16.msra.mxu0 %v4487
        %6129 = vmatprep.subr.bf16.mxu0 0
        %6130 = vmatpush1.bf16.msra.mxu0 %v4488
        %6131 = vmatprep.subr.bf16.mxu0 0
        %6132 = vmatpush1.bf16.msra.mxu0 %v4489
        %6133 = vmatprep.subr.bf16.mxu0 0
        %6134 = vmatpush1.bf16.msra.mxu0 %v4490
        %6135 = vmatprep.subr.bf16.mxu0 0
        %6136 = vmatpush1.bf16.msra.mxu0 %v4491
        %6137 = vmatprep.subr.bf16.mxu0 0
        %6138 = vmatpush1.bf16.msra.mxu0 %v4492
        %6139 = vmatprep.subr.bf16.mxu0 0
        %6140 = vmatpush1.bf16.msra.mxu0 %v4493
        %6141 = vmatprep.subr.bf16.mxu0 0
        %6142 = vmatpush1.bf16.msra.mxu0 %v4494
        %6143 = vmatprep.subr.bf16.mxu0 0
        %6144 = vmatpush1.bf16.msra.mxu0 %v4495
        %6145 = vmatprep.subr.bf16.mxu0 0
        %6146 = vmatpush1.bf16.msra.mxu0 %v4496
        %6147 = vmatprep.subr.bf16.mxu0 0
        %6148 = vmatpush1.bf16.msra.mxu0 %v4497
        %6149 = vmatprep.subr.bf16.mxu0 0
        %6150 = vmatpush1.bf16.msra.mxu0 %v4498
        %6151 = vmatprep.subr.bf16.mxu0 0
        %6152 = vmatpush1.bf16.msra.mxu0 %v4499
        %6153 = vmatprep.subr.bf16.mxu0 0
        %6154 = vmatpush1.bf16.msra.mxu0 %v4500
        %6155 = vmatprep.mubr.bf16.mxu0 %v1605
        %6156 = vmatmul.mubr.bf16.gmra.mrb[0].mxu0 %v1604
        %v6157 = vpop.f32.mrb[0].mxu0
        %v6158 = vadd.f32 %v6118, %v6157
        %v6159 = vpop.f32.mrb[0].mxu0
        %v6160 = vpop.f32.mrb[0].mxu0
        %v6161 = vpop.f32.mrb[0].mxu0
        %6162 = vdwg.mxu0
        %6163 = vmatprep.subr.bf16.mxu0 0
        %6164 = vmatpush1.bf16.msra.mxu0 %v4501
        %6165 = vmatprep.subr.bf16.mxu0 0
        %6166 = vmatpush1.bf16.msra.mxu0 %v4502
        %6167 = vmatprep.subr.bf16.mxu0 0
        %6168 = vmatpush1.bf16.msra.mxu0 %v4503
        %6169 = vmatprep.subr.bf16.mxu0 0
        %6170 = vmatpush1.bf16.msra.mxu0 %v4504
        %6171 = vmatprep.subr.bf16.mxu0 0
        %6172 = vmatpush1.bf16.msra.mxu0 %v4505
        %6173 = vmatprep.subr.bf16.mxu0 0
        %6174 = vmatpush1.bf16.msra.mxu0 %v4506
        %6175 = vmatprep.subr.bf16.mxu0 0
        %6176 = vmatpush1.bf16.msra.mxu0 %v4507
        %6177 = vmatprep.subr.bf16.mxu0 0
        %6178 = vmatpush1.bf16.msra.mxu0 %v4508
        %6179 = vmatprep.subr.bf16.mxu0 0
        %6180 = vmatpush1.bf16.msra.mxu0 %v4509
        %6181 = vmatprep.subr.bf16.mxu0 0
        %6182 = vmatpush1.bf16.msra.mxu0 %v4510
        %6183 = vmatprep.subr.bf16.mxu0 0
        %6184 = vmatpush1.bf16.msra.mxu0 %v4511
        %6185 = vmatprep.subr.bf16.mxu0 0
        %6186 = vmatpush1.bf16.msra.mxu0 %v4512
        %6187 = vmatprep.subr.bf16.mxu0 0
        %6188 = vmatpush1.bf16.msra.mxu0 %v4513
        %6189 = vmatprep.subr.bf16.mxu0 0
        %6190 = vmatpush1.bf16.msra.mxu0 %v4514
        %6191 = vmatprep.subr.bf16.mxu0 0
        %6192 = vmatpush1.bf16.msra.mxu0 %v4515
        %6193 = vmatprep.subr.bf16.mxu0 0
        %6194 = vmatpush1.bf16.msra.mxu0 %v4516
        %6195 = vmatprep.mubr.bf16.mxu0 %v1607
        %6196 = vmatmul.mubr.bf16.gmra.mrb[0].mxu0 %v1606
        %v6197 = vpop.f32.mrb[0].mxu0
        %v6198 = vadd.f32 %v6158, %v6197
        %v6199 = vpop.f32.mrb[0].mxu0
        %v6200 = vpop.f32.mrb[0].mxu0
        %v6201 = vpop.f32.mrb[0].mxu0
        %6202 = vdwg.mxu0
        %6203 = vmatprep.subr.bf16.mxu0 0
        %6204 = vmatpush1.bf16.msra.mxu0 %v4517
        %6205 = vmatprep.subr.bf16.mxu0 0
        %6206 = vmatpush1.bf16.msra.mxu0 %v4518
        %6207 = vmatprep.subr.bf16.mxu0 0
        %6208 = vmatpush1.bf16.msra.mxu0 %v4519
        %6209 = vmatprep.subr.bf16.mxu0 0
        %6210 = vmatpush1.bf16.msra.mxu0 %v4520
        %6211 = vmatprep.subr.bf16.mxu0 0
        %6212 = vmatpush1.bf16.msra.mxu0 %v4521
        %6213 = vmatprep.subr.bf16.mxu0 0
        %6214 = vmatpush1.bf16.msra.mxu0 %v4522
        %6215 = vmatprep.subr.bf16.mxu0 0
        %6216 = vmatpush1.bf16.msra.mxu0 %v4523
        %6217 = vmatprep.subr.bf16.mxu0 0
        %6218 = vmatpush1.bf16.msra.mxu0 %v4524
        %6219 = vmatprep.subr.bf16.mxu0 0
        %6220 = vmatpush1.bf16.msra.mxu0 %v4525
        %6221 = vmatprep.subr.bf16.mxu0 0
        %6222 = vmatpush1.bf16.msra.mxu0 %v4526
        %6223 = vmatprep.subr.bf16.mxu0 0
        %6224 = vmatpush1.bf16.msra.mxu0 %v4527
        %6225 = vmatprep.subr.bf16.mxu0 0
        %6226 = vmatpush1.bf16.msra.mxu0 %v4528
        %6227 = vmatprep.subr.bf16.mxu0 0
        %6228 = vmatpush1.bf16.msra.mxu0 %v4529
        %6229 = vmatprep.subr.bf16.mxu0 0
        %6230 = vmatpush1.bf16.msra.mxu0 %v4530
        %6231 = vmatprep.subr.bf16.mxu0 0
        %6232 = vmatpush1.bf16.msra.mxu0 %v4531
        %6233 = vmatprep.subr.bf16.mxu0 0
        %6234 = vmatpush1.bf16.msra.mxu0 %v4532
        %6235 = vmatprep.mubr.bf16.mxu0 %v1609
        %6236 = vmatmul.mubr.bf16.gmra.mrb[0].mxu0 %v1608
        %v6237 = vpop.f32.mrb[0].mxu0
        %v6238 = vadd.f32 %v6198, %v6237
        %v6239 = vpop.f32.mrb[0].mxu0
        %v6240 = vpop.f32.mrb[0].mxu0
        %v6241 = vpop.f32.mrb[0].mxu0
        %6242 = vdwg.mxu0
        %6243 = vmatprep.subr.bf16.mxu0 0
        %6244 = vmatpush1.bf16.msra.mxu0 %v4533
        %6245 = vmatprep.subr.bf16.mxu0 0
        %6246 = vmatpush1.bf16.msra.mxu0 %v4534
        %6247 = vmatprep.subr.bf16.mxu0 0
        %6248 = vmatpush1.bf16.msra.mxu0 %v4535
        %6249 = vmatprep.subr.bf16.mxu0 0
        %6250 = vmatpush1.bf16.msra.mxu0 %v4536
        %6251 = vmatprep.subr.bf16.mxu0 0
        %6252 = vmatpush1.bf16.msra.mxu0 %v4537
        %6253 = vmatprep.subr.bf16.mxu0 0
        %6254 = vmatpush1.bf16.msra.mxu0 %v4538
        %6255 = vmatprep.subr.bf16.mxu0 0
        %6256 = vmatpush1.bf16.msra.mxu0 %v4539
        %6257 = vmatprep.subr.bf16.mxu0 0
        %6258 = vmatpush1.bf16.msra.mxu0 %v4540
        %6259 = vmatprep.subr.bf16.mxu0 0
        %6260 = vmatpush1.bf16.msra.mxu0 %v4541
        %6261 = vmatprep.subr.bf16.mxu0 0
        %6262 = vmatpush1.bf16.msra.mxu0 %v4542
        %6263 = vmatprep.subr.bf16.mxu0 0
        %6264 = vmatpush1.bf16.msra.mxu0 %v4543
        %6265 = vmatprep.subr.bf16.mxu0 0
        %6266 = vmatpush1.bf16.msra.mxu0 %v4544
        %6267 = vmatprep.subr.bf16.mxu0 0
        %6268 = vmatpush1.bf16.msra.mxu0 %v4545
        %6269 = vmatprep.subr.bf16.mxu0 0
        %6270 = vmatpush1.bf16.msra.mxu0 %v4546
        %6271 = vmatprep.subr.bf16.mxu0 0
        %6272 = vmatpush1.bf16.msra.mxu0 %v4547
        %6273 = vmatprep.subr.bf16.mxu0 0
        %6274 = vmatpush1.bf16.msra.mxu0 %v4548
        %6275 = vmatprep.mubr.bf16.mxu0 %v1611
        %6276 = vmatmul.mubr.bf16.gmra.mrb[0].mxu0 %v1610
        %v6277 = vpop.f32.mrb[0].mxu0
        %v6278 = vadd.f32 %v6238, %v6277
        %v6279 = vpop.f32.mrb[0].mxu0
        %v6280 = vpop.f32.mrb[0].mxu0
        %v6281 = vpop.f32.mrb[0].mxu0
        %6282 = vdwg.mxu0
        %6283 = vmatprep.subr.bf16.mxu0 0
        %6284 = vmatpush1.bf16.msra.mxu0 %v4549
        %6285 = vmatprep.subr.bf16.mxu0 0
        %6286 = vmatpush1.bf16.msra.mxu0 %v4550
        %6287 = vmatprep.subr.bf16.mxu0 0
        %6288 = vmatpush1.bf16.msra.mxu0 %v4551
        %6289 = vmatprep.subr.bf16.mxu0 0
        %6290 = vmatpush1.bf16.msra.mxu0 %v4552
        %6291 = vmatprep.subr.bf16.mxu0 0
        %6292 = vmatpush1.bf16.msra.mxu0 %v4553
        %6293 = vmatprep.subr.bf16.mxu0 0
        %6294 = vmatpush1.bf16.msra.mxu0 %v4554
        %6295 = vmatprep.subr.bf16.mxu0 0
        %6296 = vmatpush1.bf16.msra.mxu0 %v4555
        %6297 = vmatprep.subr.bf16.mxu0 0
        %6298 = vmatpush1.bf16.msra.mxu0 %v4556
        %6299 = vmatprep.subr.bf16.mxu0 0
        %6300 = vmatpush1.bf16.msra.mxu0 %v4557
        %6301 = vmatprep.subr.bf16.mxu0 0
        %6302 = vmatpush1.bf16.msra.mxu0 %v4558
        %6303 = vmatprep.subr.bf16.mxu0 0
        %6304 = vmatpush1.bf16.msra.mxu0 %v4559
        %6305 = vmatprep.subr.bf16.mxu0 0
        %6306 = vmatpush1.bf16.msra.mxu0 %v4560
        %6307 = vmatprep.subr.bf16.mxu0 0
        %6308 = vmatpush1.bf16.msra.mxu0 %v4561
        %6309 = vmatprep.subr.bf16.mxu0 0
        %6310 = vmatpush1.bf16.msra.mxu0 %v4562
        %6311 = vmatprep.subr.bf16.mxu0 0
        %6312 = vmatpush1.bf16.msra.mxu0 %v4563
        %6313 = vmatprep.subr.bf16.mxu0 0
        %6314 = vmatpush1.bf16.msra.mxu0 %v4564
        %6315 = vmatprep.mubr.bf16.mxu0 %v1613
        %6316 = vmatmul.mubr.bf16.gmra.mrb[0].mxu0 %v1612
        %v6317 = vpop.f32.mrb[0].mxu0
        %v6318 = vadd.f32 %v6278, %v6317
        %v6319 = vpop.f32.mrb[0].mxu0
        %v6320 = vpop.f32.mrb[0].mxu0
        %v6321 = vpop.f32.mrb[0].mxu0
        %6322 = vdwg.mxu0
        %6323 = vmatprep.subr.bf16.mxu0 0
        %6324 = vmatpush1.bf16.msra.mxu0 %v4565
        %6325 = vmatprep.subr.bf16.mxu0 0
        %6326 = vmatpush1.bf16.msra.mxu0 %v4566
        %6327 = vmatprep.subr.bf16.mxu0 0
        %6328 = vmatpush1.bf16.msra.mxu0 %v4567
        %6329 = vmatprep.subr.bf16.mxu0 0
        %6330 = vmatpush1.bf16.msra.mxu0 %v4568
        %6331 = vmatprep.subr.bf16.mxu0 0
        %6332 = vmatpush1.bf16.msra.mxu0 %v4569
        %6333 = vmatprep.subr.bf16.mxu0 0
        %6334 = vmatpush1.bf16.msra.mxu0 %v4570
        %6335 = vmatprep.subr.bf16.mxu0 0
        %6336 = vmatpush1.bf16.msra.mxu0 %v4571
        %6337 = vmatprep.subr.bf16.mxu0 0
        %6338 = vmatpush1.bf16.msra.mxu0 %v4572
        %6339 = vmatprep.subr.bf16.mxu0 0
        %6340 = vmatpush1.bf16.msra.mxu0 %v4573
        %6341 = vmatprep.subr.bf16.mxu0 0
        %6342 = vmatpush1.bf16.msra.mxu0 %v4574
        %6343 = vmatprep.subr.bf16.mxu0 0
        %6344 = vmatpush1.bf16.msra.mxu0 %v4575
        %6345 = vmatprep.subr.bf16.mxu0 0
        %6346 = vmatpush1.bf16.msra.mxu0 %v4576
        %6347 = vmatprep.subr.bf16.mxu0 0
        %6348 = vmatpush1.bf16.msra.mxu0 %v4577
        %6349 = vmatprep.subr.bf16.mxu0 0
        %6350 = vmatpush1.bf16.msra.mxu0 %v4578
        %6351 = vmatprep.subr.bf16.mxu0 0
        %6352 = vmatpush1.bf16.msra.mxu0 %v4579
        %6353 = vmatprep.subr.bf16.mxu0 0
        %6354 = vmatpush1.bf16.msra.mxu0 %v4580
        %6355 = vmatprep.mubr.bf16.mxu0 %v1615
        %6356 = vmatmul.mubr.bf16.gmra.mrb[0].mxu0 %v1614
        %v6357 = vpop.f32.mrb[0].mxu0
        %v6358 = vadd.f32 %v6318, %v6357
        %v6359 = vpop.f32.mrb[0].mxu0
        %v6360 = vpop.f32.mrb[0].mxu0
        %v6361 = vpop.f32.mrb[0].mxu0
        %6362 = vdwg.mxu0
        %6363 = vmatprep.subr.bf16.mxu0 0
        %6364 = vmatpush1.bf16.msra.mxu0 %v4581
        %6365 = vmatprep.subr.bf16.mxu0 0
        %6366 = vmatpush1.bf16.msra.mxu0 %v4582
        %6367 = vmatprep.subr.bf16.mxu0 0
        %6368 = vmatpush1.bf16.msra.mxu0 %v4583
        %6369 = vmatprep.subr.bf16.mxu0 0
        %6370 = vmatpush1.bf16.msra.mxu0 %v4584
        %6371 = vmatprep.subr.bf16.mxu0 0
        %6372 = vmatpush1.bf16.msra.mxu0 %v4585
        %6373 = vmatprep.subr.bf16.mxu0 0
        %6374 = vmatpush1.bf16.msra.mxu0 %v4586
        %6375 = vmatprep.subr.bf16.mxu0 0
        %6376 = vmatpush1.bf16.msra.mxu0 %v4587
        %6377 = vmatprep.subr.bf16.mxu0 0
        %6378 = vmatpush1.bf16.msra.mxu0 %v4588
        %6379 = vmatprep.subr.bf16.mxu0 0
        %6380 = vmatpush1.bf16.msra.mxu0 %v4589
        %6381 = vmatprep.subr.bf16.mxu0 0
        %6382 = vmatpush1.bf16.msra.mxu0 %v4590
        %6383 = vmatprep.subr.bf16.mxu0 0
        %6384 = vmatpush1.bf16.msra.mxu0 %v4591
        %6385 = vmatprep.subr.bf16.mxu0 0
        %6386 = vmatpush1.bf16.msra.mxu0 %v4592
        %6387 = vmatprep.subr.bf16.mxu0 0
        %6388 = vmatpush1.bf16.msra.mxu0 %v4593
        %6389 = vmatprep.subr.bf16.mxu0 0
        %6390 = vmatpush1.bf16.msra.mxu0 %v4594
        %6391 = vmatprep.subr.bf16.mxu0 0
        %6392 = vmatpush1.bf16.msra.mxu0 %v4595
        %6393 = vmatprep.subr.bf16.mxu0 0
        %6394 = vmatpush1.bf16.msra.mxu0 %v4596
        %6395 = vmatprep.mubr.bf16.mxu0 %v1617
        %6396 = vmatmul.mubr.bf16.gmra.mrb[0].mxu0 %v1616
        %v6397 = vpop.f32.mrb[0].mxu0
        %v6398 = vadd.f32 %v6358, %v6397
        %v6399 = vpop.f32.mrb[0].mxu0
        %v6400 = vpop.f32.mrb[0].mxu0
        %v6401 = vpop.f32.mrb[0].mxu0
        %6402 = vdwg.mxu0
        %6403 = vmatprep.subr.bf16.mxu0 0
        %6404 = vmatpush1.bf16.msra.mxu0 %v4597
        %6405 = vmatprep.subr.bf16.mxu0 0
        %6406 = vmatpush1.bf16.msra.mxu0 %v4598
        %6407 = vmatprep.subr.bf16.mxu0 0
        %6408 = vmatpush1.bf16.msra.mxu0 %v4599
        %6409 = vmatprep.subr.bf16.mxu0 0
        %6410 = vmatpush1.bf16.msra.mxu0 %v4600
        %6411 = vmatprep.subr.bf16.mxu0 0
        %6412 = vmatpush1.bf16.msra.mxu0 %v4601
        %6413 = vmatprep.subr.bf16.mxu0 0
        %6414 = vmatpush1.bf16.msra.mxu0 %v4602
        %6415 = vmatprep.subr.bf16.mxu0 0
        %6416 = vmatpush1.bf16.msra.mxu0 %v4603
        %6417 = vmatprep.subr.bf16.mxu0 0
        %6418 = vmatpush1.bf16.msra.mxu0 %v4604
        %6419 = vmatprep.subr.bf16.mxu0 0
        %6420 = vmatpush1.bf16.msra.mxu0 %v4605
        %6421 = vmatprep.subr.bf16.mxu0 0
        %6422 = vmatpush1.bf16.msra.mxu0 %v4606
        %6423 = vmatprep.subr.bf16.mxu0 0
        %6424 = vmatpush1.bf16.msra.mxu0 %v4607
        %6425 = vmatprep.subr.bf16.mxu0 0
        %6426 = vmatpush1.bf16.msra.mxu0 %v4608
        %6427 = vmatprep.subr.bf16.mxu0 0
        %6428 = vmatpush1.bf16.msra.mxu0 %v4609
        %6429 = vmatprep.subr.bf16.mxu0 0
        %6430 = vmatpush1.bf16.msra.mxu0 %v4610
        %6431 = vmatprep.subr.bf16.mxu0 0
        %6432 = vmatpush1.bf16.msra.mxu0 %v4611
        %6433 = vmatprep.subr.bf16.mxu0 0
        %6434 = vmatpush1.bf16.msra.mxu0 %v4612
        %6435 = vmatprep.mubr.bf16.mxu0 %v1619
        %6436 = vmatmul.mubr.bf16.gmra.mrb[0].mxu0 %v1618
        %v6437 = vpop.f32.mrb[0].mxu0
        %v6438 = vadd.f32 %v6398, %v6437
        %v6439 = vpop.f32.mrb[0].mxu0
        %v6440 = vpop.f32.mrb[0].mxu0
        %v6441 = vpop.f32.mrb[0].mxu0
        %6442 = vdwg.mxu0
        %6443 = vmatprep.subr.bf16.mxu0 0
        %6444 = vmatpush1.bf16.msra.mxu0 %v4613
        %6445 = vmatprep.subr.bf16.mxu0 0
        %6446 = vmatpush1.bf16.msra.mxu0 %v4614
        %6447 = vmatprep.subr.bf16.mxu0 0
        %6448 = vmatpush1.bf16.msra.mxu0 %v4615
        %6449 = vmatprep.subr.bf16.mxu0 0
        %6450 = vmatpush1.bf16.msra.mxu0 %v4616
        %6451 = vmatprep.subr.bf16.mxu0 0
        %6452 = vmatpush1.bf16.msra.mxu0 %v4617
        %6453 = vmatprep.subr.bf16.mxu0 0
        %6454 = vmatpush1.bf16.msra.mxu0 %v4618
        %6455 = vmatprep.subr.bf16.mxu0 0
        %6456 = vmatpush1.bf16.msra.mxu0 %v4619
        %6457 = vmatprep.subr.bf16.mxu0 0
        %6458 = vmatpush1.bf16.msra.mxu0 %v4620
        %6459 = vmatprep.subr.bf16.mxu0 0
        %6460 = vmatpush1.bf16.msra.mxu0 %v4621
        %6461 = vmatprep.subr.bf16.mxu0 0
        %6462 = vmatpush1.bf16.msra.mxu0 %v4622
        %6463 = vmatprep.subr.bf16.mxu0 0
        %6464 = vmatpush1.bf16.msra.mxu0 %v4623
        %6465 = vmatprep.subr.bf16.mxu0 0
        %6466 = vmatpush1.bf16.msra.mxu0 %v4624
        %6467 = vmatprep.subr.bf16.mxu0 0
        %6468 = vmatpush1.bf16.msra.mxu0 %v4625
        %6469 = vmatprep.subr.bf16.mxu0 0
        %6470 = vmatpush1.bf16.msra.mxu0 %v4626
        %6471 = vmatprep.subr.bf16.mxu0 0
        %6472 = vmatpush1.bf16.msra.mxu0 %v4627
        %6473 = vmatprep.subr.bf16.mxu0 0
        %6474 = vmatpush1.bf16.msra.mxu0 %v4628
        %6475 = vmatprep.mubr.bf16.mxu0 %v1621
        %6476 = vmatmul.mubr.bf16.gmra.mrb[0].mxu0 %v1620
        %v6477 = vpop.f32.mrb[0].mxu0
        %v6478 = vadd.f32 %v6438, %v6477
        %v6479 = vpop.f32.mrb[0].mxu0
        %v6480 = vpop.f32.mrb[0].mxu0
        %v6481 = vpop.f32.mrb[0].mxu0
        %6482 = vdwg.mxu0
        %6483 = vmatprep.subr.bf16.mxu0 0
        %6484 = vmatpush1.bf16.msra.mxu0 %v4629
        %6485 = vmatprep.subr.bf16.mxu0 0
        %6486 = vmatpush1.bf16.msra.mxu0 %v4630
        %6487 = vmatprep.subr.bf16.mxu0 0
        %6488 = vmatpush1.bf16.msra.mxu0 %v4631
        %6489 = vmatprep.subr.bf16.mxu0 0
        %6490 = vmatpush1.bf16.msra.mxu0 %v4632
        %6491 = vmatprep.subr.bf16.mxu0 0
        %6492 = vmatpush1.bf16.msra.mxu0 %v4633
        %6493 = vmatprep.subr.bf16.mxu0 0
        %6494 = vmatpush1.bf16.msra.mxu0 %v4634
        %6495 = vmatprep.subr.bf16.mxu0 0
        %6496 = vmatpush1.bf16.msra.mxu0 %v4635
        %6497 = vmatprep.subr.bf16.mxu0 0
        %6498 = vmatpush1.bf16.msra.mxu0 %v4636
        %6499 = vmatprep.subr.bf16.mxu0 0
        %6500 = vmatpush1.bf16.msra.mxu0 %v4637
        %6501 = vmatprep.subr.bf16.mxu0 0
        %6502 = vmatpush1.bf16.msra.mxu0 %v4638
        %6503 = vmatprep.subr.bf16.mxu0 0
        %6504 = vmatpush1.bf16.msra.mxu0 %v4639
        %6505 = vmatprep.subr.bf16.mxu0 0
        %6506 = vmatpush1.bf16.msra.mxu0 %v4640
        %6507 = vmatprep.subr.bf16.mxu0 0
        %6508 = vmatpush1.bf16.msra.mxu0 %v4641
        %6509 = vmatprep.subr.bf16.mxu0 0
        %6510 = vmatpush1.bf16.msra.mxu0 %v4642
        %6511 = vmatprep.subr.bf16.mxu0 0
        %6512 = vmatpush1.bf16.msra.mxu0 %v4643
        %6513 = vmatprep.subr.bf16.mxu0 0
        %6514 = vmatpush1.bf16.msra.mxu0 %v4644
        %6515 = vmatprep.mubr.bf16.mxu0 %v1623
        %6516 = vmatmul.mubr.bf16.gmra.mrb[0].mxu0 %v1622
        %v6517 = vpop.f32.mrb[0].mxu0
        %v6518 = vadd.f32 %v6478, %v6517
        %v6519 = vpop.f32.mrb[0].mxu0
        %v6520 = vpop.f32.mrb[0].mxu0
        %v6521 = vpop.f32.mrb[0].mxu0
        %6522 = vdwg.mxu0
        %6523 = vmatprep.subr.bf16.mxu0 0
        %6524 = vmatpush1.bf16.msra.mxu0 %v4645
        %6525 = vmatprep.subr.bf16.mxu0 0
        %6526 = vmatpush1.bf16.msra.mxu0 %v4646
        %6527 = vmatprep.subr.bf16.mxu0 0
        %6528 = vmatpush1.bf16.msra.mxu0 %v4647
        %6529 = vmatprep.subr.bf16.mxu0 0
        %6530 = vmatpush1.bf16.msra.mxu0 %v4648
        %6531 = vmatprep.subr.bf16.mxu0 0
        %6532 = vmatpush1.bf16.msra.mxu0 %v4649
        %6533 = vmatprep.subr.bf16.mxu0 0
        %6534 = vmatpush1.bf16.msra.mxu0 %v4650
        %6535 = vmatprep.subr.bf16.mxu0 0
        %6536 = vmatpush1.bf16.msra.mxu0 %v4651
        %6537 = vmatprep.subr.bf16.mxu0 0
        %6538 = vmatpush1.bf16.msra.mxu0 %v4652
        %6539 = vmatprep.subr.bf16.mxu0 0
        %6540 = vmatpush1.bf16.msra.mxu0 %v4653
        %6541 = vmatprep.subr.bf16.mxu0 0
        %6542 = vmatpush1.bf16.msra.mxu0 %v4654
        %6543 = vmatprep.subr.bf16.mxu0 0
        %6544 = vmatpush1.bf16.msra.mxu0 %v4655
        %6545 = vmatprep.subr.bf16.mxu0 0
        %6546 = vmatpush1.bf16.msra.mxu0 %v4656
        %6547 = vmatprep.subr.bf16.mxu0 0
        %6548 = vmatpush1.bf16.msra.mxu0 %v4657
        %6549 = vmatprep.subr.bf16.mxu0 0
        %6550 = vmatpush1.bf16.msra.mxu0 %v4658
        %6551 = vmatprep.subr.bf16.mxu0 0
        %6552 = vmatpush1.bf16.msra.mxu0 %v4659
        %6553 = vmatprep.subr.bf16.mxu0 0
        %6554 = vmatpush1.bf16.msra.mxu0 %v4660
        %6555 = vmatprep.mubr.bf16.mxu0 %v1625
        %6556 = vmatmul.mubr.bf16.gmra.mrb[0].mxu0 %v1624
        %v6557 = vpop.f32.mrb[0].mxu0
        %v6558 = vadd.f32 %v6518, %v6557
        %v6559 = vpop.f32.mrb[0].mxu0
        %v6560 = vpop.f32.mrb[0].mxu0
        %v6561 = vpop.f32.mrb[0].mxu0
        %6562 = vdwg.mxu0
        %6563 = vmatprep.subr.bf16.mxu0 0
        %6564 = vmatpush1.bf16.msra.mxu0 %v4661
        %6565 = vmatprep.subr.bf16.mxu0 0
        %6566 = vmatpush1.bf16.msra.mxu0 %v4662
        %6567 = vmatprep.subr.bf16.mxu0 0
        %6568 = vmatpush1.bf16.msra.mxu0 %v4663
        %6569 = vmatprep.subr.bf16.mxu0 0
        %6570 = vmatpush1.bf16.msra.mxu0 %v4664
        %6571 = vmatprep.subr.bf16.mxu0 0
        %6572 = vmatpush1.bf16.msra.mxu0 %v4665
        %6573 = vmatprep.subr.bf16.mxu0 0
        %6574 = vmatpush1.bf16.msra.mxu0 %v4666
        %6575 = vmatprep.subr.bf16.mxu0 0
        %6576 = vmatpush1.bf16.msra.mxu0 %v4667
        %6577 = vmatprep.subr.bf16.mxu0 0
        %6578 = vmatpush1.bf16.msra.mxu0 %v4668
        %6579 = vmatprep.subr.bf16.mxu0 0
        %6580 = vmatpush1.bf16.msra.mxu0 %v4669
        %6581 = vmatprep.subr.bf16.mxu0 0
        %6582 = vmatpush1.bf16.msra.mxu0 %v4670
        %6583 = vmatprep.subr.bf16.mxu0 0
        %6584 = vmatpush1.bf16.msra.mxu0 %v4671
        %6585 = vmatprep.subr.bf16.mxu0 0
        %6586 = vmatpush1.bf16.msra.mxu0 %v4672
        %6587 = vmatprep.subr.bf16.mxu0 0
        %6588 = vmatpush1.bf16.msra.mxu0 %v4673
        %6589 = vmatprep.subr.bf16.mxu0 0
        %6590 = vmatpush1.bf16.msra.mxu0 %v4674
        %6591 = vmatprep.subr.bf16.mxu0 0
        %6592 = vmatpush1.bf16.msra.mxu0 %v4675
        %6593 = vmatprep.subr.bf16.mxu0 0
        %6594 = vmatpush1.bf16.msra.mxu0 %v4676
        %6595 = vmatprep.mubr.bf16.mxu0 %v1627
        %6596 = vmatmul.mubr.bf16.gmra.mrb[0].mxu0 %v1626
        %v6597 = vpop.f32.mrb[0].mxu0
        %v6598 = vadd.f32 %v6558, %v6597
        %v6599 = vpop.f32.mrb[0].mxu0
        %v6600 = vpop.f32.mrb[0].mxu0
        %v6601 = vpop.f32.mrb[0].mxu0
        %6602 = vdwg.mxu0
        %6603 = vmatprep.subr.bf16.mxu0 0
        %6604 = vmatpush1.bf16.msra.mxu0 %v4677
        %6605 = vmatprep.subr.bf16.mxu0 0
        %6606 = vmatpush1.bf16.msra.mxu0 %v4678
        %6607 = vmatprep.subr.bf16.mxu0 0
        %6608 = vmatpush1.bf16.msra.mxu0 %v4679
        %6609 = vmatprep.subr.bf16.mxu0 0
        %6610 = vmatpush1.bf16.msra.mxu0 %v4680
        %6611 = vmatprep.subr.bf16.mxu0 0
        %6612 = vmatpush1.bf16.msra.mxu0 %v4681
        %6613 = vmatprep.subr.bf16.mxu0 0
        %6614 = vmatpush1.bf16.msra.mxu0 %v4682
        %6615 = vmatprep.subr.bf16.mxu0 0
        %6616 = vmatpush1.bf16.msra.mxu0 %v4683
        %6617 = vmatprep.subr.bf16.mxu0 0
        %6618 = vmatpush1.bf16.msra.mxu0 %v4684
        %6619 = vmatprep.subr.bf16.mxu0 0
        %6620 = vmatpush1.bf16.msra.mxu0 %v4685
        %6621 = vmatprep.subr.bf16.mxu0 0
        %6622 = vmatpush1.bf16.msra.mxu0 %v4686
        %6623 = vmatprep.subr.bf16.mxu0 0
        %6624 = vmatpush1.bf16.msra.mxu0 %v4687
        %6625 = vmatprep.subr.bf16.mxu0 0
        %6626 = vmatpush1.bf16.msra.mxu0 %v4688
        %6627 = vmatprep.subr.bf16.mxu0 0
        %6628 = vmatpush1.bf16.msra.mxu0 %v4689
        %6629 = vmatprep.subr.bf16.mxu0 0
        %6630 = vmatpush1.bf16.msra.mxu0 %v4690
        %6631 = vmatprep.subr.bf16.mxu0 0
        %6632 = vmatpush1.bf16.msra.mxu0 %v4691
        %6633 = vmatprep.subr.bf16.mxu0 0
        %6634 = vmatpush1.bf16.msra.mxu0 %v4692
        %6635 = vmatprep.mubr.bf16.mxu0 %v1629
        %6636 = vmatmul.mubr.bf16.gmra.mrb[0].mxu0 %v1628
        %v6637 = vpop.f32.mrb[0].mxu0
        %v6638 = vadd.f32 %v6598, %v6637
        %v6639 = vpop.f32.mrb[0].mxu0
        %v6640 = vpop.f32.mrb[0].mxu0
        %v6641 = vpop.f32.mrb[0].mxu0
        %6642 = vdwg.mxu0
        %6643 = vmatprep.subr.bf16.mxu0 0
        %6644 = vmatpush1.bf16.msra.mxu0 %v4693
        %6645 = vmatprep.subr.bf16.mxu0 0
        %6646 = vmatpush1.bf16.msra.mxu0 %v4694
        %6647 = vmatprep.subr.bf16.mxu0 0
        %6648 = vmatpush1.bf16.msra.mxu0 %v4695
        %6649 = vmatprep.subr.bf16.mxu0 0
        %6650 = vmatpush1.bf16.msra.mxu0 %v4696
        %6651 = vmatprep.subr.bf16.mxu0 0
        %6652 = vmatpush1.bf16.msra.mxu0 %v4697
        %6653 = vmatprep.subr.bf16.mxu0 0
        %6654 = vmatpush1.bf16.msra.mxu0 %v4698
        %6655 = vmatprep.subr.bf16.mxu0 0
        %6656 = vmatpush1.bf16.msra.mxu0 %v4699
        %6657 = vmatprep.subr.bf16.mxu0 0
        %6658 = vmatpush1.bf16.msra.mxu0 %v4700
        %6659 = vmatprep.subr.bf16.mxu0 0
        %6660 = vmatpush1.bf16.msra.mxu0 %v4701
        %6661 = vmatprep.subr.bf16.mxu0 0
        %6662 = vmatpush1.bf16.msra.mxu0 %v4702
        %6663 = vmatprep.subr.bf16.mxu0 0
        %6664 = vmatpush1.bf16.msra.mxu0 %v4703
        %6665 = vmatprep.subr.bf16.mxu0 0
        %6666 = vmatpush1.bf16.msra.mxu0 %v4704
        %6667 = vmatprep.subr.bf16.mxu0 0
        %6668 = vmatpush1.bf16.msra.mxu0 %v4705
        %6669 = vmatprep.subr.bf16.mxu0 0
        %6670 = vmatpush1.bf16.msra.mxu0 %v4706
        %6671 = vmatprep.subr.bf16.mxu0 0
        %6672 = vmatpush1.bf16.msra.mxu0 %v4707
        %6673 = vmatprep.subr.bf16.mxu0 0
        %6674 = vmatpush1.bf16.msra.mxu0 %v4708
        %6675 = vmatprep.mubr.bf16.mxu0 %v1631
        %6676 = vmatmul.mubr.bf16.gmra.mrb[0].mxu0 %v1630
        %v6677 = vpop.f32.mrb[0].mxu0
        %v6678 = vadd.f32 %v6638, %v6677
        %v6679 = vpop.f32.mrb[0].mxu0
        %v6680 = vpop.f32.mrb[0].mxu0
        %v6681 = vpop.f32.mrb[0].mxu0
        %6682 = vdwg.mxu0
        %6683 = vmatprep.subr.bf16.mxu0 0
        %6684 = vmatpush1.bf16.msra.mxu0 %v4709
        %6685 = vmatprep.subr.bf16.mxu0 0
        %6686 = vmatpush1.bf16.msra.mxu0 %v4710
        %6687 = vmatprep.subr.bf16.mxu0 0
        %6688 = vmatpush1.bf16.msra.mxu0 %v4711
        %6689 = vmatprep.subr.bf16.mxu0 0
        %6690 = vmatpush1.bf16.msra.mxu0 %v4712
        %6691 = vmatprep.subr.bf16.mxu0 0
        %6692 = vmatpush1.bf16.msra.mxu0 %v4713
        %6693 = vmatprep.subr.bf16.mxu0 0
        %6694 = vmatpush1.bf16.msra.mxu0 %v4714
        %6695 = vmatprep.subr.bf16.mxu0 0
        %6696 = vmatpush1.bf16.msra.mxu0 %v4715
        %6697 = vmatprep.subr.bf16.mxu0 0
        %6698 = vmatpush1.bf16.msra.mxu0 %v4716
        %6699 = vmatprep.subr.bf16.mxu0 0
        %6700 = vmatpush1.bf16.msra.mxu0 %v4717
        %6701 = vmatprep.subr.bf16.mxu0 0
        %6702 = vmatpush1.bf16.msra.mxu0 %v4718
        %6703 = vmatprep.subr.bf16.mxu0 0
        %6704 = vmatpush1.bf16.msra.mxu0 %v4719
        %6705 = vmatprep.subr.bf16.mxu0 0
        %6706 = vmatpush1.bf16.msra.mxu0 %v4720
        %6707 = vmatprep.subr.bf16.mxu0 0
        %6708 = vmatpush1.bf16.msra.mxu0 %v4721
        %6709 = vmatprep.subr.bf16.mxu0 0
        %6710 = vmatpush1.bf16.msra.mxu0 %v4722
        %6711 = vmatprep.subr.bf16.mxu0 0
        %6712 = vmatpush1.bf16.msra.mxu0 %v4723
        %6713 = vmatprep.subr.bf16.mxu0 0
        %6714 = vmatpush1.bf16.msra.mxu0 %v4724
        %6715 = vmatprep.mubr.bf16.mxu0 %v1633
        %6716 = vmatmul.mubr.bf16.gmra.mrb[0].mxu0 %v1632
        %v6717 = vpop.f32.mrb[0].mxu0
        %v6718 = vadd.f32 %v6678, %v6717
        %v6719 = vpop.f32.mrb[0].mxu0
        %v6720 = vpop.f32.mrb[0].mxu0
        %v6721 = vpop.f32.mrb[0].mxu0
        %6722 = vdwg.mxu0
        %6723 = vmatprep.subr.bf16.mxu0 0
        %6724 = vmatpush1.bf16.msra.mxu0 %v4725
        %6725 = vmatprep.subr.bf16.mxu0 0
        %6726 = vmatpush1.bf16.msra.mxu0 %v4726
        %6727 = vmatprep.subr.bf16.mxu0 0
        %6728 = vmatpush1.bf16.msra.mxu0 %v4727
        %6729 = vmatprep.subr.bf16.mxu0 0
        %6730 = vmatpush1.bf16.msra.mxu0 %v4728
        %6731 = vmatprep.subr.bf16.mxu0 0
        %6732 = vmatpush1.bf16.msra.mxu0 %v4729
        %6733 = vmatprep.subr.bf16.mxu0 0
        %6734 = vmatpush1.bf16.msra.mxu0 %v4730
        %6735 = vmatprep.subr.bf16.mxu0 0
        %6736 = vmatpush1.bf16.msra.mxu0 %v4731
        %6737 = vmatprep.subr.bf16.mxu0 0
        %6738 = vmatpush1.bf16.msra.mxu0 %v4732
        %6739 = vmatprep.subr.bf16.mxu0 0
        %6740 = vmatpush1.bf16.msra.mxu0 %v4733
        %6741 = vmatprep.subr.bf16.mxu0 0
        %6742 = vmatpush1.bf16.msra.mxu0 %v4734
        %6743 = vmatprep.subr.bf16.mxu0 0
        %6744 = vmatpush1.bf16.msra.mxu0 %v4735
        %6745 = vmatprep.subr.bf16.mxu0 0
        %6746 = vmatpush1.bf16.msra.mxu0 %v4736
        %6747 = vmatprep.subr.bf16.mxu0 0
        %6748 = vmatpush1.bf16.msra.mxu0 %v4737
        %6749 = vmatprep.subr.bf16.mxu0 0
        %6750 = vmatpush1.bf16.msra.mxu0 %v4738
        %6751 = vmatprep.subr.bf16.mxu0 0
        %6752 = vmatpush1.bf16.msra.mxu0 %v4739
        %6753 = vmatprep.subr.bf16.mxu0 0
        %6754 = vmatpush1.bf16.msra.mxu0 %v4740
        %6755 = vmatprep.mubr.bf16.mxu0 %v1635
        %6756 = vmatmul.mubr.bf16.gmra.mrb[0].mxu0 %v1634
        %v6757 = vpop.f32.mrb[0].mxu0
        %v6758 = vadd.f32 %v6718, %v6757
        %v6759 = vpop.f32.mrb[0].mxu0
        %v6760 = vpop.f32.mrb[0].mxu0
        %v6761 = vpop.f32.mrb[0].mxu0
        %6762 = vdwg.mxu0
        %6763 = vmatprep.subr.bf16.mxu0 0
        %6764 = vmatpush1.bf16.msra.mxu0 %v4741
        %6765 = vmatprep.subr.bf16.mxu0 0
        %6766 = vmatpush1.bf16.msra.mxu0 %v4742
        %6767 = vmatprep.subr.bf16.mxu0 0
        %6768 = vmatpush1.bf16.msra.mxu0 %v4743
        %6769 = vmatprep.subr.bf16.mxu0 0
        %6770 = vmatpush1.bf16.msra.mxu0 %v4744
        %6771 = vmatprep.subr.bf16.mxu0 0
        %6772 = vmatpush1.bf16.msra.mxu0 %v4745
        %6773 = vmatprep.subr.bf16.mxu0 0
        %6774 = vmatpush1.bf16.msra.mxu0 %v4746
        %6775 = vmatprep.subr.bf16.mxu0 0
        %6776 = vmatpush1.bf16.msra.mxu0 %v4747
        %6777 = vmatprep.subr.bf16.mxu0 0
        %6778 = vmatpush1.bf16.msra.mxu0 %v4748
        %6779 = vmatprep.subr.bf16.mxu0 0
        %6780 = vmatpush1.bf16.msra.mxu0 %v4749
        %6781 = vmatprep.subr.bf16.mxu0 0
        %6782 = vmatpush1.bf16.msra.mxu0 %v4750
        %6783 = vmatprep.subr.bf16.mxu0 0
        %6784 = vmatpush1.bf16.msra.mxu0 %v4751
        %6785 = vmatprep.subr.bf16.mxu0 0
        %6786 = vmatpush1.bf16.msra.mxu0 %v4752
        %6787 = vmatprep.subr.bf16.mxu0 0
        %6788 = vmatpush1.bf16.msra.mxu0 %v4753
        %6789 = vmatprep.subr.bf16.mxu0 0
        %6790 = vmatpush1.bf16.msra.mxu0 %v4754
        %6791 = vmatprep.subr.bf16.mxu0 0
        %6792 = vmatpush1.bf16.msra.mxu0 %v4755
        %6793 = vmatprep.subr.bf16.mxu0 0
        %6794 = vmatpush1.bf16.msra.mxu0 %v4756
        %6795 = vmatprep.mubr.bf16.mxu0 %v1637
        %6796 = vmatmul.mubr.bf16.gmra.mrb[0].mxu0 %v1636
        %v6797 = vpop.f32.mrb[0].mxu0
        %v6798 = vadd.f32 %v6758, %v6797
        %v6799 = vpop.f32.mrb[0].mxu0
        %v6800 = vpop.f32.mrb[0].mxu0
        %v6801 = vpop.f32.mrb[0].mxu0
        %6802 = vdwg.mxu0
        %6803 = vmatprep.subr.bf16.mxu0 0
        %6804 = vmatpush1.bf16.msra.mxu0 %v4757
        %6805 = vmatprep.subr.bf16.mxu0 0
        %6806 = vmatpush1.bf16.msra.mxu0 %v4758
        %6807 = vmatprep.subr.bf16.mxu0 0
        %6808 = vmatpush1.bf16.msra.mxu0 %v4759
        %6809 = vmatprep.subr.bf16.mxu0 0
        %6810 = vmatpush1.bf16.msra.mxu0 %v4760
        %6811 = vmatprep.subr.bf16.mxu0 0
        %6812 = vmatpush1.bf16.msra.mxu0 %v4761
        %6813 = vmatprep.subr.bf16.mxu0 0
        %6814 = vmatpush1.bf16.msra.mxu0 %v4762
        %6815 = vmatprep.subr.bf16.mxu0 0
        %6816 = vmatpush1.bf16.msra.mxu0 %v4763
        %6817 = vmatprep.subr.bf16.mxu0 0
        %6818 = vmatpush1.bf16.msra.mxu0 %v4764
        %6819 = vmatprep.subr.bf16.mxu0 0
        %6820 = vmatpush1.bf16.msra.mxu0 %v4765
        %6821 = vmatprep.subr.bf16.mxu0 0
        %6822 = vmatpush1.bf16.msra.mxu0 %v4766
        %6823 = vmatprep.subr.bf16.mxu0 0
        %6824 = vmatpush1.bf16.msra.mxu0 %v4767
        %6825 = vmatprep.subr.bf16.mxu0 0
        %6826 = vmatpush1.bf16.msra.mxu0 %v4768
        %6827 = vmatprep.subr.bf16.mxu0 0
        %6828 = vmatpush1.bf16.msra.mxu0 %v4769
        %6829 = vmatprep.subr.bf16.mxu0 0
        %6830 = vmatpush1.bf16.msra.mxu0 %v4770
        %6831 = vmatprep.subr.bf16.mxu0 0
        %6832 = vmatpush1.bf16.msra.mxu0 %v4771
        %6833 = vmatprep.subr.bf16.mxu0 0
        %6834 = vmatpush1.bf16.msra.mxu0 %v4772
        %6835 = vmatprep.mubr.bf16.mxu0 %v1639
        %6836 = vmatmul.mubr.bf16.gmra.mrb[0].mxu0 %v1638
        %v6837 = vpop.f32.mrb[0].mxu0
        %v6838 = vadd.f32 %v6798, %v6837
        %v6839 = vpop.f32.mrb[0].mxu0
        %v6840 = vpop.f32.mrb[0].mxu0
        %v6841 = vpop.f32.mrb[0].mxu0
        %6842 = vdwg.mxu0
        %6843 = vmatprep.subr.bf16.mxu0 0
        %6844 = vmatpush1.bf16.msra.mxu0 %v4773
        %6845 = vmatprep.subr.bf16.mxu0 0
        %6846 = vmatpush1.bf16.msra.mxu0 %v4774
        %6847 = vmatprep.subr.bf16.mxu0 0
        %6848 = vmatpush1.bf16.msra.mxu0 %v4775
        %6849 = vmatprep.subr.bf16.mxu0 0
        %6850 = vmatpush1.bf16.msra.mxu0 %v4776
        %6851 = vmatprep.subr.bf16.mxu0 0
        %6852 = vmatpush1.bf16.msra.mxu0 %v4777
        %6853 = vmatprep.subr.bf16.mxu0 0
        %6854 = vmatpush1.bf16.msra.mxu0 %v4778
        %6855 = vmatprep.subr.bf16.mxu0 0
        %6856 = vmatpush1.bf16.msra.mxu0 %v4779
        %6857 = vmatprep.subr.bf16.mxu0 0
        %6858 = vmatpush1.bf16.msra.mxu0 %v4780
        %6859 = vmatprep.subr.bf16.mxu0 0
        %6860 = vmatpush1.bf16.msra.mxu0 %v4781
        %6861 = vmatprep.subr.bf16.mxu0 0
        %6862 = vmatpush1.bf16.msra.mxu0 %v4782
        %6863 = vmatprep.subr.bf16.mxu0 0
        %6864 = vmatpush1.bf16.msra.mxu0 %v4783
        %6865 = vmatprep.subr.bf16.mxu0 0
        %6866 = vmatpush1.bf16.msra.mxu0 %v4784
        %6867 = vmatprep.subr.bf16.mxu0 0
        %6868 = vmatpush1.bf16.msra.mxu0 %v4785
        %6869 = vmatprep.subr.bf16.mxu0 0
        %6870 = vmatpush1.bf16.msra.mxu0 %v4786
        %6871 = vmatprep.subr.bf16.mxu0 0
        %6872 = vmatpush1.bf16.msra.mxu0 %v4787
        %6873 = vmatprep.subr.bf16.mxu0 0
        %6874 = vmatpush1.bf16.msra.mxu0 %v4788
        %6875 = vmatprep.mubr.bf16.mxu0 %v1641
        %6876 = vmatmul.mubr.bf16.gmra.mrb[0].mxu0 %v1640
        %v6877 = vpop.f32.mrb[0].mxu0
        %v6878 = vadd.f32 %v6838, %v6877
        %v6879 = vpop.f32.mrb[0].mxu0
        %v6880 = vpop.f32.mrb[0].mxu0
        %v6881 = vpop.f32.mrb[0].mxu0
        %6882 = vdwg.mxu0
        %6883 = vmatprep.subr.bf16.mxu0 0
        %6884 = vmatpush1.bf16.msra.mxu0 %v4789
        %6885 = vmatprep.subr.bf16.mxu0 0
        %6886 = vmatpush1.bf16.msra.mxu0 %v4790
        %6887 = vmatprep.subr.bf16.mxu0 0
        %6888 = vmatpush1.bf16.msra.mxu0 %v4791
        %6889 = vmatprep.subr.bf16.mxu0 0
        %6890 = vmatpush1.bf16.msra.mxu0 %v4792
        %6891 = vmatprep.subr.bf16.mxu0 0
        %6892 = vmatpush1.bf16.msra.mxu0 %v4793
        %6893 = vmatprep.subr.bf16.mxu0 0
        %6894 = vmatpush1.bf16.msra.mxu0 %v4794
        %6895 = vmatprep.subr.bf16.mxu0 0
        %6896 = vmatpush1.bf16.msra.mxu0 %v4795
        %6897 = vmatprep.subr.bf16.mxu0 0
        %6898 = vmatpush1.bf16.msra.mxu0 %v4796
        %6899 = vmatprep.subr.bf16.mxu0 0
        %6900 = vmatpush1.bf16.msra.mxu0 %v4797
        %6901 = vmatprep.subr.bf16.mxu0 0
        %6902 = vmatpush1.bf16.msra.mxu0 %v4798
        %6903 = vmatprep.subr.bf16.mxu0 0
        %6904 = vmatpush1.bf16.msra.mxu0 %v4799
        %6905 = vmatprep.subr.bf16.mxu0 0
        %6906 = vmatpush1.bf16.msra.mxu0 %v4800
        %6907 = vmatprep.subr.bf16.mxu0 0
        %6908 = vmatpush1.bf16.msra.mxu0 %v4801
        %6909 = vmatprep.subr.bf16.mxu0 0
        %6910 = vmatpush1.bf16.msra.mxu0 %v4802
        %6911 = vmatprep.subr.bf16.mxu0 0
        %6912 = vmatpush1.bf16.msra.mxu0 %v4803
        %6913 = vmatprep.subr.bf16.mxu0 0
        %6914 = vmatpush1.bf16.msra.mxu0 %v4804
        %6915 = vmatprep.mubr.bf16.mxu0 %v1643
        %6916 = vmatmul.mubr.bf16.gmra.mrb[0].mxu0 %v1642
        %v6917 = vpop.f32.mrb[0].mxu0
        %v6918 = vadd.f32 %v6878, %v6917
        %v6919 = vpop.f32.mrb[0].mxu0
        %v6920 = vpop.f32.mrb[0].mxu0
        %v6921 = vpop.f32.mrb[0].mxu0
        %6922 = vdwg.mxu0
        %6923 = vmatprep.subr.bf16.mxu0 0
        %6924 = vmatpush1.bf16.msra.mxu0 %v4805
        %6925 = vmatprep.subr.bf16.mxu0 0
        %6926 = vmatpush1.bf16.msra.mxu0 %v4806
        %6927 = vmatprep.subr.bf16.mxu0 0
        %6928 = vmatpush1.bf16.msra.mxu0 %v4807
        %6929 = vmatprep.subr.bf16.mxu0 0
        %6930 = vmatpush1.bf16.msra.mxu0 %v4808
        %6931 = vmatprep.subr.bf16.mxu0 0
        %6932 = vmatpush1.bf16.msra.mxu0 %v4809
        %6933 = vmatprep.subr.bf16.mxu0 0
        %6934 = vmatpush1.bf16.msra.mxu0 %v4810
        %6935 = vmatprep.subr.bf16.mxu0 0
        %6936 = vmatpush1.bf16.msra.mxu0 %v4811
        %6937 = vmatprep.subr.bf16.mxu0 0
        %6938 = vmatpush1.bf16.msra.mxu0 %v4812
        %6939 = vmatprep.subr.bf16.mxu0 0
        %6940 = vmatpush1.bf16.msra.mxu0 %v4813
        %6941 = vmatprep.subr.bf16.mxu0 0
        %6942 = vmatpush1.bf16.msra.mxu0 %v4814
        %6943 = vmatprep.subr.bf16.mxu0 0
        %6944 = vmatpush1.bf16.msra.mxu0 %v4815
        %6945 = vmatprep.subr.bf16.mxu0 0
        %6946 = vmatpush1.bf16.msra.mxu0 %v4816
        %6947 = vmatprep.subr.bf16.mxu0 0
        %6948 = vmatpush1.bf16.msra.mxu0 %v4817
        %6949 = vmatprep.subr.bf16.mxu0 0
        %6950 = vmatpush1.bf16.msra.mxu0 %v4818
        %6951 = vmatprep.subr.bf16.mxu0 0
        %6952 = vmatpush1.bf16.msra.mxu0 %v4819
        %6953 = vmatprep.subr.bf16.mxu0 0
        %6954 = vmatpush1.bf16.msra.mxu0 %v4820
        %6955 = vmatprep.mubr.bf16.mxu0 %v1645
        %6956 = vmatmul.mubr.bf16.gmra.mrb[0].mxu0 %v1644
        %v6957 = vpop.f32.mrb[0].mxu0
        %v6958 = vadd.f32 %v6918, %v6957
        %v6959 = vpop.f32.mrb[0].mxu0
        %v6960 = vpop.f32.mrb[0].mxu0
        %v6961 = vpop.f32.mrb[0].mxu0
        %6962 = vdwg.mxu0
        %6963 = vmatprep.subr.bf16.mxu0 0
        %6964 = vmatpush1.bf16.msra.mxu0 %v4821
        %6965 = vmatprep.subr.bf16.mxu0 0
        %6966 = vmatpush1.bf16.msra.mxu0 %v4822
        %6967 = vmatprep.subr.bf16.mxu0 0
        %6968 = vmatpush1.bf16.msra.mxu0 %v4823
        %6969 = vmatprep.subr.bf16.mxu0 0
        %6970 = vmatpush1.bf16.msra.mxu0 %v4824
        %6971 = vmatprep.subr.bf16.mxu0 0
        %6972 = vmatpush1.bf16.msra.mxu0 %v4825
        %6973 = vmatprep.subr.bf16.mxu0 0
        %6974 = vmatpush1.bf16.msra.mxu0 %v4826
        %6975 = vmatprep.subr.bf16.mxu0 0
        %6976 = vmatpush1.bf16.msra.mxu0 %v4827
        %6977 = vmatprep.subr.bf16.mxu0 0
        %6978 = vmatpush1.bf16.msra.mxu0 %v4828
        %6979 = vmatprep.subr.bf16.mxu0 0
        %6980 = vmatpush1.bf16.msra.mxu0 %v4829
        %6981 = vmatprep.subr.bf16.mxu0 0
        %6982 = vmatpush1.bf16.msra.mxu0 %v4830
        %6983 = vmatprep.subr.bf16.mxu0 0
        %6984 = vmatpush1.bf16.msra.mxu0 %v4831
        %6985 = vmatprep.subr.bf16.mxu0 0
        %6986 = vmatpush1.bf16.msra.mxu0 %v4832
        %6987 = vmatprep.subr.bf16.mxu0 0
        %6988 = vmatpush1.bf16.msra.mxu0 %v4833
        %6989 = vmatprep.subr.bf16.mxu0 0
        %6990 = vmatpush1.bf16.msra.mxu0 %v4834
        %6991 = vmatprep.subr.bf16.mxu0 0
        %6992 = vmatpush1.bf16.msra.mxu0 %v4835
        %6993 = vmatprep.subr.bf16.mxu0 0
        %6994 = vmatpush1.bf16.msra.mxu0 %v4836
        %6995 = vmatprep.mubr.bf16.mxu0 %v1647
        %6996 = vmatmul.mubr.bf16.gmra.mrb[0].mxu0 %v1646
        %v6997 = vpop.f32.mrb[0].mxu0
        %v6998 = vadd.f32 %v6958, %v6997
        %v6999 = vpop.f32.mrb[0].mxu0
        %v7000 = vpop.f32.mrb[0].mxu0
        %v7001 = vpop.f32.mrb[0].mxu0
        %7002 = vdwg.mxu0
        %7003 = vmatprep.subr.bf16.mxu0 0
        %7004 = vmatpush1.bf16.msra.mxu0 %v4837
        %7005 = vmatprep.subr.bf16.mxu0 0
        %7006 = vmatpush1.bf16.msra.mxu0 %v4838
        %7007 = vmatprep.subr.bf16.mxu0 0
        %7008 = vmatpush1.bf16.msra.mxu0 %v4839
        %7009 = vmatprep.subr.bf16.mxu0 0
        %7010 = vmatpush1.bf16.msra.mxu0 %v4840
        %7011 = vmatprep.subr.bf16.mxu0 0
        %7012 = vmatpush1.bf16.msra.mxu0 %v4841
        %7013 = vmatprep.subr.bf16.mxu0 0
        %7014 = vmatpush1.bf16.msra.mxu0 %v4842
        %7015 = vmatprep.subr.bf16.mxu0 0
        %7016 = vmatpush1.bf16.msra.mxu0 %v4843
        %7017 = vmatprep.subr.bf16.mxu0 0
        %7018 = vmatpush1.bf16.msra.mxu0 %v4844
        %7019 = vmatprep.subr.bf16.mxu0 0
        %7020 = vmatpush1.bf16.msra.mxu0 %v4845
        %7021 = vmatprep.subr.bf16.mxu0 0
        %7022 = vmatpush1.bf16.msra.mxu0 %v4846
        %7023 = vmatprep.subr.bf16.mxu0 0
        %7024 = vmatpush1.bf16.msra.mxu0 %v4847
        %7025 = vmatprep.subr.bf16.mxu0 0
        %7026 = vmatpush1.bf16.msra.mxu0 %v4848
        %7027 = vmatprep.subr.bf16.mxu0 0
        %7028 = vmatpush1.bf16.msra.mxu0 %v4849
        %7029 = vmatprep.subr.bf16.mxu0 0
        %7030 = vmatpush1.bf16.msra.mxu0 %v4850
        %7031 = vmatprep.subr.bf16.mxu0 0
        %7032 = vmatpush1.bf16.msra.mxu0 %v4851
        %7033 = vmatprep.subr.bf16.mxu0 0
        %7034 = vmatpush1.bf16.msra.mxu0 %v4852
        %7035 = vmatprep.mubr.bf16.mxu0 %v1649
        %7036 = vmatmul.mubr.bf16.gmra.mrb[0].mxu0 %v1648
        %v7037 = vpop.f32.mrb[0].mxu0
        %v7038 = vadd.f32 %v6998, %v7037
        %v7039 = vpop.f32.mrb[0].mxu0
        %v7040 = vpop.f32.mrb[0].mxu0
        %v7041 = vpop.f32.mrb[0].mxu0
        %7042 = vdwg.mxu0
        %7043 = vmatprep.subr.bf16.mxu0 0
        %7044 = vmatpush1.bf16.msra.mxu0 %v4853
        %7045 = vmatprep.subr.bf16.mxu0 0
        %7046 = vmatpush1.bf16.msra.mxu0 0
        %7047 = vmatprep.subr.bf16.mxu0 0
        %7048 = vmatpush1.bf16.msra.mxu0 0
        %7049 = vmatprep.subr.bf16.mxu0 0
        %7050 = vmatpush1.bf16.msra.mxu0 0
        %7051 = vmatprep.subr.bf16.mxu0 0
        %7052 = vmatpush1.bf16.msra.mxu0 0
        %7053 = vmatprep.subr.bf16.mxu0 0
        %7054 = vmatpush1.bf16.msra.mxu0 0
        %7055 = vmatprep.subr.bf16.mxu0 0
        %7056 = vmatpush1.bf16.msra.mxu0 0
        %7057 = vmatprep.subr.bf16.mxu0 0
        %7058 = vmatpush1.bf16.msra.mxu0 0
        %7059 = vmatprep.subr.bf16.mxu0 0
        %7060 = vmatpush1.bf16.msra.mxu0 0
        %7061 = vmatprep.subr.bf16.mxu0 0
        %7062 = vmatpush1.bf16.msra.mxu0 0
        %7063 = vmatprep.subr.bf16.mxu0 0
        %7064 = vmatpush1.bf16.msra.mxu0 0
        %7065 = vmatprep.subr.bf16.mxu0 0
        %7066 = vmatpush1.bf16.msra.mxu0 0
        %7067 = vmatprep.subr.bf16.mxu0 0
        %7068 = vmatpush1.bf16.msra.mxu0 0
        %7069 = vmatprep.subr.bf16.mxu0 0
        %7070 = vmatpush1.bf16.msra.mxu0 0
        %7071 = vmatprep.subr.bf16.mxu0 0
        %7072 = vmatpush1.bf16.msra.mxu0 0
        %7073 = vmatprep.subr.bf16.mxu0 0
        %7074 = vmatpush1.bf16.msra.mxu0 0
        %7075 = vmatprep.mubr.bf16.mxu0 0
        %7076 = vmatmul.mubr.bf16.gmra.mrb[0].mxu0 %v5481
        %v7077 = vpop.f32.mrb[0].mxu0
        %v7078 = vadd.f32 %v7038, %v7077
        %v7079 = vpop.f32.mrb[0].mxu0
        %v7080 = vpop.f32.mrb[0].mxu0
        %v7081 = vpop.f32.mrb[0].mxu0
        %7082 = vdwg.mxu0
        %7083 = vst [vmem:[%s161] sm:$0xff] %v7078
        %s7084 = sand.u32 %s74, 1
        %s7085 = scalar_lea.sflag [#allocation4], %s7084
        %s7086 = sand.u32 %s74, 1
        %s7087 = smul.addr %s7086, 8
        %s7088 = scalar_lea.vmem [#allocation5], %s7087
        // Predicated region
        $region33: #{metric_model_forward.3} parent=27 // pred_check
          %p7089 = pneg %p84
        $region34: #{metric_model_forward.3} parent=27 // pred_check_branch
          %7091 = sbr.rel (%p7089) target = $region36
        $region35: #{metric_model_forward.3} parent=27 // pred_region
          %s7093 = ssub.s32 128, 128
          %7094 = vsyncadd %s7085, %s7093
          %s7095 = smul.addr %s19, 128
          %s7096 = scalar_lea.hbm %s2, %s7095
          %s7098 = sshll.u32 %s7088, 4
          %s7099 = int_to_ptr.vmem [resolvable:$true] %s7098
          %7101 = dma.vmem_to_hbm [thread:$0]  %s7099, 128, %s7096, %s7085
        $region36: #{metric_model_forward.3} parent=27 // pred_fallthru
          _
      $region28: #{metric_model_forward.3} parent=5 // pred_fallthru
        _
      %p7102 = scmp.le.s32.totalorder 2, %s14
      // Predicated region
      $region37: #{metric_model_forward.3} parent=5 // pred_check
        %p7103 = pneg %p7102
      $region38: #{metric_model_forward.3} parent=5 // pred_check_branch
        %7105 = sbr.rel (%p7103) target = $region40
      $region39: #{metric_model_forward.3} parent=5 // pred_region
        %s7106 = ssub.s32 %s14, 2
        // Predicated region
        $region41: #{metric_model_forward.3} parent=39 // pred_check
          %p7107 = pneg %p90
        $region42: #{metric_model_forward.3} parent=39 // pred_check_branch
          %7109 = sbr.rel (%p7107) target = $region44
        $region43: #{metric_model_forward.3} parent=39 // pred_region
          %s7110 = sand.u32 %s75, 1
          %s7111 = scalar_lea.sflag [#allocation4], %s7110
          %s7112 = sand.u32 %s75, 1
          %s7113 = smul.addr %s7112, 8
          %s7114 = scalar_lea.vmem [#allocation5], %s7113
          %7115 = dma.done %s7111, 128
        $region44: #{metric_model_forward.3} parent=39 // pred_fallthru
          _
      $region40: #{metric_model_forward.3} parent=5 // pred_fallthru
        _
    $region6: #{metric_model_forward.3} parent=1 // loop_footer
      %s18 = sadd.s32 1, %s14
    $region7: #{metric_model_forward.3} parent=1 // loop_footer_branch
      %13 = sbr.rel target = $region3
    $region8: #{metric_model_forward.3} parent=1 // loop_exit
      _
    %7116 = vsyncpa [#allocation3], 1
    %s7117 = scalar_lea.sflag [#allocation3], 1
    %7118 = vsyncpa %s7117, 1
    %7119 = vsyncpa [#allocation4], 1
    %s7120 = scalar_lea.sflag [#allocation4], 1
    %7121 = vsyncpa %s7120, 1

</llo_original>
